<compile_context>
chip_gen: v6e
topology: v6e:2x2x1
jax: 0.10.0
libtpu: 0.0.40
codegen_flags: <defaults>
</compile_context>

<pallas_src>
import functools

import jax
import jax.numpy as jnp
from jax import lax
from jax.experimental import pallas as pl
from jax.experimental.pallas import tpu as pltpu

LANE = 128


def _rup(x, m=LANE):
    return ((x + m - 1) // m) * m


# ------------------------------ Pallas kernel --------------------------------

def _c2f_kernel(x_ref, w1_ref, b1_ref, wm_ref, bm_ref, w2_ref, b2_ref, o_ref,
                pad_scr, ycat, *, H, W, TR, Cp, n, shortcut):
    """One (image, row-tile) step of C2f; every intermediate stays in VMEM.

    x_ref   : (1, (H+4n)*W, C1p)  bf16  row-padded NHWC image, flattened (HW, C)
    w1_ref  : (C1p, 2*Cp)         bf16  cv1 (1x1), BN folded, chunk-aligned cols
    b1_ref  : (1, 2*Cp)           f32
    wm_ref  : (2n*3, 3*Cp, Cp)    bf16  bottleneck 3x3, dx taps fused along K
    bm_ref  : (2n, 1, Cp)         f32
    w2_ref  : ((2+n)*Cp, C2p)     bf16  cv2 (1x1) over the lane-concat of chunks
    b2_ref  : (1, C2p)            f32
    o_ref   : (1, TR*W, C2p)      bf16
    pad_scr : (TE*W + 2W, 3*Cp)   bf16  persistent row-padded im2col slab
    ycat    : (TR*W, (2+n)*Cp)    bf16  lane-concat of chunks feeding cv2
    """
    HALO = 2 * n                  # rows of halo recomputed on each side
    TE = TR + 2 * HALO            # rows computed this step
    ME = TE * W                   # flattened rows computed
    MO = TR * W                   # flattened rows written
    OUT0 = HALO * W               # first output row inside the tile buffer
    P8 = 8                        # zero rows for the +-1 column-shift buffer

    t = pl.program_id(1)

    def silu(v):                  # f32 epilogue; divide goes to the EUP approx path
        return v * pl.reciprocal(1.0 + jnp.exp(-v), approx=True)

    # ---- border masks, generated in-kernel (no HBM mask input) --------------
    m_idx = lax.broadcasted_iota(jnp.int32, (ME, Cp), 0)
    if (W & (W - 1)) == 0:
        col = m_idx & (W - 1)
    else:
        col = m_idx % W           # TODO(synk): verify vector irem for non-pow2 W
    p_idx = m_idx + t * (TR * W)                      # flat index in padded image
    row_ok = (p_idx >= HALO * W) & (p_idx < (HALO + H) * W)   # real image rows
    col_l = row_ok & (col >= 1)                       # dx = -1 tap validity
    col_r = row_ok & (col <= W - 2)                   # dx = +1 tap validity

    # ---- zero the persistent pad rows (dy=+-1 reads at buffer ends) ---------
    zpad = jnp.zeros((W, 3 * Cp), jnp.bfloat16)
    pad_scr[0:W, :] = zpad
    pad_scr[W + ME:W + ME + W, :] = zpad

    def conv3x3(a, widx):
        """3x3 'same' conv + BN + SiLU, dx taps fused along K (3 matmuls, K=3*Cp).

        dx=+-1 values come from static slices of an 8-row zero-padded copy
        (horizontal borders masked); dy=+-1 are the 8-aligned +-W row slices of
        the persistent padded scratch; out-of-image rows are zeroed via row_ok.
        """
        am = jnp.where(row_ok, a, 0.0)                            # (ME, Cp) f32
        z8 = jnp.zeros((P8, Cp), jnp.float32)
        a8 = jnp.concatenate([z8, am, z8], axis=0)                # aligned concat
        left = jnp.where(col_l, a8[P8 - 1:P8 - 1 + ME, :], 0.0)   # x[., w-1]
        right = jnp.where(col_r, a8[P8 + 1:P8 + 1 + ME, :], 0.0)  # x[., w+1]
        pad_scr[W:W + ME, 0:Cp] = left.astype(jnp.bfloat16)
        pad_scr[W:W + ME, Cp:2 * Cp] = am.astype(jnp.bfloat16)
        pad_scr[W:W + ME, 2 * Cp:3 * Cp] = right.astype(jnp.bfloat16)
        acc = jnp.dot(pad_scr[0:ME, :], wm_ref[widx * 3 + 0],
                      preferred_element_type=jnp.float32)         # dy = -1
        acc += jnp.dot(pad_scr[W:W + ME, :], wm_ref[widx * 3 + 1],
                       preferred_element_type=jnp.float32)        # dy =  0
        acc += jnp.dot(pad_scr[2 * W:2 * W + ME, :], wm_ref[widx * 3 + 2],
                       preferred_element_type=jnp.float32)        # dy = +1
        return silu(acc + bm_ref[widx])

    # ---- cv1 (1x1) on the tile + halo rows -----------------------------------
    start = pl.multiple_of(t * (TR * W), 8)
    xw = x_ref[0, pl.ds(start, ME), :]                            # (ME, C1p) bf16
    y = jnp.dot(xw, w1_ref[...], preferred_element_type=jnp.float32)
    y = silu(y + b1_ref[...])                                     # (ME, 2*Cp) f32

    c0 = y[:, :Cp]
    cur = y[:, Cp:2 * Cp]
    ycat[:, 0:Cp] = c0[OUT0:OUT0 + MO, :].astype(jnp.bfloat16)
    ycat[:, Cp:2 * Cp] = cur[OUT0:OUT0 + MO, :].astype(jnp.bfloat16)

    # ---- bottleneck chain: y.append(m(y[-1])) ---------------------------------
    for i in range(n):
        h = conv3x3(cur, 2 * i)
        h = conv3x3(h, 2 * i + 1)
        cur = cur + h if shortcut else h
        ycat[:, (2 + i) * Cp:(3 + i) * Cp] = (
            cur[OUT0:OUT0 + MO, :].astype(jnp.bfloat16))

    # ---- cv2 (1x1) over the lane-concat of all chunks: single deep-K matmul ---
    out = jnp.dot(ycat[...], w2_ref[...], preferred_element_type=jnp.float32)
    o_ref[0] = silu(out + b2_ref[...]).astype(o_ref.dtype)


# ------------------------------ JAX wrapper -----------------------------------

def c2f_forward(x_nchw, kp, *, c1, c2, c, n, shortcut, tile_rows=None):
    """Pallas-backed forward of ultralytics C2f (g=1).  All sizes static ints."""
    N, _, H, W = x_nchw.shape
    assert W % 8 == 0, "W must be a multiple of 8"
    TR = tile_rows if tile_rows is not None else H
    assert H % TR == 0, "tile_rows must divide H"
    T = H // TR
    HALO = 2 * n
    Hp = H + 2 * HALO
    TE = TR + 2 * HALO
    C1p, Cp, C2p = _rup(c1), _rup(c), _rup(c2)

    x = jnp.transpose(x_nchw, (0, 2, 3, 1))                      # NCHW -> NHWC
    x = jnp.pad(x, ((0, 0), (HALO, HALO), (0, 0), (0, C1p - c1)))  # row + lane pad
    x = x.reshape(N, Hp * W, C1p).astype(jnp.bfloat16)

    # Advisory cost from the TRUE (unpadded) channel counts.
    M = H * W
    flops = 2 * N * M * (c1 * 2 * c + n * 2 * 9 * c * c + (2 + n) * c * c2)
    transcendentals = N * M * (2 * c + 2 * n * c + c2)
    weight_bytes = sum(int(v.size) * v.dtype.itemsize for v in kp.values())
    bytes_accessed = int(x.size * 2 + N * M * C2p * 2 + weight_bytes)

    # Explicit VMEM budget: resident weights + double-buffered I/O blocks +
    # scratch slabs + f32 temporaries, with headroom.  Capped for v7x (64 MiB).
    block_bytes = 2 * (Hp * W * C1p * 2) + 2 * (TR * W * C2p * 2)
    scratch_bytes = (TE * W + 2 * W) * 3 * Cp * 2 + TR * W * (2 + n) * Cp * 2
    temp_bytes = 10 * TE * W * Cp * 4
    vmem_limit = int(min(max(2 * (weight_bytes + block_bytes + scratch_bytes
                                  + temp_bytes), 8 * 2**20), 64 * 2**20))

    kernel = functools.partial(_c2f_kernel, H=H, W=W, TR=TR, Cp=Cp, n=n,
                               shortcut=shortcut)

    out = pl.pallas_call(
        kernel,
        out_shape=jax.ShapeDtypeStruct((N, H * W, C2p), jnp.bfloat16),
        grid_spec=pltpu.PrefetchScalarGridSpec(
            num_scalar_prefetch=0,
            grid=(N, T),
            in_specs=[
                pl.BlockSpec((1, Hp * W, C1p), lambda b, t: (b, 0, 0)),
                pl.BlockSpec((C1p, 2 * Cp), lambda b, t: (0, 0)),
                pl.BlockSpec((1, 2 * Cp), lambda b, t: (0, 0)),
                pl.BlockSpec((2 * n * 3, 3 * Cp, Cp), lambda b, t: (0, 0, 0)),
                pl.BlockSpec((2 * n, 1, Cp), lambda b, t: (0, 0, 0)),
                pl.BlockSpec(((2 + n) * Cp, C2p), lambda b, t: (0, 0)),
                pl.BlockSpec((1, C2p), lambda b, t: (0, 0)),
            ],
            out_specs=pl.BlockSpec((1, TR * W, C2p), lambda b, t: (b, t, 0)),
            scratch_shapes=[
                pltpu.VMEM((TE * W + 2 * W, 3 * Cp), jnp.bfloat16),
                pltpu.VMEM((TR * W, (2 + n) * Cp), jnp.bfloat16),
            ],
        ),
        compiler_params=pltpu.CompilerParams(
            dimension_semantics=("parallel", "parallel"),
            vmem_limit_bytes=vmem_limit),
        cost_estimate=pl.CostEstimate(flops=flops, transcendentals=transcendentals,
                                      bytes_accessed=bytes_accessed),
    )(x, kp["w1"], kp["b1"], kp["wm"], kp["bm"], kp["w2"], kp["b2"])

    out = out.reshape(N, H, W, C2p)[..., :c2]                    # drop lane padding
    return jnp.transpose(out, (0, 3, 1, 2)).astype(jnp.float32)  # NHWC -> NCHW


# --------------------------- parameter construction ---------------------------

def _make_conv_bn(key, kh, kw, cin, cout):
    """Conv2d(bias=False) + BatchNorm2d, BN folded.  Weights bf16 (HWIO), bias f32."""
    kw_, kg, kb, km = jax.random.split(key, 4)
    w = 0.2 * jax.random.normal(kw_, (kh, kw, cin, cout), jnp.float32)
    gamma = jax.random.uniform(kg, (cout,), jnp.float32, 0.5, 1.5)
    beta = 0.1 * jax.random.normal(kb, (cout,), jnp.float32)
    mean = 0.1 * jax.random.normal(km, (cout,), jnp.float32)
    var = jnp.ones((cout,), jnp.float32)
    scale = gamma / jnp.sqrt(var + 1e-3)                          # ultralytics BN eps
    return (w * scale).astype(jnp.bfloat16), beta - mean * scale


def _pack_kernel_params(ref, c1, c2, c, n):
    """Pad / pack folded weights into lane-dense, K-fused kernel operands."""
    C1p, Cp, C2p = _rup(c1), _rup(c), _rup(c2)

    w1r, b1r = ref["cv1"]
    w1s = w1r.reshape(c1, 2 * c)
    w1 = jnp.zeros((C1p, 2 * Cp), jnp.bfloat16)
    w1 = w1.at[:c1, :c].set(w1s[:, :c]).at[:c1, Cp:Cp + c].set(w1s[:, c:])
    b1 = jnp.zeros((1, 2 * Cp), jnp.float32)
    b1 = b1.at[0, :c].set(b1r[:c]).at[0, Cp:Cp + c].set(b1r[c:])

    # Bottleneck 3x3: one (3*Cp, Cp) slab per dy; row group g in {0:dx=-1,1:0,2:+1}.
    wm = jnp.zeros((2 * n * 3, 3 * Cp, Cp), jnp.bfloat16)
    bm = jnp.zeros((2 * n, 1, Cp), jnp.float32)
    for i in range(n):
        for j in range(2):
            wj, bj = ref["m"][i][j]                               # (3,3,c,c) HWIO
            for d in range(3):
                for g in range(3):
                    wm = wm.at[(i * 2 + j) * 3 + d,
                               g * Cp:g * Cp + c, :c].set(wj[d, g])
            bm = bm.at[i * 2 + j, 0, :c].set(bj)

    # cv2: one ((2+n)*Cp, C2p) matrix matching the lane-concat of the chunks.
    w2r, b2r = ref["cv2"]
    w2s = w2r.reshape((2 + n) * c, c2)
    w2 = jnp.zeros(((2 + n) * Cp, C2p), jnp.bfloat16)
    for j in range(2 + n):
        w2 = w2.at[j * Cp:j * Cp + c, :c2].set(w2s[j * c:(j + 1) * c, :])
    b2 = jnp.zeros((1, C2p), jnp.float32).at[0, :c2].set(b2r)

    return {"w1": w1, "b1": b1, "wm": wm, "bm": bm, "w2": w2, "b2": b2}


def init_c2f_params(key, c1, c2, n=1, e=0.5):
    c = int(c2 * e)
    keys = jax.random.split(key, 2 + 2 * n)
    ref = {
        "cv1": _make_conv_bn(keys[0], 1, 1, c1, 2 * c),
        "cv2": _make_conv_bn(keys[1], 1, 1, (2 + n) * c, c2),
        "m": [(_make_conv_bn(keys[2 + 2 * i], 3, 3, c, c),
               _make_conv_bn(keys[3 + 2 * i], 3, 3, c, c)) for i in range(n)],
    }
    return ref, _pack_kernel_params(ref, c1, c2, c, n)


# ----------------------------- pure-JAX reference ------------------------------

def _silu(v):
    return v * (1.0 / (1.0 + jnp.exp(-v)))


def _ref_conv(x, w, b, padding):
    y = jax.lax.conv_general_dilated(
        x.astype(jnp.bfloat16), w, window_strides=(1, 1), padding=padding,
        dimension_numbers=("NHWC", "HWIO", "NHWC"),
        preferred_element_type=jnp.float32)
    return _silu(y + b)


def c2f_forward_ref(x_nchw, rp, *, c, n, shortcut):
    """Pure-JAX C2f reference with the same bf16-matmul / f32-epilogue numerics."""
    x = jnp.transpose(x_nchw, (0, 2, 3, 1))
    y = _ref_conv(x, *rp["cv1"], padding="VALID")
    ys = [y[..., :c], y[..., c:]]
    for i in range(n):
        inp = ys[-1]
        h = _ref_conv(inp, *rp["m"][i][0], padding=((1, 1), (1, 1)))
        h = _ref_conv(h, *rp["m"][i][1], padding=((1, 1), (1, 1)))
        ys.append(inp + h if shortcut else h)
    out = _ref_conv(jnp.concatenate(ys, axis=-1), *rp["cv2"], padding="VALID")
    return jnp.transpose(out, (0, 3, 1, 2))


# ------------------------------------ main -------------------------------------

if __name__ == "__main__":
    key = jax.random.PRNGKey(0)
    kx, kp1, kp2, kx2 = jax.random.split(key, 4)

    # Config 1: C2f(4, 4, n=1) on 2x4x16x16, two 8-row tiles per image.
    N, C1, H, W = 2, 4, 16, 16
    C2_OUT, N_BLOCKS, E = 4, 1, 0.5
    C_HID = int(C2_OUT * E)
    x = jax.random.normal(kx, (N, C1, H, W), jnp.float32)
    ref_params, kern_params = init_c2f_params(kp1, C1, C2_OUT, n=N_BLOCKS, e=E)

    for shortcut in (False, True):               # C2f default is shortcut=False
        fwd = jax.jit(functools.partial(
            c2f_forward, c1=C1, c2=C2_OUT, c=C_HID, n=N_BLOCKS,
            shortcut=shortcut, tile_rows=8))
        out = jax.block_until_ready(fwd(x, kern_params))
        ref = jax.block_until_ready(
            c2f_forward_ref(x, ref_params, c=C_HID, n=N_BLOCKS, shortcut=shortcut))
        assert out.shape == (N, C2_OUT, H, W), out.shape
        err = float(jnp.max(jnp.abs(out - ref)))
        assert jnp.allclose(out, ref, rtol=1e-2, atol=1e-2), err

    # Config 2: C2f(8, 8, n=2, shortcut=True), 4-row tiles (multi-bottleneck halo).
    C1b, C2b, NB2, E2 = 8, 8, 2, 0.5
    Cb = int(C2b * E2)
    xb = jax.random.normal(kx2, (2, C1b, 16, 16), jnp.float32)
    ref_p2, kern_p2 = init_c2f_params(kp2, C1b, C2b, n=NB2, e=E2)
    fwd2 = jax.jit(functools.partial(
        c2f_forward, c1=C1b, c2=C2b, c=Cb, n=NB2, shortcut=True, tile_rows=4))
    out2 = jax.block_until_ready(fwd2(xb, kern_p2))
    ref2 = jax.block_until_ready(
        c2f_forward_ref(xb, ref_p2, c=Cb, n=NB2, shortcut=True))
    err2 = float(jnp.max(jnp.abs(out2 - ref2)))
    assert jnp.allclose(out2, ref2, rtol=1e-2, atol=1e-2), err2

    print("KERNEL_OK")
</pallas_src>

<mosaic_0001>
module attributes {stable_mosaic.version = 11 : i64} {
  func.func @_c2f_kernel(%arg0: i32, %arg1: i32, %arg2: memref<1x320x128xbf16, #tpu.memory_space<vmem>>, %arg3: memref<128x256xbf16, #tpu.memory_space<vmem>>, %arg4: memref<1x256xf32, #tpu.memory_space<vmem>>, %arg5: memref<6x384x128xbf16, #tpu.memory_space<vmem>>, %arg6: memref<2x1x128xf32, #tpu.memory_space<vmem>>, %arg7: memref<384x128xbf16, #tpu.memory_space<vmem>>, %arg8: memref<1x128xf32, #tpu.memory_space<vmem>>, %arg9: memref<1x128x128xbf16, #tpu.memory_space<vmem>>, %arg10: memref<224x384xbf16, #tpu.memory_space<vmem>>, %arg11: memref<128x384xbf16, #tpu.memory_space<vmem>>) attributes {dimension_semantics = [#tpu.dimension_semantics<parallel>, #tpu.dimension_semantics<parallel>], iteration_bounds = array<i64: 2, 2>, scalar_prefetch = 0 : i64, scratch_operands = 2 : i64, tpu.core_type = #tpu.core_type<tc>, window_params = [{transform_indices = @transform_0, window_bounds = array<i64: 1, 320, 128>}, {pipeline_mode = #tpu.pipeline_mode<synchronous>, transform_indices = @transform_1, window_bounds = array<i64: 128, 256>}, {pipeline_mode = #tpu.pipeline_mode<synchronous>, transform_indices = @transform_2, window_bounds = array<i64: 1, 256>}, {pipeline_mode = #tpu.pipeline_mode<synchronous>, transform_indices = @transform_3, window_bounds = array<i64: 6, 384, 128>}, {pipeline_mode = #tpu.pipeline_mode<synchronous>, transform_indices = @transform_4, window_bounds = array<i64: 2, 1, 128>}, {pipeline_mode = #tpu.pipeline_mode<synchronous>, transform_indices = @transform_5, window_bounds = array<i64: 384, 128>}, {pipeline_mode = #tpu.pipeline_mode<synchronous>, transform_indices = @transform_6, window_bounds = array<i64: 1, 128>}, {transform_indices = @transform_7, window_bounds = array<i64: 1, 128, 128>}]} {
    %0 = tpu.iota {dimensions = array<i32: 0>} : vector<192x128xi32>
    %c15_i32 = arith.constant 15 : i32
    %1 = vector.broadcast %c15_i32 : i32 to vector<192x128xi32>
    %2 = arith.andi %0, %1 : vector<192x128xi32>
    %c128_i32 = arith.constant 128 : i32
    %3 = arith.muli %arg1, %c128_i32 : i32
    %4 = vector.broadcast %3 : i32 to vector<192x128xi32>
    %5 = arith.addi %0, %4 : vector<192x128xi32>
    %c32_i32 = arith.constant 32 : i32
    %6 = vector.broadcast %c32_i32 : i32 to vector<192x128xi32>
    %7 = arith.cmpi sge, %5, %6 : vector<192x128xi32>
    %c288_i32 = arith.constant 288 : i32
    %8 = vector.broadcast %c288_i32 : i32 to vector<192x128xi32>
    %9 = arith.cmpi slt, %5, %8 : vector<192x128xi32>
    %10 = arith.andi %7, %9 : vector<192x128xi1>
    %c1_i32 = arith.constant 1 : i32
    %11 = vector.broadcast %c1_i32 : i32 to vector<192x128xi32>
    %12 = arith.cmpi sge, %2, %11 : vector<192x128xi32>
    %13 = arith.andi %10, %12 : vector<192x128xi1>
    %c14_i32 = arith.constant 14 : i32
    %14 = vector.broadcast %c14_i32 : i32 to vector<192x128xi32>
    %15 = arith.cmpi sle, %2, %14 : vector<192x128xi32>
    %16 = arith.andi %10, %15 : vector<192x128xi1>
    %cst = arith.constant 0.000000e+00 : bf16
    %17 = vector.broadcast %cst : bf16 to vector<16x384xbf16>
    %c0 = arith.constant 0 : index
    %c0_0 = arith.constant 0 : index
    %18 = vector.load %arg10[%c0, %c0_0] : memref<224x384xbf16, #tpu.memory_space<vmem>>, vector<16x384xbf16>
    tpu.vector_store %arg10[%c0, %c0_0], %17 {strides = array<i32>} : memref<224x384xbf16, #tpu.memory_space<vmem>>, vector<16x384xbf16>,
    %c208 = arith.constant 208 : index
    %c0_1 = arith.constant 0 : index
    %19 = vector.load %arg10[%c208, %c0_1] : memref<224x384xbf16, #tpu.memory_space<vmem>>, vector<16x384xbf16>
    tpu.vector_store %arg10[%c208, %c0_1], %17 {strides = array<i32>} : memref<224x384xbf16, #tpu.memory_space<vmem>>, vector<16x384xbf16>,
    %c128_i32_2 = arith.constant 128 : i32
    %20 = arith.muli %arg1, %c128_i32_2 : i32
    %21 = tpu.assume_multiple %20, 8 : i32
    %c0_3 = arith.constant 0 : index
    %22 = arith.index_cast %21 : i32 to index
    %c0_4 = arith.constant 0 : index
    %23 = vector.load %arg2[%c0_3, %22, %c0_4] : memref<1x320x128xbf16, #tpu.memory_space<vmem>>, vector<1x192x128xbf16>
    %24 = vector.shape_cast %23 : vector<1x192x128xbf16> to vector<192x128xbf16>
    %c0_5 = arith.constant 0 : index
    %c0_6 = arith.constant 0 : index
    %25 = vector.load %arg3[%c0_5, %c0_6] : memref<128x256xbf16, #tpu.memory_space<vmem>>, vector<128x256xbf16>
    %cst_7 = arith.constant dense<0.000000e+00> : vector<192x256xf32>
    %26 = tpu.matmul %24, %25, %cst_7 {dimension_numbers = #tpu.dot_dimension_numbers<[1], [0], [0], [1], [0, 0, 1, 1], [], []>} : vector<192x128xbf16>, vector<128x256xbf16>, vector<192x256xf32> -> vector<192x256xf32>
    %c0_8 = arith.constant 0 : index
    %c0_9 = arith.constant 0 : index
    %27 = vector.load %arg4[%c0_8, %c0_9] : memref<1x256xf32, #tpu.memory_space<vmem>>, vector<1x256xf32>
    %28 = vector.broadcast %27 : vector<1x256xf32> to vector<192x256xf32>
    %29 = arith.addf %26, %28 : vector<192x256xf32>
    %cst_10 = arith.constant 0.000000e+00 : f32
    %30 = vector.broadcast %cst_10 : f32 to vector<192x256xf32>
    %31 = arith.subf %30, %29 : vector<192x256xf32>
    %32 = math.exp %31 : vector<192x256xf32>
    %cst_11 = arith.constant 1.000000e+00 : f32
    %33 = vector.broadcast %cst_11 : f32 to vector<192x256xf32>
    %34 = arith.addf %33, %32 : vector<192x256xf32>
    %35 = tpu.reciprocal %34 {approx = true} : vector<192x256xf32> -> vector<192x256xf32>
    %36 = arith.mulf %29, %35 : vector<192x256xf32>
    %37 = vector.extract_strided_slice %36 {offsets = [0, 0], sizes = [192, 128], strides = [1, 1]} : vector<192x256xf32> to vector<192x128xf32>
    %38 = vector.extract_strided_slice %36 {offsets = [0, 128], sizes = [192, 128], strides = [1, 1]} : vector<192x256xf32> to vector<192x128xf32>
    %39 = vector.extract_strided_slice %37 {offsets = [32, 0], sizes = [128, 128], strides = [1, 1]} : vector<192x128xf32> to vector<128x128xf32>
    %40 = arith.truncf %39 : vector<128x128xf32> to vector<128x128xbf16>
    %c0_12 = arith.constant 0 : index
    %c0_13 = arith.constant 0 : index
    %41 = vector.load %arg11[%c0_12, %c0_13] : memref<128x384xbf16, #tpu.memory_space<vmem>>, vector<128x128xbf16>
    tpu.vector_store %arg11[%c0_12, %c0_13], %40 {strides = array<i32>} : memref<128x384xbf16, #tpu.memory_space<vmem>>, vector<128x128xbf16>,
    %42 = vector.extract_strided_slice %38 {offsets = [32, 0], sizes = [128, 128], strides = [1, 1]} : vector<192x128xf32> to vector<128x128xf32>
    %43 = arith.truncf %42 : vector<128x128xf32> to vector<128x128xbf16>
    %c0_14 = arith.constant 0 : index
    %c128 = arith.constant 128 : index
    %44 = vector.load %arg11[%c0_14, %c128] : memref<128x384xbf16, #tpu.memory_space<vmem>>, vector<128x128xbf16>
    tpu.vector_store %arg11[%c0_14, %c128], %43 {strides = array<i32>} : memref<128x384xbf16, #tpu.memory_space<vmem>>, vector<128x128xbf16>,
    %cst_15 = arith.constant 0.000000e+00 : f32
    %45 = vector.broadcast %cst_15 : f32 to vector<192x128xf32>
    %46 = arith.select %10, %38, %45 : vector<192x128xi1>, vector<192x128xf32>
    %cst_16 = arith.constant 0.000000e+00 : f32
    %47 = vector.broadcast %cst_16 : f32 to vector<8x128xf32>
    %48 = tpu.concatenate %47, %46, %47 in 0 : vector<8x128xf32>, vector<192x128xf32>, vector<8x128xf32> -> vector<208x128xf32>
    %49 = vector.extract_strided_slice %48 {offsets = [7, 0], sizes = [192, 128], strides = [1, 1]} : vector<208x128xf32> to vector<192x128xf32>
    %cst_17 = arith.constant 0.000000e+00 : f32
    %50 = vector.broadcast %cst_17 : f32 to vector<192x128xf32>
    %51 = arith.select %13, %49, %50 : vector<192x128xi1>, vector<192x128xf32>
    %52 = vector.extract_strided_slice %48 {offsets = [9, 0], sizes = [192, 128], strides = [1, 1]} : vector<208x128xf32> to vector<192x128xf32>
    %cst_18 = arith.constant 0.000000e+00 : f32
    %53 = vector.broadcast %cst_18 : f32 to vector<192x128xf32>
    %54 = arith.select %16, %52, %53 : vector<192x128xi1>, vector<192x128xf32>
    %55 = arith.truncf %51 : vector<192x128xf32> to vector<192x128xbf16>
    %c16 = arith.constant 16 : index
    %c0_19 = arith.constant 0 : index
    %56 = vector.load %arg10[%c16, %c0_19] : memref<224x384xbf16, #tpu.memory_space<vmem>>, vector<192x128xbf16>
    tpu.vector_store %arg10[%c16, %c0_19], %55 {strides = array<i32>} : memref<224x384xbf16, #tpu.memory_space<vmem>>, vector<192x128xbf16>,
    %57 = arith.truncf %46 : vector<192x128xf32> to vector<192x128xbf16>
    %c16_20 = arith.constant 16 : index
    %c128_21 = arith.constant 128 : index
    %58 = vector.load %arg10[%c16_20, %c128_21] : memref<224x384xbf16, #tpu.memory_space<vmem>>, vector<192x128xbf16>
    tpu.vector_store %arg10[%c16_20, %c128_21], %57 {strides = array<i32>} : memref<224x384xbf16, #tpu.memory_space<vmem>>, vector<192x128xbf16>,
    %59 = arith.truncf %54 : vector<192x128xf32> to vector<192x128xbf16>
    %c16_22 = arith.constant 16 : index
    %c256 = arith.constant 256 : index
    %60 = vector.load %arg10[%c16_22, %c256] : memref<224x384xbf16, #tpu.memory_space<vmem>>, vector<192x128xbf16>
    tpu.vector_store %arg10[%c16_22, %c256], %59 {strides = array<i32>} : memref<224x384xbf16, #tpu.memory_space<vmem>>, vector<192x128xbf16>,
    %c0_23 = arith.constant 0 : index
    %c0_24 = arith.constant 0 : index
    %61 = vector.load %arg10[%c0_23, %c0_24] : memref<224x384xbf16, #tpu.memory_space<vmem>>, vector<192x384xbf16>
    %c0_25 = arith.constant 0 : index
    %c0_26 = arith.constant 0 : index
    %c0_27 = arith.constant 0 : index
    %62 = vector.load %arg5[%c0_25, %c0_26, %c0_27] : memref<6x384x128xbf16, #tpu.memory_space<vmem>>, vector<1x384x128xbf16>
    %63 = vector.shape_cast %62 : vector<1x384x128xbf16> to vector<384x128xbf16>
    %cst_28 = arith.constant dense<0.000000e+00> : vector<192x128xf32>
    %64 = tpu.matmul %61, %63, %cst_28 {dimension_numbers = #tpu.dot_dimension_numbers<[1], [0], [0], [1], [0, 0, 1, 1], [], []>} : vector<192x384xbf16>, vector<384x128xbf16>, vector<192x128xf32> -> vector<192x128xf32>
    %c16_29 = arith.constant 16 : index
    %c0_30 = arith.constant 0 : index
    %65 = vector.load %arg10[%c16_29, %c0_30] : memref<224x384xbf16, #tpu.memory_space<vmem>>, vector<192x384xbf16>
    %c1 = arith.constant 1 : index
    %c0_31 = arith.constant 0 : index
    %c0_32 = arith.constant 0 : index
    %66 = vector.load %arg5[%c1, %c0_31, %c0_32] : memref<6x384x128xbf16, #tpu.memory_space<vmem>>, vector<1x384x128xbf16>
    %67 = vector.shape_cast %66 : vector<1x384x128xbf16> to vector<384x128xbf16>
    %cst_33 = arith.constant dense<0.000000e+00> : vector<192x128xf32>
    %68 = tpu.matmul %65, %67, %cst_33 {dimension_numbers = #tpu.dot_dimension_numbers<[1], [0], [0], [1], [0, 0, 1, 1], [], []>} : vector<192x384xbf16>, vector<384x128xbf16>, vector<192x128xf32> -> vector<192x128xf32>
    %69 = arith.addf %64, %68 : vector<192x128xf32>
    %c32 = arith.constant 32 : index
    %c0_34 = arith.constant 0 : index
    %70 = vector.load %arg10[%c32, %c0_34] : memref<224x384xbf16, #tpu.memory_space<vmem>>, vector<192x384xbf16>
    %c2 = arith.constant 2 : index
    %c0_35 = arith.constant 0 : index
    %c0_36 = arith.constant 0 : index
    %71 = vector.load %arg5[%c2, %c0_35, %c0_36] : memref<6x384x128xbf16, #tpu.memory_space<vmem>>, vector<1x384x128xbf16>
    %72 = vector.shape_cast %71 : vector<1x384x128xbf16> to vector<384x128xbf16>
    %cst_37 = arith.constant dense<0.000000e+00> : vector<192x128xf32>
    %73 = tpu.matmul %70, %72, %cst_37 {dimension_numbers = #tpu.dot_dimension_numbers<[1], [0], [0], [1], [0, 0, 1, 1], [], []>} : vector<192x384xbf16>, vector<384x128xbf16>, vector<192x128xf32> -> vector<192x128xf32>
    %74 = arith.addf %69, %73 : vector<192x128xf32>
    %c0_38 = arith.constant 0 : index
    %c0_39 = arith.constant 0 : index
    %c0_40 = arith.constant 0 : index
    %75 = vector.load %arg6[%c0_38, %c0_39, %c0_40] : memref<2x1x128xf32, #tpu.memory_space<vmem>>, vector<1x1x128xf32>
    %76 = vector.shape_cast %75 : vector<1x1x128xf32> to vector<1x128xf32>
    %77 = vector.broadcast %76 : vector<1x128xf32> to vector<192x128xf32>
    %78 = arith.addf %74, %77 : vector<192x128xf32>
    %cst_41 = arith.constant 0.000000e+00 : f32
    %79 = vector.broadcast %cst_41 : f32 to vector<192x128xf32>
    %80 = arith.subf %79, %78 : vector<192x128xf32>
    %81 = math.exp %80 : vector<192x128xf32>
    %cst_42 = arith.constant 1.000000e+00 : f32
    %82 = vector.broadcast %cst_42 : f32 to vector<192x128xf32>
    %83 = arith.addf %82, %81 : vector<192x128xf32>
    %84 = tpu.reciprocal %83 {approx = true} : vector<192x128xf32> -> vector<192x128xf32>
    %85 = arith.mulf %78, %84 : vector<192x128xf32>
    %cst_43 = arith.constant 0.000000e+00 : f32
    %86 = vector.broadcast %cst_43 : f32 to vector<192x128xf32>
    %87 = arith.select %10, %85, %86 : vector<192x128xi1>, vector<192x128xf32>
    %cst_44 = arith.constant 0.000000e+00 : f32
    %88 = vector.broadcast %cst_44 : f32 to vector<8x128xf32>
    %89 = tpu.concatenate %88, %87, %88 in 0 : vector<8x128xf32>, vector<192x128xf32>, vector<8x128xf32> -> vector<208x128xf32>
    %90 = vector.extract_strided_slice %89 {offsets = [7, 0], sizes = [192, 128], strides = [1, 1]} : vector<208x128xf32> to vector<192x128xf32>
    %cst_45 = arith.constant 0.000000e+00 : f32
    %91 = vector.broadcast %cst_45 : f32 to vector<192x128xf32>
    %92 = arith.select %13, %90, %91 : vector<192x128xi1>, vector<192x128xf32>
    %93 = vector.extract_strided_slice %89 {offsets = [9, 0], sizes = [192, 128], strides = [1, 1]} : vector<208x128xf32> to vector<192x128xf32>
    %cst_46 = arith.constant 0.000000e+00 : f32
    %94 = vector.broadcast %cst_46 : f32 to vector<192x128xf32>
    %95 = arith.select %16, %93, %94 : vector<192x128xi1>, vector<192x128xf32>
    %96 = arith.truncf %92 : vector<192x128xf32> to vector<192x128xbf16>
    %c16_47 = arith.constant 16 : index
    %c0_48 = arith.constant 0 : index
    %97 = vector.load %arg10[%c16_47, %c0_48] : memref<224x384xbf16, #tpu.memory_space<vmem>>, vector<192x128xbf16>
    tpu.vector_store %arg10[%c16_47, %c0_48], %96 {strides = array<i32>} : memref<224x384xbf16, #tpu.memory_space<vmem>>, vector<192x128xbf16>,
    %98 = arith.truncf %87 : vector<192x128xf32> to vector<192x128xbf16>
    %c16_49 = arith.constant 16 : index
    %c128_50 = arith.constant 128 : index
    %99 = vector.load %arg10[%c16_49, %c128_50] : memref<224x384xbf16, #tpu.memory_space<vmem>>, vector<192x128xbf16>
    tpu.vector_store %arg10[%c16_49, %c128_50], %98 {strides = array<i32>} : memref<224x384xbf16, #tpu.memory_space<vmem>>, vector<192x128xbf16>,
    %100 = arith.truncf %95 : vector<192x128xf32> to vector<192x128xbf16>
    %c16_51 = arith.constant 16 : index
    %c256_52 = arith.constant 256 : index
    %101 = vector.load %arg10[%c16_51, %c256_52] : memref<224x384xbf16, #tpu.memory_space<vmem>>, vector<192x128xbf16>
    tpu.vector_store %arg10[%c16_51, %c256_52], %100 {strides = array<i32>} : memref<224x384xbf16, #tpu.memory_space<vmem>>, vector<192x128xbf16>,
    %c0_53 = arith.constant 0 : index
    %c0_54 = arith.constant 0 : index
    %102 = vector.load %arg10[%c0_53, %c0_54] : memref<224x384xbf16, #tpu.memory_space<vmem>>, vector<192x384xbf16>
    %c3 = arith.constant 3 : index
    %c0_55 = arith.constant 0 : index
    %c0_56 = arith.constant 0 : index
    %103 = vector.load %arg5[%c3, %c0_55, %c0_56] : memref<6x384x128xbf16, #tpu.memory_space<vmem>>, vector<1x384x128xbf16>
    %104 = vector.shape_cast %103 : vector<1x384x128xbf16> to vector<384x128xbf16>
    %cst_57 = arith.constant dense<0.000000e+00> : vector<192x128xf32>
    %105 = tpu.matmul %102, %104, %cst_57 {dimension_numbers = #tpu.dot_dimension_numbers<[1], [0], [0], [1], [0, 0, 1, 1], [], []>} : vector<192x384xbf16>, vector<384x128xbf16>, vector<192x128xf32> -> vector<192x128xf32>
    %c16_58 = arith.constant 16 : index
    %c0_59 = arith.constant 0 : index
    %106 = vector.load %arg10[%c16_58, %c0_59] : memref<224x384xbf16, #tpu.memory_space<vmem>>, vector<192x384xbf16>
    %c4 = arith.constant 4 : index
    %c0_60 = arith.constant 0 : index
    %c0_61 = arith.constant 0 : index
    %107 = vector.load %arg5[%c4, %c0_60, %c0_61] : memref<6x384x128xbf16, #tpu.memory_space<vmem>>, vector<1x384x128xbf16>
    %108 = vector.shape_cast %107 : vector<1x384x128xbf16> to vector<384x128xbf16>
    %cst_62 = arith.constant dense<0.000000e+00> : vector<192x128xf32>
    %109 = tpu.matmul %106, %108, %cst_62 {dimension_numbers = #tpu.dot_dimension_numbers<[1], [0], [0], [1], [0, 0, 1, 1], [], []>} : vector<192x384xbf16>, vector<384x128xbf16>, vector<192x128xf32> -> vector<192x128xf32>
    %110 = arith.addf %105, %109 : vector<192x128xf32>
    %c32_63 = arith.constant 32 : index
    %c0_64 = arith.constant 0 : index
    %111 = vector.load %arg10[%c32_63, %c0_64] : memref<224x384xbf16, #tpu.memory_space<vmem>>, vector<192x384xbf16>
    %c5 = arith.constant 5 : index
    %c0_65 = arith.constant 0 : index
    %c0_66 = arith.constant 0 : index
    %112 = vector.load %arg5[%c5, %c0_65, %c0_66] : memref<6x384x128xbf16, #tpu.memory_space<vmem>>, vector<1x384x128xbf16>
    %113 = vector.shape_cast %112 : vector<1x384x128xbf16> to vector<384x128xbf16>
    %cst_67 = arith.constant dense<0.000000e+00> : vector<192x128xf32>
    %114 = tpu.matmul %111, %113, %cst_67 {dimension_numbers = #tpu.dot_dimension_numbers<[1], [0], [0], [1], [0, 0, 1, 1], [], []>} : vector<192x384xbf16>, vector<384x128xbf16>, vector<192x128xf32> -> vector<192x128xf32>
    %115 = arith.addf %110, %114 : vector<192x128xf32>
    %c1_68 = arith.constant 1 : index
    %c0_69 = arith.constant 0 : index
    %c0_70 = arith.constant 0 : index
    %116 = vector.load %arg6[%c1_68, %c0_69, %c0_70] : memref<2x1x128xf32, #tpu.memory_space<vmem>>, vector<1x1x128xf32>
    %117 = vector.shape_cast %116 : vector<1x1x128xf32> to vector<1x128xf32>
    %118 = vector.broadcast %117 : vector<1x128xf32> to vector<192x128xf32>
    %119 = arith.addf %115, %118 : vector<192x128xf32>
    %cst_71 = arith.constant 0.000000e+00 : f32
    %120 = vector.broadcast %cst_71 : f32 to vector<192x128xf32>
    %121 = arith.subf %120, %119 : vector<192x128xf32>
    %122 = math.exp %121 : vector<192x128xf32>
    %cst_72 = arith.constant 1.000000e+00 : f32
    %123 = vector.broadcast %cst_72 : f32 to vector<192x128xf32>
    %124 = arith.addf %123, %122 : vector<192x128xf32>
    %125 = tpu.reciprocal %124 {approx = true} : vector<192x128xf32> -> vector<192x128xf32>
    %126 = arith.mulf %119, %125 : vector<192x128xf32>
    %127 = vector.extract_strided_slice %126 {offsets = [32, 0], sizes = [128, 128], strides = [1, 1]} : vector<192x128xf32> to vector<128x128xf32>
    %128 = arith.truncf %127 : vector<128x128xf32> to vector<128x128xbf16>
    %c0_73 = arith.constant 0 : index
    %c256_74 = arith.constant 256 : index
    %129 = vector.load %arg11[%c0_73, %c256_74] : memref<128x384xbf16, #tpu.memory_space<vmem>>, vector<128x128xbf16>
    tpu.vector_store %arg11[%c0_73, %c256_74], %128 {strides = array<i32>} : memref<128x384xbf16, #tpu.memory_space<vmem>>, vector<128x128xbf16>,
    %c0_75 = arith.constant 0 : index
    %c0_76 = arith.constant 0 : index
    %130 = vector.load %arg11[%c0_75, %c0_76] : memref<128x384xbf16, #tpu.memory_space<vmem>>, vector<128x384xbf16>
    %c0_77 = arith.constant 0 : index
    %c0_78 = arith.constant 0 : index
    %131 = vector.load %arg7[%c0_77, %c0_78] : memref<384x128xbf16, #tpu.memory_space<vmem>>, vector<384x128xbf16>
    %cst_79 = arith.constant dense<0.000000e+00> : vector<128x128xf32>
    %132 = tpu.matmul %130, %131, %cst_79 {dimension_numbers = #tpu.dot_dimension_numbers<[1], [0], [0], [1], [0, 0, 1, 1], [], []>} : vector<128x384xbf16>, vector<384x128xbf16>, vector<128x128xf32> -> vector<128x128xf32>
    %c0_80 = arith.constant 0 : index
    %c0_81 = arith.constant 0 : index
    %133 = vector.load %arg8[%c0_80, %c0_81] : memref<1x128xf32, #tpu.memory_space<vmem>>, vector<1x128xf32>
    %134 = vector.broadcast %133 : vector<1x128xf32> to vector<128x128xf32>
    %135 = arith.addf %132, %134 : vector<128x128xf32>
    %cst_82 = arith.constant 0.000000e+00 : f32
    %136 = vector.broadcast %cst_82 : f32 to vector<128x128xf32>
    %137 = arith.subf %136, %135 : vector<128x128xf32>
    %138 = math.exp %137 : vector<128x128xf32>
    %cst_83 = arith.constant 1.000000e+00 : f32
    %139 = vector.broadcast %cst_83 : f32 to vector<128x128xf32>
    %140 = arith.addf %139, %138 : vector<128x128xf32>
    %141 = tpu.reciprocal %140 {approx = true} : vector<128x128xf32> -> vector<128x128xf32>
    %142 = arith.mulf %135, %141 : vector<128x128xf32>
    %143 = arith.truncf %142 : vector<128x128xf32> to vector<128x128xbf16>
    %c0_84 = arith.constant 0 : index
    %c0_85 = arith.constant 0 : index
    %c0_86 = arith.constant 0 : index
    %144 = vector.load %arg9[%c0_84, %c0_85, %c0_86] : memref<1x128x128xbf16, #tpu.memory_space<vmem>>, vector<1x128x128xbf16>
    %145 = vector.shape_cast %144 : vector<1x128x128xbf16> to vector<128x128xbf16>
    %146 = vector.shape_cast %143 : vector<128x128xbf16> to vector<1x128x128xbf16>
    tpu.vector_store %arg9[%c0_84, %c0_85, %c0_86], %146 {strides = array<i32>} : memref<1x128x128xbf16, #tpu.memory_space<vmem>>, vector<1x128x128xbf16>,
    return
  }
  func.func @transform_0(%arg0: i32, %arg1: i32) -> (i32, i32, i32) {
    %c0_i32 = arith.constant 0 : i32
    %c0_i32_0 = arith.constant 0 : i32
    %c0_i32_1 = arith.constant 0 : i32
    return %arg0, %c0_i32, %c0_i32_0 : i32, i32, i32
  }
  func.func @transform_1(%arg0: i32, %arg1: i32) -> (i32, i32) {
    %c0_i32 = arith.constant 0 : i32
    %c0_i32_0 = arith.constant 0 : i32
    %c0_i32_1 = arith.constant 0 : i32
    return %c0_i32, %c0_i32_0 : i32, i32
  }
  func.func @transform_2(%arg0: i32, %arg1: i32) -> (i32, i32) {
    %c0_i32 = arith.constant 0 : i32
    %c0_i32_0 = arith.constant 0 : i32
    %c0_i32_1 = arith.constant 0 : i32
    return %c0_i32, %c0_i32_0 : i32, i32
  }
  func.func @transform_3(%arg0: i32, %arg1: i32) -> (i32, i32, i32) {
    %c0_i32 = arith.constant 0 : i32
    %c0_i32_0 = arith.constant 0 : i32
    %c0_i32_1 = arith.constant 0 : i32
    %c0_i32_2 = arith.constant 0 : i32
    return %c0_i32, %c0_i32_0, %c0_i32_1 : i32, i32, i32
  }
  func.func @transform_4(%arg0: i32, %arg1: i32) -> (i32, i32, i32) {
    %c0_i32 = arith.constant 0 : i32
    %c0_i32_0 = arith.constant 0 : i32
    %c0_i32_1 = arith.constant 0 : i32
    %c0_i32_2 = arith.constant 0 : i32
    return %c0_i32, %c0_i32_0, %c0_i32_1 : i32, i32, i32
  }
  func.func @transform_5(%arg0: i32, %arg1: i32) -> (i32, i32) {
    %c0_i32 = arith.constant 0 : i32
    %c0_i32_0 = arith.constant 0 : i32
    %c0_i32_1 = arith.constant 0 : i32
    return %c0_i32, %c0_i32_0 : i32, i32
  }
  func.func @transform_6(%arg0: i32, %arg1: i32) -> (i32, i32) {
    %c0_i32 = arith.constant 0 : i32
    %c0_i32_0 = arith.constant 0 : i32
    %c0_i32_1 = arith.constant 0 : i32
    return %c0_i32, %c0_i32_0 : i32, i32
  }
  func.func @transform_7(%arg0: i32, %arg1: i32) -> (i32, i32, i32) {
    %c0_i32 = arith.constant 0 : i32
    %c0_i32_0 = arith.constant 0 : i32
    return %arg0, %arg1, %c0_i32 : i32, i32, i32
  }
}

</mosaic_0001>

<llo_original>
// kernel: c2f_forward.1
$region0: #{c2f_forward.1}
  #allocation0 [shape = 'u32[]', space=smem, size = 0x4, offset = 0x4, fixed_abs, tag = 'smem constant byte address 0x4 - core index']
  #allocation1 [shape = 'u32[144,128]{1,0:T(1,128)}', space=vmem, size = 0x12000, scoped, tag = 'internal scratch']
  #allocation2 [shape = 'bf16[224,384]{1,0:T(8,128)(2,1)}', space=vmem, size = 0x2a000, scoped, tag = 'scratch operand']
  #allocation3 [shape = 'bf16[128,384]{1,0:T(8,128)(2,1)}', space=vmem, size = 0x18000, scoped, tag = 'scratch operand']
  %s0 = inlined_call_operand.vmem [shape: bf16[2,320,128], index: 0, kind: input, shape index: {}]
  %s1 = inlined_call_operand.vmem [shape: bf16[128,256], index: 1, kind: input, shape index: {}]
  %s2 = inlined_call_operand.vmem [shape: f32[1,256], index: 2, kind: input, shape index: {}]
  %s3 = inlined_call_operand.hbm [shape: bf16[6,384,128], index: 3, kind: input, shape index: {}]
  %s4 = inlined_call_operand.vmem [shape: f32[2,1,128], index: 4, kind: input, shape index: {}]
  %s5 = inlined_call_operand.vmem [shape: bf16[384,128], index: 5, kind: input, shape index: {}]
  %s6 = inlined_call_operand.vmem [shape: f32[1,128], index: 6, kind: input, shape index: {}]
  %s7 = inlined_call_operand.vmem [shape: bf16[2,256,128], index: 7, kind: output, shape index: {}]
  %s8 = sld [smem:[#allocation0]]
  $region65: #{c2f_forward.1} parent=0
    _
  %s10 = ssub.s32 1, %s8
  %s11 = scalar_select 0, %s10, %s8
  $region1: #{c2f_forward.1} parent=0
    #allocation4 [shape = 'u8[589824]{0}', space=vmem, size = 0x90000, scoped, tag = 'input window, operand 3, single buffered']
    #allocation5 [shape = 's32[2]{0}', space=sflag, size = 0x8, scoped, tag = 'scoped memory for c2f_forward.1']
    %12 = vsyncpa [#allocation5], 0
    loop: start=0, step=1, limit=6
    $region2: #{c2f_forward.1} parent=1 // loop_pre_header
      _
    $region3: #{c2f_forward.1} parent=1 // loop_header
      %s14 = sphi 0, %s18
      %p15 = scmp.ge.s32.totalorder %s14, 6
      %s21 = sphi 0, %s33
      %s22 = sphi 0, %s29
      %s23 = sphi 0, %s21
      %s24 = sphi 0, %s22
      %s25 = sphi 0, %s23
      %s26 = sphi 0, %s24
      %s36 = sphi 0, %s38
      %s39 = sphi 0, %s36
      %s40 = sphi 0, %s39
      %s56 = sphi 0, %s40
      %s60 = sphi 0, %s60
      %s62 = sphi 0, %s60
      %s63 = sphi 0, %s62
      %s77 = sphi 0, %s63
      %s81 = sphi 0, %s81
      %s83 = sphi 0, %s81
      %s84 = sphi 0, %s83
      %s98 = sphi 0, %s84
      %s102 = sphi 0, %s102
      %s104 = sphi 0, %s102
      %s105 = sphi 0, %s104
      %s119 = sphi 0, %s105
      %s123 = sphi 0, %s123
      %s125 = sphi 0, %s123
      %s126 = sphi 0, %s125
      %s140 = sphi 0, %s126
      %s144 = sphi 0, %s144
      %s146 = sphi 0, %s144
      %s147 = sphi 0, %s146
      %s161 = sphi 0, %s147
      %s165 = sphi 0, %s165
      %s167 = sphi 0, %s165
      %s168 = sphi 0, %s167
      %s182 = sphi 0, %s168
      %s190 = sphi 0, %s192
      %s193 = sphi 0, %s190
      %s194 = sphi 0, %s193
      %s210 = sphi 0, %s194
    $region4: #{c2f_forward.1} parent=1 // loop_header_branch
      %17 = sbr.rel (%p15) target = $region8
    $region5: #{c2f_forward.1} parent=1 // loop_body
      %s19 = ssub.s32 %s14, 1
      %s20 = ssub.s32 %s14, 2
      %s27 = sadd.s32 1, %s22
      %p28 = scmp.ge.s32.totalorder %s27, 2
      %s29 = scalar_select %p28, 0, %s27
      %s30 = sadd.s32 1, %s21
      %s31 = scalar_select %p28, %s30, %s21
      %p32 = scmp.ge.s32.totalorder %s31, 2
      %s33 = scalar_select %p32, 0, %s31
      %s34 = ssub.s32 %s21, %s33
      %p35 = scmp.eq.s32.totalorder %s34, 0
      %s37 = sadd.s32 %s36, 1
      %s38 = scalar_select %p35, %s36, %s37
      %p41 = pneg %p35
      %p42 = scmp.eq.s32.totalorder %s14, 3
      %p43 = por %p41, %p42
      %p44 = scmp.ne.s32.totalorder %s36, %s39
      %p45 = scmp.eq.s32.totalorder %s14, 0
      %p46 = por %p44, %p45
      %p47 = scmp.ne.s32.totalorder %s36, %s39
      %p48 = scmp.eq.s32.totalorder %s19, 3
      %p49 = por %p47, %p48
      %p50 = scmp.ne.s32.totalorder %s39, %s40
      %p51 = scmp.eq.s32.totalorder %s19, 0
      %p52 = por %p50, %p51
      %p53 = scmp.ne.s32.totalorder %s39, %s40
      %p54 = scmp.eq.s32.totalorder %s20, 3
      %p55 = por %p53, %p54
      %p57 = scmp.ne.s32.totalorder %s40, %s56
      %p58 = scmp.eq.s32.totalorder %s20, 0
      %p59 = por %p57, %p58
      %s61 = sadd.s32 %s60, 1
      %p64 = scmp.eq.s32.totalorder %s14, 3
      %p65 = scmp.ne.s32.totalorder %s60, %s62
      %p66 = scmp.eq.s32.totalorder %s14, 0
      %p67 = por %p65, %p66
      %p68 = scmp.ne.s32.totalorder %s60, %s62
      %p69 = scmp.eq.s32.totalorder %s19, 3
      %p70 = por %p68, %p69
      %p71 = scmp.ne.s32.totalorder %s62, %s63
      %p72 = scmp.eq.s32.totalorder %s19, 0
      %p73 = por %p71, %p72
      %p74 = scmp.ne.s32.totalorder %s62, %s63
      %p75 = scmp.eq.s32.totalorder %s20, 3
      %p76 = por %p74, %p75
      %p78 = scmp.ne.s32.totalorder %s63, %s77
      %p79 = scmp.eq.s32.totalorder %s20, 0
      %p80 = por %p78, %p79
      %s82 = sadd.s32 %s81, 1
      %p85 = scmp.eq.s32.totalorder %s14, 3
      %p86 = scmp.ne.s32.totalorder %s81, %s83
      %p87 = scmp.eq.s32.totalorder %s14, 0
      %p88 = por %p86, %p87
      %p89 = scmp.ne.s32.totalorder %s81, %s83
      %p90 = scmp.eq.s32.totalorder %s19, 3
      %p91 = por %p89, %p90
      %p92 = scmp.ne.s32.totalorder %s83, %s84
      %p93 = scmp.eq.s32.totalorder %s19, 0
      %p94 = por %p92, %p93
      %p95 = scmp.ne.s32.totalorder %s83, %s84
      %p96 = scmp.eq.s32.totalorder %s20, 3
      %p97 = por %p95, %p96
      %p99 = scmp.ne.s32.totalorder %s84, %s98
      %p100 = scmp.eq.s32.totalorder %s20, 0
      %p101 = por %p99, %p100
      %s103 = sadd.s32 %s102, 1
      %p106 = scmp.eq.s32.totalorder %s14, 3
      %p107 = scmp.ne.s32.totalorder %s102, %s104
      %p108 = scmp.eq.s32.totalorder %s14, 0
      %p109 = por %p107, %p108
      %p110 = scmp.ne.s32.totalorder %s102, %s104
      %p111 = scmp.eq.s32.totalorder %s19, 3
      %p112 = por %p110, %p111
      %p113 = scmp.ne.s32.totalorder %s104, %s105
      %p114 = scmp.eq.s32.totalorder %s19, 0
      %p115 = por %p113, %p114
      %p116 = scmp.ne.s32.totalorder %s104, %s105
      %p117 = scmp.eq.s32.totalorder %s20, 3
      %p118 = por %p116, %p117
      %p120 = scmp.ne.s32.totalorder %s105, %s119
      %p121 = scmp.eq.s32.totalorder %s20, 0
      %p122 = por %p120, %p121
      %s124 = sadd.s32 %s123, 1
      %p127 = scmp.eq.s32.totalorder %s14, 3
      %p128 = scmp.ne.s32.totalorder %s123, %s125
      %p129 = scmp.eq.s32.totalorder %s14, 0
      %p130 = por %p128, %p129
      %p131 = scmp.ne.s32.totalorder %s123, %s125
      %p132 = scmp.eq.s32.totalorder %s19, 3
      %p133 = por %p131, %p132
      %p134 = scmp.ne.s32.totalorder %s125, %s126
      %p135 = scmp.eq.s32.totalorder %s19, 0
      %p136 = por %p134, %p135
      %p137 = scmp.ne.s32.totalorder %s125, %s126
      %p138 = scmp.eq.s32.totalorder %s20, 3
      %p139 = por %p137, %p138
      %p141 = scmp.ne.s32.totalorder %s126, %s140
      %p142 = scmp.eq.s32.totalorder %s20, 0
      %p143 = por %p141, %p142
      %s145 = sadd.s32 %s144, 1
      %p148 = scmp.eq.s32.totalorder %s14, 3
      %p149 = scmp.ne.s32.totalorder %s144, %s146
      %p150 = scmp.eq.s32.totalorder %s14, 0
      %p151 = por %p149, %p150
      %p152 = scmp.ne.s32.totalorder %s144, %s146
      %p153 = scmp.eq.s32.totalorder %s19, 3
      %p154 = por %p152, %p153
      %p155 = scmp.ne.s32.totalorder %s146, %s147
      %p156 = scmp.eq.s32.totalorder %s19, 0
      %p157 = por %p155, %p156
      %p158 = scmp.ne.s32.totalorder %s146, %s147
      %p159 = scmp.eq.s32.totalorder %s20, 3
      %p160 = por %p158, %p159
      %p162 = scmp.ne.s32.totalorder %s147, %s161
      %p163 = scmp.eq.s32.totalorder %s20, 0
      %p164 = por %p162, %p163
      %s166 = sadd.s32 %s165, 1
      %p169 = scmp.eq.s32.totalorder %s14, 3
      %p170 = scmp.ne.s32.totalorder %s165, %s167
      %p171 = scmp.eq.s32.totalorder %s14, 0
      %p172 = por %p170, %p171
      %p173 = scmp.ne.s32.totalorder %s165, %s167
      %p174 = scmp.eq.s32.totalorder %s19, 3
      %p175 = por %p173, %p174
      %p176 = scmp.ne.s32.totalorder %s167, %s168
      %p177 = scmp.eq.s32.totalorder %s19, 0
      %p178 = por %p176, %p177
      %p179 = scmp.ne.s32.totalorder %s167, %s168
      %p180 = scmp.eq.s32.totalorder %s20, 3
      %p181 = por %p179, %p180
      %p183 = scmp.ne.s32.totalorder %s168, %s182
      %p184 = scmp.eq.s32.totalorder %s20, 0
      %p185 = por %p183, %p184
      %s186 = ssub.s32 %s21, %s33
      %s187 = ssub.s32 %s22, %s29
      %s188 = sor.u32 %s186, %s187
      %p189 = scmp.eq.s32.totalorder %s188, 0
      %s191 = sadd.s32 %s190, 1
      %s192 = scalar_select %p189, %s190, %s191
      %p195 = pneg %p189
      %p196 = scmp.eq.s32.totalorder %s14, 3
      %p197 = por %p195, %p196
      %p198 = scmp.ne.s32.totalorder %s190, %s193
      %p199 = scmp.eq.s32.totalorder %s14, 0
      %p200 = por %p198, %p199
      %p201 = scmp.ne.s32.totalorder %s190, %s193
      %p202 = scmp.eq.s32.totalorder %s19, 3
      %p203 = por %p201, %p202
      %p204 = scmp.ne.s32.totalorder %s193, %s194
      %p205 = scmp.eq.s32.totalorder %s19, 0
      %p206 = por %p204, %p205
      %p207 = scmp.ne.s32.totalorder %s193, %s194
      %p208 = scmp.eq.s32.totalorder %s20, 3
      %p209 = por %p207, %p208
      %p211 = scmp.ne.s32.totalorder %s194, %s210
      %p212 = scmp.eq.s32.totalorder %s20, 0
      %p213 = por %p211, %p212
      %p214 = scmp.le.s32.totalorder 1, %s14
      %p215 = scmp.lt.s32.totalorder %s14, 5
      %p216 = pnand %p214, %p215
      %p217 = pneg %p216
      // Predicated region
      $region9: #{c2f_forward.1} parent=5 // pred_check
        _
      $region10: #{c2f_forward.1} parent=5 // pred_check_branch
        %219 = sbr.rel (%p216) target = $region12
      $region11: #{c2f_forward.1} parent=5 // pred_region
        %s220 = ssub.s32 %s14, 1
        // Predicated region
        $region13: #{c2f_forward.1} parent=11 // pred_check
          %p221 = pneg %p73
        $region14: #{c2f_forward.1} parent=11 // pred_check_branch
          %223 = sbr.rel (%p221) target = $region16
        $region15: #{c2f_forward.1} parent=11 // pred_region
          _
        $region16: #{c2f_forward.1} parent=11 // pred_fallthru
          _
        // Predicated region
        $region17: #{c2f_forward.1} parent=11 // pred_check
          %p224 = pneg %p94
        $region18: #{c2f_forward.1} parent=11 // pred_check_branch
          %226 = sbr.rel (%p224) target = $region20
        $region19: #{c2f_forward.1} parent=11 // pred_region
          _
        $region20: #{c2f_forward.1} parent=11 // pred_fallthru
          _
        // Predicated region
        $region21: #{c2f_forward.1} parent=11 // pred_check
          %p227 = pneg %p115
        $region22: #{c2f_forward.1} parent=11 // pred_check_branch
          %229 = sbr.rel (%p227) target = $region24
        $region23: #{c2f_forward.1} parent=11 // pred_region
          %s231 = ssub.s32 18432, 18432
          %232 = vsyncadd [#allocation5], %s231
          %s233 = sshll.u32 [#allocation4], 4
          %s234 = int_to_ptr.vmem [resolvable:$true] %s233
          %239 = dma.hbm_to_vmem [thread:$0]  %s3, 18432, %s234, [#allocation5], 64, 64, 4
        $region24: #{c2f_forward.1} parent=11 // pred_fallthru
          _
        // Predicated region
        $region25: #{c2f_forward.1} parent=11 // pred_check
          %p240 = pneg %p136
        $region26: #{c2f_forward.1} parent=11 // pred_check_branch
          %242 = sbr.rel (%p240) target = $region28
        $region27: #{c2f_forward.1} parent=11 // pred_region
          _
        $region28: #{c2f_forward.1} parent=11 // pred_fallthru
          _
        // Predicated region
        $region29: #{c2f_forward.1} parent=11 // pred_check
          %p243 = pneg %p157
        $region30: #{c2f_forward.1} parent=11 // pred_check_branch
          %245 = sbr.rel (%p243) target = $region32
        $region31: #{c2f_forward.1} parent=11 // pred_region
          _
        $region32: #{c2f_forward.1} parent=11 // pred_fallthru
          _
        // Predicated region
        $region33: #{c2f_forward.1} parent=11 // pred_check
          %p246 = pneg %p178
        $region34: #{c2f_forward.1} parent=11 // pred_check_branch
          %248 = sbr.rel (%p246) target = $region36
        $region35: #{c2f_forward.1} parent=11 // pred_region
          _
        $region36: #{c2f_forward.1} parent=11 // pred_fallthru
          _
      $region12: #{c2f_forward.1} parent=5 // pred_fallthru
        _
      %p249 = scmp.lt.s32.totalorder %s14, 4
      // Predicated region
      $region37: #{c2f_forward.1} parent=5 // pred_check
        %p250 = pneg %p249
      $region38: #{c2f_forward.1} parent=5 // pred_check_branch
        %252 = sbr.rel (%p250) target = $region40
      $region39: #{c2f_forward.1} parent=5 // pred_region
        // Predicated region
        $region41: #{c2f_forward.1} parent=39 // pred_check
          %p253 = pneg %p46
        $region42: #{c2f_forward.1} parent=39 // pred_check_branch
          %255 = sbr.rel (%p253) target = $region44
        $region43: #{c2f_forward.1} parent=39 // pred_region
          %p256 = scmp.lt.s32.totalorder %s21, 1
          %s257 = scalar_select %p256, %s21, 1
          %s258 = smul.addr %s257, 40
          %s259 = smul.addr %s258, 4
          %s260 = scalar_lea.vmem %s0, %s259
        $region44: #{c2f_forward.1} parent=39 // pred_fallthru
          _
      $region40: #{c2f_forward.1} parent=5 // pred_fallthru
        _
      %p261 = scmp.le.s32.totalorder 1, %s14
      %p262 = scmp.lt.s32.totalorder %s14, 5
      %p263 = pnand %p261, %p262
      %p264 = pneg %p263
      // Predicated region
      $region45: #{c2f_forward.1} parent=5 // pred_check
        _
      $region46: #{c2f_forward.1} parent=5 // pred_check_branch
        %266 = sbr.rel (%p263) target = $region48
      $region47: #{c2f_forward.1} parent=5 // pred_region
        %s267 = ssub.s32 %s14, 1
        // Predicated region
        $region49: #{c2f_forward.1} parent=47 // pred_check
          %p268 = pneg %p115
        $region50: #{c2f_forward.1} parent=47 // pred_check_branch
          %270 = sbr.rel (%p268) target = $region52
        $region51: #{c2f_forward.1} parent=47 // pred_region
          %271 = dma.done [#allocation5], 18432
        $region52: #{c2f_forward.1} parent=47 // pred_fallthru
          _
        %p272 = scmp.lt.s32.totalorder %s23, 1
        %s273 = scalar_select %p272, %s23, 1
        %s274 = smul.addr %s273, 40
        %s275 = smul.addr %s274, 4
        %s276 = scalar_lea.vmem %s0, %s275
        %p277 = pneg %p52
        %p278 = pneg %p49
        %p279 = pneg %p73
        %p280 = pneg %p70
        %p281 = pneg %p94
        %p282 = pneg %p91
        %p283 = pneg %p115
        %p284 = pneg %p112
        %p285 = pneg %p136
        %p286 = pneg %p133
        %p287 = pneg %p157
        %p288 = pneg %p154
        %p289 = pneg %p178
        %p290 = pneg %p175
        %p291 = pneg %p206
        %p292 = pneg %p203
        %s293 = smul.u32 16, %s24
        %p294 = scmp.lt.s32.totalorder %s23, 1
        %s295 = scalar_select %p294, %s23, 1
        %p296 = scmp.lt.s32.totalorder %s293, 31
        %s297 = scalar_select %p296, %s293, 31
        %s298 = smul.addr %s295, 32
        %s299 = sadd.s32 %s297, %s298
        %s300 = smul.addr %s299, 4
        %s301 = scalar_lea.vmem %s7, %s300
        %p302 = scmp.lt.s32.totalorder %s23, 1
        %s303 = scalar_select %p302, %s23, 1
        %s304 = smul.addr %s303, 40
        %s305 = smul.addr %s304, 4
        %s306 = scalar_lea.vmem %s0, %s305
        %s307 = smul.u32 16, %s24
        %p308 = scmp.lt.s32.totalorder %s23, 1
        %s309 = scalar_select %p308, %s23, 1
        %p310 = scmp.lt.s32.totalorder %s307, 31
        %s311 = scalar_select %p310, %s307, 31
        %s312 = smul.addr %s309, 32
        %s313 = sadd.s32 %s311, %s312
        %s314 = smul.addr %s313, 4
        %s315 = scalar_lea.vmem %s7, %s314
        %s316 = smul.u32 16, %s24
        %v318 = vlaneseq
        %v319 = vshrl.u32 %v318, 7
        %v320 = vadd.s32 %v319, 8
        %v321 = vadd.s32 %v319, 16
        %v322 = vadd.s32 %v319, 24
        %v323 = vadd.s32 %v319, 32
        %v324 = vadd.s32 %v319, 40
        %v325 = vadd.s32 %v319, 48
        %v326 = vadd.s32 %v319, 56
        %v327 = vadd.s32 %v319, 64
        %v328 = vadd.s32 %v319, 72
        %v329 = vadd.s32 %v319, 80
        %v330 = vadd.s32 %v319, 88
        %v331 = vadd.s32 %v319, 96
        %v332 = vadd.s32 %v319, 104
        %v333 = vadd.s32 %v319, 112
        %v334 = vadd.s32 %v319, 120
        %v335 = vadd.s32 %v319, 128
        %v336 = vadd.s32 %v319, 136
        %v337 = vadd.s32 %v319, 144
        %v338 = vadd.s32 %v319, 152
        %v339 = vadd.s32 %v319, 160
        %v340 = vadd.s32 %v319, 168
        %v341 = vadd.s32 %v319, 176
        %v342 = vadd.s32 %v319, 184
        %v343 = vand.u32 %v319, 15
        %v344 = vand.u32 %v320, 15
        %v345 = vand.u32 %v321, 15
        %v346 = vand.u32 %v322, 15
        %v347 = vand.u32 %v323, 15
        %v348 = vand.u32 %v324, 15
        %v349 = vand.u32 %v325, 15
        %v350 = vand.u32 %v326, 15
        %v351 = vand.u32 %v327, 15
        %v352 = vand.u32 %v328, 15
        %v353 = vand.u32 %v329, 15
        %v354 = vand.u32 %v330, 15
        %v355 = vand.u32 %v331, 15
        %v356 = vand.u32 %v332, 15
        %v357 = vand.u32 %v333, 15
        %v358 = vand.u32 %v334, 15
        %v359 = vand.u32 %v335, 15
        %v360 = vand.u32 %v336, 15
        %v361 = vand.u32 %v337, 15
        %v362 = vand.u32 %v338, 15
        %v363 = vand.u32 %v339, 15
        %v364 = vand.u32 %v340, 15
        %v365 = vand.u32 %v341, 15
        %v366 = vand.u32 %v342, 15
        %s367 = smul.u32 %s24, 128
        %v368 = vstv %s367
        %v369 = vadd.s32 %v319, %v368
        %v370 = vadd.s32 %v320, %v368
        %v371 = vadd.s32 %v321, %v368
        %v372 = vadd.s32 %v322, %v368
        %v373 = vadd.s32 %v323, %v368
        %v374 = vadd.s32 %v324, %v368
        %v375 = vadd.s32 %v325, %v368
        %v376 = vadd.s32 %v326, %v368
        %v377 = vadd.s32 %v327, %v368
        %v378 = vadd.s32 %v328, %v368
        %v379 = vadd.s32 %v329, %v368
        %v380 = vadd.s32 %v330, %v368
        %v381 = vadd.s32 %v331, %v368
        %v382 = vadd.s32 %v332, %v368
        %v383 = vadd.s32 %v333, %v368
        %v384 = vadd.s32 %v334, %v368
        %v385 = vadd.s32 %v335, %v368
        %v386 = vadd.s32 %v336, %v368
        %v387 = vadd.s32 %v337, %v368
        %v388 = vadd.s32 %v338, %v368
        %v389 = vadd.s32 %v339, %v368
        %v390 = vadd.s32 %v340, %v368
        %v391 = vadd.s32 %v341, %v368
        %v392 = vadd.s32 %v342, %v368
        %vm393 = vcmp.ge.s32.totalorder %v369, 32
        %vm394 = vcmp.ge.s32.totalorder %v370, 32
        %vm395 = vcmp.ge.s32.totalorder %v371, 32
        %vm396 = vcmp.ge.s32.totalorder %v372, 32
        %vm397 = vcmp.ge.s32.totalorder %v373, 32
        %vm398 = vcmp.ge.s32.totalorder %v374, 32
        %vm399 = vcmp.ge.s32.totalorder %v375, 32
        %vm400 = vcmp.ge.s32.totalorder %v376, 32
        %vm401 = vcmp.ge.s32.totalorder %v377, 32
        %vm402 = vcmp.ge.s32.totalorder %v378, 32
        %vm403 = vcmp.ge.s32.totalorder %v379, 32
        %vm404 = vcmp.ge.s32.totalorder %v380, 32
        %vm405 = vcmp.ge.s32.totalorder %v381, 32
        %vm406 = vcmp.ge.s32.totalorder %v382, 32
        %vm407 = vcmp.ge.s32.totalorder %v383, 32
        %vm408 = vcmp.ge.s32.totalorder %v384, 32
        %vm409 = vcmp.ge.s32.totalorder %v385, 32
        %vm410 = vcmp.ge.s32.totalorder %v386, 32
        %vm411 = vcmp.ge.s32.totalorder %v387, 32
        %vm412 = vcmp.ge.s32.totalorder %v388, 32
        %vm413 = vcmp.ge.s32.totalorder %v389, 32
        %vm414 = vcmp.ge.s32.totalorder %v390, 32
        %vm415 = vcmp.ge.s32.totalorder %v391, 32
        %vm416 = vcmp.ge.s32.totalorder %v392, 32
        %vm417 = vcmp.lt.s32.totalorder %v369, 288
        %vm418 = vcmp.lt.s32.totalorder %v370, 288
        %vm419 = vcmp.lt.s32.totalorder %v371, 288
        %vm420 = vcmp.lt.s32.totalorder %v372, 288
        %vm421 = vcmp.lt.s32.totalorder %v373, 288
        %vm422 = vcmp.lt.s32.totalorder %v374, 288
        %vm423 = vcmp.lt.s32.totalorder %v375, 288
        %vm424 = vcmp.lt.s32.totalorder %v376, 288
        %vm425 = vcmp.lt.s32.totalorder %v377, 288
        %vm426 = vcmp.lt.s32.totalorder %v378, 288
        %vm427 = vcmp.lt.s32.totalorder %v379, 288
        %vm428 = vcmp.lt.s32.totalorder %v380, 288
        %vm429 = vcmp.lt.s32.totalorder %v381, 288
        %vm430 = vcmp.lt.s32.totalorder %v382, 288
        %vm431 = vcmp.lt.s32.totalorder %v383, 288
        %vm432 = vcmp.lt.s32.totalorder %v384, 288
        %vm433 = vcmp.lt.s32.totalorder %v385, 288
        %vm434 = vcmp.lt.s32.totalorder %v386, 288
        %vm435 = vcmp.lt.s32.totalorder %v387, 288
        %vm436 = vcmp.lt.s32.totalorder %v388, 288
        %vm437 = vcmp.lt.s32.totalorder %v389, 288
        %vm438 = vcmp.lt.s32.totalorder %v390, 288
        %vm439 = vcmp.lt.s32.totalorder %v391, 288
        %vm440 = vcmp.lt.s32.totalorder %v392, 288
        %vm441 = vmand %vm393, %vm417
        %vm442 = vmand %vm394, %vm418
        %vm443 = vmand %vm395, %vm419
        %vm444 = vmand %vm396, %vm420
        %vm445 = vmand %vm397, %vm421
        %vm446 = vmand %vm398, %vm422
        %vm447 = vmand %vm399, %vm423
        %vm448 = vmand %vm400, %vm424
        %vm449 = vmand %vm401, %vm425
        %vm450 = vmand %vm402, %vm426
        %vm451 = vmand %vm403, %vm427
        %vm452 = vmand %vm404, %vm428
        %vm453 = vmand %vm405, %vm429
        %vm454 = vmand %vm406, %vm430
        %vm455 = vmand %vm407, %vm431
        %vm456 = vmand %vm408, %vm432
        %vm457 = vmand %vm409, %vm433
        %vm458 = vmand %vm410, %vm434
        %vm459 = vmand %vm411, %vm435
        %vm460 = vmand %vm412, %vm436
        %vm461 = vmand %vm413, %vm437
        %vm462 = vmand %vm414, %vm438
        %vm463 = vmand %vm415, %vm439
        %vm464 = vmand %vm416, %vm440
        %vm465 = vcmp.ge.s32.totalorder %v343, 1
        %vm466 = vcmp.ge.s32.totalorder %v344, 1
        %vm467 = vcmp.ge.s32.totalorder %v345, 1
        %vm468 = vcmp.ge.s32.totalorder %v346, 1
        %vm469 = vcmp.ge.s32.totalorder %v347, 1
        %vm470 = vcmp.ge.s32.totalorder %v348, 1
        %vm471 = vcmp.ge.s32.totalorder %v349, 1
        %vm472 = vcmp.ge.s32.totalorder %v350, 1
        %vm473 = vcmp.ge.s32.totalorder %v351, 1
        %vm474 = vcmp.ge.s32.totalorder %v352, 1
        %vm475 = vcmp.ge.s32.totalorder %v353, 1
        %vm476 = vcmp.ge.s32.totalorder %v354, 1
        %vm477 = vcmp.ge.s32.totalorder %v355, 1
        %vm478 = vcmp.ge.s32.totalorder %v356, 1
        %vm479 = vcmp.ge.s32.totalorder %v357, 1
        %vm480 = vcmp.ge.s32.totalorder %v358, 1
        %vm481 = vcmp.ge.s32.totalorder %v359, 1
        %vm482 = vcmp.ge.s32.totalorder %v360, 1
        %vm483 = vcmp.ge.s32.totalorder %v361, 1
        %vm484 = vcmp.ge.s32.totalorder %v362, 1
        %vm485 = vcmp.ge.s32.totalorder %v363, 1
        %vm486 = vcmp.ge.s32.totalorder %v364, 1
        %vm487 = vcmp.ge.s32.totalorder %v365, 1
        %vm488 = vcmp.ge.s32.totalorder %v366, 1
        %vm489 = vmand %vm441, %vm465
        %vm490 = vmand %vm442, %vm466
        %vm491 = vmand %vm443, %vm467
        %vm492 = vmand %vm444, %vm468
        %vm493 = vmand %vm445, %vm469
        %vm494 = vmand %vm446, %vm470
        %vm495 = vmand %vm447, %vm471
        %vm496 = vmand %vm448, %vm472
        %vm497 = vmand %vm449, %vm473
        %vm498 = vmand %vm450, %vm474
        %vm499 = vmand %vm451, %vm475
        %vm500 = vmand %vm452, %vm476
        %vm501 = vmand %vm453, %vm477
        %vm502 = vmand %vm454, %vm478
        %vm503 = vmand %vm455, %vm479
        %vm504 = vmand %vm456, %vm480
        %vm505 = vmand %vm457, %vm481
        %vm506 = vmand %vm458, %vm482
        %vm507 = vmand %vm459, %vm483
        %vm508 = vmand %vm460, %vm484
        %vm509 = vmand %vm461, %vm485
        %vm510 = vmand %vm462, %vm486
        %vm511 = vmand %vm463, %vm487
        %vm512 = vmand %vm464, %vm488
        %vm513 = vcmp.le.s32.totalorder %v343, 14
        %vm514 = vcmp.le.s32.totalorder %v344, 14
        %vm515 = vcmp.le.s32.totalorder %v345, 14
        %vm516 = vcmp.le.s32.totalorder %v346, 14
        %vm517 = vcmp.le.s32.totalorder %v347, 14
        %vm518 = vcmp.le.s32.totalorder %v348, 14
        %vm519 = vcmp.le.s32.totalorder %v349, 14
        %vm520 = vcmp.le.s32.totalorder %v350, 14
        %vm521 = vcmp.le.s32.totalorder %v351, 14
        %vm522 = vcmp.le.s32.totalorder %v352, 14
        %vm523 = vcmp.le.s32.totalorder %v353, 14
        %vm524 = vcmp.le.s32.totalorder %v354, 14
        %vm525 = vcmp.le.s32.totalorder %v355, 14
        %vm526 = vcmp.le.s32.totalorder %v356, 14
        %vm527 = vcmp.le.s32.totalorder %v357, 14
        %vm528 = vcmp.le.s32.totalorder %v358, 14
        %vm529 = vcmp.le.s32.totalorder %v359, 14
        %vm530 = vcmp.le.s32.totalorder %v360, 14
        %vm531 = vcmp.le.s32.totalorder %v361, 14
        %vm532 = vcmp.le.s32.totalorder %v362, 14
        %vm533 = vcmp.le.s32.totalorder %v363, 14
        %vm534 = vcmp.le.s32.totalorder %v364, 14
        %vm535 = vcmp.le.s32.totalorder %v365, 14
        %vm536 = vcmp.le.s32.totalorder %v366, 14
        %vm537 = vmand %vm441, %vm513
        %vm538 = vmand %vm442, %vm514
        %vm539 = vmand %vm443, %vm515
        %vm540 = vmand %vm444, %vm516
        %vm541 = vmand %vm445, %vm517
        %vm542 = vmand %vm446, %vm518
        %vm543 = vmand %vm447, %vm519
        %vm544 = vmand %vm448, %vm520
        %vm545 = vmand %vm449, %vm521
        %vm546 = vmand %vm450, %vm522
        %vm547 = vmand %vm451, %vm523
        %vm548 = vmand %vm452, %vm524
        %vm549 = vmand %vm453, %vm525
        %vm550 = vmand %vm454, %vm526
        %vm551 = vmand %vm455, %vm527
        %vm552 = vmand %vm456, %vm528
        %vm553 = vmand %vm457, %vm529
        %vm554 = vmand %vm458, %vm530
        %vm555 = vmand %vm459, %vm531
        %vm556 = vmand %vm460, %vm532
        %vm557 = vmand %vm461, %vm533
        %vm558 = vmand %vm462, %vm534
        %vm559 = vmand %vm463, %vm535
        %vm560 = vmand %vm464, %vm536
        %561 = vst [vmem:[#allocation2] sm:$0xff] 0
        %562 = vst [vmem:[#allocation2 + $0x8] sm:$0xf] 0
        %563 = vst [vmem:[#allocation2 + $0xc] sm:$0xff] 0
        %564 = vst [vmem:[#allocation2 + $0x14] sm:$0xf] 0
        %565 = vst [vmem:[#allocation2 + $0x138] sm:$0xff] 0
        %566 = vst [vmem:[#allocation2 + $0x140] sm:$0xf] 0
        %567 = vst [vmem:[#allocation2 + $0x144] sm:$0xff] 0
        %568 = vst [vmem:[#allocation2 + $0x14c] sm:$0xf] 0
        %s569 = sshra.s32 %s367, 3
        %s570 = sand.u32 %s367, 7
        %s571 = smul.addr %s569, 4
        %s572 = scalar_lea.vmem %s306, %s571
        %v573 = vld [vmem:[%s572] sm:$0xf]
        %v574 = vld [vmem:[%s572 + $0x4] sm:$0xf]
        %v575 = vld [vmem:[%s572 + $0x8] sm:$0xf]
        %v576 = vld [vmem:[%s572 + $0xc] sm:$0xf]
        %v577 = vld [vmem:[%s572 + $0x10] sm:$0xf]
        %v578 = vld [vmem:[%s572 + $0x14] sm:$0xf]
        %v579 = vld [vmem:[%s572 + $0x18] sm:$0xf]
        %v580 = vld [vmem:[%s572 + $0x1c] sm:$0xf]
        %v581 = vld [vmem:[%s572 + $0x20] sm:$0xf]
        %v582 = vld [vmem:[%s572 + $0x24] sm:$0xf]
        %v583 = vld [vmem:[%s572 + $0x28] sm:$0xf]
        %v584 = vld [vmem:[%s572 + $0x2c] sm:$0xf]
        %v585 = vld [vmem:[%s572 + $0x30] sm:$0xf]
        %v586 = vld [vmem:[%s572 + $0x34] sm:$0xf]
        %v587 = vld [vmem:[%s572 + $0x38] sm:$0xf]
        %v588 = vld [vmem:[%s572 + $0x3c] sm:$0xf]
        %v589 = vld [vmem:[%s572 + $0x40] sm:$0xf]
        %v590 = vld [vmem:[%s572 + $0x44] sm:$0xf]
        %v591 = vld [vmem:[%s572 + $0x48] sm:$0xf]
        %v592 = vld [vmem:[%s572 + $0x4c] sm:$0xf]
        %v593 = vld [vmem:[%s572 + $0x50] sm:$0xf]
        %v594 = vld [vmem:[%s572 + $0x54] sm:$0xf]
        %v595 = vld [vmem:[%s572 + $0x58] sm:$0xf]
        %v596 = vld [vmem:[%s572 + $0x5c] sm:$0xf]
        %v597 = vld [vmem:[%s1] sm:$0xff]
        %v598 = vld [vmem:[%s1 + $0x8] sm:$0xff]
        %v599 = vld [vmem:[%s1 + $0x10] sm:$0xff]
        %v600 = vld [vmem:[%s1 + $0x18] sm:$0xff]
        %v601 = vld [vmem:[%s1 + $0x20] sm:$0xff]
        %v602 = vld [vmem:[%s1 + $0x28] sm:$0xff]
        %v603 = vld [vmem:[%s1 + $0x30] sm:$0xff]
        %v604 = vld [vmem:[%s1 + $0x38] sm:$0xff]
        %v605 = vld [vmem:[%s1 + $0x40] sm:$0xff]
        %v606 = vld [vmem:[%s1 + $0x48] sm:$0xff]
        %v607 = vld [vmem:[%s1 + $0x50] sm:$0xff]
        %v608 = vld [vmem:[%s1 + $0x58] sm:$0xff]
        %v609 = vld [vmem:[%s1 + $0x60] sm:$0xff]
        %v610 = vld [vmem:[%s1 + $0x68] sm:$0xff]
        %v611 = vld [vmem:[%s1 + $0x70] sm:$0xff]
        %v612 = vld [vmem:[%s1 + $0x78] sm:$0xff]
        %v613 = vld [vmem:[%s2] sm:$0x3]
        %v615 = vlaneseq
        %v616 = vshrl.u32 %v615, 7
        %v617 = vsub.s32 0, %v616
        %v618 = vrot.slane %v613, %v617
        %v619 = vlaneseq
        %v620 = vshrl.u32 %v619, 7
        %v621 = vsub.s32 1, %v620
        %v622 = vrot.slane %v613, %v621
        %v649 = vunpack.c.l.b16 %v573
        %v650 = vunpack.c.l.b16 %v574
        %v651 = vunpack.c.l.b16 %v575
        %v652 = vunpack.c.l.b16 %v576
        %v653 = vunpack.c.l.b16 %v577
        %v654 = vunpack.c.l.b16 %v578
        %v655 = vunpack.c.l.b16 %v579
        %v656 = vunpack.c.l.b16 %v580
        %v657 = vunpack.c.l.b16 %v581
        %v658 = vunpack.c.l.b16 %v582
        %v659 = vunpack.c.l.b16 %v583
        %v660 = vunpack.c.l.b16 %v584
        %v661 = vunpack.c.l.b16 %v585
        %v662 = vunpack.c.l.b16 %v586
        %v663 = vunpack.c.l.b16 %v587
        %v664 = vunpack.c.l.b16 %v588
        %v665 = vunpack.c.l.b16 %v589
        %v666 = vunpack.c.l.b16 %v590
        %v667 = vunpack.c.l.b16 %v591
        %v668 = vunpack.c.l.b16 %v592
        %v669 = vunpack.c.l.b16 %v593
        %v670 = vunpack.c.l.b16 %v594
        %v671 = vunpack.c.l.b16 %v595
        %v672 = vunpack.c.l.b16 %v596
        %v673 = vpack.c.b16 %v650, %v649
        %v674 = vpack.c.b16 %v652, %v651
        %v675 = vpack.c.b16 %v654, %v653
        %v676 = vpack.c.b16 %v656, %v655
        %v677 = vpack.c.b16 %v658, %v657
        %v678 = vpack.c.b16 %v660, %v659
        %v679 = vpack.c.b16 %v662, %v661
        %v680 = vpack.c.b16 %v664, %v663
        %v681 = vpack.c.b16 %v666, %v665
        %v682 = vpack.c.b16 %v668, %v667
        %v683 = vpack.c.b16 %v670, %v669
        %v684 = vpack.c.b16 %v672, %v671
        %v713 = vunpack.c.l.b16 %v597
        %v714 = vunpack.c.h.b16 %v597
        %v715 = vunpack.c.l.b16 %v598
        %v716 = vunpack.c.h.b16 %v598
        %v717 = vunpack.c.l.b16 %v599
        %v718 = vunpack.c.h.b16 %v599
        %v719 = vunpack.c.l.b16 %v600
        %v720 = vunpack.c.h.b16 %v600
        %v721 = vunpack.c.l.b16 %v601
        %v722 = vunpack.c.h.b16 %v601
        %v723 = vunpack.c.l.b16 %v602
        %v724 = vunpack.c.h.b16 %v602
        %v725 = vunpack.c.l.b16 %v603
        %v726 = vunpack.c.h.b16 %v603
        %v727 = vunpack.c.l.b16 %v604
        %v728 = vunpack.c.h.b16 %v604
        %v729 = vunpack.c.l.b16 %v605
        %v730 = vunpack.c.h.b16 %v605
        %v731 = vunpack.c.l.b16 %v606
        %v732 = vunpack.c.h.b16 %v606
        %v733 = vunpack.c.l.b16 %v607
        %v734 = vunpack.c.h.b16 %v607
        %v735 = vunpack.c.l.b16 %v608
        %v736 = vunpack.c.h.b16 %v608
        %v737 = vunpack.c.l.b16 %v609
        %v738 = vunpack.c.h.b16 %v609
        %v739 = vunpack.c.l.b16 %v610
        %v740 = vunpack.c.h.b16 %v610
        %v741 = vunpack.c.l.b16 %v611
        %v742 = vunpack.c.h.b16 %v611
        %v743 = vunpack.c.l.b16 %v612
        %v744 = vunpack.c.h.b16 %v612
        %v745 = vpack.c.b16 %v715, %v713
        %v746 = vpack.c.b16 %v716, %v714
        %v747 = vpack.c.b16 %v719, %v717
        %v748 = vpack.c.b16 %v720, %v718
        %v749 = vpack.c.b16 %v723, %v721
        %v750 = vpack.c.b16 %v724, %v722
        %v751 = vpack.c.b16 %v727, %v725
        %v752 = vpack.c.b16 %v728, %v726
        %v753 = vpack.c.b16 %v731, %v729
        %v754 = vpack.c.b16 %v732, %v730
        %v755 = vpack.c.b16 %v735, %v733
        %v756 = vpack.c.b16 %v736, %v734
        %v757 = vpack.c.b16 %v739, %v737
        %v758 = vpack.c.b16 %v740, %v738
        %v759 = vpack.c.b16 %v743, %v741
        %v760 = vpack.c.b16 %v744, %v742
        %777 = vmatprep.subr.bf16.mxu0 %v760
        %778 = vmatpush1.bf16.msra.mxu0 %v759
        %779 = vmatprep.subr.bf16.mxu0 %v758
        %780 = vmatpush1.bf16.msra.mxu0 %v757
        %781 = vmatprep.subr.bf16.mxu0 %v756
        %782 = vmatpush1.bf16.msra.mxu0 %v755
        %783 = vmatprep.subr.bf16.mxu0 %v754
        %784 = vmatpush1.bf16.msra.mxu0 %v753
        %785 = vmatprep.subr.bf16.mxu0 %v752
        %786 = vmatpush1.bf16.msra.mxu0 %v751
        %787 = vmatprep.subr.bf16.mxu0 %v750
        %788 = vmatpush1.bf16.msra.mxu0 %v749
        %789 = vmatprep.subr.bf16.mxu0 %v748
        %790 = vmatpush1.bf16.msra.mxu0 %v747
        %791 = vmatprep.subr.bf16.mxu0 %v746
        %792 = vmatpush1.bf16.msra.mxu0 %v745
        %793 = vmatprep.subr.bf16.mxu0 0
        %794 = vmatpush2.bf16.msra.mxu0 0
        %795 = vmatprep.subr.bf16.mxu0 0
        %796 = vmatpush2.bf16.msra.mxu0 0
        %797 = vmatprep.subr.bf16.mxu0 0
        %798 = vmatpush2.bf16.msra.mxu0 0
        %799 = vmatprep.subr.bf16.mxu0 0
        %800 = vmatpush2.bf16.msra.mxu0 0
        %801 = vmatprep.subr.bf16.mxu0 0
        %802 = vmatpush2.bf16.msra.mxu0 0
        %803 = vmatprep.subr.bf16.mxu0 0
        %804 = vmatpush2.bf16.msra.mxu0 0
        %805 = vmatprep.subr.bf16.mxu0 0
        %806 = vmatpush2.bf16.msra.mxu0 0
        %807 = vmatprep.subr.bf16.mxu0 0
        %808 = vmatpush2.bf16.msra.mxu0 0
        %809 = vmatprep.mubr.bf16.mxu0 0
        %810 = vmatmul.mubr.bf16.gmra.mxu0 %v673
        %v811 = vpop.f32.mrf.mxu0
        %v812 = vpop.f32.mrf.mxu0
        %v813 = vadd.f32 %v622, %v812
        %v814 = vpop.f32.mrf.mxu0
        %v815 = vpop.f32.mrf.mxu0
        %v816 = vadd.f32 %v622, %v815
        %817 = vmatprep.mubr.bf16.mxu0 0
        %818 = vmatmul.mubr.bf16.gmra.mxu0 %v674
        %v819 = vpop.f32.mrf.mxu0
        %v820 = vpop.f32.mrf.mxu0
        %v821 = vadd.f32 %v622, %v820
        %v822 = vpop.f32.mrf.mxu0
        %v823 = vpop.f32.mrf.mxu0
        %v824 = vadd.f32 %v622, %v823
        %825 = vmatprep.mubr.bf16.mxu0 0
        %826 = vmatmul.mubr.bf16.gmra.mxu0 %v675
        %v827 = vpop.f32.mrf.mxu0
        %v828 = vadd.f32 %v618, %v827
        %v829 = vpop.f32.mrf.mxu0
        %v830 = vadd.f32 %v622, %v829
        %v831 = vpop.f32.mrf.mxu0
        %v832 = vadd.f32 %v618, %v831
        %v833 = vpop.f32.mrf.mxu0
        %v834 = vadd.f32 %v622, %v833
        %835 = vmatprep.mubr.bf16.mxu0 0
        %836 = vmatmul.mubr.bf16.gmra.mxu0 %v676
        %v837 = vpop.f32.mrf.mxu0
        %v838 = vadd.f32 %v618, %v837
        %v839 = vpop.f32.mrf.mxu0
        %v840 = vadd.f32 %v622, %v839
        %v841 = vpop.f32.mrf.mxu0
        %v842 = vadd.f32 %v618, %v841
        %v843 = vpop.f32.mrf.mxu0
        %v844 = vadd.f32 %v622, %v843
        %845 = vmatprep.mubr.bf16.mxu0 0
        %846 = vmatmul.mubr.bf16.gmra.mxu0 %v677
        %v847 = vpop.f32.mrf.mxu0
        %v848 = vadd.f32 %v618, %v847
        %v849 = vpop.f32.mrf.mxu0
        %v850 = vadd.f32 %v622, %v849
        %v851 = vpop.f32.mrf.mxu0
        %v852 = vadd.f32 %v618, %v851
        %v853 = vpop.f32.mrf.mxu0
        %v854 = vadd.f32 %v622, %v853
        %855 = vmatprep.mubr.bf16.mxu0 0
        %856 = vmatmul.mubr.bf16.gmra.mxu0 %v678
        %v857 = vpop.f32.mrf.mxu0
        %v858 = vadd.f32 %v618, %v857
        %v859 = vpop.f32.mrf.mxu0
        %v860 = vadd.f32 %v622, %v859
        %v861 = vpop.f32.mrf.mxu0
        %v862 = vadd.f32 %v618, %v861
        %v863 = vpop.f32.mrf.mxu0
        %v864 = vadd.f32 %v622, %v863
        %865 = vmatprep.mubr.bf16.mxu0 0
        %866 = vmatmul.mubr.bf16.gmra.mxu0 %v679
        %v867 = vpop.f32.mrf.mxu0
        %v868 = vadd.f32 %v618, %v867
        %v869 = vpop.f32.mrf.mxu0
        %v870 = vadd.f32 %v622, %v869
        %v871 = vpop.f32.mrf.mxu0
        %v872 = vadd.f32 %v618, %v871
        %v873 = vpop.f32.mrf.mxu0
        %v874 = vadd.f32 %v622, %v873
        %875 = vmatprep.mubr.bf16.mxu0 0
        %876 = vmatmul.mubr.bf16.gmra.mxu0 %v680
        %v877 = vpop.f32.mrf.mxu0
        %v878 = vadd.f32 %v618, %v877
        %v879 = vpop.f32.mrf.mxu0
        %v880 = vadd.f32 %v622, %v879
        %v881 = vpop.f32.mrf.mxu0
        %v882 = vadd.f32 %v618, %v881
        %v883 = vpop.f32.mrf.mxu0
        %v884 = vadd.f32 %v622, %v883
        %885 = vmatprep.mubr.bf16.mxu0 0
        %886 = vmatmul.mubr.bf16.gmra.mxu0 %v681
        %v887 = vpop.f32.mrf.mxu0
        %v888 = vadd.f32 %v618, %v887
        %v889 = vpop.f32.mrf.mxu0
        %v890 = vadd.f32 %v622, %v889
        %v891 = vpop.f32.mrf.mxu0
        %v892 = vadd.f32 %v618, %v891
        %v893 = vpop.f32.mrf.mxu0
        %v894 = vadd.f32 %v622, %v893
        %895 = vmatprep.mubr.bf16.mxu0 0
        %896 = vmatmul.mubr.bf16.gmra.mxu0 %v682
        %v897 = vpop.f32.mrf.mxu0
        %v898 = vadd.f32 %v618, %v897
        %v899 = vpop.f32.mrf.mxu0
        %v900 = vadd.f32 %v622, %v899
        %v901 = vpop.f32.mrf.mxu0
        %v902 = vadd.f32 %v618, %v901
        %v903 = vpop.f32.mrf.mxu0
        %v904 = vadd.f32 %v622, %v903
        %905 = vmatprep.mubr.bf16.mxu0 0
        %906 = vmatmul.mubr.bf16.gmra.mxu0 %v683
        %v907 = vpop.f32.mrf.mxu0
        %v908 = vpop.f32.mrf.mxu0
        %v909 = vadd.f32 %v622, %v908
        %v910 = vpop.f32.mrf.mxu0
        %v911 = vpop.f32.mrf.mxu0
        %v912 = vadd.f32 %v622, %v911
        %913 = vmatprep.mubr.bf16.mxu0 0
        %914 = vmatmul.mubr.bf16.gmra.mxu0 %v684
        %v915 = vpop.f32.mrf.mxu0
        %v916 = vpop.f32.mrf.mxu0
        %v917 = vadd.f32 %v622, %v916
        %v918 = vpop.f32.mrf.mxu0
        %v919 = vpop.f32.mrf.mxu0
        %v920 = vadd.f32 %v622, %v919
        %921 = vdwg.mxu0
        %v922 = vsub.f32 0.0, %v813
        %v923 = vsub.f32 0.0, %v816
        %v924 = vsub.f32 0.0, %v821
        %v925 = vsub.f32 0.0, %v824
        %v926 = vsub.f32 0.0, %v828
        %v927 = vsub.f32 0.0, %v830
        %v928 = vsub.f32 0.0, %v832
        %v929 = vsub.f32 0.0, %v834
        %v930 = vsub.f32 0.0, %v838
        %v931 = vsub.f32 0.0, %v840
        %v932 = vsub.f32 0.0, %v842
        %v933 = vsub.f32 0.0, %v844
        %v934 = vsub.f32 0.0, %v848
        %v935 = vsub.f32 0.0, %v850
        %v936 = vsub.f32 0.0, %v852
        %v937 = vsub.f32 0.0, %v854
        %v938 = vsub.f32 0.0, %v858
        %v939 = vsub.f32 0.0, %v860
        %v940 = vsub.f32 0.0, %v862
        %v941 = vsub.f32 0.0, %v864
        %v942 = vsub.f32 0.0, %v868
        %v943 = vsub.f32 0.0, %v870
        %v944 = vsub.f32 0.0, %v872
        %v945 = vsub.f32 0.0, %v874
        %v946 = vsub.f32 0.0, %v878
        %v947 = vsub.f32 0.0, %v880
        %v948 = vsub.f32 0.0, %v882
        %v949 = vsub.f32 0.0, %v884
        %v950 = vsub.f32 0.0, %v888
        %v951 = vsub.f32 0.0, %v890
        %v952 = vsub.f32 0.0, %v892
        %v953 = vsub.f32 0.0, %v894
        %v954 = vsub.f32 0.0, %v898
        %v955 = vsub.f32 0.0, %v900
        %v956 = vsub.f32 0.0, %v902
        %v957 = vsub.f32 0.0, %v904
        %v958 = vsub.f32 0.0, %v909
        %v959 = vsub.f32 0.0, %v912
        %v960 = vsub.f32 0.0, %v917
        %v961 = vsub.f32 0.0, %v920
        %v962 = vmul.f32 %v922, 1.442695
        %v963 = vpow.pop %v962
        %v964 = vmul.f32 %v923, 1.442695
        %v965 = vpow.pop %v964
        %v966 = vmul.f32 %v924, 1.442695
        %v967 = vpow.pop %v966
        %v968 = vmul.f32 %v925, 1.442695
        %v969 = vpow.pop %v968
        %v970 = vmul.f32 %v926, 1.442695
        %v971 = vpow.pop %v970
        %v972 = vmul.f32 %v927, 1.442695
        %v973 = vpow.pop %v972
        %v974 = vmul.f32 %v928, 1.442695
        %v975 = vpow.pop %v974
        %v976 = vmul.f32 %v929, 1.442695
        %v977 = vpow.pop %v976
        %v978 = vmul.f32 %v930, 1.442695
        %v979 = vpow.pop %v978
        %v980 = vmul.f32 %v931, 1.442695
        %v981 = vpow.pop %v980
        %v982 = vmul.f32 %v932, 1.442695
        %v983 = vpow.pop %v982
        %v984 = vmul.f32 %v933, 1.442695
        %v985 = vpow.pop %v984
        %v986 = vmul.f32 %v934, 1.442695
        %v987 = vpow.pop %v986
        %v988 = vmul.f32 %v935, 1.442695
        %v989 = vpow.pop %v988
        %v990 = vmul.f32 %v936, 1.442695
        %v991 = vpow.pop %v990
        %v992 = vmul.f32 %v937, 1.442695
        %v993 = vpow.pop %v992
        %v994 = vmul.f32 %v938, 1.442695
        %v995 = vpow.pop %v994
        %v996 = vmul.f32 %v939, 1.442695
        %v997 = vpow.pop %v996
        %v998 = vmul.f32 %v940, 1.442695
        %v999 = vpow.pop %v998
        %v1000 = vmul.f32 %v941, 1.442695
        %v1001 = vpow.pop %v1000
        %v1002 = vmul.f32 %v942, 1.442695
        %v1003 = vpow.pop %v1002
        %v1004 = vmul.f32 %v943, 1.442695
        %v1005 = vpow.pop %v1004
        %v1006 = vmul.f32 %v944, 1.442695
        %v1007 = vpow.pop %v1006
        %v1008 = vmul.f32 %v945, 1.442695
        %v1009 = vpow.pop %v1008
        %v1010 = vmul.f32 %v946, 1.442695
        %v1011 = vpow.pop %v1010
        %v1012 = vmul.f32 %v947, 1.442695
        %v1013 = vpow.pop %v1012
        %v1014 = vmul.f32 %v948, 1.442695
        %v1015 = vpow.pop %v1014
        %v1016 = vmul.f32 %v949, 1.442695
        %v1017 = vpow.pop %v1016
        %v1018 = vmul.f32 %v950, 1.442695
        %v1019 = vpow.pop %v1018
        %v1020 = vmul.f32 %v951, 1.442695
        %v1021 = vpow.pop %v1020
        %v1022 = vmul.f32 %v952, 1.442695
        %v1023 = vpow.pop %v1022
        %v1024 = vmul.f32 %v953, 1.442695
        %v1025 = vpow.pop %v1024
        %v1026 = vmul.f32 %v954, 1.442695
        %v1027 = vpow.pop %v1026
        %v1028 = vmul.f32 %v955, 1.442695
        %v1029 = vpow.pop %v1028
        %v1030 = vmul.f32 %v956, 1.442695
        %v1031 = vpow.pop %v1030
        %v1032 = vmul.f32 %v957, 1.442695
        %v1033 = vpow.pop %v1032
        %v1034 = vmul.f32 %v958, 1.442695
        %v1035 = vpow.pop %v1034
        %v1036 = vmul.f32 %v959, 1.442695
        %v1037 = vpow.pop %v1036
        %v1038 = vmul.f32 %v960, 1.442695
        %v1039 = vpow.pop %v1038
        %v1040 = vmul.f32 %v961, 1.442695
        %v1041 = vpow.pop %v1040
        %v1042 = vadd.f32 %v963, 1.0
        %v1043 = vadd.f32 %v965, 1.0
        %v1044 = vadd.f32 %v967, 1.0
        %v1045 = vadd.f32 %v969, 1.0
        %v1046 = vadd.f32 %v971, 1.0
        %v1047 = vadd.f32 %v973, 1.0
        %v1048 = vadd.f32 %v975, 1.0
        %v1049 = vadd.f32 %v977, 1.0
        %v1050 = vadd.f32 %v979, 1.0
        %v1051 = vadd.f32 %v981, 1.0
        %v1052 = vadd.f32 %v983, 1.0
        %v1053 = vadd.f32 %v985, 1.0
        %v1054 = vadd.f32 %v987, 1.0
        %v1055 = vadd.f32 %v989, 1.0
        %v1056 = vadd.f32 %v991, 1.0
        %v1057 = vadd.f32 %v993, 1.0
        %v1058 = vadd.f32 %v995, 1.0
        %v1059 = vadd.f32 %v997, 1.0
        %v1060 = vadd.f32 %v999, 1.0
        %v1061 = vadd.f32 %v1001, 1.0
        %v1062 = vadd.f32 %v1003, 1.0
        %v1063 = vadd.f32 %v1005, 1.0
        %v1064 = vadd.f32 %v1007, 1.0
        %v1065 = vadd.f32 %v1009, 1.0
        %v1066 = vadd.f32 %v1011, 1.0
        %v1067 = vadd.f32 %v1013, 1.0
        %v1068 = vadd.f32 %v1015, 1.0
        %v1069 = vadd.f32 %v1017, 1.0
        %v1070 = vadd.f32 %v1019, 1.0
        %v1071 = vadd.f32 %v1021, 1.0
        %v1072 = vadd.f32 %v1023, 1.0
        %v1073 = vadd.f32 %v1025, 1.0
        %v1074 = vadd.f32 %v1027, 1.0
        %v1075 = vadd.f32 %v1029, 1.0
        %v1076 = vadd.f32 %v1031, 1.0
        %v1077 = vadd.f32 %v1033, 1.0
        %v1078 = vadd.f32 %v1035, 1.0
        %v1079 = vadd.f32 %v1037, 1.0
        %v1080 = vadd.f32 %v1039, 1.0
        %v1081 = vadd.f32 %v1041, 1.0
        %v1082 = vrcp.pop %v1042
        %v1083 = vrcp.pop %v1043
        %v1084 = vrcp.pop %v1044
        %v1085 = vrcp.pop %v1045
        %v1086 = vrcp.pop %v1046
        %v1087 = vrcp.pop %v1047
        %v1088 = vrcp.pop %v1048
        %v1089 = vrcp.pop %v1049
        %v1090 = vrcp.pop %v1050
        %v1091 = vrcp.pop %v1051
        %v1092 = vrcp.pop %v1052
        %v1093 = vrcp.pop %v1053
        %v1094 = vrcp.pop %v1054
        %v1095 = vrcp.pop %v1055
        %v1096 = vrcp.pop %v1056
        %v1097 = vrcp.pop %v1057
        %v1098 = vrcp.pop %v1058
        %v1099 = vrcp.pop %v1059
        %v1100 = vrcp.pop %v1060
        %v1101 = vrcp.pop %v1061
        %v1102 = vrcp.pop %v1062
        %v1103 = vrcp.pop %v1063
        %v1104 = vrcp.pop %v1064
        %v1105 = vrcp.pop %v1065
        %v1106 = vrcp.pop %v1066
        %v1107 = vrcp.pop %v1067
        %v1108 = vrcp.pop %v1068
        %v1109 = vrcp.pop %v1069
        %v1110 = vrcp.pop %v1070
        %v1111 = vrcp.pop %v1071
        %v1112 = vrcp.pop %v1072
        %v1113 = vrcp.pop %v1073
        %v1114 = vrcp.pop %v1074
        %v1115 = vrcp.pop %v1075
        %v1116 = vrcp.pop %v1076
        %v1117 = vrcp.pop %v1077
        %v1118 = vrcp.pop %v1078
        %v1119 = vrcp.pop %v1079
        %v1120 = vrcp.pop %v1080
        %v1121 = vrcp.pop %v1081
        %v1122 = vmul.f32 %v813, %v1082
        %v1123 = vmul.f32 %v816, %v1083
        %v1124 = vmul.f32 %v821, %v1084
        %v1125 = vmul.f32 %v824, %v1085
        %v1126 = vmul.f32 %v828, %v1086
        %v1127 = vmul.f32 %v830, %v1087
        %v1128 = vmul.f32 %v832, %v1088
        %v1129 = vmul.f32 %v834, %v1089
        %v1130 = vmul.f32 %v838, %v1090
        %v1131 = vmul.f32 %v840, %v1091
        %v1132 = vmul.f32 %v842, %v1092
        %v1133 = vmul.f32 %v844, %v1093
        %v1134 = vmul.f32 %v848, %v1094
        %v1135 = vmul.f32 %v850, %v1095
        %v1136 = vmul.f32 %v852, %v1096
        %v1137 = vmul.f32 %v854, %v1097
        %v1138 = vmul.f32 %v858, %v1098
        %v1139 = vmul.f32 %v860, %v1099
        %v1140 = vmul.f32 %v862, %v1100
        %v1141 = vmul.f32 %v864, %v1101
        %v1142 = vmul.f32 %v868, %v1102
        %v1143 = vmul.f32 %v870, %v1103
        %v1144 = vmul.f32 %v872, %v1104
        %v1145 = vmul.f32 %v874, %v1105
        %v1146 = vmul.f32 %v878, %v1106
        %v1147 = vmul.f32 %v880, %v1107
        %v1148 = vmul.f32 %v882, %v1108
        %v1149 = vmul.f32 %v884, %v1109
        %v1150 = vmul.f32 %v888, %v1110
        %v1151 = vmul.f32 %v890, %v1111
        %v1152 = vmul.f32 %v892, %v1112
        %v1153 = vmul.f32 %v894, %v1113
        %v1154 = vmul.f32 %v898, %v1114
        %v1155 = vmul.f32 %v900, %v1115
        %v1156 = vmul.f32 %v902, %v1116
        %v1157 = vmul.f32 %v904, %v1117
        %v1158 = vmul.f32 %v909, %v1118
        %v1159 = vmul.f32 %v912, %v1119
        %v1160 = vmul.f32 %v917, %v1120
        %v1161 = vmul.f32 %v920, %v1121
        %v1162 = vpack.c.bf16 %v1128, %v1126
        %v1163 = vpack.c.bf16 %v1132, %v1130
        %v1164 = vpack.c.bf16 %v1136, %v1134
        %v1165 = vpack.c.bf16 %v1140, %v1138
        %v1166 = vpack.c.bf16 %v1144, %v1142
        %v1167 = vpack.c.bf16 %v1148, %v1146
        %v1168 = vpack.c.bf16 %v1152, %v1150
        %v1169 = vpack.c.bf16 %v1156, %v1154
        %v1178 = vunpack.c.l.b16 %v1162
        %v1179 = vunpack.c.h.b16 %v1162
        %v1180 = vunpack.c.l.b16 %v1163
        %v1181 = vunpack.c.h.b16 %v1163
        %v1182 = vunpack.c.l.b16 %v1164
        %v1183 = vunpack.c.h.b16 %v1164
        %v1184 = vunpack.c.l.b16 %v1165
        %v1185 = vunpack.c.h.b16 %v1165
        %v1186 = vunpack.c.l.b16 %v1166
        %v1187 = vunpack.c.h.b16 %v1166
        %v1188 = vunpack.c.l.b16 %v1167
        %v1189 = vunpack.c.h.b16 %v1167
        %v1190 = vunpack.c.l.b16 %v1168
        %v1191 = vunpack.c.h.b16 %v1168
        %v1192 = vunpack.c.l.b16 %v1169
        %v1193 = vunpack.c.h.b16 %v1169
        %v1194 = vpack.c.b16 %v1178, %v1178
        %v1195 = vpack.c.b16 %v1179, %v1179
        %v1196 = vpack.c.b16 %v1180, %v1180
        %v1197 = vpack.c.b16 %v1181, %v1181
        %v1198 = vpack.c.b16 %v1182, %v1182
        %v1199 = vpack.c.b16 %v1183, %v1183
        %v1200 = vpack.c.b16 %v1184, %v1184
        %v1201 = vpack.c.b16 %v1185, %v1185
        %v1202 = vpack.c.b16 %v1186, %v1186
        %v1203 = vpack.c.b16 %v1187, %v1187
        %v1204 = vpack.c.b16 %v1188, %v1188
        %v1205 = vpack.c.b16 %v1189, %v1189
        %v1206 = vpack.c.b16 %v1190, %v1190
        %v1207 = vpack.c.b16 %v1191, %v1191
        %v1208 = vpack.c.b16 %v1192, %v1192
        %v1209 = vpack.c.b16 %v1193, %v1193
        %1226 = vst [vmem:[#allocation3] sm:$0xf] %v1194
        %1227 = vst [vmem:[#allocation3 + $0xc] sm:$0xf] %v1195
        %1228 = vst [vmem:[#allocation3 + $0x18] sm:$0xf] %v1196
        %1229 = vst [vmem:[#allocation3 + $0x24] sm:$0xf] %v1197
        %1230 = vst [vmem:[#allocation3 + $0x30] sm:$0xf] %v1198
        %1231 = vst [vmem:[#allocation3 + $0x3c] sm:$0xf] %v1199
        %1232 = vst [vmem:[#allocation3 + $0x48] sm:$0xf] %v1200
        %1233 = vst [vmem:[#allocation3 + $0x54] sm:$0xf] %v1201
        %1234 = vst [vmem:[#allocation3 + $0x60] sm:$0xf] %v1202
        %1235 = vst [vmem:[#allocation3 + $0x6c] sm:$0xf] %v1203
        %1236 = vst [vmem:[#allocation3 + $0x78] sm:$0xf] %v1204
        %1237 = vst [vmem:[#allocation3 + $0x84] sm:$0xf] %v1205
        %1238 = vst [vmem:[#allocation3 + $0x90] sm:$0xf] %v1206
        %1239 = vst [vmem:[#allocation3 + $0x9c] sm:$0xf] %v1207
        %1240 = vst [vmem:[#allocation3 + $0xa8] sm:$0xf] %v1208
        %1241 = vst [vmem:[#allocation3 + $0xb4] sm:$0xf] %v1209
        %v1242 = vpack.c.bf16 %v1129, %v1127
        %v1243 = vpack.c.bf16 %v1133, %v1131
        %v1244 = vpack.c.bf16 %v1137, %v1135
        %v1245 = vpack.c.bf16 %v1141, %v1139
        %v1246 = vpack.c.bf16 %v1145, %v1143
        %v1247 = vpack.c.bf16 %v1149, %v1147
        %v1248 = vpack.c.bf16 %v1153, %v1151
        %v1249 = vpack.c.bf16 %v1157, %v1155
        %v1258 = vunpack.c.l.b16 %v1242
        %v1259 = vunpack.c.h.b16 %v1242
        %v1260 = vunpack.c.l.b16 %v1243
        %v1261 = vunpack.c.h.b16 %v1243
        %v1262 = vunpack.c.l.b16 %v1244
        %v1263 = vunpack.c.h.b16 %v1244
        %v1264 = vunpack.c.l.b16 %v1245
        %v1265 = vunpack.c.h.b16 %v1245
        %v1266 = vunpack.c.l.b16 %v1246
        %v1267 = vunpack.c.h.b16 %v1246
        %v1268 = vunpack.c.l.b16 %v1247
        %v1269 = vunpack.c.h.b16 %v1247
        %v1270 = vunpack.c.l.b16 %v1248
        %v1271 = vunpack.c.h.b16 %v1248
        %v1272 = vunpack.c.l.b16 %v1249
        %v1273 = vunpack.c.h.b16 %v1249
        %v1274 = vpack.c.b16 %v1258, %v1258
        %v1275 = vpack.c.b16 %v1259, %v1259
        %v1276 = vpack.c.b16 %v1260, %v1260
        %v1277 = vpack.c.b16 %v1261, %v1261
        %v1278 = vpack.c.b16 %v1262, %v1262
        %v1279 = vpack.c.b16 %v1263, %v1263
        %v1280 = vpack.c.b16 %v1264, %v1264
        %v1281 = vpack.c.b16 %v1265, %v1265
        %v1282 = vpack.c.b16 %v1266, %v1266
        %v1283 = vpack.c.b16 %v1267, %v1267
        %v1284 = vpack.c.b16 %v1268, %v1268
        %v1285 = vpack.c.b16 %v1269, %v1269
        %v1286 = vpack.c.b16 %v1270, %v1270
        %v1287 = vpack.c.b16 %v1271, %v1271
        %v1288 = vpack.c.b16 %v1272, %v1272
        %v1289 = vpack.c.b16 %v1273, %v1273
        %1306 = vst [vmem:[#allocation3 + $0x4] sm:$0xf] %v1274
        %1307 = vst [vmem:[#allocation3 + $0x10] sm:$0xf] %v1275
        %1308 = vst [vmem:[#allocation3 + $0x1c] sm:$0xf] %v1276
        %1309 = vst [vmem:[#allocation3 + $0x28] sm:$0xf] %v1277
        %1310 = vst [vmem:[#allocation3 + $0x34] sm:$0xf] %v1278
        %1311 = vst [vmem:[#allocation3 + $0x40] sm:$0xf] %v1279
        %1312 = vst [vmem:[#allocation3 + $0x4c] sm:$0xf] %v1280
        %1313 = vst [vmem:[#allocation3 + $0x58] sm:$0xf] %v1281
        %1314 = vst [vmem:[#allocation3 + $0x64] sm:$0xf] %v1282
        %1315 = vst [vmem:[#allocation3 + $0x70] sm:$0xf] %v1283
        %1316 = vst [vmem:[#allocation3 + $0x7c] sm:$0xf] %v1284
        %1317 = vst [vmem:[#allocation3 + $0x88] sm:$0xf] %v1285
        %1318 = vst [vmem:[#allocation3 + $0x94] sm:$0xf] %v1286
        %1319 = vst [vmem:[#allocation3 + $0xa0] sm:$0xf] %v1287
        %1320 = vst [vmem:[#allocation3 + $0xac] sm:$0xf] %v1288
        %1321 = vst [vmem:[#allocation3 + $0xb8] sm:$0xf] %v1289
        %v1322 = vsel %vm441, %v1122, 0.0
        %v1323 = vsel %vm442, %v1123, 0.0
        %v1324 = vsel %vm443, %v1124, 0.0
        %v1325 = vsel %vm444, %v1125, 0.0
        %v1326 = vsel %vm445, %v1127, 0.0
        %v1327 = vsel %vm446, %v1129, 0.0
        %v1328 = vsel %vm447, %v1131, 0.0
        %v1329 = vsel %vm448, %v1133, 0.0
        %v1330 = vsel %vm449, %v1135, 0.0
        %v1331 = vsel %vm450, %v1137, 0.0
        %v1332 = vsel %vm451, %v1139, 0.0
        %v1333 = vsel %vm452, %v1141, 0.0
        %v1334 = vsel %vm453, %v1143, 0.0
        %v1335 = vsel %vm454, %v1145, 0.0
        %v1336 = vsel %vm455, %v1147, 0.0
        %v1337 = vsel %vm456, %v1149, 0.0
        %v1338 = vsel %vm457, %v1151, 0.0
        %v1339 = vsel %vm458, %v1153, 0.0
        %v1340 = vsel %vm459, %v1155, 0.0
        %v1341 = vsel %vm460, %v1157, 0.0
        %v1342 = vsel %vm461, %v1158, 0.0
        %v1343 = vsel %vm462, %v1159, 0.0
        %v1344 = vsel %vm463, %v1160, 0.0
        %v1345 = vsel %vm464, %v1161, 0.0
        %vm1371 = vcmask 1040384
        %v1372 = vrot.slane 0.0, 7
        %v1373 = vrot.slane %v1322, 7
        %v1374 = vsel %vm1371, %v1372, %v1373
        %v1375 = vrot.slane %v1323, 7
        %v1376 = vsel %vm1371, %v1373, %v1375
        %v1377 = vrot.slane %v1324, 7
        %v1378 = vsel %vm1371, %v1375, %v1377
        %v1379 = vrot.slane %v1325, 7
        %v1380 = vsel %vm1371, %v1377, %v1379
        %v1381 = vrot.slane %v1326, 7
        %v1382 = vsel %vm1371, %v1379, %v1381
        %v1383 = vrot.slane %v1327, 7
        %v1384 = vsel %vm1371, %v1381, %v1383
        %v1385 = vrot.slane %v1328, 7
        %v1386 = vsel %vm1371, %v1383, %v1385
        %v1387 = vrot.slane %v1329, 7
        %v1388 = vsel %vm1371, %v1385, %v1387
        %v1389 = vrot.slane %v1330, 7
        %v1390 = vsel %vm1371, %v1387, %v1389
        %v1391 = vrot.slane %v1331, 7
        %v1392 = vsel %vm1371, %v1389, %v1391
        %v1393 = vrot.slane %v1332, 7
        %v1394 = vsel %vm1371, %v1391, %v1393
        %v1395 = vrot.slane %v1333, 7
        %v1396 = vsel %vm1371, %v1393, %v1395
        %v1397 = vrot.slane %v1334, 7
        %v1398 = vsel %vm1371, %v1395, %v1397
        %v1399 = vrot.slane %v1335, 7
        %v1400 = vsel %vm1371, %v1397, %v1399
        %v1401 = vrot.slane %v1336, 7
        %v1402 = vsel %vm1371, %v1399, %v1401
        %v1403 = vrot.slane %v1337, 7
        %v1404 = vsel %vm1371, %v1401, %v1403
        %v1405 = vrot.slane %v1338, 7
        %v1406 = vsel %vm1371, %v1403, %v1405
        %v1407 = vrot.slane %v1339, 7
        %v1408 = vsel %vm1371, %v1405, %v1407
        %v1409 = vrot.slane %v1340, 7
        %v1410 = vsel %vm1371, %v1407, %v1409
        %v1411 = vrot.slane %v1341, 7
        %v1412 = vsel %vm1371, %v1409, %v1411
        %v1413 = vrot.slane %v1342, 7
        %v1414 = vsel %vm1371, %v1411, %v1413
        %v1415 = vrot.slane %v1343, 7
        %v1416 = vsel %vm1371, %v1413, %v1415
        %v1417 = vrot.slane %v1344, 7
        %v1418 = vsel %vm1371, %v1415, %v1417
        %v1419 = vrot.slane %v1345, 7
        %v1420 = vsel %vm1371, %v1417, %v1419
        %v1445 = vsel %vm489, %v1374, 0.0
        %v1446 = vsel %vm490, %v1376, 0.0
        %v1447 = vsel %vm491, %v1378, 0.0
        %v1448 = vsel %vm492, %v1380, 0.0
        %v1449 = vsel %vm493, %v1382, 0.0
        %v1450 = vsel %vm494, %v1384, 0.0
        %v1451 = vsel %vm495, %v1386, 0.0
        %v1452 = vsel %vm496, %v1388, 0.0
        %v1453 = vsel %vm497, %v1390, 0.0
        %v1454 = vsel %vm498, %v1392, 0.0
        %v1455 = vsel %vm499, %v1394, 0.0
        %v1456 = vsel %vm500, %v1396, 0.0
        %v1457 = vsel %vm501, %v1398, 0.0
        %v1458 = vsel %vm502, %v1400, 0.0
        %v1459 = vsel %vm503, %v1402, 0.0
        %v1460 = vsel %vm504, %v1404, 0.0
        %v1461 = vsel %vm505, %v1406, 0.0
        %v1462 = vsel %vm506, %v1408, 0.0
        %v1463 = vsel %vm507, %v1410, 0.0
        %v1464 = vsel %vm508, %v1412, 0.0
        %v1465 = vsel %vm509, %v1414, 0.0
        %v1466 = vsel %vm510, %v1416, 0.0
        %v1467 = vsel %vm511, %v1418, 0.0
        %v1468 = vsel %vm512, %v1420, 0.0
        %vm1469 = vcmask 1046528
        %v1470 = vrot.slane %v1322, 1
        %v1471 = vrot.slane %v1323, 1
        %v1472 = vsel %vm1469, %v1470, %v1471
        %v1473 = vrot.slane %v1324, 1
        %v1474 = vsel %vm1469, %v1471, %v1473
        %v1475 = vrot.slane %v1325, 1
        %v1476 = vsel %vm1469, %v1473, %v1475
        %v1477 = vrot.slane %v1326, 1
        %v1478 = vsel %vm1469, %v1475, %v1477
        %v1479 = vrot.slane %v1327, 1
        %v1480 = vsel %vm1469, %v1477, %v1479
        %v1481 = vrot.slane %v1328, 1
        %v1482 = vsel %vm1469, %v1479, %v1481
        %v1483 = vrot.slane %v1329, 1
        %v1484 = vsel %vm1469, %v1481, %v1483
        %v1485 = vrot.slane %v1330, 1
        %v1486 = vsel %vm1469, %v1483, %v1485
        %v1487 = vrot.slane %v1331, 1
        %v1488 = vsel %vm1469, %v1485, %v1487
        %v1489 = vrot.slane %v1332, 1
        %v1490 = vsel %vm1469, %v1487, %v1489
        %v1491 = vrot.slane %v1333, 1
        %v1492 = vsel %vm1469, %v1489, %v1491
        %v1493 = vrot.slane %v1334, 1
        %v1494 = vsel %vm1469, %v1491, %v1493
        %v1495 = vrot.slane %v1335, 1
        %v1496 = vsel %vm1469, %v1493, %v1495
        %v1497 = vrot.slane %v1336, 1
        %v1498 = vsel %vm1469, %v1495, %v1497
        %v1499 = vrot.slane %v1337, 1
        %v1500 = vsel %vm1469, %v1497, %v1499
        %v1501 = vrot.slane %v1338, 1
        %v1502 = vsel %vm1469, %v1499, %v1501
        %v1503 = vrot.slane %v1339, 1
        %v1504 = vsel %vm1469, %v1501, %v1503
        %v1505 = vrot.slane %v1340, 1
        %v1506 = vsel %vm1469, %v1503, %v1505
        %v1507 = vrot.slane %v1341, 1
        %v1508 = vsel %vm1469, %v1505, %v1507
        %v1509 = vrot.slane %v1342, 1
        %v1510 = vsel %vm1469, %v1507, %v1509
        %v1511 = vrot.slane %v1343, 1
        %v1512 = vsel %vm1469, %v1509, %v1511
        %v1513 = vrot.slane %v1344, 1
        %v1514 = vsel %vm1469, %v1511, %v1513
        %v1515 = vrot.slane %v1345, 1
        %v1516 = vsel %vm1469, %v1513, %v1515
        %v1517 = vrot.slane 0.0, 1
        %v1518 = vsel %vm1469, %v1515, %v1517
        %v1543 = vsel %vm537, %v1472, 0.0
        %v1544 = vsel %vm538, %v1474, 0.0
        %v1545 = vsel %vm539, %v1476, 0.0
        %v1546 = vsel %vm540, %v1478, 0.0
        %v1547 = vsel %vm541, %v1480, 0.0
        %v1548 = vsel %vm542, %v1482, 0.0
        %v1549 = vsel %vm543, %v1484, 0.0
        %v1550 = vsel %vm544, %v1486, 0.0
        %v1551 = vsel %vm545, %v1488, 0.0
        %v1552 = vsel %vm546, %v1490, 0.0
        %v1553 = vsel %vm547, %v1492, 0.0
        %v1554 = vsel %vm548, %v1494, 0.0
        %v1555 = vsel %vm549, %v1496, 0.0
        %v1556 = vsel %vm550, %v1498, 0.0
        %v1557 = vsel %vm551, %v1500, 0.0
        %v1558 = vsel %vm552, %v1502, 0.0
        %v1559 = vsel %vm553, %v1504, 0.0
        %v1560 = vsel %vm554, %v1506, 0.0
        %v1561 = vsel %vm555, %v1508, 0.0
        %v1562 = vsel %vm556, %v1510, 0.0
        %v1563 = vsel %vm557, %v1512, 0.0
        %v1564 = vsel %vm558, %v1514, 0.0
        %v1565 = vsel %vm559, %v1516, 0.0
        %v1566 = vsel %vm560, %v1518, 0.0
        %v1567 = vpack.c.bf16 %v1446, %v1445
        %v1568 = vpack.c.bf16 %v1448, %v1447
        %v1569 = vpack.c.bf16 %v1450, %v1449
        %v1570 = vpack.c.bf16 %v1452, %v1451
        %v1571 = vpack.c.bf16 %v1454, %v1453
        %v1572 = vpack.c.bf16 %v1456, %v1455
        %v1573 = vpack.c.bf16 %v1458, %v1457
        %v1574 = vpack.c.bf16 %v1460, %v1459
        %v1575 = vpack.c.bf16 %v1462, %v1461
        %v1576 = vpack.c.bf16 %v1464, %v1463
        %v1577 = vpack.c.bf16 %v1466, %v1465
        %v1578 = vpack.c.bf16 %v1468, %v1467
        %v1591 = vunpack.c.l.b16 %v1567
        %v1592 = vunpack.c.h.b16 %v1567
        %v1593 = vunpack.c.l.b16 %v1568
        %v1594 = vunpack.c.h.b16 %v1568
        %v1595 = vunpack.c.l.b16 %v1569
        %v1596 = vunpack.c.h.b16 %v1569
        %v1597 = vunpack.c.l.b16 %v1570
        %v1598 = vunpack.c.h.b16 %v1570
        %v1599 = vunpack.c.l.b16 %v1571
        %v1600 = vunpack.c.h.b16 %v1571
        %v1601 = vunpack.c.l.b16 %v1572
        %v1602 = vunpack.c.h.b16 %v1572
        %v1603 = vunpack.c.l.b16 %v1573
        %v1604 = vunpack.c.h.b16 %v1573
        %v1605 = vunpack.c.l.b16 %v1574
        %v1606 = vunpack.c.h.b16 %v1574
        %v1607 = vunpack.c.l.b16 %v1575
        %v1608 = vunpack.c.h.b16 %v1575
        %v1609 = vunpack.c.l.b16 %v1576
        %v1610 = vunpack.c.h.b16 %v1576
        %v1611 = vunpack.c.l.b16 %v1577
        %v1612 = vunpack.c.h.b16 %v1577
        %v1613 = vunpack.c.l.b16 %v1578
        %v1614 = vunpack.c.h.b16 %v1578
        %v1615 = vpack.c.b16 %v1591, %v1591
        %v1616 = vpack.c.b16 %v1592, %v1592
        %v1617 = vpack.c.b16 %v1593, %v1593
        %v1618 = vpack.c.b16 %v1594, %v1594
        %v1619 = vpack.c.b16 %v1595, %v1595
        %v1620 = vpack.c.b16 %v1596, %v1596
        %v1621 = vpack.c.b16 %v1597, %v1597
        %v1622 = vpack.c.b16 %v1598, %v1598
        %v1623 = vpack.c.b16 %v1599, %v1599
        %v1624 = vpack.c.b16 %v1600, %v1600
        %v1625 = vpack.c.b16 %v1601, %v1601
        %v1626 = vpack.c.b16 %v1602, %v1602
        %v1627 = vpack.c.b16 %v1603, %v1603
        %v1628 = vpack.c.b16 %v1604, %v1604
        %v1629 = vpack.c.b16 %v1605, %v1605
        %v1630 = vpack.c.b16 %v1606, %v1606
        %v1631 = vpack.c.b16 %v1607, %v1607
        %v1632 = vpack.c.b16 %v1608, %v1608
        %v1633 = vpack.c.b16 %v1609, %v1609
        %v1634 = vpack.c.b16 %v1610, %v1610
        %v1635 = vpack.c.b16 %v1611, %v1611
        %v1636 = vpack.c.b16 %v1612, %v1612
        %v1637 = vpack.c.b16 %v1613, %v1613
        %v1638 = vpack.c.b16 %v1614, %v1614
        %1663 = vst [vmem:[#allocation2 + $0x18] sm:$0xf] %v1615
        %1664 = vst [vmem:[#allocation2 + $0x24] sm:$0xf] %v1616
        %1665 = vst [vmem:[#allocation2 + $0x30] sm:$0xf] %v1617
        %1666 = vst [vmem:[#allocation2 + $0x3c] sm:$0xf] %v1618
        %1667 = vst [vmem:[#allocation2 + $0x48] sm:$0xf] %v1619
        %1668 = vst [vmem:[#allocation2 + $0x54] sm:$0xf] %v1620
        %1669 = vst [vmem:[#allocation2 + $0x60] sm:$0xf] %v1621
        %1670 = vst [vmem:[#allocation2 + $0x6c] sm:$0xf] %v1622
        %1671 = vst [vmem:[#allocation2 + $0x78] sm:$0xf] %v1623
        %1672 = vst [vmem:[#allocation2 + $0x84] sm:$0xf] %v1624
        %1673 = vst [vmem:[#allocation2 + $0x90] sm:$0xf] %v1625
        %1674 = vst [vmem:[#allocation2 + $0x9c] sm:$0xf] %v1626
        %1675 = vst [vmem:[#allocation2 + $0xa8] sm:$0xf] %v1627
        %1676 = vst [vmem:[#allocation2 + $0xb4] sm:$0xf] %v1628
        %1677 = vst [vmem:[#allocation2 + $0xc0] sm:$0xf] %v1629
        %1678 = vst [vmem:[#allocation2 + $0xcc] sm:$0xf] %v1630
        %1679 = vst [vmem:[#allocation2 + $0xd8] sm:$0xf] %v1631
        %1680 = vst [vmem:[#allocation2 + $0xe4] sm:$0xf] %v1632
        %1681 = vst [vmem:[#allocation2 + $0xf0] sm:$0xf] %v1633
        %1682 = vst [vmem:[#allocation2 + $0xfc] sm:$0xf] %v1634
        %1683 = vst [vmem:[#allocation2 + $0x108] sm:$0xf] %v1635
        %1684 = vst [vmem:[#allocation2 + $0x114] sm:$0xf] %v1636
        %1685 = vst [vmem:[#allocation2 + $0x120] sm:$0xf] %v1637
        %1686 = vst [vmem:[#allocation2 + $0x12c] sm:$0xf] %v1638
        %v1687 = vpack.c.bf16 %v1323, %v1322
        %v1688 = vpack.c.bf16 %v1325, %v1324
        %v1689 = vpack.c.bf16 %v1327, %v1326
        %v1690 = vpack.c.bf16 %v1329, %v1328
        %v1691 = vpack.c.bf16 %v1331, %v1330
        %v1692 = vpack.c.bf16 %v1333, %v1332
        %v1693 = vpack.c.bf16 %v1335, %v1334
        %v1694 = vpack.c.bf16 %v1337, %v1336
        %v1695 = vpack.c.bf16 %v1339, %v1338
        %v1696 = vpack.c.bf16 %v1341, %v1340
        %v1697 = vpack.c.bf16 %v1343, %v1342
        %v1698 = vpack.c.bf16 %v1345, %v1344
        %v1711 = vunpack.c.l.b16 %v1687
        %v1712 = vunpack.c.h.b16 %v1687
        %v1713 = vunpack.c.l.b16 %v1688
        %v1714 = vunpack.c.h.b16 %v1688
        %v1715 = vunpack.c.l.b16 %v1689
        %v1716 = vunpack.c.h.b16 %v1689
        %v1717 = vunpack.c.l.b16 %v1690
        %v1718 = vunpack.c.h.b16 %v1690
        %v1719 = vunpack.c.l.b16 %v1691
        %v1720 = vunpack.c.h.b16 %v1691
        %v1721 = vunpack.c.l.b16 %v1692
        %v1722 = vunpack.c.h.b16 %v1692
        %v1723 = vunpack.c.l.b16 %v1693
        %v1724 = vunpack.c.h.b16 %v1693
        %v1725 = vunpack.c.l.b16 %v1694
        %v1726 = vunpack.c.h.b16 %v1694
        %v1727 = vunpack.c.l.b16 %v1695
        %v1728 = vunpack.c.h.b16 %v1695
        %v1729 = vunpack.c.l.b16 %v1696
        %v1730 = vunpack.c.h.b16 %v1696
        %v1731 = vunpack.c.l.b16 %v1697
        %v1732 = vunpack.c.h.b16 %v1697
        %v1733 = vunpack.c.l.b16 %v1698
        %v1734 = vunpack.c.h.b16 %v1698
        %v1735 = vpack.c.b16 %v1711, %v1711
        %v1736 = vpack.c.b16 %v1712, %v1712
        %v1737 = vpack.c.b16 %v1713, %v1713
        %v1738 = vpack.c.b16 %v1714, %v1714
        %v1739 = vpack.c.b16 %v1715, %v1715
        %v1740 = vpack.c.b16 %v1716, %v1716
        %v1741 = vpack.c.b16 %v1717, %v1717
        %v1742 = vpack.c.b16 %v1718, %v1718
        %v1743 = vpack.c.b16 %v1719, %v1719
        %v1744 = vpack.c.b16 %v1720, %v1720
        %v1745 = vpack.c.b16 %v1721, %v1721
        %v1746 = vpack.c.b16 %v1722, %v1722
        %v1747 = vpack.c.b16 %v1723, %v1723
        %v1748 = vpack.c.b16 %v1724, %v1724
        %v1749 = vpack.c.b16 %v1725, %v1725
        %v1750 = vpack.c.b16 %v1726, %v1726
        %v1751 = vpack.c.b16 %v1727, %v1727
        %v1752 = vpack.c.b16 %v1728, %v1728
        %v1753 = vpack.c.b16 %v1729, %v1729
        %v1754 = vpack.c.b16 %v1730, %v1730
        %v1755 = vpack.c.b16 %v1731, %v1731
        %v1756 = vpack.c.b16 %v1732, %v1732
        %v1757 = vpack.c.b16 %v1733, %v1733
        %v1758 = vpack.c.b16 %v1734, %v1734
        %1783 = vst [vmem:[#allocation2 + $0x1c] sm:$0xf] %v1735
        %1784 = vst [vmem:[#allocation2 + $0x28] sm:$0xf] %v1736
        %1785 = vst [vmem:[#allocation2 + $0x34] sm:$0xf] %v1737
        %1786 = vst [vmem:[#allocation2 + $0x40] sm:$0xf] %v1738
        %1787 = vst [vmem:[#allocation2 + $0x4c] sm:$0xf] %v1739
        %1788 = vst [vmem:[#allocation2 + $0x58] sm:$0xf] %v1740
        %1789 = vst [vmem:[#allocation2 + $0x64] sm:$0xf] %v1741
        %1790 = vst [vmem:[#allocation2 + $0x70] sm:$0xf] %v1742
        %1791 = vst [vmem:[#allocation2 + $0x7c] sm:$0xf] %v1743
        %1792 = vst [vmem:[#allocation2 + $0x88] sm:$0xf] %v1744
        %1793 = vst [vmem:[#allocation2 + $0x94] sm:$0xf] %v1745
        %1794 = vst [vmem:[#allocation2 + $0xa0] sm:$0xf] %v1746
        %1795 = vst [vmem:[#allocation2 + $0xac] sm:$0xf] %v1747
        %1796 = vst [vmem:[#allocation2 + $0xb8] sm:$0xf] %v1748
        %1797 = vst [vmem:[#allocation2 + $0xc4] sm:$0xf] %v1749
        %1798 = vst [vmem:[#allocation2 + $0xd0] sm:$0xf] %v1750
        %1799 = vst [vmem:[#allocation2 + $0xdc] sm:$0xf] %v1751
        %1800 = vst [vmem:[#allocation2 + $0xe8] sm:$0xf] %v1752
        %1801 = vst [vmem:[#allocation2 + $0xf4] sm:$0xf] %v1753
        %1802 = vst [vmem:[#allocation2 + $0x100] sm:$0xf] %v1754
        %1803 = vst [vmem:[#allocation2 + $0x10c] sm:$0xf] %v1755
        %1804 = vst [vmem:[#allocation2 + $0x118] sm:$0xf] %v1756
        %1805 = vst [vmem:[#allocation2 + $0x124] sm:$0xf] %v1757
        %1806 = vst [vmem:[#allocation2 + $0x130] sm:$0xf] %v1758
        %v1807 = vpack.c.bf16 %v1544, %v1543
        %v1808 = vpack.c.bf16 %v1546, %v1545
        %v1809 = vpack.c.bf16 %v1548, %v1547
        %v1810 = vpack.c.bf16 %v1550, %v1549
        %v1811 = vpack.c.bf16 %v1552, %v1551
        %v1812 = vpack.c.bf16 %v1554, %v1553
        %v1813 = vpack.c.bf16 %v1556, %v1555
        %v1814 = vpack.c.bf16 %v1558, %v1557
        %v1815 = vpack.c.bf16 %v1560, %v1559
        %v1816 = vpack.c.bf16 %v1562, %v1561
        %v1817 = vpack.c.bf16 %v1564, %v1563
        %v1818 = vpack.c.bf16 %v1566, %v1565
        %v1831 = vunpack.c.l.b16 %v1807
        %v1832 = vunpack.c.h.b16 %v1807
        %v1833 = vunpack.c.l.b16 %v1808
        %v1834 = vunpack.c.h.b16 %v1808
        %v1835 = vunpack.c.l.b16 %v1809
        %v1836 = vunpack.c.h.b16 %v1809
        %v1837 = vunpack.c.l.b16 %v1810
        %v1838 = vunpack.c.h.b16 %v1810
        %v1839 = vunpack.c.l.b16 %v1811
        %v1840 = vunpack.c.h.b16 %v1811
        %v1841 = vunpack.c.l.b16 %v1812
        %v1842 = vunpack.c.h.b16 %v1812
        %v1843 = vunpack.c.l.b16 %v1813
        %v1844 = vunpack.c.h.b16 %v1813
        %v1845 = vunpack.c.l.b16 %v1814
        %v1846 = vunpack.c.h.b16 %v1814
        %v1847 = vunpack.c.l.b16 %v1815
        %v1848 = vunpack.c.h.b16 %v1815
        %v1849 = vunpack.c.l.b16 %v1816
        %v1850 = vunpack.c.h.b16 %v1816
        %v1851 = vunpack.c.l.b16 %v1817
        %v1852 = vunpack.c.h.b16 %v1817
        %v1853 = vunpack.c.l.b16 %v1818
        %v1854 = vunpack.c.h.b16 %v1818
        %v1855 = vpack.c.b16 %v1831, %v1831
        %v1856 = vpack.c.b16 %v1832, %v1832
        %v1857 = vpack.c.b16 %v1833, %v1833
        %v1858 = vpack.c.b16 %v1834, %v1834
        %v1859 = vpack.c.b16 %v1835, %v1835
        %v1860 = vpack.c.b16 %v1836, %v1836
        %v1861 = vpack.c.b16 %v1837, %v1837
        %v1862 = vpack.c.b16 %v1838, %v1838
        %v1863 = vpack.c.b16 %v1839, %v1839
        %v1864 = vpack.c.b16 %v1840, %v1840
        %v1865 = vpack.c.b16 %v1841, %v1841
        %v1866 = vpack.c.b16 %v1842, %v1842
        %v1867 = vpack.c.b16 %v1843, %v1843
        %v1868 = vpack.c.b16 %v1844, %v1844
        %v1869 = vpack.c.b16 %v1845, %v1845
        %v1870 = vpack.c.b16 %v1846, %v1846
        %v1871 = vpack.c.b16 %v1847, %v1847
        %v1872 = vpack.c.b16 %v1848, %v1848
        %v1873 = vpack.c.b16 %v1849, %v1849
        %v1874 = vpack.c.b16 %v1850, %v1850
        %v1875 = vpack.c.b16 %v1851, %v1851
        %v1876 = vpack.c.b16 %v1852, %v1852
        %v1877 = vpack.c.b16 %v1853, %v1853
        %v1878 = vpack.c.b16 %v1854, %v1854
        %1903 = vst [vmem:[#allocation2 + $0x20] sm:$0xf] %v1855
        %1904 = vst [vmem:[#allocation2 + $0x2c] sm:$0xf] %v1856
        %1905 = vst [vmem:[#allocation2 + $0x38] sm:$0xf] %v1857
        %1906 = vst [vmem:[#allocation2 + $0x44] sm:$0xf] %v1858
        %1907 = vst [vmem:[#allocation2 + $0x50] sm:$0xf] %v1859
        %1908 = vst [vmem:[#allocation2 + $0x5c] sm:$0xf] %v1860
        %1909 = vst [vmem:[#allocation2 + $0x68] sm:$0xf] %v1861
        %1910 = vst [vmem:[#allocation2 + $0x74] sm:$0xf] %v1862
        %1911 = vst [vmem:[#allocation2 + $0x80] sm:$0xf] %v1863
        %1912 = vst [vmem:[#allocation2 + $0x8c] sm:$0xf] %v1864
        %1913 = vst [vmem:[#allocation2 + $0x98] sm:$0xf] %v1865
        %1914 = vst [vmem:[#allocation2 + $0xa4] sm:$0xf] %v1866
        %1915 = vst [vmem:[#allocation2 + $0xb0] sm:$0xf] %v1867
        %1916 = vst [vmem:[#allocation2 + $0xbc] sm:$0xf] %v1868
        %1917 = vst [vmem:[#allocation2 + $0xc8] sm:$0xf] %v1869
        %1918 = vst [vmem:[#allocation2 + $0xd4] sm:$0xf] %v1870
        %1919 = vst [vmem:[#allocation2 + $0xe0] sm:$0xf] %v1871
        %1920 = vst [vmem:[#allocation2 + $0xec] sm:$0xf] %v1872
        %1921 = vst [vmem:[#allocation2 + $0xf8] sm:$0xf] %v1873
        %1922 = vst [vmem:[#allocation2 + $0x104] sm:$0xf] %v1874
        %1923 = vst [vmem:[#allocation2 + $0x110] sm:$0xf] %v1875
        %1924 = vst [vmem:[#allocation2 + $0x11c] sm:$0xf] %v1876
        %1925 = vst [vmem:[#allocation2 + $0x128] sm:$0xf] %v1877
        %1926 = vst [vmem:[#allocation2 + $0x134] sm:$0xf] %v1878
        %v1927 = vld [vmem:[#allocation2] sm:$0xff]
        %v1928 = vld [vmem:[#allocation2 + $0x8] sm:$0xf]
        %v1929 = vld [vmem:[#allocation2 + $0xc] sm:$0xff]
        %v1930 = vld [vmem:[#allocation2 + $0x14] sm:$0xf]
        %v1931 = vld [vmem:[#allocation2 + $0x18] sm:$0xff]
        %v1932 = vld [vmem:[#allocation2 + $0x20] sm:$0xf]
        %v1933 = vld [vmem:[#allocation2 + $0x24] sm:$0xff]
        %v1934 = vld [vmem:[#allocation2 + $0x2c] sm:$0xf]
        %v1935 = vld [vmem:[#allocation2 + $0x30] sm:$0xff]
        %v1936 = vld [vmem:[#allocation2 + $0x38] sm:$0xf]
        %v1937 = vld [vmem:[#allocation2 + $0x3c] sm:$0xff]
        %v1938 = vld [vmem:[#allocation2 + $0x44] sm:$0xf]
        %v1939 = vld [vmem:[#allocation2 + $0x48] sm:$0xff]
        %v1940 = vld [vmem:[#allocation2 + $0x50] sm:$0xf]
        %v1941 = vld [vmem:[#allocation2 + $0x54] sm:$0xff]
        %v1942 = vld [vmem:[#allocation2 + $0x5c] sm:$0xf]
        %v1943 = vld [vmem:[#allocation2 + $0x60] sm:$0xff]
        %v1944 = vld [vmem:[#allocation2 + $0x68] sm:$0xf]
        %v1945 = vld [vmem:[#allocation2 + $0x6c] sm:$0xff]
        %v1946 = vld [vmem:[#allocation2 + $0x74] sm:$0xf]
        %v1947 = vld [vmem:[#allocation2 + $0x78] sm:$0xff]
        %v1948 = vld [vmem:[#allocation2 + $0x80] sm:$0xf]
        %v1949 = vld [vmem:[#allocation2 + $0x84] sm:$0xff]
        %v1950 = vld [vmem:[#allocation2 + $0x8c] sm:$0xf]
        %v1951 = vld [vmem:[#allocation2 + $0x90] sm:$0xff]
        %v1952 = vld [vmem:[#allocation2 + $0x98] sm:$0xf]
        %v1953 = vld [vmem:[#allocation2 + $0x9c] sm:$0xff]
        %v1954 = vld [vmem:[#allocation2 + $0xa4] sm:$0xf]
        %v1955 = vld [vmem:[#allocation2 + $0xa8] sm:$0xff]
        %v1956 = vld [vmem:[#allocation2 + $0xb0] sm:$0xf]
        %v1957 = vld [vmem:[#allocation2 + $0xb4] sm:$0xff]
        %v1958 = vld [vmem:[#allocation2 + $0xbc] sm:$0xf]
        %v1959 = vld [vmem:[#allocation2 + $0xc0] sm:$0xff]
        %v1960 = vld [vmem:[#allocation2 + $0xc8] sm:$0xf]
        %v1961 = vld [vmem:[#allocation2 + $0xcc] sm:$0xff]
        %v1962 = vld [vmem:[#allocation2 + $0xd4] sm:$0xf]
        %v1963 = vld [vmem:[#allocation2 + $0xd8] sm:$0xff]
        %v1964 = vld [vmem:[#allocation2 + $0xe0] sm:$0xf]
        %v1965 = vld [vmem:[#allocation2 + $0xe4] sm:$0xff]
        %v1966 = vld [vmem:[#allocation2 + $0xec] sm:$0xf]
        %v1967 = vld [vmem:[#allocation2 + $0xf0] sm:$0xff]
        %v1968 = vld [vmem:[#allocation2 + $0xf8] sm:$0xf]
        %v1969 = vld [vmem:[#allocation2 + $0xfc] sm:$0xff]
        %v1970 = vld [vmem:[#allocation2 + $0x104] sm:$0xf]
        %v1971 = vld [vmem:[#allocation2 + $0x108] sm:$0xff]
        %v1972 = vld [vmem:[#allocation2 + $0x110] sm:$0xf]
        %v1973 = vld [vmem:[#allocation2 + $0x114] sm:$0xff]
        %v1974 = vld [vmem:[#allocation2 + $0x11c] sm:$0xf]
        %v1975 = vld [vmem:[#allocation4] sm:$0xf]
        %v1976 = vld [vmem:[#allocation4 + $0x4] sm:$0xf]
        %v1977 = vld [vmem:[#allocation4 + $0x8] sm:$0xf]
        %v1978 = vld [vmem:[#allocation4 + $0xc] sm:$0xf]
        %v1979 = vld [vmem:[#allocation4 + $0x10] sm:$0xf]
        %v1980 = vld [vmem:[#allocation4 + $0x14] sm:$0xf]
        %v1981 = vld [vmem:[#allocation4 + $0x18] sm:$0xf]
        %v1982 = vld [vmem:[#allocation4 + $0x1c] sm:$0xf]
        %v1983 = vld [vmem:[#allocation4 + $0x20] sm:$0xf]
        %v1984 = vld [vmem:[#allocation4 + $0x24] sm:$0xf]
        %v1985 = vld [vmem:[#allocation4 + $0x28] sm:$0xf]
        %v1986 = vld [vmem:[#allocation4 + $0x2c] sm:$0xf]
        %v1987 = vld [vmem:[#allocation4 + $0x30] sm:$0xf]
        %v1988 = vld [vmem:[#allocation4 + $0x34] sm:$0xf]
        %v1989 = vld [vmem:[#allocation4 + $0x38] sm:$0xf]
        %v1990 = vld [vmem:[#allocation4 + $0x3c] sm:$0xf]
        %v1991 = vld [vmem:[#allocation4 + $0x40] sm:$0xf]
        %v1992 = vld [vmem:[#allocation4 + $0x44] sm:$0xf]
        %v1993 = vld [vmem:[#allocation4 + $0x48] sm:$0xf]
        %v1994 = vld [vmem:[#allocation4 + $0x4c] sm:$0xf]
        %v1995 = vld [vmem:[#allocation4 + $0x50] sm:$0xf]
        %v1996 = vld [vmem:[#allocation4 + $0x54] sm:$0xf]
        %v1997 = vld [vmem:[#allocation4 + $0x58] sm:$0xf]
        %v1998 = vld [vmem:[#allocation4 + $0x5c] sm:$0xf]
        %v1999 = vld [vmem:[#allocation4 + $0x60] sm:$0xf]
        %v2000 = vld [vmem:[#allocation4 + $0x64] sm:$0xf]
        %v2001 = vld [vmem:[#allocation4 + $0x68] sm:$0xf]
        %v2002 = vld [vmem:[#allocation4 + $0x6c] sm:$0xf]
        %v2003 = vld [vmem:[#allocation4 + $0x70] sm:$0xf]
        %v2004 = vld [vmem:[#allocation4 + $0x74] sm:$0xf]
        %v2005 = vld [vmem:[#allocation4 + $0x78] sm:$0xf]
        %v2006 = vld [vmem:[#allocation4 + $0x7c] sm:$0xf]
        %v2007 = vld [vmem:[#allocation4 + $0x80] sm:$0xf]
        %v2008 = vld [vmem:[#allocation4 + $0x84] sm:$0xf]
        %v2009 = vld [vmem:[#allocation4 + $0x88] sm:$0xf]
        %v2010 = vld [vmem:[#allocation4 + $0x8c] sm:$0xf]
        %v2011 = vld [vmem:[#allocation4 + $0x90] sm:$0xf]
        %v2012 = vld [vmem:[#allocation4 + $0x94] sm:$0xf]
        %v2013 = vld [vmem:[#allocation4 + $0x98] sm:$0xf]
        %v2014 = vld [vmem:[#allocation4 + $0x9c] sm:$0xf]
        %v2015 = vld [vmem:[#allocation4 + $0xa0] sm:$0xf]
        %v2016 = vld [vmem:[#allocation4 + $0xa4] sm:$0xf]
        %v2017 = vld [vmem:[#allocation4 + $0xa8] sm:$0xf]
        %v2018 = vld [vmem:[#allocation4 + $0xac] sm:$0xf]
        %v2019 = vld [vmem:[#allocation4 + $0xb0] sm:$0xf]
        %v2020 = vld [vmem:[#allocation4 + $0xb4] sm:$0xf]
        %v2021 = vld [vmem:[#allocation4 + $0xb8] sm:$0xf]
        %v2022 = vld [vmem:[#allocation4 + $0xbc] sm:$0xf]
        %v2023 = vld [vmem:[#allocation2 + $0x120] sm:$0xff]
        %v2024 = vld [vmem:[#allocation2 + $0x128] sm:$0xf]
        %v2025 = vld [vmem:[#allocation2 + $0x12c] sm:$0xff]
        %v2026 = vld [vmem:[#allocation2 + $0x134] sm:$0xf]
        %s2027 = scalar_lea.vmem [#allocation4], 192
        %v2028 = vld [vmem:[%s2027] sm:$0xf]
        %v2029 = vld [vmem:[%s2027 + $0x4] sm:$0xf]
        %v2030 = vld [vmem:[%s2027 + $0x8] sm:$0xf]
        %v2031 = vld [vmem:[%s2027 + $0xc] sm:$0xf]
        %v2032 = vld [vmem:[%s2027 + $0x10] sm:$0xf]
        %v2033 = vld [vmem:[%s2027 + $0x14] sm:$0xf]
        %v2034 = vld [vmem:[%s2027 + $0x18] sm:$0xf]
        %v2035 = vld [vmem:[%s2027 + $0x1c] sm:$0xf]
        %v2036 = vld [vmem:[%s2027 + $0x20] sm:$0xf]
        %v2037 = vld [vmem:[%s2027 + $0x24] sm:$0xf]
        %v2038 = vld [vmem:[%s2027 + $0x28] sm:$0xf]
        %v2039 = vld [vmem:[%s2027 + $0x2c] sm:$0xf]
        %v2040 = vld [vmem:[%s2027 + $0x30] sm:$0xf]
        %v2041 = vld [vmem:[%s2027 + $0x34] sm:$0xf]
        %v2042 = vld [vmem:[%s2027 + $0x38] sm:$0xf]
        %v2043 = vld [vmem:[%s2027 + $0x3c] sm:$0xf]
        %v2044 = vld [vmem:[%s2027 + $0x40] sm:$0xf]
        %v2045 = vld [vmem:[%s2027 + $0x44] sm:$0xf]
        %v2046 = vld [vmem:[%s2027 + $0x48] sm:$0xf]
        %v2047 = vld [vmem:[%s2027 + $0x4c] sm:$0xf]
        %v2048 = vld [vmem:[%s2027 + $0x50] sm:$0xf]
        %v2049 = vld [vmem:[%s2027 + $0x54] sm:$0xf]
        %v2050 = vld [vmem:[%s2027 + $0x58] sm:$0xf]
        %v2051 = vld [vmem:[%s2027 + $0x5c] sm:$0xf]
        %v2052 = vld [vmem:[%s2027 + $0x60] sm:$0xf]
        %v2053 = vld [vmem:[%s2027 + $0x64] sm:$0xf]
        %v2054 = vld [vmem:[%s2027 + $0x68] sm:$0xf]
        %v2055 = vld [vmem:[%s2027 + $0x6c] sm:$0xf]
        %v2056 = vld [vmem:[%s2027 + $0x70] sm:$0xf]
        %v2057 = vld [vmem:[%s2027 + $0x74] sm:$0xf]
        %v2058 = vld [vmem:[%s2027 + $0x78] sm:$0xf]
        %v2059 = vld [vmem:[%s2027 + $0x7c] sm:$0xf]
        %v2060 = vld [vmem:[%s2027 + $0x80] sm:$0xf]
        %v2061 = vld [vmem:[%s2027 + $0x84] sm:$0xf]
        %v2062 = vld [vmem:[%s2027 + $0x88] sm:$0xf]
        %v2063 = vld [vmem:[%s2027 + $0x8c] sm:$0xf]
        %v2064 = vld [vmem:[%s2027 + $0x90] sm:$0xf]
        %v2065 = vld [vmem:[%s2027 + $0x94] sm:$0xf]
        %v2066 = vld [vmem:[%s2027 + $0x98] sm:$0xf]
        %v2067 = vld [vmem:[%s2027 + $0x9c] sm:$0xf]
        %v2068 = vld [vmem:[%s2027 + $0xa0] sm:$0xf]
        %v2069 = vld [vmem:[%s2027 + $0xa4] sm:$0xf]
        %v2070 = vld [vmem:[%s2027 + $0xa8] sm:$0xf]
        %v2071 = vld [vmem:[%s2027 + $0xac] sm:$0xf]
        %v2072 = vld [vmem:[%s2027 + $0xb0] sm:$0xf]
        %v2073 = vld [vmem:[%s2027 + $0xb4] sm:$0xf]
        %v2074 = vld [vmem:[%s2027 + $0xb8] sm:$0xf]
        %v2075 = vld [vmem:[%s2027 + $0xbc] sm:$0xf]
        %v2124 = vunpack.c.l.b16 %v1931
        %v2125 = vunpack.c.h.b16 %v1931
        %v2126 = vunpack.c.l.b16 %v1932
        %v2127 = vunpack.c.l.b16 %v1933
        %v2128 = vunpack.c.h.b16 %v1933
        %v2129 = vunpack.c.l.b16 %v1934
        %v2130 = vunpack.c.l.b16 %v1935
        %v2131 = vunpack.c.h.b16 %v1935
        %v2132 = vunpack.c.l.b16 %v1936
        %v2133 = vunpack.c.l.b16 %v1937
        %v2134 = vunpack.c.h.b16 %v1937
        %v2135 = vunpack.c.l.b16 %v1938
        %v2136 = vunpack.c.l.b16 %v1939
        %v2137 = vunpack.c.h.b16 %v1939
        %v2138 = vunpack.c.l.b16 %v1940
        %v2139 = vunpack.c.l.b16 %v1941
        %v2140 = vunpack.c.h.b16 %v1941
        %v2141 = vunpack.c.l.b16 %v1942
        %v2142 = vunpack.c.l.b16 %v1943
        %v2143 = vunpack.c.h.b16 %v1943
        %v2144 = vunpack.c.l.b16 %v1944
        %v2145 = vunpack.c.l.b16 %v1945
        %v2146 = vunpack.c.h.b16 %v1945
        %v2147 = vunpack.c.l.b16 %v1946
        %v2148 = vunpack.c.l.b16 %v1947
        %v2149 = vunpack.c.h.b16 %v1947
        %v2150 = vunpack.c.l.b16 %v1948
        %v2151 = vunpack.c.l.b16 %v1949
        %v2152 = vunpack.c.h.b16 %v1949
        %v2153 = vunpack.c.l.b16 %v1950
        %v2154 = vunpack.c.l.b16 %v1951
        %v2155 = vunpack.c.h.b16 %v1951
        %v2156 = vunpack.c.l.b16 %v1952
        %v2157 = vunpack.c.l.b16 %v1953
        %v2158 = vunpack.c.h.b16 %v1953
        %v2159 = vunpack.c.l.b16 %v1954
        %v2160 = vunpack.c.l.b16 %v1955
        %v2161 = vunpack.c.h.b16 %v1955
        %v2162 = vunpack.c.l.b16 %v1956
        %v2163 = vunpack.c.l.b16 %v1957
        %v2164 = vunpack.c.h.b16 %v1957
        %v2165 = vunpack.c.l.b16 %v1958
        %v2166 = vunpack.c.l.b16 %v1959
        %v2167 = vunpack.c.h.b16 %v1959
        %v2168 = vunpack.c.l.b16 %v1960
        %v2169 = vunpack.c.l.b16 %v1961
        %v2170 = vunpack.c.h.b16 %v1961
        %v2171 = vunpack.c.l.b16 %v1962
        %v2172 = vunpack.c.l.b16 %v1963
        %v2173 = vunpack.c.h.b16 %v1963
        %v2174 = vunpack.c.l.b16 %v1964
        %v2175 = vunpack.c.l.b16 %v1965
        %v2176 = vunpack.c.h.b16 %v1965
        %v2177 = vunpack.c.l.b16 %v1966
        %v2178 = vunpack.c.l.b16 %v1967
        %v2179 = vunpack.c.h.b16 %v1967
        %v2180 = vunpack.c.l.b16 %v1968
        %v2181 = vunpack.c.l.b16 %v1969
        %v2182 = vunpack.c.h.b16 %v1969
        %v2183 = vunpack.c.l.b16 %v1970
        %v2184 = vunpack.c.l.b16 %v1971
        %v2185 = vunpack.c.h.b16 %v1971
        %v2186 = vunpack.c.l.b16 %v1972
        %v2187 = vunpack.c.l.b16 %v1973
        %v2188 = vunpack.c.h.b16 %v1973
        %v2189 = vunpack.c.l.b16 %v1974
        %v2190 = vunpack.c.l.b16 %v2023
        %v2191 = vunpack.c.h.b16 %v2023
        %v2192 = vunpack.c.l.b16 %v2024
        %v2193 = vunpack.c.l.b16 %v2025
        %v2194 = vunpack.c.h.b16 %v2025
        %v2195 = vunpack.c.l.b16 %v2026
        %v2196 = vpack.c.b16 %v2127, %v2124
        %v2197 = vpack.c.b16 %v2128, %v2125
        %v2198 = vpack.c.b16 %v2129, %v2126
        %v2199 = vpack.c.b16 %v2133, %v2130
        %v2200 = vpack.c.b16 %v2134, %v2131
        %v2201 = vpack.c.b16 %v2135, %v2132
        %v2202 = vpack.c.b16 %v2139, %v2136
        %v2203 = vpack.c.b16 %v2140, %v2137
        %v2204 = vpack.c.b16 %v2141, %v2138
        %v2205 = vpack.c.b16 %v2145, %v2142
        %v2206 = vpack.c.b16 %v2146, %v2143
        %v2207 = vpack.c.b16 %v2147, %v2144
        %v2208 = vpack.c.b16 %v2151, %v2148
        %v2209 = vpack.c.b16 %v2152, %v2149
        %v2210 = vpack.c.b16 %v2153, %v2150
        %v2211 = vpack.c.b16 %v2157, %v2154
        %v2212 = vpack.c.b16 %v2158, %v2155
        %v2213 = vpack.c.b16 %v2159, %v2156
        %v2214 = vpack.c.b16 %v2163, %v2160
        %v2215 = vpack.c.b16 %v2164, %v2161
        %v2216 = vpack.c.b16 %v2165, %v2162
        %v2217 = vpack.c.b16 %v2169, %v2166
        %v2218 = vpack.c.b16 %v2170, %v2167
        %v2219 = vpack.c.b16 %v2171, %v2168
        %v2220 = vpack.c.b16 %v2175, %v2172
        %v2221 = vpack.c.b16 %v2176, %v2173
        %v2222 = vpack.c.b16 %v2177, %v2174
        %v2223 = vpack.c.b16 %v2181, %v2178
        %v2224 = vpack.c.b16 %v2182, %v2179
        %v2225 = vpack.c.b16 %v2183, %v2180
        %v2226 = vpack.c.b16 %v2187, %v2184
        %v2227 = vpack.c.b16 %v2188, %v2185
        %v2228 = vpack.c.b16 %v2189, %v2186
        %v2229 = vpack.c.b16 %v2193, %v2190
        %v2230 = vpack.c.b16 %v2194, %v2191
        %v2231 = vpack.c.b16 %v2195, %v2192
        %v2316 = vunpack.c.l.b16 %v2028
        %v2317 = vunpack.c.l.b16 %v2029
        %v2318 = vunpack.c.l.b16 %v2030
        %v2319 = vunpack.c.l.b16 %v2031
        %v2320 = vunpack.c.l.b16 %v2032
        %v2321 = vunpack.c.l.b16 %v2033
        %v2322 = vunpack.c.l.b16 %v2034
        %v2323 = vunpack.c.l.b16 %v2035
        %v2324 = vunpack.c.l.b16 %v2036
        %v2325 = vunpack.c.l.b16 %v2037
        %v2326 = vunpack.c.l.b16 %v2038
        %v2327 = vunpack.c.l.b16 %v2039
        %v2328 = vunpack.c.l.b16 %v2040
        %v2329 = vunpack.c.l.b16 %v2041
        %v2330 = vunpack.c.l.b16 %v2042
        %v2331 = vunpack.c.l.b16 %v2043
        %v2332 = vunpack.c.l.b16 %v2044
        %v2333 = vunpack.c.l.b16 %v2045
        %v2334 = vunpack.c.l.b16 %v2046
        %v2335 = vunpack.c.l.b16 %v2047
        %v2336 = vunpack.c.l.b16 %v2048
        %v2337 = vunpack.c.l.b16 %v2049
        %v2338 = vunpack.c.l.b16 %v2050
        %v2339 = vunpack.c.l.b16 %v2051
        %v2340 = vunpack.c.l.b16 %v2052
        %v2341 = vunpack.c.l.b16 %v2053
        %v2342 = vunpack.c.l.b16 %v2054
        %v2343 = vunpack.c.l.b16 %v2055
        %v2344 = vunpack.c.l.b16 %v2056
        %v2345 = vunpack.c.l.b16 %v2057
        %v2346 = vunpack.c.l.b16 %v2058
        %v2347 = vunpack.c.l.b16 %v2059
        %v2348 = vunpack.c.l.b16 %v2060
        %v2349 = vunpack.c.l.b16 %v2061
        %v2350 = vunpack.c.l.b16 %v2062
        %v2351 = vunpack.c.l.b16 %v2063
        %v2352 = vunpack.c.l.b16 %v2064
        %v2353 = vunpack.c.l.b16 %v2065
        %v2354 = vunpack.c.l.b16 %v2066
        %v2355 = vunpack.c.l.b16 %v2067
        %v2356 = vunpack.c.l.b16 %v2068
        %v2357 = vunpack.c.l.b16 %v2069
        %v2358 = vunpack.c.l.b16 %v2070
        %v2359 = vunpack.c.l.b16 %v2071
        %v2360 = vunpack.c.l.b16 %v2072
        %v2361 = vunpack.c.l.b16 %v2073
        %v2362 = vunpack.c.l.b16 %v2074
        %v2363 = vunpack.c.l.b16 %v2075
        %v2364 = vpack.c.b16 %v2317, %v2316
        %v2365 = vpack.c.b16 %v2319, %v2318
        %v2366 = vpack.c.b16 %v2321, %v2320
        %v2367 = vpack.c.b16 %v2323, %v2322
        %v2368 = vpack.c.b16 %v2325, %v2324
        %v2369 = vpack.c.b16 %v2327, %v2326
        %v2370 = vpack.c.b16 %v2329, %v2328
        %v2371 = vpack.c.b16 %v2331, %v2330
        %v2372 = vpack.c.b16 %v2333, %v2332
        %v2373 = vpack.c.b16 %v2335, %v2334
        %v2374 = vpack.c.b16 %v2337, %v2336
        %v2375 = vpack.c.b16 %v2339, %v2338
        %v2376 = vpack.c.b16 %v2341, %v2340
        %v2377 = vpack.c.b16 %v2343, %v2342
        %v2378 = vpack.c.b16 %v2345, %v2344
        %v2379 = vpack.c.b16 %v2347, %v2346
        %v2380 = vpack.c.b16 %v2349, %v2348
        %v2381 = vpack.c.b16 %v2351, %v2350
        %v2382 = vpack.c.b16 %v2353, %v2352
        %v2383 = vpack.c.b16 %v2355, %v2354
        %v2384 = vpack.c.b16 %v2357, %v2356
        %v2385 = vpack.c.b16 %v2359, %v2358
        %v2386 = vpack.c.b16 %v2361, %v2360
        %v2387 = vpack.c.b16 %v2363, %v2362
        %2412 = vmatprep.subr.bf16.mxu0 0
        %2413 = vmatpush1.bf16.msra.mxu0 %v2371
        %2414 = vmatprep.subr.bf16.mxu0 0
        %2415 = vmatpush1.bf16.msra.mxu0 %v2370
        %2416 = vmatprep.subr.bf16.mxu0 0
        %2417 = vmatpush1.bf16.msra.mxu0 %v2369
        %2418 = vmatprep.subr.bf16.mxu0 0
        %2419 = vmatpush1.bf16.msra.mxu0 %v2368
        %2420 = vmatprep.subr.bf16.mxu0 0
        %2421 = vmatpush1.bf16.msra.mxu0 %v2367
        %2422 = vmatprep.subr.bf16.mxu0 0
        %2423 = vmatpush1.bf16.msra.mxu0 %v2366
        %2424 = vmatprep.subr.bf16.mxu0 0
        %2425 = vmatpush1.bf16.msra.mxu0 %v2365
        %2426 = vmatprep.subr.bf16.mxu0 0
        %2427 = vmatpush1.bf16.msra.mxu0 %v2364
        %2428 = vmatprep.subr.bf16.mxu0 0
        %2429 = vmatpush2.bf16.msra.mxu0 %v2379
        %2430 = vmatprep.subr.bf16.mxu0 0
        %2431 = vmatpush2.bf16.msra.mxu0 %v2378
        %2432 = vmatprep.subr.bf16.mxu0 0
        %2433 = vmatpush2.bf16.msra.mxu0 %v2377
        %2434 = vmatprep.subr.bf16.mxu0 0
        %2435 = vmatpush2.bf16.msra.mxu0 %v2376
        %2436 = vmatprep.subr.bf16.mxu0 0
        %2437 = vmatpush2.bf16.msra.mxu0 %v2375
        %2438 = vmatprep.subr.bf16.mxu0 0
        %2439 = vmatpush2.bf16.msra.mxu0 %v2374
        %2440 = vmatprep.subr.bf16.mxu0 0
        %2441 = vmatpush2.bf16.msra.mxu0 %v2373
        %2442 = vmatprep.subr.bf16.mxu0 0
        %2443 = vmatpush2.bf16.msra.mxu0 %v2372
        %2444 = vmatprep.mubr.bf16.mxu0 %v2197
        %2445 = vmatmul.mubr.bf16.gmra.mxu0 %v2196
        %v2446 = vpop.f32.mrf.mxu0
        %v2447 = vadd.f32 0.0, %v2446
        %v2448 = vpop.f32.mrf.mxu0
        %v2449 = vpop.f32.mrf.mxu0
        %v2450 = vadd.f32 0.0, %v2449
        %v2451 = vpop.f32.mrf.mxu0
        %2452 = vmatprep.mubr.bf16.mxu0 %v2200
        %2453 = vmatmul.mubr.bf16.gmra.mxu0 %v2199
        %v2454 = vpop.f32.mrf.mxu0
        %v2455 = vadd.f32 0.0, %v2454
        %v2456 = vpop.f32.mrf.mxu0
        %v2457 = vpop.f32.mrf.mxu0
        %v2458 = vadd.f32 0.0, %v2457
        %v2459 = vpop.f32.mrf.mxu0
        %2460 = vmatprep.mubr.bf16.mxu0 %v2203
        %2461 = vmatmul.mubr.bf16.gmra.mxu0 %v2202
        %v2462 = vpop.f32.mrf.mxu0
        %v2463 = vadd.f32 0.0, %v2462
        %v2464 = vpop.f32.mrf.mxu0
        %v2465 = vpop.f32.mrf.mxu0
        %v2466 = vadd.f32 0.0, %v2465
        %v2467 = vpop.f32.mrf.mxu0
        %2468 = vmatprep.mubr.bf16.mxu0 %v2206
        %2469 = vmatmul.mubr.bf16.gmra.mxu0 %v2205
        %v2470 = vpop.f32.mrf.mxu0
        %v2471 = vadd.f32 0.0, %v2470
        %v2472 = vpop.f32.mrf.mxu0
        %v2473 = vpop.f32.mrf.mxu0
        %v2474 = vadd.f32 0.0, %v2473
        %v2475 = vpop.f32.mrf.mxu0
        %2476 = vmatprep.mubr.bf16.mxu0 %v2209
        %2477 = vmatmul.mubr.bf16.gmra.mxu0 %v2208
        %v2478 = vpop.f32.mrf.mxu0
        %v2479 = vadd.f32 0.0, %v2478
        %v2480 = vpop.f32.mrf.mxu0
        %v2481 = vpop.f32.mrf.mxu0
        %v2482 = vadd.f32 0.0, %v2481
        %v2483 = vpop.f32.mrf.mxu0
        %2484 = vmatprep.mubr.bf16.mxu0 %v2212
        %2485 = vmatmul.mubr.bf16.gmra.mxu0 %v2211
        %v2486 = vpop.f32.mrf.mxu0
        %v2487 = vadd.f32 0.0, %v2486
        %v2488 = vpop.f32.mrf.mxu0
        %v2489 = vpop.f32.mrf.mxu0
        %v2490 = vadd.f32 0.0, %v2489
        %v2491 = vpop.f32.mrf.mxu0
        %2492 = vmatprep.mubr.bf16.mxu0 %v2215
        %2493 = vmatmul.mubr.bf16.gmra.mxu0 %v2214
        %v2494 = vpop.f32.mrf.mxu0
        %v2495 = vadd.f32 0.0, %v2494
        %v2496 = vpop.f32.mrf.mxu0
        %v2497 = vpop.f32.mrf.mxu0
        %v2498 = vadd.f32 0.0, %v2497
        %v2499 = vpop.f32.mrf.mxu0
        %2500 = vmatprep.mubr.bf16.mxu0 %v2218
        %2501 = vmatmul.mubr.bf16.gmra.mxu0 %v2217
        %v2502 = vpop.f32.mrf.mxu0
        %v2503 = vadd.f32 0.0, %v2502
        %v2504 = vpop.f32.mrf.mxu0
        %v2505 = vpop.f32.mrf.mxu0
        %v2506 = vadd.f32 0.0, %v2505
        %v2507 = vpop.f32.mrf.mxu0
        %2508 = vmatprep.mubr.bf16.mxu0 %v2221
        %2509 = vmatmul.mubr.bf16.gmra.mxu0 %v2220
        %v2510 = vpop.f32.mrf.mxu0
        %v2511 = vadd.f32 0.0, %v2510
        %v2512 = vpop.f32.mrf.mxu0
        %v2513 = vpop.f32.mrf.mxu0
        %v2514 = vadd.f32 0.0, %v2513
        %v2515 = vpop.f32.mrf.mxu0
        %2516 = vmatprep.mubr.bf16.mxu0 %v2224
        %2517 = vmatmul.mubr.bf16.gmra.mxu0 %v2223
        %v2518 = vpop.f32.mrf.mxu0
        %v2519 = vadd.f32 0.0, %v2518
        %v2520 = vpop.f32.mrf.mxu0
        %v2521 = vpop.f32.mrf.mxu0
        %v2522 = vadd.f32 0.0, %v2521
        %v2523 = vpop.f32.mrf.mxu0
        %2524 = vmatprep.mubr.bf16.mxu0 %v2227
        %2525 = vmatmul.mubr.bf16.gmra.mxu0 %v2226
        %v2526 = vpop.f32.mrf.mxu0
        %v2527 = vadd.f32 0.0, %v2526
        %v2528 = vpop.f32.mrf.mxu0
        %v2529 = vpop.f32.mrf.mxu0
        %v2530 = vadd.f32 0.0, %v2529
        %v2531 = vpop.f32.mrf.mxu0
        %2532 = vmatprep.mubr.bf16.mxu0 %v2230
        %2533 = vmatmul.mubr.bf16.gmra.mxu0 %v2229
        %v2534 = vpop.f32.mrf.mxu0
        %v2535 = vadd.f32 0.0, %v2534
        %v2536 = vpop.f32.mrf.mxu0
        %v2537 = vpop.f32.mrf.mxu0
        %v2538 = vadd.f32 0.0, %v2537
        %v2539 = vpop.f32.mrf.mxu0
        %2540 = vdwg.mxu0
        %2541 = vmatprep.subr.bf16.mxu0 0
        %2542 = vmatpush1.bf16.msra.mxu0 %v2387
        %2543 = vmatprep.subr.bf16.mxu0 0
        %2544 = vmatpush1.bf16.msra.mxu0 %v2386
        %2545 = vmatprep.subr.bf16.mxu0 0
        %2546 = vmatpush1.bf16.msra.mxu0 %v2385
        %2547 = vmatprep.subr.bf16.mxu0 0
        %2548 = vmatpush1.bf16.msra.mxu0 %v2384
        %2549 = vmatprep.subr.bf16.mxu0 0
        %2550 = vmatpush1.bf16.msra.mxu0 %v2383
        %2551 = vmatprep.subr.bf16.mxu0 0
        %2552 = vmatpush1.bf16.msra.mxu0 %v2382
        %2553 = vmatprep.subr.bf16.mxu0 0
        %2554 = vmatpush1.bf16.msra.mxu0 %v2381
        %2555 = vmatprep.subr.bf16.mxu0 0
        %2556 = vmatpush1.bf16.msra.mxu0 %v2380
        %2557 = vmatprep.subr.bf16.mxu0 0
        %2558 = vmatpush2.bf16.msra.mxu0 0
        %2559 = vmatprep.subr.bf16.mxu0 0
        %2560 = vmatpush2.bf16.msra.mxu0 0
        %2561 = vmatprep.subr.bf16.mxu0 0
        %2562 = vmatpush2.bf16.msra.mxu0 0
        %2563 = vmatprep.subr.bf16.mxu0 0
        %2564 = vmatpush2.bf16.msra.mxu0 0
        %2565 = vmatprep.subr.bf16.mxu0 0
        %2566 = vmatpush2.bf16.msra.mxu0 0
        %2567 = vmatprep.subr.bf16.mxu0 0
        %2568 = vmatpush2.bf16.msra.mxu0 0
        %2569 = vmatprep.subr.bf16.mxu0 0
        %2570 = vmatpush2.bf16.msra.mxu0 0
        %2571 = vmatprep.subr.bf16.mxu0 0
        %2572 = vmatpush2.bf16.msra.mxu0 0
        %2573 = vmatprep.mubr.bf16.mxu0 0
        %2574 = vmatmul.mubr.bf16.gmra.mxu0 %v2198
        %v2575 = vpop.f32.mrf.mxu0
        %v2576 = vadd.f32 %v2447, %v2575
        %v2577 = vpop.f32.mrf.mxu0
        %v2578 = vpop.f32.mrf.mxu0
        %v2579 = vadd.f32 %v2450, %v2578
        %v2580 = vpop.f32.mrf.mxu0
        %2581 = vmatprep.mubr.bf16.mxu0 0
        %2582 = vmatmul.mubr.bf16.gmra.mxu0 %v2201
        %v2583 = vpop.f32.mrf.mxu0
        %v2584 = vadd.f32 %v2455, %v2583
        %v2585 = vpop.f32.mrf.mxu0
        %v2586 = vpop.f32.mrf.mxu0
        %v2587 = vadd.f32 %v2458, %v2586
        %v2588 = vpop.f32.mrf.mxu0
        %2589 = vmatprep.mubr.bf16.mxu0 0
        %2590 = vmatmul.mubr.bf16.gmra.mxu0 %v2204
        %v2591 = vpop.f32.mrf.mxu0
        %v2592 = vadd.f32 %v2463, %v2591
        %v2593 = vpop.f32.mrf.mxu0
        %v2594 = vpop.f32.mrf.mxu0
        %v2595 = vadd.f32 %v2466, %v2594
        %v2596 = vpop.f32.mrf.mxu0
        %2597 = vmatprep.mubr.bf16.mxu0 0
        %2598 = vmatmul.mubr.bf16.gmra.mxu0 %v2207
        %v2599 = vpop.f32.mrf.mxu0
        %v2600 = vadd.f32 %v2471, %v2599
        %v2601 = vpop.f32.mrf.mxu0
        %v2602 = vpop.f32.mrf.mxu0
        %v2603 = vadd.f32 %v2474, %v2602
        %v2604 = vpop.f32.mrf.mxu0
        %2605 = vmatprep.mubr.bf16.mxu0 0
        %2606 = vmatmul.mubr.bf16.gmra.mxu0 %v2210
        %v2607 = vpop.f32.mrf.mxu0
        %v2608 = vadd.f32 %v2479, %v2607
        %v2609 = vpop.f32.mrf.mxu0
        %v2610 = vpop.f32.mrf.mxu0
        %v2611 = vadd.f32 %v2482, %v2610
        %v2612 = vpop.f32.mrf.mxu0
        %2613 = vmatprep.mubr.bf16.mxu0 0
        %2614 = vmatmul.mubr.bf16.gmra.mxu0 %v2213
        %v2615 = vpop.f32.mrf.mxu0
        %v2616 = vadd.f32 %v2487, %v2615
        %v2617 = vpop.f32.mrf.mxu0
        %v2618 = vpop.f32.mrf.mxu0
        %v2619 = vadd.f32 %v2490, %v2618
        %v2620 = vpop.f32.mrf.mxu0
        %2621 = vmatprep.mubr.bf16.mxu0 0
        %2622 = vmatmul.mubr.bf16.gmra.mxu0 %v2216
        %v2623 = vpop.f32.mrf.mxu0
        %v2624 = vadd.f32 %v2495, %v2623
        %v2625 = vpop.f32.mrf.mxu0
        %v2626 = vpop.f32.mrf.mxu0
        %v2627 = vadd.f32 %v2498, %v2626
        %v2628 = vpop.f32.mrf.mxu0
        %2629 = vmatprep.mubr.bf16.mxu0 0
        %2630 = vmatmul.mubr.bf16.gmra.mxu0 %v2219
        %v2631 = vpop.f32.mrf.mxu0
        %v2632 = vadd.f32 %v2503, %v2631
        %v2633 = vpop.f32.mrf.mxu0
        %v2634 = vpop.f32.mrf.mxu0
        %v2635 = vadd.f32 %v2506, %v2634
        %v2636 = vpop.f32.mrf.mxu0
        %2637 = vmatprep.mubr.bf16.mxu0 0
        %2638 = vmatmul.mubr.bf16.gmra.mxu0 %v2222
        %v2639 = vpop.f32.mrf.mxu0
        %v2640 = vadd.f32 %v2511, %v2639
        %v2641 = vpop.f32.mrf.mxu0
        %v2642 = vpop.f32.mrf.mxu0
        %v2643 = vadd.f32 %v2514, %v2642
        %v2644 = vpop.f32.mrf.mxu0
        %2645 = vmatprep.mubr.bf16.mxu0 0
        %2646 = vmatmul.mubr.bf16.gmra.mxu0 %v2225
        %v2647 = vpop.f32.mrf.mxu0
        %v2648 = vadd.f32 %v2519, %v2647
        %v2649 = vpop.f32.mrf.mxu0
        %v2650 = vpop.f32.mrf.mxu0
        %v2651 = vadd.f32 %v2522, %v2650
        %v2652 = vpop.f32.mrf.mxu0
        %2653 = vmatprep.mubr.bf16.mxu0 0
        %2654 = vmatmul.mubr.bf16.gmra.mxu0 %v2228
        %v2655 = vpop.f32.mrf.mxu0
        %v2656 = vadd.f32 %v2527, %v2655
        %v2657 = vpop.f32.mrf.mxu0
        %v2658 = vpop.f32.mrf.mxu0
        %v2659 = vadd.f32 %v2530, %v2658
        %v2660 = vpop.f32.mrf.mxu0
        %2661 = vmatprep.mubr.bf16.mxu0 0
        %2662 = vmatmul.mubr.bf16.gmra.mxu0 %v2231
        %v2663 = vpop.f32.mrf.mxu0
        %v2664 = vadd.f32 %v2535, %v2663
        %v2665 = vpop.f32.mrf.mxu0
        %v2666 = vpop.f32.mrf.mxu0
        %v2667 = vadd.f32 %v2538, %v2666
        %v2668 = vpop.f32.mrf.mxu0
        %2669 = vdwg.mxu0
        %v2674 = vunpack.c.l.b16 %v1927
        %v2675 = vunpack.c.h.b16 %v1927
        %v2676 = vunpack.c.l.b16 %v1928
        %v2677 = vunpack.c.l.b16 %v1929
        %v2678 = vunpack.c.h.b16 %v1929
        %v2679 = vunpack.c.l.b16 %v1930
        %v2680 = vpack.c.b16 %v2677, %v2674
        %v2681 = vpack.c.b16 %v2678, %v2675
        %v2682 = vpack.c.b16 %v2679, %v2676
        %v2734 = vunpack.c.l.b16 %v1975
        %v2735 = vunpack.c.l.b16 %v1976
        %v2736 = vunpack.c.l.b16 %v1977
        %v2737 = vunpack.c.l.b16 %v1978
        %v2738 = vunpack.c.l.b16 %v1979
        %v2739 = vunpack.c.l.b16 %v1980
        %v2740 = vunpack.c.l.b16 %v1981
        %v2741 = vunpack.c.l.b16 %v1982
        %v2742 = vunpack.c.l.b16 %v1983
        %v2743 = vunpack.c.l.b16 %v1984
        %v2744 = vunpack.c.l.b16 %v1985
        %v2745 = vunpack.c.l.b16 %v1986
        %v2746 = vunpack.c.l.b16 %v1987
        %v2747 = vunpack.c.l.b16 %v1988
        %v2748 = vunpack.c.l.b16 %v1989
        %v2749 = vunpack.c.l.b16 %v1990
        %v2750 = vunpack.c.l.b16 %v1991
        %v2751 = vunpack.c.l.b16 %v1992
        %v2752 = vunpack.c.l.b16 %v1993
        %v2753 = vunpack.c.l.b16 %v1994
        %v2754 = vunpack.c.l.b16 %v1995
        %v2755 = vunpack.c.l.b16 %v1996
        %v2756 = vunpack.c.l.b16 %v1997
        %v2757 = vunpack.c.l.b16 %v1998
        %v2758 = vunpack.c.l.b16 %v1999
        %v2759 = vunpack.c.l.b16 %v2000
        %v2760 = vunpack.c.l.b16 %v2001
        %v2761 = vunpack.c.l.b16 %v2002
        %v2762 = vunpack.c.l.b16 %v2003
        %v2763 = vunpack.c.l.b16 %v2004
        %v2764 = vunpack.c.l.b16 %v2005
        %v2765 = vunpack.c.l.b16 %v2006
        %v2766 = vunpack.c.l.b16 %v2007
        %v2767 = vunpack.c.l.b16 %v2008
        %v2768 = vunpack.c.l.b16 %v2009
        %v2769 = vunpack.c.l.b16 %v2010
        %v2770 = vunpack.c.l.b16 %v2011
        %v2771 = vunpack.c.l.b16 %v2012
        %v2772 = vunpack.c.l.b16 %v2013
        %v2773 = vunpack.c.l.b16 %v2014
        %v2774 = vunpack.c.l.b16 %v2015
        %v2775 = vunpack.c.l.b16 %v2016
        %v2776 = vunpack.c.l.b16 %v2017
        %v2777 = vunpack.c.l.b16 %v2018
        %v2778 = vunpack.c.l.b16 %v2019
        %v2779 = vunpack.c.l.b16 %v2020
        %v2780 = vunpack.c.l.b16 %v2021
        %v2781 = vunpack.c.l.b16 %v2022
        %v2782 = vpack.c.b16 %v2735, %v2734
        %v2783 = vpack.c.b16 %v2737, %v2736
        %v2784 = vpack.c.b16 %v2739, %v2738
        %v2785 = vpack.c.b16 %v2741, %v2740
        %v2786 = vpack.c.b16 %v2743, %v2742
        %v2787 = vpack.c.b16 %v2745, %v2744
        %v2788 = vpack.c.b16 %v2747, %v2746
        %v2789 = vpack.c.b16 %v2749, %v2748
        %v2790 = vpack.c.b16 %v2751, %v2750
        %v2791 = vpack.c.b16 %v2753, %v2752
        %v2792 = vpack.c.b16 %v2755, %v2754
        %v2793 = vpack.c.b16 %v2757, %v2756
        %v2794 = vpack.c.b16 %v2759, %v2758
        %v2795 = vpack.c.b16 %v2761, %v2760
        %v2796 = vpack.c.b16 %v2763, %v2762
        %v2797 = vpack.c.b16 %v2765, %v2764
        %v2798 = vpack.c.b16 %v2767, %v2766
        %v2799 = vpack.c.b16 %v2769, %v2768
        %v2800 = vpack.c.b16 %v2771, %v2770
        %v2801 = vpack.c.b16 %v2773, %v2772
        %v2802 = vpack.c.b16 %v2775, %v2774
        %v2803 = vpack.c.b16 %v2777, %v2776
        %v2804 = vpack.c.b16 %v2779, %v2778
        %v2805 = vpack.c.b16 %v2781, %v2780
        %2830 = vmatprep.subr.bf16.mxu0 0
        %2831 = vmatpush1.bf16.msra.mxu0 %v2789
        %2832 = vmatprep.subr.bf16.mxu0 0
        %2833 = vmatpush1.bf16.msra.mxu0 %v2788
        %2834 = vmatprep.subr.bf16.mxu0 0
        %2835 = vmatpush1.bf16.msra.mxu0 %v2787
        %2836 = vmatprep.subr.bf16.mxu0 0
        %2837 = vmatpush1.bf16.msra.mxu0 %v2786
        %2838 = vmatprep.subr.bf16.mxu0 0
        %2839 = vmatpush1.bf16.msra.mxu0 %v2785
        %2840 = vmatprep.subr.bf16.mxu0 0
        %2841 = vmatpush1.bf16.msra.mxu0 %v2784
        %2842 = vmatprep.subr.bf16.mxu0 0
        %2843 = vmatpush1.bf16.msra.mxu0 %v2783
        %2844 = vmatprep.subr.bf16.mxu0 0
        %2845 = vmatpush1.bf16.msra.mxu0 %v2782
        %2846 = vmatprep.subr.bf16.mxu0 0
        %2847 = vmatpush2.bf16.msra.mxu0 %v2797
        %2848 = vmatprep.subr.bf16.mxu0 0
        %2849 = vmatpush2.bf16.msra.mxu0 %v2796
        %2850 = vmatprep.subr.bf16.mxu0 0
        %2851 = vmatpush2.bf16.msra.mxu0 %v2795
        %2852 = vmatprep.subr.bf16.mxu0 0
        %2853 = vmatpush2.bf16.msra.mxu0 %v2794
        %2854 = vmatprep.subr.bf16.mxu0 0
        %2855 = vmatpush2.bf16.msra.mxu0 %v2793
        %2856 = vmatprep.subr.bf16.mxu0 0
        %2857 = vmatpush2.bf16.msra.mxu0 %v2792
        %2858 = vmatprep.subr.bf16.mxu0 0
        %2859 = vmatpush2.bf16.msra.mxu0 %v2791
        %2860 = vmatprep.subr.bf16.mxu0 0
        %2861 = vmatpush2.bf16.msra.mxu0 %v2790
        %2862 = vmatprep.mubr.bf16.mxu0 %v2681
        %2863 = vmatmul.mubr.bf16.gmra.mxu0 %v2680
        %v2864 = vpop.f32.mrf.mxu0
        %v2865 = vadd.f32 %v2576, %v2864
        %v2866 = vpop.f32.mrf.mxu0
        %v2867 = vpop.f32.mrf.mxu0
        %v2868 = vadd.f32 %v2579, %v2867
        %v2869 = vpop.f32.mrf.mxu0
        %2870 = vmatprep.mubr.bf16.mxu0 %v2197
        %2871 = vmatmul.mubr.bf16.gmra.mxu0 %v2196
        %v2872 = vpop.f32.mrf.mxu0
        %v2873 = vadd.f32 %v2584, %v2872
        %v2874 = vpop.f32.mrf.mxu0
        %v2875 = vpop.f32.mrf.mxu0
        %v2876 = vadd.f32 %v2587, %v2875
        %v2877 = vpop.f32.mrf.mxu0
        %2878 = vmatprep.mubr.bf16.mxu0 %v2200
        %2879 = vmatmul.mubr.bf16.gmra.mxu0 %v2199
        %v2880 = vpop.f32.mrf.mxu0
        %v2881 = vadd.f32 %v2592, %v2880
        %v2882 = vpop.f32.mrf.mxu0
        %v2883 = vpop.f32.mrf.mxu0
        %v2884 = vadd.f32 %v2595, %v2883
        %v2885 = vpop.f32.mrf.mxu0
        %2886 = vmatprep.mubr.bf16.mxu0 %v2203
        %2887 = vmatmul.mubr.bf16.gmra.mxu0 %v2202
        %v2888 = vpop.f32.mrf.mxu0
        %v2889 = vadd.f32 %v2600, %v2888
        %v2890 = vpop.f32.mrf.mxu0
        %v2891 = vpop.f32.mrf.mxu0
        %v2892 = vadd.f32 %v2603, %v2891
        %v2893 = vpop.f32.mrf.mxu0
        %2894 = vmatprep.mubr.bf16.mxu0 %v2206
        %2895 = vmatmul.mubr.bf16.gmra.mxu0 %v2205
        %v2896 = vpop.f32.mrf.mxu0
        %v2897 = vadd.f32 %v2608, %v2896
        %v2898 = vpop.f32.mrf.mxu0
        %v2899 = vpop.f32.mrf.mxu0
        %v2900 = vadd.f32 %v2611, %v2899
        %v2901 = vpop.f32.mrf.mxu0
        %2902 = vmatprep.mubr.bf16.mxu0 %v2209
        %2903 = vmatmul.mubr.bf16.gmra.mxu0 %v2208
        %v2904 = vpop.f32.mrf.mxu0
        %v2905 = vadd.f32 %v2616, %v2904
        %v2906 = vpop.f32.mrf.mxu0
        %v2907 = vpop.f32.mrf.mxu0
        %v2908 = vadd.f32 %v2619, %v2907
        %v2909 = vpop.f32.mrf.mxu0
        %2910 = vmatprep.mubr.bf16.mxu0 %v2212
        %2911 = vmatmul.mubr.bf16.gmra.mxu0 %v2211
        %v2912 = vpop.f32.mrf.mxu0
        %v2913 = vadd.f32 %v2624, %v2912
        %v2914 = vpop.f32.mrf.mxu0
        %v2915 = vpop.f32.mrf.mxu0
        %v2916 = vadd.f32 %v2627, %v2915
        %v2917 = vpop.f32.mrf.mxu0
        %2918 = vmatprep.mubr.bf16.mxu0 %v2215
        %2919 = vmatmul.mubr.bf16.gmra.mxu0 %v2214
        %v2920 = vpop.f32.mrf.mxu0
        %v2921 = vadd.f32 %v2632, %v2920
        %v2922 = vpop.f32.mrf.mxu0
        %v2923 = vpop.f32.mrf.mxu0
        %v2924 = vadd.f32 %v2635, %v2923
        %v2925 = vpop.f32.mrf.mxu0
        %2926 = vmatprep.mubr.bf16.mxu0 %v2218
        %2927 = vmatmul.mubr.bf16.gmra.mxu0 %v2217
        %v2928 = vpop.f32.mrf.mxu0
        %v2929 = vadd.f32 %v2640, %v2928
        %v2930 = vpop.f32.mrf.mxu0
        %v2931 = vpop.f32.mrf.mxu0
        %v2932 = vadd.f32 %v2643, %v2931
        %v2933 = vpop.f32.mrf.mxu0
        %2934 = vmatprep.mubr.bf16.mxu0 %v2221
        %2935 = vmatmul.mubr.bf16.gmra.mxu0 %v2220
        %v2936 = vpop.f32.mrf.mxu0
        %v2937 = vadd.f32 %v2648, %v2936
        %v2938 = vpop.f32.mrf.mxu0
        %v2939 = vpop.f32.mrf.mxu0
        %v2940 = vadd.f32 %v2651, %v2939
        %v2941 = vpop.f32.mrf.mxu0
        %2942 = vmatprep.mubr.bf16.mxu0 %v2224
        %2943 = vmatmul.mubr.bf16.gmra.mxu0 %v2223
        %v2944 = vpop.f32.mrf.mxu0
        %v2945 = vadd.f32 %v2656, %v2944
        %v2946 = vpop.f32.mrf.mxu0
        %v2947 = vpop.f32.mrf.mxu0
        %v2948 = vadd.f32 %v2659, %v2947
        %v2949 = vpop.f32.mrf.mxu0
        %2950 = vmatprep.mubr.bf16.mxu0 %v2227
        %2951 = vmatmul.mubr.bf16.gmra.mxu0 %v2226
        %v2952 = vpop.f32.mrf.mxu0
        %v2953 = vadd.f32 %v2664, %v2952
        %v2954 = vpop.f32.mrf.mxu0
        %v2955 = vpop.f32.mrf.mxu0
        %v2956 = vadd.f32 %v2667, %v2955
        %v2957 = vpop.f32.mrf.mxu0
        %2958 = vdwg.mxu0
        %2959 = vmatprep.subr.bf16.mxu0 0
        %2960 = vmatpush1.bf16.msra.mxu0 %v2805
        %2961 = vmatprep.subr.bf16.mxu0 0
        %2962 = vmatpush1.bf16.msra.mxu0 %v2804
        %2963 = vmatprep.subr.bf16.mxu0 0
        %2964 = vmatpush1.bf16.msra.mxu0 %v2803
        %2965 = vmatprep.subr.bf16.mxu0 0
        %2966 = vmatpush1.bf16.msra.mxu0 %v2802
        %2967 = vmatprep.subr.bf16.mxu0 0
        %2968 = vmatpush1.bf16.msra.mxu0 %v2801
        %2969 = vmatprep.subr.bf16.mxu0 0
        %2970 = vmatpush1.bf16.msra.mxu0 %v2800
        %2971 = vmatprep.subr.bf16.mxu0 0
        %2972 = vmatpush1.bf16.msra.mxu0 %v2799
        %2973 = vmatprep.subr.bf16.mxu0 0
        %2974 = vmatpush1.bf16.msra.mxu0 %v2798
        %2975 = vmatprep.subr.bf16.mxu0 0
        %2976 = vmatpush2.bf16.msra.mxu0 0
        %2977 = vmatprep.subr.bf16.mxu0 0
        %2978 = vmatpush2.bf16.msra.mxu0 0
        %2979 = vmatprep.subr.bf16.mxu0 0
        %2980 = vmatpush2.bf16.msra.mxu0 0
        %2981 = vmatprep.subr.bf16.mxu0 0
        %2982 = vmatpush2.bf16.msra.mxu0 0
        %2983 = vmatprep.subr.bf16.mxu0 0
        %2984 = vmatpush2.bf16.msra.mxu0 0
        %2985 = vmatprep.subr.bf16.mxu0 0
        %2986 = vmatpush2.bf16.msra.mxu0 0
        %2987 = vmatprep.subr.bf16.mxu0 0
        %2988 = vmatpush2.bf16.msra.mxu0 0
        %2989 = vmatprep.subr.bf16.mxu0 0
        %2990 = vmatpush2.bf16.msra.mxu0 0
        %2991 = vmatprep.mubr.bf16.mxu0 0
        %2992 = vmatmul.mubr.bf16.gmra.mxu0 %v2682
        %v2993 = vpop.f32.mrf.mxu0
        %v2994 = vadd.f32 %v2865, %v2993
        %v2995 = vpop.f32.mrf.mxu0
        %v2996 = vpop.f32.mrf.mxu0
        %v2997 = vadd.f32 %v2868, %v2996
        %v2998 = vpop.f32.mrf.mxu0
        %2999 = vmatprep.mubr.bf16.mxu0 0
        %3000 = vmatmul.mubr.bf16.gmra.mxu0 %v2198
        %v3001 = vpop.f32.mrf.mxu0
        %v3002 = vadd.f32 %v2873, %v3001
        %v3003 = vpop.f32.mrf.mxu0
        %v3004 = vpop.f32.mrf.mxu0
        %v3005 = vadd.f32 %v2876, %v3004
        %v3006 = vpop.f32.mrf.mxu0
        %3007 = vmatprep.mubr.bf16.mxu0 0
        %3008 = vmatmul.mubr.bf16.gmra.mxu0 %v2201
        %v3009 = vpop.f32.mrf.mxu0
        %v3010 = vadd.f32 %v2881, %v3009
        %v3011 = vpop.f32.mrf.mxu0
        %v3012 = vpop.f32.mrf.mxu0
        %v3013 = vadd.f32 %v2884, %v3012
        %v3014 = vpop.f32.mrf.mxu0
        %3015 = vmatprep.mubr.bf16.mxu0 0
        %3016 = vmatmul.mubr.bf16.gmra.mxu0 %v2204
        %v3017 = vpop.f32.mrf.mxu0
        %v3018 = vadd.f32 %v2889, %v3017
        %v3019 = vpop.f32.mrf.mxu0
        %v3020 = vpop.f32.mrf.mxu0
        %v3021 = vadd.f32 %v2892, %v3020
        %v3022 = vpop.f32.mrf.mxu0
        %3023 = vmatprep.mubr.bf16.mxu0 0
        %3024 = vmatmul.mubr.bf16.gmra.mxu0 %v2207
        %v3025 = vpop.f32.mrf.mxu0
        %v3026 = vadd.f32 %v2897, %v3025
        %v3027 = vpop.f32.mrf.mxu0
        %v3028 = vpop.f32.mrf.mxu0
        %v3029 = vadd.f32 %v2900, %v3028
        %v3030 = vpop.f32.mrf.mxu0
        %3031 = vmatprep.mubr.bf16.mxu0 0
        %3032 = vmatmul.mubr.bf16.gmra.mxu0 %v2210
        %v3033 = vpop.f32.mrf.mxu0
        %v3034 = vadd.f32 %v2905, %v3033
        %v3035 = vpop.f32.mrf.mxu0
        %v3036 = vpop.f32.mrf.mxu0
        %v3037 = vadd.f32 %v2908, %v3036
        %v3038 = vpop.f32.mrf.mxu0
        %3039 = vmatprep.mubr.bf16.mxu0 0
        %3040 = vmatmul.mubr.bf16.gmra.mxu0 %v2213
        %v3041 = vpop.f32.mrf.mxu0
        %v3042 = vadd.f32 %v2913, %v3041
        %v3043 = vpop.f32.mrf.mxu0
        %v3044 = vpop.f32.mrf.mxu0
        %v3045 = vadd.f32 %v2916, %v3044
        %v3046 = vpop.f32.mrf.mxu0
        %3047 = vmatprep.mubr.bf16.mxu0 0
        %3048 = vmatmul.mubr.bf16.gmra.mxu0 %v2216
        %v3049 = vpop.f32.mrf.mxu0
        %v3050 = vadd.f32 %v2921, %v3049
        %v3051 = vpop.f32.mrf.mxu0
        %v3052 = vpop.f32.mrf.mxu0
        %v3053 = vadd.f32 %v2924, %v3052
        %v3054 = vpop.f32.mrf.mxu0
        %3055 = vmatprep.mubr.bf16.mxu0 0
        %3056 = vmatmul.mubr.bf16.gmra.mxu0 %v2219
        %v3057 = vpop.f32.mrf.mxu0
        %v3058 = vadd.f32 %v2929, %v3057
        %v3059 = vpop.f32.mrf.mxu0
        %v3060 = vpop.f32.mrf.mxu0
        %v3061 = vadd.f32 %v2932, %v3060
        %v3062 = vpop.f32.mrf.mxu0
        %3063 = vmatprep.mubr.bf16.mxu0 0
        %3064 = vmatmul.mubr.bf16.gmra.mxu0 %v2222
        %v3065 = vpop.f32.mrf.mxu0
        %v3066 = vadd.f32 %v2937, %v3065
        %v3067 = vpop.f32.mrf.mxu0
        %v3068 = vpop.f32.mrf.mxu0
        %v3069 = vadd.f32 %v2940, %v3068
        %v3070 = vpop.f32.mrf.mxu0
        %3071 = vmatprep.mubr.bf16.mxu0 0
        %3072 = vmatmul.mubr.bf16.gmra.mxu0 %v2225
        %v3073 = vpop.f32.mrf.mxu0
        %v3074 = vadd.f32 %v2945, %v3073
        %v3075 = vpop.f32.mrf.mxu0
        %v3076 = vpop.f32.mrf.mxu0
        %v3077 = vadd.f32 %v2948, %v3076
        %v3078 = vpop.f32.mrf.mxu0
        %3079 = vmatprep.mubr.bf16.mxu0 0
        %3080 = vmatmul.mubr.bf16.gmra.mxu0 %v2228
        %v3081 = vpop.f32.mrf.mxu0
        %v3082 = vadd.f32 %v2953, %v3081
        %v3083 = vpop.f32.mrf.mxu0
        %v3084 = vpop.f32.mrf.mxu0
        %v3085 = vadd.f32 %v2956, %v3084
        %v3086 = vpop.f32.mrf.mxu0
        %3087 = vdwg.mxu0
        %v3088 = vld [vmem:[#allocation2 + $0x30] sm:$0xff]
        %v3089 = vld [vmem:[#allocation2 + $0x38] sm:$0xf]
        %v3090 = vld [vmem:[#allocation2 + $0x3c] sm:$0xff]
        %v3091 = vld [vmem:[#allocation2 + $0x44] sm:$0xf]
        %v3092 = vld [vmem:[#allocation2 + $0x48] sm:$0xff]
        %v3093 = vld [vmem:[#allocation2 + $0x50] sm:$0xf]
        %v3094 = vld [vmem:[#allocation2 + $0x54] sm:$0xff]
        %v3095 = vld [vmem:[#allocation2 + $0x5c] sm:$0xf]
        %v3096 = vld [vmem:[#allocation2 + $0x60] sm:$0xff]
        %v3097 = vld [vmem:[#allocation2 + $0x68] sm:$0xf]
        %v3098 = vld [vmem:[#allocation2 + $0x6c] sm:$0xff]
        %v3099 = vld [vmem:[#allocation2 + $0x74] sm:$0xf]
        %v3100 = vld [vmem:[#allocation2 + $0x78] sm:$0xff]
        %v3101 = vld [vmem:[#allocation2 + $0x80] sm:$0xf]
        %v3102 = vld [vmem:[#allocation2 + $0x84] sm:$0xff]
        %v3103 = vld [vmem:[#allocation2 + $0x8c] sm:$0xf]
        %v3104 = vld [vmem:[#allocation2 + $0x90] sm:$0xff]
        %v3105 = vld [vmem:[#allocation2 + $0x98] sm:$0xf]
        %v3106 = vld [vmem:[#allocation2 + $0x9c] sm:$0xff]
        %v3107 = vld [vmem:[#allocation2 + $0xa4] sm:$0xf]
        %v3108 = vld [vmem:[#allocation2 + $0xa8] sm:$0xff]
        %v3109 = vld [vmem:[#allocation2 + $0xb0] sm:$0xf]
        %v3110 = vld [vmem:[#allocation2 + $0xb4] sm:$0xff]
        %v3111 = vld [vmem:[#allocation2 + $0xbc] sm:$0xf]
        %v3112 = vld [vmem:[#allocation2 + $0xc0] sm:$0xff]
        %v3113 = vld [vmem:[#allocation2 + $0xc8] sm:$0xf]
        %v3114 = vld [vmem:[#allocation2 + $0xcc] sm:$0xff]
        %v3115 = vld [vmem:[#allocation2 + $0xd4] sm:$0xf]
        %v3116 = vld [vmem:[#allocation2 + $0xd8] sm:$0xff]
        %v3117 = vld [vmem:[#allocation2 + $0xe0] sm:$0xf]
        %v3118 = vld [vmem:[#allocation2 + $0xe4] sm:$0xff]
        %v3119 = vld [vmem:[#allocation2 + $0xec] sm:$0xf]
        %v3120 = vld [vmem:[#allocation2 + $0xf0] sm:$0xff]
        %v3121 = vld [vmem:[#allocation2 + $0xf8] sm:$0xf]
        %v3122 = vld [vmem:[#allocation2 + $0xfc] sm:$0xff]
        %v3123 = vld [vmem:[#allocation2 + $0x104] sm:$0xf]
        %v3124 = vld [vmem:[#allocation2 + $0x108] sm:$0xff]
        %v3125 = vld [vmem:[#allocation2 + $0x110] sm:$0xf]
        %v3126 = vld [vmem:[#allocation2 + $0x114] sm:$0xff]
        %v3127 = vld [vmem:[#allocation2 + $0x11c] sm:$0xf]
        %v3128 = vld [vmem:[#allocation2 + $0x120] sm:$0xff]
        %v3129 = vld [vmem:[#allocation2 + $0x128] sm:$0xf]
        %v3130 = vld [vmem:[#allocation2 + $0x12c] sm:$0xff]
        %v3131 = vld [vmem:[#allocation2 + $0x134] sm:$0xf]
        %v3132 = vld [vmem:[#allocation2 + $0x138] sm:$0xff]
        %v3133 = vld [vmem:[#allocation2 + $0x140] sm:$0xf]
        %v3134 = vld [vmem:[#allocation2 + $0x144] sm:$0xff]
        %v3135 = vld [vmem:[#allocation2 + $0x14c] sm:$0xf]
        %s3136 = scalar_lea.vmem [#allocation4], 384
        %v3137 = vld [vmem:[%s3136] sm:$0xf]
        %v3138 = vld [vmem:[%s3136 + $0x4] sm:$0xf]
        %v3139 = vld [vmem:[%s3136 + $0x8] sm:$0xf]
        %v3140 = vld [vmem:[%s3136 + $0xc] sm:$0xf]
        %v3141 = vld [vmem:[%s3136 + $0x10] sm:$0xf]
        %v3142 = vld [vmem:[%s3136 + $0x14] sm:$0xf]
        %v3143 = vld [vmem:[%s3136 + $0x18] sm:$0xf]
        %v3144 = vld [vmem:[%s3136 + $0x1c] sm:$0xf]
        %v3145 = vld [vmem:[%s3136 + $0x20] sm:$0xf]
        %v3146 = vld [vmem:[%s3136 + $0x24] sm:$0xf]
        %v3147 = vld [vmem:[%s3136 + $0x28] sm:$0xf]
        %v3148 = vld [vmem:[%s3136 + $0x2c] sm:$0xf]
        %v3149 = vld [vmem:[%s3136 + $0x30] sm:$0xf]
        %v3150 = vld [vmem:[%s3136 + $0x34] sm:$0xf]
        %v3151 = vld [vmem:[%s3136 + $0x38] sm:$0xf]
        %v3152 = vld [vmem:[%s3136 + $0x3c] sm:$0xf]
        %v3153 = vld [vmem:[%s3136 + $0x40] sm:$0xf]
        %v3154 = vld [vmem:[%s3136 + $0x44] sm:$0xf]
        %v3155 = vld [vmem:[%s3136 + $0x48] sm:$0xf]
        %v3156 = vld [vmem:[%s3136 + $0x4c] sm:$0xf]
        %v3157 = vld [vmem:[%s3136 + $0x50] sm:$0xf]
        %v3158 = vld [vmem:[%s3136 + $0x54] sm:$0xf]
        %v3159 = vld [vmem:[%s3136 + $0x58] sm:$0xf]
        %v3160 = vld [vmem:[%s3136 + $0x5c] sm:$0xf]
        %v3161 = vld [vmem:[%s3136 + $0x60] sm:$0xf]
        %v3162 = vld [vmem:[%s3136 + $0x64] sm:$0xf]
        %v3163 = vld [vmem:[%s3136 + $0x68] sm:$0xf]
        %v3164 = vld [vmem:[%s3136 + $0x6c] sm:$0xf]
        %v3165 = vld [vmem:[%s3136 + $0x70] sm:$0xf]
        %v3166 = vld [vmem:[%s3136 + $0x74] sm:$0xf]
        %v3167 = vld [vmem:[%s3136 + $0x78] sm:$0xf]
        %v3168 = vld [vmem:[%s3136 + $0x7c] sm:$0xf]
        %v3169 = vld [vmem:[%s3136 + $0x80] sm:$0xf]
        %v3170 = vld [vmem:[%s3136 + $0x84] sm:$0xf]
        %v3171 = vld [vmem:[%s3136 + $0x88] sm:$0xf]
        %v3172 = vld [vmem:[%s3136 + $0x8c] sm:$0xf]
        %v3173 = vld [vmem:[%s3136 + $0x90] sm:$0xf]
        %v3174 = vld [vmem:[%s3136 + $0x94] sm:$0xf]
        %v3175 = vld [vmem:[%s3136 + $0x98] sm:$0xf]
        %v3176 = vld [vmem:[%s3136 + $0x9c] sm:$0xf]
        %v3177 = vld [vmem:[%s3136 + $0xa0] sm:$0xf]
        %v3178 = vld [vmem:[%s3136 + $0xa4] sm:$0xf]
        %v3179 = vld [vmem:[%s3136 + $0xa8] sm:$0xf]
        %v3180 = vld [vmem:[%s3136 + $0xac] sm:$0xf]
        %v3181 = vld [vmem:[%s3136 + $0xb0] sm:$0xf]
        %v3182 = vld [vmem:[%s3136 + $0xb4] sm:$0xf]
        %v3183 = vld [vmem:[%s3136 + $0xb8] sm:$0xf]
        %v3184 = vld [vmem:[%s3136 + $0xbc] sm:$0xf]
        %v3233 = vunpack.c.l.b16 %v3088
        %v3234 = vunpack.c.h.b16 %v3088
        %v3235 = vunpack.c.l.b16 %v3089
        %v3236 = vunpack.c.l.b16 %v3090
        %v3237 = vunpack.c.h.b16 %v3090
        %v3238 = vunpack.c.l.b16 %v3091
        %v3239 = vunpack.c.l.b16 %v3092
        %v3240 = vunpack.c.h.b16 %v3092
        %v3241 = vunpack.c.l.b16 %v3093
        %v3242 = vunpack.c.l.b16 %v3094
        %v3243 = vunpack.c.h.b16 %v3094
        %v3244 = vunpack.c.l.b16 %v3095
        %v3245 = vunpack.c.l.b16 %v3096
        %v3246 = vunpack.c.h.b16 %v3096
        %v3247 = vunpack.c.l.b16 %v3097
        %v3248 = vunpack.c.l.b16 %v3098
        %v3249 = vunpack.c.h.b16 %v3098
        %v3250 = vunpack.c.l.b16 %v3099
        %v3251 = vunpack.c.l.b16 %v3100
        %v3252 = vunpack.c.h.b16 %v3100
        %v3253 = vunpack.c.l.b16 %v3101
        %v3254 = vunpack.c.l.b16 %v3102
        %v3255 = vunpack.c.h.b16 %v3102
        %v3256 = vunpack.c.l.b16 %v3103
        %v3257 = vunpack.c.l.b16 %v3104
        %v3258 = vunpack.c.h.b16 %v3104
        %v3259 = vunpack.c.l.b16 %v3105
        %v3260 = vunpack.c.l.b16 %v3106
        %v3261 = vunpack.c.h.b16 %v3106
        %v3262 = vunpack.c.l.b16 %v3107
        %v3263 = vunpack.c.l.b16 %v3108
        %v3264 = vunpack.c.h.b16 %v3108
        %v3265 = vunpack.c.l.b16 %v3109
        %v3266 = vunpack.c.l.b16 %v3110
        %v3267 = vunpack.c.h.b16 %v3110
        %v3268 = vunpack.c.l.b16 %v3111
        %v3269 = vunpack.c.l.b16 %v3112
        %v3270 = vunpack.c.h.b16 %v3112
        %v3271 = vunpack.c.l.b16 %v3113
        %v3272 = vunpack.c.l.b16 %v3114
        %v3273 = vunpack.c.h.b16 %v3114
        %v3274 = vunpack.c.l.b16 %v3115
        %v3275 = vunpack.c.l.b16 %v3116
        %v3276 = vunpack.c.h.b16 %v3116
        %v3277 = vunpack.c.l.b16 %v3117
        %v3278 = vunpack.c.l.b16 %v3118
        %v3279 = vunpack.c.h.b16 %v3118
        %v3280 = vunpack.c.l.b16 %v3119
        %v3281 = vunpack.c.l.b16 %v3120
        %v3282 = vunpack.c.h.b16 %v3120
        %v3283 = vunpack.c.l.b16 %v3121
        %v3284 = vunpack.c.l.b16 %v3122
        %v3285 = vunpack.c.h.b16 %v3122
        %v3286 = vunpack.c.l.b16 %v3123
        %v3287 = vunpack.c.l.b16 %v3124
        %v3288 = vunpack.c.h.b16 %v3124
        %v3289 = vunpack.c.l.b16 %v3125
        %v3290 = vunpack.c.l.b16 %v3126
        %v3291 = vunpack.c.h.b16 %v3126
        %v3292 = vunpack.c.l.b16 %v3127
        %v3293 = vunpack.c.l.b16 %v3128
        %v3294 = vunpack.c.h.b16 %v3128
        %v3295 = vunpack.c.l.b16 %v3129
        %v3296 = vunpack.c.l.b16 %v3130
        %v3297 = vunpack.c.h.b16 %v3130
        %v3298 = vunpack.c.l.b16 %v3131
        %v3299 = vunpack.c.l.b16 %v3132
        %v3300 = vunpack.c.h.b16 %v3132
        %v3301 = vunpack.c.l.b16 %v3133
        %v3302 = vunpack.c.l.b16 %v3134
        %v3303 = vunpack.c.h.b16 %v3134
        %v3304 = vunpack.c.l.b16 %v3135
        %v3305 = vpack.c.b16 %v3236, %v3233
        %v3306 = vpack.c.b16 %v3237, %v3234
        %v3307 = vpack.c.b16 %v3238, %v3235
        %v3308 = vpack.c.b16 %v3242, %v3239
        %v3309 = vpack.c.b16 %v3243, %v3240
        %v3310 = vpack.c.b16 %v3244, %v3241
        %v3311 = vpack.c.b16 %v3248, %v3245
        %v3312 = vpack.c.b16 %v3249, %v3246
        %v3313 = vpack.c.b16 %v3250, %v3247
        %v3314 = vpack.c.b16 %v3254, %v3251
        %v3315 = vpack.c.b16 %v3255, %v3252
        %v3316 = vpack.c.b16 %v3256, %v3253
        %v3317 = vpack.c.b16 %v3260, %v3257
        %v3318 = vpack.c.b16 %v3261, %v3258
        %v3319 = vpack.c.b16 %v3262, %v3259
        %v3320 = vpack.c.b16 %v3266, %v3263
        %v3321 = vpack.c.b16 %v3267, %v3264
        %v3322 = vpack.c.b16 %v3268, %v3265
        %v3323 = vpack.c.b16 %v3272, %v3269
        %v3324 = vpack.c.b16 %v3273, %v3270
        %v3325 = vpack.c.b16 %v3274, %v3271
        %v3326 = vpack.c.b16 %v3278, %v3275
        %v3327 = vpack.c.b16 %v3279, %v3276
        %v3328 = vpack.c.b16 %v3280, %v3277
        %v3329 = vpack.c.b16 %v3284, %v3281
        %v3330 = vpack.c.b16 %v3285, %v3282
        %v3331 = vpack.c.b16 %v3286, %v3283
        %v3332 = vpack.c.b16 %v3290, %v3287
        %v3333 = vpack.c.b16 %v3291, %v3288
        %v3334 = vpack.c.b16 %v3292, %v3289
        %v3335 = vpack.c.b16 %v3296, %v3293
        %v3336 = vpack.c.b16 %v3297, %v3294
        %v3337 = vpack.c.b16 %v3298, %v3295
        %v3338 = vpack.c.b16 %v3302, %v3299
        %v3339 = vpack.c.b16 %v3303, %v3300
        %v3340 = vpack.c.b16 %v3304, %v3301
        %v3425 = vunpack.c.l.b16 %v3137
        %v3426 = vunpack.c.l.b16 %v3138
        %v3427 = vunpack.c.l.b16 %v3139
        %v3428 = vunpack.c.l.b16 %v3140
        %v3429 = vunpack.c.l.b16 %v3141
        %v3430 = vunpack.c.l.b16 %v3142
        %v3431 = vunpack.c.l.b16 %v3143
        %v3432 = vunpack.c.l.b16 %v3144
        %v3433 = vunpack.c.l.b16 %v3145
        %v3434 = vunpack.c.l.b16 %v3146
        %v3435 = vunpack.c.l.b16 %v3147
        %v3436 = vunpack.c.l.b16 %v3148
        %v3437 = vunpack.c.l.b16 %v3149
        %v3438 = vunpack.c.l.b16 %v3150
        %v3439 = vunpack.c.l.b16 %v3151
        %v3440 = vunpack.c.l.b16 %v3152
        %v3441 = vunpack.c.l.b16 %v3153
        %v3442 = vunpack.c.l.b16 %v3154
        %v3443 = vunpack.c.l.b16 %v3155
        %v3444 = vunpack.c.l.b16 %v3156
        %v3445 = vunpack.c.l.b16 %v3157
        %v3446 = vunpack.c.l.b16 %v3158
        %v3447 = vunpack.c.l.b16 %v3159
        %v3448 = vunpack.c.l.b16 %v3160
        %v3449 = vunpack.c.l.b16 %v3161
        %v3450 = vunpack.c.l.b16 %v3162
        %v3451 = vunpack.c.l.b16 %v3163
        %v3452 = vunpack.c.l.b16 %v3164
        %v3453 = vunpack.c.l.b16 %v3165
        %v3454 = vunpack.c.l.b16 %v3166
        %v3455 = vunpack.c.l.b16 %v3167
        %v3456 = vunpack.c.l.b16 %v3168
        %v3457 = vunpack.c.l.b16 %v3169
        %v3458 = vunpack.c.l.b16 %v3170
        %v3459 = vunpack.c.l.b16 %v3171
        %v3460 = vunpack.c.l.b16 %v3172
        %v3461 = vunpack.c.l.b16 %v3173
        %v3462 = vunpack.c.l.b16 %v3174
        %v3463 = vunpack.c.l.b16 %v3175
        %v3464 = vunpack.c.l.b16 %v3176
        %v3465 = vunpack.c.l.b16 %v3177
        %v3466 = vunpack.c.l.b16 %v3178
        %v3467 = vunpack.c.l.b16 %v3179
        %v3468 = vunpack.c.l.b16 %v3180
        %v3469 = vunpack.c.l.b16 %v3181
        %v3470 = vunpack.c.l.b16 %v3182
        %v3471 = vunpack.c.l.b16 %v3183
        %v3472 = vunpack.c.l.b16 %v3184
        %v3473 = vpack.c.b16 %v3426, %v3425
        %v3474 = vpack.c.b16 %v3428, %v3427
        %v3475 = vpack.c.b16 %v3430, %v3429
        %v3476 = vpack.c.b16 %v3432, %v3431
        %v3477 = vpack.c.b16 %v3434, %v3433
        %v3478 = vpack.c.b16 %v3436, %v3435
        %v3479 = vpack.c.b16 %v3438, %v3437
        %v3480 = vpack.c.b16 %v3440, %v3439
        %v3481 = vpack.c.b16 %v3442, %v3441
        %v3482 = vpack.c.b16 %v3444, %v3443
        %v3483 = vpack.c.b16 %v3446, %v3445
        %v3484 = vpack.c.b16 %v3448, %v3447
        %v3485 = vpack.c.b16 %v3450, %v3449
        %v3486 = vpack.c.b16 %v3452, %v3451
        %v3487 = vpack.c.b16 %v3454, %v3453
        %v3488 = vpack.c.b16 %v3456, %v3455
        %v3489 = vpack.c.b16 %v3458, %v3457
        %v3490 = vpack.c.b16 %v3460, %v3459
        %v3491 = vpack.c.b16 %v3462, %v3461
        %v3492 = vpack.c.b16 %v3464, %v3463
        %v3493 = vpack.c.b16 %v3466, %v3465
        %v3494 = vpack.c.b16 %v3468, %v3467
        %v3495 = vpack.c.b16 %v3470, %v3469
        %v3496 = vpack.c.b16 %v3472, %v3471
        %3521 = vmatprep.subr.bf16.mxu0 0
        %3522 = vmatpush1.bf16.msra.mxu0 %v3480
        %3523 = vmatprep.subr.bf16.mxu0 0
        %3524 = vmatpush1.bf16.msra.mxu0 %v3479
        %3525 = vmatprep.subr.bf16.mxu0 0
        %3526 = vmatpush1.bf16.msra.mxu0 %v3478
        %3527 = vmatprep.subr.bf16.mxu0 0
        %3528 = vmatpush1.bf16.msra.mxu0 %v3477
        %3529 = vmatprep.subr.bf16.mxu0 0
        %3530 = vmatpush1.bf16.msra.mxu0 %v3476
        %3531 = vmatprep.subr.bf16.mxu0 0
        %3532 = vmatpush1.bf16.msra.mxu0 %v3475
        %3533 = vmatprep.subr.bf16.mxu0 0
        %3534 = vmatpush1.bf16.msra.mxu0 %v3474
        %3535 = vmatprep.subr.bf16.mxu0 0
        %3536 = vmatpush1.bf16.msra.mxu0 %v3473
        %3537 = vmatprep.subr.bf16.mxu0 0
        %3538 = vmatpush2.bf16.msra.mxu0 %v3488
        %3539 = vmatprep.subr.bf16.mxu0 0
        %3540 = vmatpush2.bf16.msra.mxu0 %v3487
        %3541 = vmatprep.subr.bf16.mxu0 0
        %3542 = vmatpush2.bf16.msra.mxu0 %v3486
        %3543 = vmatprep.subr.bf16.mxu0 0
        %3544 = vmatpush2.bf16.msra.mxu0 %v3485
        %3545 = vmatprep.subr.bf16.mxu0 0
        %3546 = vmatpush2.bf16.msra.mxu0 %v3484
        %3547 = vmatprep.subr.bf16.mxu0 0
        %3548 = vmatpush2.bf16.msra.mxu0 %v3483
        %3549 = vmatprep.subr.bf16.mxu0 0
        %3550 = vmatpush2.bf16.msra.mxu0 %v3482
        %3551 = vmatprep.subr.bf16.mxu0 0
        %3552 = vmatpush2.bf16.msra.mxu0 %v3481
        %3553 = vmatprep.mubr.bf16.mxu0 %v3306
        %3554 = vmatmul.mubr.bf16.gmra.mxu0 %v3305
        %v3555 = vpop.f32.mrf.mxu0
        %v3556 = vadd.f32 0.0, %v3555
        %v3557 = vpop.f32.mrf.mxu0
        %v3558 = vpop.f32.mrf.mxu0
        %v3559 = vadd.f32 0.0, %v3558
        %v3560 = vpop.f32.mrf.mxu0
        %3561 = vmatprep.mubr.bf16.mxu0 %v3309
        %3562 = vmatmul.mubr.bf16.gmra.mxu0 %v3308
        %v3563 = vpop.f32.mrf.mxu0
        %v3564 = vadd.f32 0.0, %v3563
        %v3565 = vpop.f32.mrf.mxu0
        %v3566 = vpop.f32.mrf.mxu0
        %v3567 = vadd.f32 0.0, %v3566
        %v3568 = vpop.f32.mrf.mxu0
        %3569 = vmatprep.mubr.bf16.mxu0 %v3312
        %3570 = vmatmul.mubr.bf16.gmra.mxu0 %v3311
        %v3571 = vpop.f32.mrf.mxu0
        %v3572 = vadd.f32 0.0, %v3571
        %v3573 = vpop.f32.mrf.mxu0
        %v3574 = vpop.f32.mrf.mxu0
        %v3575 = vadd.f32 0.0, %v3574
        %v3576 = vpop.f32.mrf.mxu0
        %3577 = vmatprep.mubr.bf16.mxu0 %v3315
        %3578 = vmatmul.mubr.bf16.gmra.mxu0 %v3314
        %v3579 = vpop.f32.mrf.mxu0
        %v3580 = vadd.f32 0.0, %v3579
        %v3581 = vpop.f32.mrf.mxu0
        %v3582 = vpop.f32.mrf.mxu0
        %v3583 = vadd.f32 0.0, %v3582
        %v3584 = vpop.f32.mrf.mxu0
        %3585 = vmatprep.mubr.bf16.mxu0 %v3318
        %3586 = vmatmul.mubr.bf16.gmra.mxu0 %v3317
        %v3587 = vpop.f32.mrf.mxu0
        %v3588 = vadd.f32 0.0, %v3587
        %v3589 = vpop.f32.mrf.mxu0
        %v3590 = vpop.f32.mrf.mxu0
        %v3591 = vadd.f32 0.0, %v3590
        %v3592 = vpop.f32.mrf.mxu0
        %3593 = vmatprep.mubr.bf16.mxu0 %v3321
        %3594 = vmatmul.mubr.bf16.gmra.mxu0 %v3320
        %v3595 = vpop.f32.mrf.mxu0
        %v3596 = vadd.f32 0.0, %v3595
        %v3597 = vpop.f32.mrf.mxu0
        %v3598 = vpop.f32.mrf.mxu0
        %v3599 = vadd.f32 0.0, %v3598
        %v3600 = vpop.f32.mrf.mxu0
        %3601 = vmatprep.mubr.bf16.mxu0 %v3324
        %3602 = vmatmul.mubr.bf16.gmra.mxu0 %v3323
        %v3603 = vpop.f32.mrf.mxu0
        %v3604 = vadd.f32 0.0, %v3603
        %v3605 = vpop.f32.mrf.mxu0
        %v3606 = vpop.f32.mrf.mxu0
        %v3607 = vadd.f32 0.0, %v3606
        %v3608 = vpop.f32.mrf.mxu0
        %3609 = vmatprep.mubr.bf16.mxu0 %v3327
        %3610 = vmatmul.mubr.bf16.gmra.mxu0 %v3326
        %v3611 = vpop.f32.mrf.mxu0
        %v3612 = vadd.f32 0.0, %v3611
        %v3613 = vpop.f32.mrf.mxu0
        %v3614 = vpop.f32.mrf.mxu0
        %v3615 = vadd.f32 0.0, %v3614
        %v3616 = vpop.f32.mrf.mxu0
        %3617 = vmatprep.mubr.bf16.mxu0 %v3330
        %3618 = vmatmul.mubr.bf16.gmra.mxu0 %v3329
        %v3619 = vpop.f32.mrf.mxu0
        %v3620 = vadd.f32 0.0, %v3619
        %v3621 = vpop.f32.mrf.mxu0
        %v3622 = vpop.f32.mrf.mxu0
        %v3623 = vadd.f32 0.0, %v3622
        %v3624 = vpop.f32.mrf.mxu0
        %3625 = vmatprep.mubr.bf16.mxu0 %v3333
        %3626 = vmatmul.mubr.bf16.gmra.mxu0 %v3332
        %v3627 = vpop.f32.mrf.mxu0
        %v3628 = vadd.f32 0.0, %v3627
        %v3629 = vpop.f32.mrf.mxu0
        %v3630 = vpop.f32.mrf.mxu0
        %v3631 = vadd.f32 0.0, %v3630
        %v3632 = vpop.f32.mrf.mxu0
        %3633 = vmatprep.mubr.bf16.mxu0 %v3336
        %3634 = vmatmul.mubr.bf16.gmra.mxu0 %v3335
        %v3635 = vpop.f32.mrf.mxu0
        %v3636 = vadd.f32 0.0, %v3635
        %v3637 = vpop.f32.mrf.mxu0
        %v3638 = vpop.f32.mrf.mxu0
        %v3639 = vadd.f32 0.0, %v3638
        %v3640 = vpop.f32.mrf.mxu0
        %3641 = vmatprep.mubr.bf16.mxu0 %v3339
        %3642 = vmatmul.mubr.bf16.gmra.mxu0 %v3338
        %v3643 = vpop.f32.mrf.mxu0
        %v3644 = vadd.f32 0.0, %v3643
        %v3645 = vpop.f32.mrf.mxu0
        %v3646 = vpop.f32.mrf.mxu0
        %v3647 = vadd.f32 0.0, %v3646
        %v3648 = vpop.f32.mrf.mxu0
        %3649 = vdwg.mxu0
        %3650 = vmatprep.subr.bf16.mxu0 0
        %3651 = vmatpush1.bf16.msra.mxu0 %v3496
        %3652 = vmatprep.subr.bf16.mxu0 0
        %3653 = vmatpush1.bf16.msra.mxu0 %v3495
        %3654 = vmatprep.subr.bf16.mxu0 0
        %3655 = vmatpush1.bf16.msra.mxu0 %v3494
        %3656 = vmatprep.subr.bf16.mxu0 0
        %3657 = vmatpush1.bf16.msra.mxu0 %v3493
        %3658 = vmatprep.subr.bf16.mxu0 0
        %3659 = vmatpush1.bf16.msra.mxu0 %v3492
        %3660 = vmatprep.subr.bf16.mxu0 0
        %3661 = vmatpush1.bf16.msra.mxu0 %v3491
        %3662 = vmatprep.subr.bf16.mxu0 0
        %3663 = vmatpush1.bf16.msra.mxu0 %v3490
        %3664 = vmatprep.subr.bf16.mxu0 0
        %3665 = vmatpush1.bf16.msra.mxu0 %v3489
        %3666 = vmatprep.subr.bf16.mxu0 0
        %3667 = vmatpush2.bf16.msra.mxu0 0
        %3668 = vmatprep.subr.bf16.mxu0 0
        %3669 = vmatpush2.bf16.msra.mxu0 0
        %3670 = vmatprep.subr.bf16.mxu0 0
        %3671 = vmatpush2.bf16.msra.mxu0 0
        %3672 = vmatprep.subr.bf16.mxu0 0
        %3673 = vmatpush2.bf16.msra.mxu0 0
        %3674 = vmatprep.subr.bf16.mxu0 0
        %3675 = vmatpush2.bf16.msra.mxu0 0
        %3676 = vmatprep.subr.bf16.mxu0 0
        %3677 = vmatpush2.bf16.msra.mxu0 0
        %3678 = vmatprep.subr.bf16.mxu0 0
        %3679 = vmatpush2.bf16.msra.mxu0 0
        %3680 = vmatprep.subr.bf16.mxu0 0
        %3681 = vmatpush2.bf16.msra.mxu0 0
        %3682 = vmatprep.mubr.bf16.mxu0 0
        %3683 = vmatmul.mubr.bf16.gmra.mxu0 %v3307
        %v3684 = vpop.f32.mrf.mxu0
        %v3685 = vadd.f32 %v3556, %v3684
        %v3686 = vpop.f32.mrf.mxu0
        %v3687 = vpop.f32.mrf.mxu0
        %v3688 = vadd.f32 %v3559, %v3687
        %v3689 = vpop.f32.mrf.mxu0
        %3690 = vmatprep.mubr.bf16.mxu0 0
        %3691 = vmatmul.mubr.bf16.gmra.mxu0 %v3310
        %v3692 = vpop.f32.mrf.mxu0
        %v3693 = vadd.f32 %v3564, %v3692
        %v3694 = vpop.f32.mrf.mxu0
        %v3695 = vpop.f32.mrf.mxu0
        %v3696 = vadd.f32 %v3567, %v3695
        %v3697 = vpop.f32.mrf.mxu0
        %3698 = vmatprep.mubr.bf16.mxu0 0
        %3699 = vmatmul.mubr.bf16.gmra.mxu0 %v3313
        %v3700 = vpop.f32.mrf.mxu0
        %v3701 = vadd.f32 %v3572, %v3700
        %v3702 = vpop.f32.mrf.mxu0
        %v3703 = vpop.f32.mrf.mxu0
        %v3704 = vadd.f32 %v3575, %v3703
        %v3705 = vpop.f32.mrf.mxu0
        %3706 = vmatprep.mubr.bf16.mxu0 0
        %3707 = vmatmul.mubr.bf16.gmra.mxu0 %v3316
        %v3708 = vpop.f32.mrf.mxu0
        %v3709 = vadd.f32 %v3580, %v3708
        %v3710 = vpop.f32.mrf.mxu0
        %v3711 = vpop.f32.mrf.mxu0
        %v3712 = vadd.f32 %v3583, %v3711
        %v3713 = vpop.f32.mrf.mxu0
        %3714 = vmatprep.mubr.bf16.mxu0 0
        %3715 = vmatmul.mubr.bf16.gmra.mxu0 %v3319
        %v3716 = vpop.f32.mrf.mxu0
        %v3717 = vadd.f32 %v3588, %v3716
        %v3718 = vpop.f32.mrf.mxu0
        %v3719 = vpop.f32.mrf.mxu0
        %v3720 = vadd.f32 %v3591, %v3719
        %v3721 = vpop.f32.mrf.mxu0
        %3722 = vmatprep.mubr.bf16.mxu0 0
        %3723 = vmatmul.mubr.bf16.gmra.mxu0 %v3322
        %v3724 = vpop.f32.mrf.mxu0
        %v3725 = vadd.f32 %v3596, %v3724
        %v3726 = vpop.f32.mrf.mxu0
        %v3727 = vpop.f32.mrf.mxu0
        %v3728 = vadd.f32 %v3599, %v3727
        %v3729 = vpop.f32.mrf.mxu0
        %3730 = vmatprep.mubr.bf16.mxu0 0
        %3731 = vmatmul.mubr.bf16.gmra.mxu0 %v3325
        %v3732 = vpop.f32.mrf.mxu0
        %v3733 = vadd.f32 %v3604, %v3732
        %v3734 = vpop.f32.mrf.mxu0
        %v3735 = vpop.f32.mrf.mxu0
        %v3736 = vadd.f32 %v3607, %v3735
        %v3737 = vpop.f32.mrf.mxu0
        %3738 = vmatprep.mubr.bf16.mxu0 0
        %3739 = vmatmul.mubr.bf16.gmra.mxu0 %v3328
        %v3740 = vpop.f32.mrf.mxu0
        %v3741 = vadd.f32 %v3612, %v3740
        %v3742 = vpop.f32.mrf.mxu0
        %v3743 = vpop.f32.mrf.mxu0
        %v3744 = vadd.f32 %v3615, %v3743
        %v3745 = vpop.f32.mrf.mxu0
        %3746 = vmatprep.mubr.bf16.mxu0 0
        %3747 = vmatmul.mubr.bf16.gmra.mxu0 %v3331
        %v3748 = vpop.f32.mrf.mxu0
        %v3749 = vadd.f32 %v3620, %v3748
        %v3750 = vpop.f32.mrf.mxu0
        %v3751 = vpop.f32.mrf.mxu0
        %v3752 = vadd.f32 %v3623, %v3751
        %v3753 = vpop.f32.mrf.mxu0
        %3754 = vmatprep.mubr.bf16.mxu0 0
        %3755 = vmatmul.mubr.bf16.gmra.mxu0 %v3334
        %v3756 = vpop.f32.mrf.mxu0
        %v3757 = vadd.f32 %v3628, %v3756
        %v3758 = vpop.f32.mrf.mxu0
        %v3759 = vpop.f32.mrf.mxu0
        %v3760 = vadd.f32 %v3631, %v3759
        %v3761 = vpop.f32.mrf.mxu0
        %3762 = vmatprep.mubr.bf16.mxu0 0
        %3763 = vmatmul.mubr.bf16.gmra.mxu0 %v3337
        %v3764 = vpop.f32.mrf.mxu0
        %v3765 = vadd.f32 %v3636, %v3764
        %v3766 = vpop.f32.mrf.mxu0
        %v3767 = vpop.f32.mrf.mxu0
        %v3768 = vadd.f32 %v3639, %v3767
        %v3769 = vpop.f32.mrf.mxu0
        %3770 = vmatprep.mubr.bf16.mxu0 0
        %3771 = vmatmul.mubr.bf16.gmra.mxu0 %v3340
        %v3772 = vpop.f32.mrf.mxu0
        %v3773 = vadd.f32 %v3644, %v3772
        %v3774 = vpop.f32.mrf.mxu0
        %v3775 = vpop.f32.mrf.mxu0
        %v3776 = vadd.f32 %v3647, %v3775
        %v3777 = vpop.f32.mrf.mxu0
        %3778 = vdwg.mxu0
        %v3779 = vadd.f32 %v2994, %v3685
        %v3780 = vadd.f32 %v2997, %v3688
        %v3781 = vadd.f32 %v3002, %v3693
        %v3782 = vadd.f32 %v3005, %v3696
        %v3783 = vadd.f32 %v3010, %v3701
        %v3784 = vadd.f32 %v3013, %v3704
        %v3785 = vadd.f32 %v3018, %v3709
        %v3786 = vadd.f32 %v3021, %v3712
        %v3787 = vadd.f32 %v3026, %v3717
        %v3788 = vadd.f32 %v3029, %v3720
        %v3789 = vadd.f32 %v3034, %v3725
        %v3790 = vadd.f32 %v3037, %v3728
        %v3791 = vadd.f32 %v3042, %v3733
        %v3792 = vadd.f32 %v3045, %v3736
        %v3793 = vadd.f32 %v3050, %v3741
        %v3794 = vadd.f32 %v3053, %v3744
        %v3795 = vadd.f32 %v3058, %v3749
        %v3796 = vadd.f32 %v3061, %v3752
        %v3797 = vadd.f32 %v3066, %v3757
        %v3798 = vadd.f32 %v3069, %v3760
        %v3799 = vadd.f32 %v3074, %v3765
        %v3800 = vadd.f32 %v3077, %v3768
        %v3801 = vadd.f32 %v3082, %v3773
        %v3802 = vadd.f32 %v3085, %v3776
        %v3803 = vld [vmem:[%s4] sm:$0x1]
        %v3805 = vlaneseq
        %v3806 = vshrl.u32 %v3805, 7
        %v3807 = vsub.s32 0, %v3806
        %v3808 = vrot.slane %v3803, %v3807
        %v3810 = vadd.f32 %v3779, %v3808
        %v3811 = vadd.f32 %v3780, %v3808
        %v3812 = vadd.f32 %v3781, %v3808
        %v3813 = vadd.f32 %v3782, %v3808
        %v3814 = vadd.f32 %v3783, %v3808
        %v3815 = vadd.f32 %v3784, %v3808
        %v3816 = vadd.f32 %v3785, %v3808
        %v3817 = vadd.f32 %v3786, %v3808
        %v3818 = vadd.f32 %v3787, %v3808
        %v3819 = vadd.f32 %v3788, %v3808
        %v3820 = vadd.f32 %v3789, %v3808
        %v3821 = vadd.f32 %v3790, %v3808
        %v3822 = vadd.f32 %v3791, %v3808
        %v3823 = vadd.f32 %v3792, %v3808
        %v3824 = vadd.f32 %v3793, %v3808
        %v3825 = vadd.f32 %v3794, %v3808
        %v3826 = vadd.f32 %v3795, %v3808
        %v3827 = vadd.f32 %v3796, %v3808
        %v3828 = vadd.f32 %v3797, %v3808
        %v3829 = vadd.f32 %v3798, %v3808
        %v3830 = vadd.f32 %v3799, %v3808
        %v3831 = vadd.f32 %v3800, %v3808
        %v3832 = vadd.f32 %v3801, %v3808
        %v3833 = vadd.f32 %v3802, %v3808
        %v3834 = vsub.f32 0.0, %v3810
        %v3835 = vsub.f32 0.0, %v3811
        %v3836 = vsub.f32 0.0, %v3812
        %v3837 = vsub.f32 0.0, %v3813
        %v3838 = vsub.f32 0.0, %v3814
        %v3839 = vsub.f32 0.0, %v3815
        %v3840 = vsub.f32 0.0, %v3816
        %v3841 = vsub.f32 0.0, %v3817
        %v3842 = vsub.f32 0.0, %v3818
        %v3843 = vsub.f32 0.0, %v3819
        %v3844 = vsub.f32 0.0, %v3820
        %v3845 = vsub.f32 0.0, %v3821
        %v3846 = vsub.f32 0.0, %v3822
        %v3847 = vsub.f32 0.0, %v3823
        %v3848 = vsub.f32 0.0, %v3824
        %v3849 = vsub.f32 0.0, %v3825
        %v3850 = vsub.f32 0.0, %v3826
        %v3851 = vsub.f32 0.0, %v3827
        %v3852 = vsub.f32 0.0, %v3828
        %v3853 = vsub.f32 0.0, %v3829
        %v3854 = vsub.f32 0.0, %v3830
        %v3855 = vsub.f32 0.0, %v3831
        %v3856 = vsub.f32 0.0, %v3832
        %v3857 = vsub.f32 0.0, %v3833
        %v3858 = vmul.f32 %v3834, 1.442695
        %v3859 = vpow.pop %v3858
        %v3860 = vmul.f32 %v3835, 1.442695
        %v3861 = vpow.pop %v3860
        %v3862 = vmul.f32 %v3836, 1.442695
        %v3863 = vpow.pop %v3862
        %v3864 = vmul.f32 %v3837, 1.442695
        %v3865 = vpow.pop %v3864
        %v3866 = vmul.f32 %v3838, 1.442695
        %v3867 = vpow.pop %v3866
        %v3868 = vmul.f32 %v3839, 1.442695
        %v3869 = vpow.pop %v3868
        %v3870 = vmul.f32 %v3840, 1.442695
        %v3871 = vpow.pop %v3870
        %v3872 = vmul.f32 %v3841, 1.442695
        %v3873 = vpow.pop %v3872
        %v3874 = vmul.f32 %v3842, 1.442695
        %v3875 = vpow.pop %v3874
        %v3876 = vmul.f32 %v3843, 1.442695
        %v3877 = vpow.pop %v3876
        %v3878 = vmul.f32 %v3844, 1.442695
        %v3879 = vpow.pop %v3878
        %v3880 = vmul.f32 %v3845, 1.442695
        %v3881 = vpow.pop %v3880
        %v3882 = vmul.f32 %v3846, 1.442695
        %v3883 = vpow.pop %v3882
        %v3884 = vmul.f32 %v3847, 1.442695
        %v3885 = vpow.pop %v3884
        %v3886 = vmul.f32 %v3848, 1.442695
        %v3887 = vpow.pop %v3886
        %v3888 = vmul.f32 %v3849, 1.442695
        %v3889 = vpow.pop %v3888
        %v3890 = vmul.f32 %v3850, 1.442695
        %v3891 = vpow.pop %v3890
        %v3892 = vmul.f32 %v3851, 1.442695
        %v3893 = vpow.pop %v3892
        %v3894 = vmul.f32 %v3852, 1.442695
        %v3895 = vpow.pop %v3894
        %v3896 = vmul.f32 %v3853, 1.442695
        %v3897 = vpow.pop %v3896
        %v3898 = vmul.f32 %v3854, 1.442695
        %v3899 = vpow.pop %v3898
        %v3900 = vmul.f32 %v3855, 1.442695
        %v3901 = vpow.pop %v3900
        %v3902 = vmul.f32 %v3856, 1.442695
        %v3903 = vpow.pop %v3902
        %v3904 = vmul.f32 %v3857, 1.442695
        %v3905 = vpow.pop %v3904
        %v3906 = vadd.f32 %v3859, 1.0
        %v3907 = vadd.f32 %v3861, 1.0
        %v3908 = vadd.f32 %v3863, 1.0
        %v3909 = vadd.f32 %v3865, 1.0
        %v3910 = vadd.f32 %v3867, 1.0
        %v3911 = vadd.f32 %v3869, 1.0
        %v3912 = vadd.f32 %v3871, 1.0
        %v3913 = vadd.f32 %v3873, 1.0
        %v3914 = vadd.f32 %v3875, 1.0
        %v3915 = vadd.f32 %v3877, 1.0
        %v3916 = vadd.f32 %v3879, 1.0
        %v3917 = vadd.f32 %v3881, 1.0
        %v3918 = vadd.f32 %v3883, 1.0
        %v3919 = vadd.f32 %v3885, 1.0
        %v3920 = vadd.f32 %v3887, 1.0
        %v3921 = vadd.f32 %v3889, 1.0
        %v3922 = vadd.f32 %v3891, 1.0
        %v3923 = vadd.f32 %v3893, 1.0
        %v3924 = vadd.f32 %v3895, 1.0
        %v3925 = vadd.f32 %v3897, 1.0
        %v3926 = vadd.f32 %v3899, 1.0
        %v3927 = vadd.f32 %v3901, 1.0
        %v3928 = vadd.f32 %v3903, 1.0
        %v3929 = vadd.f32 %v3905, 1.0
        %v3930 = vrcp.pop %v3906
        %v3931 = vrcp.pop %v3907
        %v3932 = vrcp.pop %v3908
        %v3933 = vrcp.pop %v3909
        %v3934 = vrcp.pop %v3910
        %v3935 = vrcp.pop %v3911
        %v3936 = vrcp.pop %v3912
        %v3937 = vrcp.pop %v3913
        %v3938 = vrcp.pop %v3914
        %v3939 = vrcp.pop %v3915
        %v3940 = vrcp.pop %v3916
        %v3941 = vrcp.pop %v3917
        %v3942 = vrcp.pop %v3918
        %v3943 = vrcp.pop %v3919
        %v3944 = vrcp.pop %v3920
        %v3945 = vrcp.pop %v3921
        %v3946 = vrcp.pop %v3922
        %v3947 = vrcp.pop %v3923
        %v3948 = vrcp.pop %v3924
        %v3949 = vrcp.pop %v3925
        %v3950 = vrcp.pop %v3926
        %v3951 = vrcp.pop %v3927
        %v3952 = vrcp.pop %v3928
        %v3953 = vrcp.pop %v3929
        %v3954 = vmul.f32 %v3810, %v3930
        %v3955 = vmul.f32 %v3811, %v3931
        %v3956 = vmul.f32 %v3812, %v3932
        %v3957 = vmul.f32 %v3813, %v3933
        %v3958 = vmul.f32 %v3814, %v3934
        %v3959 = vmul.f32 %v3815, %v3935
        %v3960 = vmul.f32 %v3816, %v3936
        %v3961 = vmul.f32 %v3817, %v3937
        %v3962 = vmul.f32 %v3818, %v3938
        %v3963 = vmul.f32 %v3819, %v3939
        %v3964 = vmul.f32 %v3820, %v3940
        %v3965 = vmul.f32 %v3821, %v3941
        %v3966 = vmul.f32 %v3822, %v3942
        %v3967 = vmul.f32 %v3823, %v3943
        %v3968 = vmul.f32 %v3824, %v3944
        %v3969 = vmul.f32 %v3825, %v3945
        %v3970 = vmul.f32 %v3826, %v3946
        %v3971 = vmul.f32 %v3827, %v3947
        %v3972 = vmul.f32 %v3828, %v3948
        %v3973 = vmul.f32 %v3829, %v3949
        %v3974 = vmul.f32 %v3830, %v3950
        %v3975 = vmul.f32 %v3831, %v3951
        %v3976 = vmul.f32 %v3832, %v3952
        %v3977 = vmul.f32 %v3833, %v3953
        %v3978 = vsel %vm441, %v3954, 0.0
        %v3979 = vsel %vm442, %v3955, 0.0
        %v3980 = vsel %vm443, %v3956, 0.0
        %v3981 = vsel %vm444, %v3957, 0.0
        %v3982 = vsel %vm445, %v3958, 0.0
        %v3983 = vsel %vm446, %v3959, 0.0
        %v3984 = vsel %vm447, %v3960, 0.0
        %v3985 = vsel %vm448, %v3961, 0.0
        %v3986 = vsel %vm449, %v3962, 0.0
        %v3987 = vsel %vm450, %v3963, 0.0
        %v3988 = vsel %vm451, %v3964, 0.0
        %v3989 = vsel %vm452, %v3965, 0.0
        %v3990 = vsel %vm453, %v3966, 0.0
        %v3991 = vsel %vm454, %v3967, 0.0
        %v3992 = vsel %vm455, %v3968, 0.0
        %v3993 = vsel %vm456, %v3969, 0.0
        %v3994 = vsel %vm457, %v3970, 0.0
        %v3995 = vsel %vm458, %v3971, 0.0
        %v3996 = vsel %vm459, %v3972, 0.0
        %v3997 = vsel %vm460, %v3973, 0.0
        %v3998 = vsel %vm461, %v3974, 0.0
        %v3999 = vsel %vm462, %v3975, 0.0
        %v4000 = vsel %vm463, %v3976, 0.0
        %v4001 = vsel %vm464, %v3977, 0.0
        %v4026 = vrot.slane %v3978, 7
        %v4027 = vsel %vm1371, %v1372, %v4026
        %v4028 = vrot.slane %v3979, 7
        %v4029 = vsel %vm1371, %v4026, %v4028
        %v4030 = vrot.slane %v3980, 7
        %v4031 = vsel %vm1371, %v4028, %v4030
        %v4032 = vrot.slane %v3981, 7
        %v4033 = vsel %vm1371, %v4030, %v4032
        %v4034 = vrot.slane %v3982, 7
        %v4035 = vsel %vm1371, %v4032, %v4034
        %v4036 = vrot.slane %v3983, 7
        %v4037 = vsel %vm1371, %v4034, %v4036
        %v4038 = vrot.slane %v3984, 7
        %v4039 = vsel %vm1371, %v4036, %v4038
        %v4040 = vrot.slane %v3985, 7
        %v4041 = vsel %vm1371, %v4038, %v4040
        %v4042 = vrot.slane %v3986, 7
        %v4043 = vsel %vm1371, %v4040, %v4042
        %v4044 = vrot.slane %v3987, 7
        %v4045 = vsel %vm1371, %v4042, %v4044
        %v4046 = vrot.slane %v3988, 7
        %v4047 = vsel %vm1371, %v4044, %v4046
        %v4048 = vrot.slane %v3989, 7
        %v4049 = vsel %vm1371, %v4046, %v4048
        %v4050 = vrot.slane %v3990, 7
        %v4051 = vsel %vm1371, %v4048, %v4050
        %v4052 = vrot.slane %v3991, 7
        %v4053 = vsel %vm1371, %v4050, %v4052
        %v4054 = vrot.slane %v3992, 7
        %v4055 = vsel %vm1371, %v4052, %v4054
        %v4056 = vrot.slane %v3993, 7
        %v4057 = vsel %vm1371, %v4054, %v4056
        %v4058 = vrot.slane %v3994, 7
        %v4059 = vsel %vm1371, %v4056, %v4058
        %v4060 = vrot.slane %v3995, 7
        %v4061 = vsel %vm1371, %v4058, %v4060
        %v4062 = vrot.slane %v3996, 7
        %v4063 = vsel %vm1371, %v4060, %v4062
        %v4064 = vrot.slane %v3997, 7
        %v4065 = vsel %vm1371, %v4062, %v4064
        %v4066 = vrot.slane %v3998, 7
        %v4067 = vsel %vm1371, %v4064, %v4066
        %v4068 = vrot.slane %v3999, 7
        %v4069 = vsel %vm1371, %v4066, %v4068
        %v4070 = vrot.slane %v4000, 7
        %v4071 = vsel %vm1371, %v4068, %v4070
        %v4072 = vrot.slane %v4001, 7
        %v4073 = vsel %vm1371, %v4070, %v4072
        %v4098 = vsel %vm489, %v4027, 0.0
        %v4099 = vsel %vm490, %v4029, 0.0
        %v4100 = vsel %vm491, %v4031, 0.0
        %v4101 = vsel %vm492, %v4033, 0.0
        %v4102 = vsel %vm493, %v4035, 0.0
        %v4103 = vsel %vm494, %v4037, 0.0
        %v4104 = vsel %vm495, %v4039, 0.0
        %v4105 = vsel %vm496, %v4041, 0.0
        %v4106 = vsel %vm497, %v4043, 0.0
        %v4107 = vsel %vm498, %v4045, 0.0
        %v4108 = vsel %vm499, %v4047, 0.0
        %v4109 = vsel %vm500, %v4049, 0.0
        %v4110 = vsel %vm501, %v4051, 0.0
        %v4111 = vsel %vm502, %v4053, 0.0
        %v4112 = vsel %vm503, %v4055, 0.0
        %v4113 = vsel %vm504, %v4057, 0.0
        %v4114 = vsel %vm505, %v4059, 0.0
        %v4115 = vsel %vm506, %v4061, 0.0
        %v4116 = vsel %vm507, %v4063, 0.0
        %v4117 = vsel %vm508, %v4065, 0.0
        %v4118 = vsel %vm509, %v4067, 0.0
        %v4119 = vsel %vm510, %v4069, 0.0
        %v4120 = vsel %vm511, %v4071, 0.0
        %v4121 = vsel %vm512, %v4073, 0.0
        %v4122 = vrot.slane %v3978, 1
        %v4123 = vrot.slane %v3979, 1
        %v4124 = vsel %vm1469, %v4122, %v4123
        %v4125 = vrot.slane %v3980, 1
        %v4126 = vsel %vm1469, %v4123, %v4125
        %v4127 = vrot.slane %v3981, 1
        %v4128 = vsel %vm1469, %v4125, %v4127
        %v4129 = vrot.slane %v3982, 1
        %v4130 = vsel %vm1469, %v4127, %v4129
        %v4131 = vrot.slane %v3983, 1
        %v4132 = vsel %vm1469, %v4129, %v4131
        %v4133 = vrot.slane %v3984, 1
        %v4134 = vsel %vm1469, %v4131, %v4133
        %v4135 = vrot.slane %v3985, 1
        %v4136 = vsel %vm1469, %v4133, %v4135
        %v4137 = vrot.slane %v3986, 1
        %v4138 = vsel %vm1469, %v4135, %v4137
        %v4139 = vrot.slane %v3987, 1
        %v4140 = vsel %vm1469, %v4137, %v4139
        %v4141 = vrot.slane %v3988, 1
        %v4142 = vsel %vm1469, %v4139, %v4141
        %v4143 = vrot.slane %v3989, 1
        %v4144 = vsel %vm1469, %v4141, %v4143
        %v4145 = vrot.slane %v3990, 1
        %v4146 = vsel %vm1469, %v4143, %v4145
        %v4147 = vrot.slane %v3991, 1
        %v4148 = vsel %vm1469, %v4145, %v4147
        %v4149 = vrot.slane %v3992, 1
        %v4150 = vsel %vm1469, %v4147, %v4149
        %v4151 = vrot.slane %v3993, 1
        %v4152 = vsel %vm1469, %v4149, %v4151
        %v4153 = vrot.slane %v3994, 1
        %v4154 = vsel %vm1469, %v4151, %v4153
        %v4155 = vrot.slane %v3995, 1
        %v4156 = vsel %vm1469, %v4153, %v4155
        %v4157 = vrot.slane %v3996, 1
        %v4158 = vsel %vm1469, %v4155, %v4157
        %v4159 = vrot.slane %v3997, 1
        %v4160 = vsel %vm1469, %v4157, %v4159
        %v4161 = vrot.slane %v3998, 1
        %v4162 = vsel %vm1469, %v4159, %v4161
        %v4163 = vrot.slane %v3999, 1
        %v4164 = vsel %vm1469, %v4161, %v4163
        %v4165 = vrot.slane %v4000, 1
        %v4166 = vsel %vm1469, %v4163, %v4165
        %v4167 = vrot.slane %v4001, 1
        %v4168 = vsel %vm1469, %v4165, %v4167
        %v4169 = vsel %vm1469, %v4167, %v1517
        %v4194 = vsel %vm537, %v4124, 0.0
        %v4195 = vsel %vm538, %v4126, 0.0
        %v4196 = vsel %vm539, %v4128, 0.0
        %v4197 = vsel %vm540, %v4130, 0.0
        %v4198 = vsel %vm541, %v4132, 0.0
        %v4199 = vsel %vm542, %v4134, 0.0
        %v4200 = vsel %vm543, %v4136, 0.0
        %v4201 = vsel %vm544, %v4138, 0.0
        %v4202 = vsel %vm545, %v4140, 0.0
        %v4203 = vsel %vm546, %v4142, 0.0
        %v4204 = vsel %vm547, %v4144, 0.0
        %v4205 = vsel %vm548, %v4146, 0.0
        %v4206 = vsel %vm549, %v4148, 0.0
        %v4207 = vsel %vm550, %v4150, 0.0
        %v4208 = vsel %vm551, %v4152, 0.0
        %v4209 = vsel %vm552, %v4154, 0.0
        %v4210 = vsel %vm553, %v4156, 0.0
        %v4211 = vsel %vm554, %v4158, 0.0
        %v4212 = vsel %vm555, %v4160, 0.0
        %v4213 = vsel %vm556, %v4162, 0.0
        %v4214 = vsel %vm557, %v4164, 0.0
        %v4215 = vsel %vm558, %v4166, 0.0
        %v4216 = vsel %vm559, %v4168, 0.0
        %v4217 = vsel %vm560, %v4169, 0.0
        %v4218 = vpack.c.bf16 %v4099, %v4098
        %v4219 = vpack.c.bf16 %v4101, %v4100
        %v4220 = vpack.c.bf16 %v4103, %v4102
        %v4221 = vpack.c.bf16 %v4105, %v4104
        %v4222 = vpack.c.bf16 %v4107, %v4106
        %v4223 = vpack.c.bf16 %v4109, %v4108
        %v4224 = vpack.c.bf16 %v4111, %v4110
        %v4225 = vpack.c.bf16 %v4113, %v4112
        %v4226 = vpack.c.bf16 %v4115, %v4114
        %v4227 = vpack.c.bf16 %v4117, %v4116
        %v4228 = vpack.c.bf16 %v4119, %v4118
        %v4229 = vpack.c.bf16 %v4121, %v4120
        %v4242 = vunpack.c.l.b16 %v4218
        %v4243 = vunpack.c.h.b16 %v4218
        %v4244 = vunpack.c.l.b16 %v4219
        %v4245 = vunpack.c.h.b16 %v4219
        %v4246 = vunpack.c.l.b16 %v4220
        %v4247 = vunpack.c.h.b16 %v4220
        %v4248 = vunpack.c.l.b16 %v4221
        %v4249 = vunpack.c.h.b16 %v4221
        %v4250 = vunpack.c.l.b16 %v4222
        %v4251 = vunpack.c.h.b16 %v4222
        %v4252 = vunpack.c.l.b16 %v4223
        %v4253 = vunpack.c.h.b16 %v4223
        %v4254 = vunpack.c.l.b16 %v4224
        %v4255 = vunpack.c.h.b16 %v4224
        %v4256 = vunpack.c.l.b16 %v4225
        %v4257 = vunpack.c.h.b16 %v4225
        %v4258 = vunpack.c.l.b16 %v4226
        %v4259 = vunpack.c.h.b16 %v4226
        %v4260 = vunpack.c.l.b16 %v4227
        %v4261 = vunpack.c.h.b16 %v4227
        %v4262 = vunpack.c.l.b16 %v4228
        %v4263 = vunpack.c.h.b16 %v4228
        %v4264 = vunpack.c.l.b16 %v4229
        %v4265 = vunpack.c.h.b16 %v4229
        %v4266 = vpack.c.b16 %v4242, %v4242
        %v4267 = vpack.c.b16 %v4243, %v4243
        %v4268 = vpack.c.b16 %v4244, %v4244
        %v4269 = vpack.c.b16 %v4245, %v4245
        %v4270 = vpack.c.b16 %v4246, %v4246
        %v4271 = vpack.c.b16 %v4247, %v4247
        %v4272 = vpack.c.b16 %v4248, %v4248
        %v4273 = vpack.c.b16 %v4249, %v4249
        %v4274 = vpack.c.b16 %v4250, %v4250
        %v4275 = vpack.c.b16 %v4251, %v4251
        %v4276 = vpack.c.b16 %v4252, %v4252
        %v4277 = vpack.c.b16 %v4253, %v4253
        %v4278 = vpack.c.b16 %v4254, %v4254
        %v4279 = vpack.c.b16 %v4255, %v4255
        %v4280 = vpack.c.b16 %v4256, %v4256
        %v4281 = vpack.c.b16 %v4257, %v4257
        %v4282 = vpack.c.b16 %v4258, %v4258
        %v4283 = vpack.c.b16 %v4259, %v4259
        %v4284 = vpack.c.b16 %v4260, %v4260
        %v4285 = vpack.c.b16 %v4261, %v4261
        %v4286 = vpack.c.b16 %v4262, %v4262
        %v4287 = vpack.c.b16 %v4263, %v4263
        %v4288 = vpack.c.b16 %v4264, %v4264
        %v4289 = vpack.c.b16 %v4265, %v4265
        %4314 = vst [vmem:[#allocation2 + $0x18] sm:$0xf] %v4266
        %4315 = vst [vmem:[#allocation2 + $0x24] sm:$0xf] %v4267
        %4316 = vst [vmem:[#allocation2 + $0x30] sm:$0xf] %v4268
        %4317 = vst [vmem:[#allocation2 + $0x3c] sm:$0xf] %v4269
        %4318 = vst [vmem:[#allocation2 + $0x48] sm:$0xf] %v4270
        %4319 = vst [vmem:[#allocation2 + $0x54] sm:$0xf] %v4271
        %4320 = vst [vmem:[#allocation2 + $0x60] sm:$0xf] %v4272
        %4321 = vst [vmem:[#allocation2 + $0x6c] sm:$0xf] %v4273
        %4322 = vst [vmem:[#allocation2 + $0x78] sm:$0xf] %v4274
        %4323 = vst [vmem:[#allocation2 + $0x84] sm:$0xf] %v4275
        %4324 = vst [vmem:[#allocation2 + $0x90] sm:$0xf] %v4276
        %4325 = vst [vmem:[#allocation2 + $0x9c] sm:$0xf] %v4277
        %4326 = vst [vmem:[#allocation2 + $0xa8] sm:$0xf] %v4278
        %4327 = vst [vmem:[#allocation2 + $0xb4] sm:$0xf] %v4279
        %4328 = vst [vmem:[#allocation2 + $0xc0] sm:$0xf] %v4280
        %4329 = vst [vmem:[#allocation2 + $0xcc] sm:$0xf] %v4281
        %4330 = vst [vmem:[#allocation2 + $0xd8] sm:$0xf] %v4282
        %4331 = vst [vmem:[#allocation2 + $0xe4] sm:$0xf] %v4283
        %4332 = vst [vmem:[#allocation2 + $0xf0] sm:$0xf] %v4284
        %4333 = vst [vmem:[#allocation2 + $0xfc] sm:$0xf] %v4285
        %4334 = vst [vmem:[#allocation2 + $0x108] sm:$0xf] %v4286
        %4335 = vst [vmem:[#allocation2 + $0x114] sm:$0xf] %v4287
        %4336 = vst [vmem:[#allocation2 + $0x120] sm:$0xf] %v4288
        %4337 = vst [vmem:[#allocation2 + $0x12c] sm:$0xf] %v4289
        %v4338 = vpack.c.bf16 %v3979, %v3978
        %v4339 = vpack.c.bf16 %v3981, %v3980
        %v4340 = vpack.c.bf16 %v3983, %v3982
        %v4341 = vpack.c.bf16 %v3985, %v3984
        %v4342 = vpack.c.bf16 %v3987, %v3986
        %v4343 = vpack.c.bf16 %v3989, %v3988
        %v4344 = vpack.c.bf16 %v3991, %v3990
        %v4345 = vpack.c.bf16 %v3993, %v3992
        %v4346 = vpack.c.bf16 %v3995, %v3994
        %v4347 = vpack.c.bf16 %v3997, %v3996
        %v4348 = vpack.c.bf16 %v3999, %v3998
        %v4349 = vpack.c.bf16 %v4001, %v4000
        %v4362 = vunpack.c.l.b16 %v4338
        %v4363 = vunpack.c.h.b16 %v4338
        %v4364 = vunpack.c.l.b16 %v4339
        %v4365 = vunpack.c.h.b16 %v4339
        %v4366 = vunpack.c.l.b16 %v4340
        %v4367 = vunpack.c.h.b16 %v4340
        %v4368 = vunpack.c.l.b16 %v4341
        %v4369 = vunpack.c.h.b16 %v4341
        %v4370 = vunpack.c.l.b16 %v4342
        %v4371 = vunpack.c.h.b16 %v4342
        %v4372 = vunpack.c.l.b16 %v4343
        %v4373 = vunpack.c.h.b16 %v4343
        %v4374 = vunpack.c.l.b16 %v4344
        %v4375 = vunpack.c.h.b16 %v4344
        %v4376 = vunpack.c.l.b16 %v4345
        %v4377 = vunpack.c.h.b16 %v4345
        %v4378 = vunpack.c.l.b16 %v4346
        %v4379 = vunpack.c.h.b16 %v4346
        %v4380 = vunpack.c.l.b16 %v4347
        %v4381 = vunpack.c.h.b16 %v4347
        %v4382 = vunpack.c.l.b16 %v4348
        %v4383 = vunpack.c.h.b16 %v4348
        %v4384 = vunpack.c.l.b16 %v4349
        %v4385 = vunpack.c.h.b16 %v4349
        %v4386 = vpack.c.b16 %v4362, %v4362
        %v4387 = vpack.c.b16 %v4363, %v4363
        %v4388 = vpack.c.b16 %v4364, %v4364
        %v4389 = vpack.c.b16 %v4365, %v4365
        %v4390 = vpack.c.b16 %v4366, %v4366
        %v4391 = vpack.c.b16 %v4367, %v4367
        %v4392 = vpack.c.b16 %v4368, %v4368
        %v4393 = vpack.c.b16 %v4369, %v4369
        %v4394 = vpack.c.b16 %v4370, %v4370
        %v4395 = vpack.c.b16 %v4371, %v4371
        %v4396 = vpack.c.b16 %v4372, %v4372
        %v4397 = vpack.c.b16 %v4373, %v4373
        %v4398 = vpack.c.b16 %v4374, %v4374
        %v4399 = vpack.c.b16 %v4375, %v4375
        %v4400 = vpack.c.b16 %v4376, %v4376
        %v4401 = vpack.c.b16 %v4377, %v4377
        %v4402 = vpack.c.b16 %v4378, %v4378
        %v4403 = vpack.c.b16 %v4379, %v4379
        %v4404 = vpack.c.b16 %v4380, %v4380
        %v4405 = vpack.c.b16 %v4381, %v4381
        %v4406 = vpack.c.b16 %v4382, %v4382
        %v4407 = vpack.c.b16 %v4383, %v4383
        %v4408 = vpack.c.b16 %v4384, %v4384
        %v4409 = vpack.c.b16 %v4385, %v4385
        %4434 = vst [vmem:[#allocation2 + $0x1c] sm:$0xf] %v4386
        %4435 = vst [vmem:[#allocation2 + $0x28] sm:$0xf] %v4387
        %4436 = vst [vmem:[#allocation2 + $0x34] sm:$0xf] %v4388
        %4437 = vst [vmem:[#allocation2 + $0x40] sm:$0xf] %v4389
        %4438 = vst [vmem:[#allocation2 + $0x4c] sm:$0xf] %v4390
        %4439 = vst [vmem:[#allocation2 + $0x58] sm:$0xf] %v4391
        %4440 = vst [vmem:[#allocation2 + $0x64] sm:$0xf] %v4392
        %4441 = vst [vmem:[#allocation2 + $0x70] sm:$0xf] %v4393
        %4442 = vst [vmem:[#allocation2 + $0x7c] sm:$0xf] %v4394
        %4443 = vst [vmem:[#allocation2 + $0x88] sm:$0xf] %v4395
        %4444 = vst [vmem:[#allocation2 + $0x94] sm:$0xf] %v4396
        %4445 = vst [vmem:[#allocation2 + $0xa0] sm:$0xf] %v4397
        %4446 = vst [vmem:[#allocation2 + $0xac] sm:$0xf] %v4398
        %4447 = vst [vmem:[#allocation2 + $0xb8] sm:$0xf] %v4399
        %4448 = vst [vmem:[#allocation2 + $0xc4] sm:$0xf] %v4400
        %4449 = vst [vmem:[#allocation2 + $0xd0] sm:$0xf] %v4401
        %4450 = vst [vmem:[#allocation2 + $0xdc] sm:$0xf] %v4402
        %4451 = vst [vmem:[#allocation2 + $0xe8] sm:$0xf] %v4403
        %4452 = vst [vmem:[#allocation2 + $0xf4] sm:$0xf] %v4404
        %4453 = vst [vmem:[#allocation2 + $0x100] sm:$0xf] %v4405
        %4454 = vst [vmem:[#allocation2 + $0x10c] sm:$0xf] %v4406
        %4455 = vst [vmem:[#allocation2 + $0x118] sm:$0xf] %v4407
        %4456 = vst [vmem:[#allocation2 + $0x124] sm:$0xf] %v4408
        %4457 = vst [vmem:[#allocation2 + $0x130] sm:$0xf] %v4409
        %v4458 = vpack.c.bf16 %v4195, %v4194
        %v4459 = vpack.c.bf16 %v4197, %v4196
        %v4460 = vpack.c.bf16 %v4199, %v4198
        %v4461 = vpack.c.bf16 %v4201, %v4200
        %v4462 = vpack.c.bf16 %v4203, %v4202
        %v4463 = vpack.c.bf16 %v4205, %v4204
        %v4464 = vpack.c.bf16 %v4207, %v4206
        %v4465 = vpack.c.bf16 %v4209, %v4208
        %v4466 = vpack.c.bf16 %v4211, %v4210
        %v4467 = vpack.c.bf16 %v4213, %v4212
        %v4468 = vpack.c.bf16 %v4215, %v4214
        %v4469 = vpack.c.bf16 %v4217, %v4216
        %v4482 = vunpack.c.l.b16 %v4458
        %v4483 = vunpack.c.h.b16 %v4458
        %v4484 = vunpack.c.l.b16 %v4459
        %v4485 = vunpack.c.h.b16 %v4459
        %v4486 = vunpack.c.l.b16 %v4460
        %v4487 = vunpack.c.h.b16 %v4460
        %v4488 = vunpack.c.l.b16 %v4461
        %v4489 = vunpack.c.h.b16 %v4461
        %v4490 = vunpack.c.l.b16 %v4462
        %v4491 = vunpack.c.h.b16 %v4462
        %v4492 = vunpack.c.l.b16 %v4463
        %v4493 = vunpack.c.h.b16 %v4463
        %v4494 = vunpack.c.l.b16 %v4464
        %v4495 = vunpack.c.h.b16 %v4464
        %v4496 = vunpack.c.l.b16 %v4465
        %v4497 = vunpack.c.h.b16 %v4465
        %v4498 = vunpack.c.l.b16 %v4466
        %v4499 = vunpack.c.h.b16 %v4466
        %v4500 = vunpack.c.l.b16 %v4467
        %v4501 = vunpack.c.h.b16 %v4467
        %v4502 = vunpack.c.l.b16 %v4468
        %v4503 = vunpack.c.h.b16 %v4468
        %v4504 = vunpack.c.l.b16 %v4469
        %v4505 = vunpack.c.h.b16 %v4469
        %v4506 = vpack.c.b16 %v4482, %v4482
        %v4507 = vpack.c.b16 %v4483, %v4483
        %v4508 = vpack.c.b16 %v4484, %v4484
        %v4509 = vpack.c.b16 %v4485, %v4485
        %v4510 = vpack.c.b16 %v4486, %v4486
        %v4511 = vpack.c.b16 %v4487, %v4487
        %v4512 = vpack.c.b16 %v4488, %v4488
        %v4513 = vpack.c.b16 %v4489, %v4489
        %v4514 = vpack.c.b16 %v4490, %v4490
        %v4515 = vpack.c.b16 %v4491, %v4491
        %v4516 = vpack.c.b16 %v4492, %v4492
        %v4517 = vpack.c.b16 %v4493, %v4493
        %v4518 = vpack.c.b16 %v4494, %v4494
        %v4519 = vpack.c.b16 %v4495, %v4495
        %v4520 = vpack.c.b16 %v4496, %v4496
        %v4521 = vpack.c.b16 %v4497, %v4497
        %v4522 = vpack.c.b16 %v4498, %v4498
        %v4523 = vpack.c.b16 %v4499, %v4499
        %v4524 = vpack.c.b16 %v4500, %v4500
        %v4525 = vpack.c.b16 %v4501, %v4501
        %v4526 = vpack.c.b16 %v4502, %v4502
        %v4527 = vpack.c.b16 %v4503, %v4503
        %v4528 = vpack.c.b16 %v4504, %v4504
        %v4529 = vpack.c.b16 %v4505, %v4505
        %4554 = vst [vmem:[#allocation2 + $0x20] sm:$0xf] %v4506
        %4555 = vst [vmem:[#allocation2 + $0x2c] sm:$0xf] %v4507
        %4556 = vst [vmem:[#allocation2 + $0x38] sm:$0xf] %v4508
        %4557 = vst [vmem:[#allocation2 + $0x44] sm:$0xf] %v4509
        %4558 = vst [vmem:[#allocation2 + $0x50] sm:$0xf] %v4510
        %4559 = vst [vmem:[#allocation2 + $0x5c] sm:$0xf] %v4511
        %4560 = vst [vmem:[#allocation2 + $0x68] sm:$0xf] %v4512
        %4561 = vst [vmem:[#allocation2 + $0x74] sm:$0xf] %v4513
        %4562 = vst [vmem:[#allocation2 + $0x80] sm:$0xf] %v4514
        %4563 = vst [vmem:[#allocation2 + $0x8c] sm:$0xf] %v4515
        %4564 = vst [vmem:[#allocation2 + $0x98] sm:$0xf] %v4516
        %4565 = vst [vmem:[#allocation2 + $0xa4] sm:$0xf] %v4517
        %4566 = vst [vmem:[#allocation2 + $0xb0] sm:$0xf] %v4518
        %4567 = vst [vmem:[#allocation2 + $0xbc] sm:$0xf] %v4519
        %4568 = vst [vmem:[#allocation2 + $0xc8] sm:$0xf] %v4520
        %4569 = vst [vmem:[#allocation2 + $0xd4] sm:$0xf] %v4521
        %4570 = vst [vmem:[#allocation2 + $0xe0] sm:$0xf] %v4522
        %4571 = vst [vmem:[#allocation2 + $0xec] sm:$0xf] %v4523
        %4572 = vst [vmem:[#allocation2 + $0xf8] sm:$0xf] %v4524
        %4573 = vst [vmem:[#allocation2 + $0x104] sm:$0xf] %v4525
        %4574 = vst [vmem:[#allocation2 + $0x110] sm:$0xf] %v4526
        %4575 = vst [vmem:[#allocation2 + $0x11c] sm:$0xf] %v4527
        %4576 = vst [vmem:[#allocation2 + $0x128] sm:$0xf] %v4528
        %4577 = vst [vmem:[#allocation2 + $0x134] sm:$0xf] %v4529
        %v4578 = vld [vmem:[#allocation2] sm:$0xff]
        %v4579 = vld [vmem:[#allocation2 + $0x8] sm:$0xf]
        %v4580 = vld [vmem:[#allocation2 + $0xc] sm:$0xff]
        %v4581 = vld [vmem:[#allocation2 + $0x14] sm:$0xf]
        %v4582 = vld [vmem:[#allocation2 + $0x18] sm:$0xff]
        %v4583 = vld [vmem:[#allocation2 + $0x20] sm:$0xf]
        %v4584 = vld [vmem:[#allocation2 + $0x24] sm:$0xff]
        %v4585 = vld [vmem:[#allocation2 + $0x2c] sm:$0xf]
        %v4586 = vld [vmem:[#allocation2 + $0x30] sm:$0xff]
        %v4587 = vld [vmem:[#allocation2 + $0x38] sm:$0xf]
        %v4588 = vld [vmem:[#allocation2 + $0x3c] sm:$0xff]
        %v4589 = vld [vmem:[#allocation2 + $0x44] sm:$0xf]
        %v4590 = vld [vmem:[#allocation2 + $0x48] sm:$0xff]
        %v4591 = vld [vmem:[#allocation2 + $0x50] sm:$0xf]
        %v4592 = vld [vmem:[#allocation2 + $0x54] sm:$0xff]
        %v4593 = vld [vmem:[#allocation2 + $0x5c] sm:$0xf]
        %v4594 = vld [vmem:[#allocation2 + $0x60] sm:$0xff]
        %v4595 = vld [vmem:[#allocation2 + $0x68] sm:$0xf]
        %v4596 = vld [vmem:[#allocation2 + $0x6c] sm:$0xff]
        %v4597 = vld [vmem:[#allocation2 + $0x74] sm:$0xf]
        %v4598 = vld [vmem:[#allocation2 + $0x78] sm:$0xff]
        %v4599 = vld [vmem:[#allocation2 + $0x80] sm:$0xf]
        %v4600 = vld [vmem:[#allocation2 + $0x84] sm:$0xff]
        %v4601 = vld [vmem:[#allocation2 + $0x8c] sm:$0xf]
        %v4602 = vld [vmem:[#allocation2 + $0x90] sm:$0xff]
        %v4603 = vld [vmem:[#allocation2 + $0x98] sm:$0xf]
        %v4604 = vld [vmem:[#allocation2 + $0x9c] sm:$0xff]
        %v4605 = vld [vmem:[#allocation2 + $0xa4] sm:$0xf]
        %v4606 = vld [vmem:[#allocation2 + $0xa8] sm:$0xff]
        %v4607 = vld [vmem:[#allocation2 + $0xb0] sm:$0xf]
        %v4608 = vld [vmem:[#allocation2 + $0xb4] sm:$0xff]
        %v4609 = vld [vmem:[#allocation2 + $0xbc] sm:$0xf]
        %v4610 = vld [vmem:[#allocation2 + $0xc0] sm:$0xff]
        %v4611 = vld [vmem:[#allocation2 + $0xc8] sm:$0xf]
        %v4612 = vld [vmem:[#allocation2 + $0xcc] sm:$0xff]
        %v4613 = vld [vmem:[#allocation2 + $0xd4] sm:$0xf]
        %v4614 = vld [vmem:[#allocation2 + $0xd8] sm:$0xff]
        %v4615 = vld [vmem:[#allocation2 + $0xe0] sm:$0xf]
        %v4616 = vld [vmem:[#allocation2 + $0xe4] sm:$0xff]
        %v4617 = vld [vmem:[#allocation2 + $0xec] sm:$0xf]
        %v4618 = vld [vmem:[#allocation2 + $0xf0] sm:$0xff]
        %v4619 = vld [vmem:[#allocation2 + $0xf8] sm:$0xf]
        %v4620 = vld [vmem:[#allocation2 + $0xfc] sm:$0xff]
        %v4621 = vld [vmem:[#allocation2 + $0x104] sm:$0xf]
        %v4622 = vld [vmem:[#allocation2 + $0x108] sm:$0xff]
        %v4623 = vld [vmem:[#allocation2 + $0x110] sm:$0xf]
        %v4624 = vld [vmem:[#allocation2 + $0x114] sm:$0xff]
        %v4625 = vld [vmem:[#allocation2 + $0x11c] sm:$0xf]
        %s4626 = scalar_lea.vmem [#allocation4], 576
        %v4627 = vld [vmem:[%s4626] sm:$0xf]
        %v4628 = vld [vmem:[%s4626 + $0x4] sm:$0xf]
        %v4629 = vld [vmem:[%s4626 + $0x8] sm:$0xf]
        %v4630 = vld [vmem:[%s4626 + $0xc] sm:$0xf]
        %v4631 = vld [vmem:[%s4626 + $0x10] sm:$0xf]
        %v4632 = vld [vmem:[%s4626 + $0x14] sm:$0xf]
        %v4633 = vld [vmem:[%s4626 + $0x18] sm:$0xf]
        %v4634 = vld [vmem:[%s4626 + $0x1c] sm:$0xf]
        %v4635 = vld [vmem:[%s4626 + $0x20] sm:$0xf]
        %v4636 = vld [vmem:[%s4626 + $0x24] sm:$0xf]
        %v4637 = vld [vmem:[%s4626 + $0x28] sm:$0xf]
        %v4638 = vld [vmem:[%s4626 + $0x2c] sm:$0xf]
        %v4639 = vld [vmem:[%s4626 + $0x30] sm:$0xf]
        %v4640 = vld [vmem:[%s4626 + $0x34] sm:$0xf]
        %v4641 = vld [vmem:[%s4626 + $0x38] sm:$0xf]
        %v4642 = vld [vmem:[%s4626 + $0x3c] sm:$0xf]
        %v4643 = vld [vmem:[%s4626 + $0x40] sm:$0xf]
        %v4644 = vld [vmem:[%s4626 + $0x44] sm:$0xf]
        %v4645 = vld [vmem:[%s4626 + $0x48] sm:$0xf]
        %v4646 = vld [vmem:[%s4626 + $0x4c] sm:$0xf]
        %v4647 = vld [vmem:[%s4626 + $0x50] sm:$0xf]
        %v4648 = vld [vmem:[%s4626 + $0x54] sm:$0xf]
        %v4649 = vld [vmem:[%s4626 + $0x58] sm:$0xf]
        %v4650 = vld [vmem:[%s4626 + $0x5c] sm:$0xf]
        %v4651 = vld [vmem:[%s4626 + $0x60] sm:$0xf]
        %v4652 = vld [vmem:[%s4626 + $0x64] sm:$0xf]
        %v4653 = vld [vmem:[%s4626 + $0x68] sm:$0xf]
        %v4654 = vld [vmem:[%s4626 + $0x6c] sm:$0xf]
        %v4655 = vld [vmem:[%s4626 + $0x70] sm:$0xf]
        %v4656 = vld [vmem:[%s4626 + $0x74] sm:$0xf]
        %v4657 = vld [vmem:[%s4626 + $0x78] sm:$0xf]
        %v4658 = vld [vmem:[%s4626 + $0x7c] sm:$0xf]
        %v4659 = vld [vmem:[%s4626 + $0x80] sm:$0xf]
        %v4660 = vld [vmem:[%s4626 + $0x84] sm:$0xf]
        %v4661 = vld [vmem:[%s4626 + $0x88] sm:$0xf]
        %v4662 = vld [vmem:[%s4626 + $0x8c] sm:$0xf]
        %v4663 = vld [vmem:[%s4626 + $0x90] sm:$0xf]
        %v4664 = vld [vmem:[%s4626 + $0x94] sm:$0xf]
        %v4665 = vld [vmem:[%s4626 + $0x98] sm:$0xf]
        %v4666 = vld [vmem:[%s4626 + $0x9c] sm:$0xf]
        %v4667 = vld [vmem:[%s4626 + $0xa0] sm:$0xf]
        %v4668 = vld [vmem:[%s4626 + $0xa4] sm:$0xf]
        %v4669 = vld [vmem:[%s4626 + $0xa8] sm:$0xf]
        %v4670 = vld [vmem:[%s4626 + $0xac] sm:$0xf]
        %v4671 = vld [vmem:[%s4626 + $0xb0] sm:$0xf]
        %v4672 = vld [vmem:[%s4626 + $0xb4] sm:$0xf]
        %v4673 = vld [vmem:[%s4626 + $0xb8] sm:$0xf]
        %v4674 = vld [vmem:[%s4626 + $0xbc] sm:$0xf]
        %v4675 = vld [vmem:[#allocation2 + $0x120] sm:$0xff]
        %v4676 = vld [vmem:[#allocation2 + $0x128] sm:$0xf]
        %v4677 = vld [vmem:[#allocation2 + $0x12c] sm:$0xff]
        %v4678 = vld [vmem:[#allocation2 + $0x134] sm:$0xf]
        %s4679 = scalar_lea.vmem [#allocation4], 768
        %v4680 = vld [vmem:[%s4679] sm:$0xf]
        %v4681 = vld [vmem:[%s4679 + $0x4] sm:$0xf]
        %v4682 = vld [vmem:[%s4679 + $0x8] sm:$0xf]
        %v4683 = vld [vmem:[%s4679 + $0xc] sm:$0xf]
        %v4684 = vld [vmem:[%s4679 + $0x10] sm:$0xf]
        %v4685 = vld [vmem:[%s4679 + $0x14] sm:$0xf]
        %v4686 = vld [vmem:[%s4679 + $0x18] sm:$0xf]
        %v4687 = vld [vmem:[%s4679 + $0x1c] sm:$0xf]
        %v4688 = vld [vmem:[%s4679 + $0x20] sm:$0xf]
        %v4689 = vld [vmem:[%s4679 + $0x24] sm:$0xf]
        %v4690 = vld [vmem:[%s4679 + $0x28] sm:$0xf]
        %v4691 = vld [vmem:[%s4679 + $0x2c] sm:$0xf]
        %v4692 = vld [vmem:[%s4679 + $0x30] sm:$0xf]
        %v4693 = vld [vmem:[%s4679 + $0x34] sm:$0xf]
        %v4694 = vld [vmem:[%s4679 + $0x38] sm:$0xf]
        %v4695 = vld [vmem:[%s4679 + $0x3c] sm:$0xf]
        %v4696 = vld [vmem:[%s4679 + $0x40] sm:$0xf]
        %v4697 = vld [vmem:[%s4679 + $0x44] sm:$0xf]
        %v4698 = vld [vmem:[%s4679 + $0x48] sm:$0xf]
        %v4699 = vld [vmem:[%s4679 + $0x4c] sm:$0xf]
        %v4700 = vld [vmem:[%s4679 + $0x50] sm:$0xf]
        %v4701 = vld [vmem:[%s4679 + $0x54] sm:$0xf]
        %v4702 = vld [vmem:[%s4679 + $0x58] sm:$0xf]
        %v4703 = vld [vmem:[%s4679 + $0x5c] sm:$0xf]
        %v4704 = vld [vmem:[%s4679 + $0x60] sm:$0xf]
        %v4705 = vld [vmem:[%s4679 + $0x64] sm:$0xf]
        %v4706 = vld [vmem:[%s4679 + $0x68] sm:$0xf]
        %v4707 = vld [vmem:[%s4679 + $0x6c] sm:$0xf]
        %v4708 = vld [vmem:[%s4679 + $0x70] sm:$0xf]
        %v4709 = vld [vmem:[%s4679 + $0x74] sm:$0xf]
        %v4710 = vld [vmem:[%s4679 + $0x78] sm:$0xf]
        %v4711 = vld [vmem:[%s4679 + $0x7c] sm:$0xf]
        %v4712 = vld [vmem:[%s4679 + $0x80] sm:$0xf]
        %v4713 = vld [vmem:[%s4679 + $0x84] sm:$0xf]
        %v4714 = vld [vmem:[%s4679 + $0x88] sm:$0xf]
        %v4715 = vld [vmem:[%s4679 + $0x8c] sm:$0xf]
        %v4716 = vld [vmem:[%s4679 + $0x90] sm:$0xf]
        %v4717 = vld [vmem:[%s4679 + $0x94] sm:$0xf]
        %v4718 = vld [vmem:[%s4679 + $0x98] sm:$0xf]
        %v4719 = vld [vmem:[%s4679 + $0x9c] sm:$0xf]
        %v4720 = vld [vmem:[%s4679 + $0xa0] sm:$0xf]
        %v4721 = vld [vmem:[%s4679 + $0xa4] sm:$0xf]
        %v4722 = vld [vmem:[%s4679 + $0xa8] sm:$0xf]
        %v4723 = vld [vmem:[%s4679 + $0xac] sm:$0xf]
        %v4724 = vld [vmem:[%s4679 + $0xb0] sm:$0xf]
        %v4725 = vld [vmem:[%s4679 + $0xb4] sm:$0xf]
        %v4726 = vld [vmem:[%s4679 + $0xb8] sm:$0xf]
        %v4727 = vld [vmem:[%s4679 + $0xbc] sm:$0xf]
        %v4776 = vunpack.c.l.b16 %v4582
        %v4777 = vunpack.c.h.b16 %v4582
        %v4778 = vunpack.c.l.b16 %v4583
        %v4779 = vunpack.c.l.b16 %v4584
        %v4780 = vunpack.c.h.b16 %v4584
        %v4781 = vunpack.c.l.b16 %v4585
        %v4782 = vunpack.c.l.b16 %v4586
        %v4783 = vunpack.c.h.b16 %v4586
        %v4784 = vunpack.c.l.b16 %v4587
        %v4785 = vunpack.c.l.b16 %v4588
        %v4786 = vunpack.c.h.b16 %v4588
        %v4787 = vunpack.c.l.b16 %v4589
        %v4788 = vunpack.c.l.b16 %v4590
        %v4789 = vunpack.c.h.b16 %v4590
        %v4790 = vunpack.c.l.b16 %v4591
        %v4791 = vunpack.c.l.b16 %v4592
        %v4792 = vunpack.c.h.b16 %v4592
        %v4793 = vunpack.c.l.b16 %v4593
        %v4794 = vunpack.c.l.b16 %v4594
        %v4795 = vunpack.c.h.b16 %v4594
        %v4796 = vunpack.c.l.b16 %v4595
        %v4797 = vunpack.c.l.b16 %v4596
        %v4798 = vunpack.c.h.b16 %v4596
        %v4799 = vunpack.c.l.b16 %v4597
        %v4800 = vunpack.c.l.b16 %v4598
        %v4801 = vunpack.c.h.b16 %v4598
        %v4802 = vunpack.c.l.b16 %v4599
        %v4803 = vunpack.c.l.b16 %v4600
        %v4804 = vunpack.c.h.b16 %v4600
        %v4805 = vunpack.c.l.b16 %v4601
        %v4806 = vunpack.c.l.b16 %v4602
        %v4807 = vunpack.c.h.b16 %v4602
        %v4808 = vunpack.c.l.b16 %v4603
        %v4809 = vunpack.c.l.b16 %v4604
        %v4810 = vunpack.c.h.b16 %v4604
        %v4811 = vunpack.c.l.b16 %v4605
        %v4812 = vunpack.c.l.b16 %v4606
        %v4813 = vunpack.c.h.b16 %v4606
        %v4814 = vunpack.c.l.b16 %v4607
        %v4815 = vunpack.c.l.b16 %v4608
        %v4816 = vunpack.c.h.b16 %v4608
        %v4817 = vunpack.c.l.b16 %v4609
        %v4818 = vunpack.c.l.b16 %v4610
        %v4819 = vunpack.c.h.b16 %v4610
        %v4820 = vunpack.c.l.b16 %v4611
        %v4821 = vunpack.c.l.b16 %v4612
        %v4822 = vunpack.c.h.b16 %v4612
        %v4823 = vunpack.c.l.b16 %v4613
        %v4824 = vunpack.c.l.b16 %v4614
        %v4825 = vunpack.c.h.b16 %v4614
        %v4826 = vunpack.c.l.b16 %v4615
        %v4827 = vunpack.c.l.b16 %v4616
        %v4828 = vunpack.c.h.b16 %v4616
        %v4829 = vunpack.c.l.b16 %v4617
        %v4830 = vunpack.c.l.b16 %v4618
        %v4831 = vunpack.c.h.b16 %v4618
        %v4832 = vunpack.c.l.b16 %v4619
        %v4833 = vunpack.c.l.b16 %v4620
        %v4834 = vunpack.c.h.b16 %v4620
        %v4835 = vunpack.c.l.b16 %v4621
        %v4836 = vunpack.c.l.b16 %v4622
        %v4837 = vunpack.c.h.b16 %v4622
        %v4838 = vunpack.c.l.b16 %v4623
        %v4839 = vunpack.c.l.b16 %v4624
        %v4840 = vunpack.c.h.b16 %v4624
        %v4841 = vunpack.c.l.b16 %v4625
        %v4842 = vunpack.c.l.b16 %v4675
        %v4843 = vunpack.c.h.b16 %v4675
        %v4844 = vunpack.c.l.b16 %v4676
        %v4845 = vunpack.c.l.b16 %v4677
        %v4846 = vunpack.c.h.b16 %v4677
        %v4847 = vunpack.c.l.b16 %v4678
        %v4848 = vpack.c.b16 %v4779, %v4776
        %v4849 = vpack.c.b16 %v4780, %v4777
        %v4850 = vpack.c.b16 %v4781, %v4778
        %v4851 = vpack.c.b16 %v4785, %v4782
        %v4852 = vpack.c.b16 %v4786, %v4783
        %v4853 = vpack.c.b16 %v4787, %v4784
        %v4854 = vpack.c.b16 %v4791, %v4788
        %v4855 = vpack.c.b16 %v4792, %v4789
        %v4856 = vpack.c.b16 %v4793, %v4790
        %v4857 = vpack.c.b16 %v4797, %v4794
        %v4858 = vpack.c.b16 %v4798, %v4795
        %v4859 = vpack.c.b16 %v4799, %v4796
        %v4860 = vpack.c.b16 %v4803, %v4800
        %v4861 = vpack.c.b16 %v4804, %v4801
        %v4862 = vpack.c.b16 %v4805, %v4802
        %v4863 = vpack.c.b16 %v4809, %v4806
        %v4864 = vpack.c.b16 %v4810, %v4807
        %v4865 = vpack.c.b16 %v4811, %v4808
        %v4866 = vpack.c.b16 %v4815, %v4812
        %v4867 = vpack.c.b16 %v4816, %v4813
        %v4868 = vpack.c.b16 %v4817, %v4814
        %v4869 = vpack.c.b16 %v4821, %v4818
        %v4870 = vpack.c.b16 %v4822, %v4819
        %v4871 = vpack.c.b16 %v4823, %v4820
        %v4872 = vpack.c.b16 %v4827, %v4824
        %v4873 = vpack.c.b16 %v4828, %v4825
        %v4874 = vpack.c.b16 %v4829, %v4826
        %v4875 = vpack.c.b16 %v4833, %v4830
        %v4876 = vpack.c.b16 %v4834, %v4831
        %v4877 = vpack.c.b16 %v4835, %v4832
        %v4878 = vpack.c.b16 %v4839, %v4836
        %v4879 = vpack.c.b16 %v4840, %v4837
        %v4880 = vpack.c.b16 %v4841, %v4838
        %v4881 = vpack.c.b16 %v4845, %v4842
        %v4882 = vpack.c.b16 %v4846, %v4843
        %v4883 = vpack.c.b16 %v4847, %v4844
        %v4968 = vunpack.c.l.b16 %v4680
        %v4969 = vunpack.c.l.b16 %v4681
        %v4970 = vunpack.c.l.b16 %v4682
        %v4971 = vunpack.c.l.b16 %v4683
        %v4972 = vunpack.c.l.b16 %v4684
        %v4973 = vunpack.c.l.b16 %v4685
        %v4974 = vunpack.c.l.b16 %v4686
        %v4975 = vunpack.c.l.b16 %v4687
        %v4976 = vunpack.c.l.b16 %v4688
        %v4977 = vunpack.c.l.b16 %v4689
        %v4978 = vunpack.c.l.b16 %v4690
        %v4979 = vunpack.c.l.b16 %v4691
        %v4980 = vunpack.c.l.b16 %v4692
        %v4981 = vunpack.c.l.b16 %v4693
        %v4982 = vunpack.c.l.b16 %v4694
        %v4983 = vunpack.c.l.b16 %v4695
        %v4984 = vunpack.c.l.b16 %v4696
        %v4985 = vunpack.c.l.b16 %v4697
        %v4986 = vunpack.c.l.b16 %v4698
        %v4987 = vunpack.c.l.b16 %v4699
        %v4988 = vunpack.c.l.b16 %v4700
        %v4989 = vunpack.c.l.b16 %v4701
        %v4990 = vunpack.c.l.b16 %v4702
        %v4991 = vunpack.c.l.b16 %v4703
        %v4992 = vunpack.c.l.b16 %v4704
        %v4993 = vunpack.c.l.b16 %v4705
        %v4994 = vunpack.c.l.b16 %v4706
        %v4995 = vunpack.c.l.b16 %v4707
        %v4996 = vunpack.c.l.b16 %v4708
        %v4997 = vunpack.c.l.b16 %v4709
        %v4998 = vunpack.c.l.b16 %v4710
        %v4999 = vunpack.c.l.b16 %v4711
        %v5000 = vunpack.c.l.b16 %v4712
        %v5001 = vunpack.c.l.b16 %v4713
        %v5002 = vunpack.c.l.b16 %v4714
        %v5003 = vunpack.c.l.b16 %v4715
        %v5004 = vunpack.c.l.b16 %v4716
        %v5005 = vunpack.c.l.b16 %v4717
        %v5006 = vunpack.c.l.b16 %v4718
        %v5007 = vunpack.c.l.b16 %v4719
        %v5008 = vunpack.c.l.b16 %v4720
        %v5009 = vunpack.c.l.b16 %v4721
        %v5010 = vunpack.c.l.b16 %v4722
        %v5011 = vunpack.c.l.b16 %v4723
        %v5012 = vunpack.c.l.b16 %v4724
        %v5013 = vunpack.c.l.b16 %v4725
        %v5014 = vunpack.c.l.b16 %v4726
        %v5015 = vunpack.c.l.b16 %v4727
        %v5016 = vpack.c.b16 %v4969, %v4968
        %v5017 = vpack.c.b16 %v4971, %v4970
        %v5018 = vpack.c.b16 %v4973, %v4972
        %v5019 = vpack.c.b16 %v4975, %v4974
        %v5020 = vpack.c.b16 %v4977, %v4976
        %v5021 = vpack.c.b16 %v4979, %v4978
        %v5022 = vpack.c.b16 %v4981, %v4980
        %v5023 = vpack.c.b16 %v4983, %v4982
        %v5024 = vpack.c.b16 %v4985, %v4984
        %v5025 = vpack.c.b16 %v4987, %v4986
        %v5026 = vpack.c.b16 %v4989, %v4988
        %v5027 = vpack.c.b16 %v4991, %v4990
        %v5028 = vpack.c.b16 %v4993, %v4992
        %v5029 = vpack.c.b16 %v4995, %v4994
        %v5030 = vpack.c.b16 %v4997, %v4996
        %v5031 = vpack.c.b16 %v4999, %v4998
        %v5032 = vpack.c.b16 %v5001, %v5000
        %v5033 = vpack.c.b16 %v5003, %v5002
        %v5034 = vpack.c.b16 %v5005, %v5004
        %v5035 = vpack.c.b16 %v5007, %v5006
        %v5036 = vpack.c.b16 %v5009, %v5008
        %v5037 = vpack.c.b16 %v5011, %v5010
        %v5038 = vpack.c.b16 %v5013, %v5012
        %v5039 = vpack.c.b16 %v5015, %v5014
        %5064 = vmatprep.subr.bf16.mxu0 0
        %5065 = vmatpush1.bf16.msra.mxu0 %v5023
        %5066 = vmatprep.subr.bf16.mxu0 0
        %5067 = vmatpush1.bf16.msra.mxu0 %v5022
        %5068 = vmatprep.subr.bf16.mxu0 0
        %5069 = vmatpush1.bf16.msra.mxu0 %v5021
        %5070 = vmatprep.subr.bf16.mxu0 0
        %5071 = vmatpush1.bf16.msra.mxu0 %v5020
        %5072 = vmatprep.subr.bf16.mxu0 0
        %5073 = vmatpush1.bf16.msra.mxu0 %v5019
        %5074 = vmatprep.subr.bf16.mxu0 0
        %5075 = vmatpush1.bf16.msra.mxu0 %v5018
        %5076 = vmatprep.subr.bf16.mxu0 0
        %5077 = vmatpush1.bf16.msra.mxu0 %v5017
        %5078 = vmatprep.subr.bf16.mxu0 0
        %5079 = vmatpush1.bf16.msra.mxu0 %v5016
        %5080 = vmatprep.subr.bf16.mxu0 0
        %5081 = vmatpush2.bf16.msra.mxu0 %v5031
        %5082 = vmatprep.subr.bf16.mxu0 0
        %5083 = vmatpush2.bf16.msra.mxu0 %v5030
        %5084 = vmatprep.subr.bf16.mxu0 0
        %5085 = vmatpush2.bf16.msra.mxu0 %v5029
        %5086 = vmatprep.subr.bf16.mxu0 0
        %5087 = vmatpush2.bf16.msra.mxu0 %v5028
        %5088 = vmatprep.subr.bf16.mxu0 0
        %5089 = vmatpush2.bf16.msra.mxu0 %v5027
        %5090 = vmatprep.subr.bf16.mxu0 0
        %5091 = vmatpush2.bf16.msra.mxu0 %v5026
        %5092 = vmatprep.subr.bf16.mxu0 0
        %5093 = vmatpush2.bf16.msra.mxu0 %v5025
        %5094 = vmatprep.subr.bf16.mxu0 0
        %5095 = vmatpush2.bf16.msra.mxu0 %v5024
        %5096 = vmatprep.mubr.bf16.mxu0 %v4849
        %5097 = vmatmul.mubr.bf16.gmra.mxu0 %v4848
        %v5098 = vpop.f32.mrf.mxu0
        %v5099 = vpop.f32.mrf.mxu0
        %v5100 = vpop.f32.mrf.mxu0
        %v5101 = vpop.f32.mrf.mxu0
        %5102 = vmatprep.mubr.bf16.mxu0 %v4852
        %5103 = vmatmul.mubr.bf16.gmra.mxu0 %v4851
        %v5104 = vpop.f32.mrf.mxu0
        %v5105 = vpop.f32.mrf.mxu0
        %v5106 = vpop.f32.mrf.mxu0
        %v5107 = vpop.f32.mrf.mxu0
        %5108 = vmatprep.mubr.bf16.mxu0 %v4855
        %5109 = vmatmul.mubr.bf16.gmra.mxu0 %v4854
        %v5110 = vpop.f32.mrf.mxu0
        %v5111 = vadd.f32 0.0, %v5110
        %v5112 = vpop.f32.mrf.mxu0
        %v5113 = vpop.f32.mrf.mxu0
        %v5114 = vadd.f32 0.0, %v5113
        %v5115 = vpop.f32.mrf.mxu0
        %5116 = vmatprep.mubr.bf16.mxu0 %v4858
        %5117 = vmatmul.mubr.bf16.gmra.mxu0 %v4857
        %v5118 = vpop.f32.mrf.mxu0
        %v5119 = vadd.f32 0.0, %v5118
        %v5120 = vpop.f32.mrf.mxu0
        %v5121 = vpop.f32.mrf.mxu0
        %v5122 = vadd.f32 0.0, %v5121
        %v5123 = vpop.f32.mrf.mxu0
        %5124 = vmatprep.mubr.bf16.mxu0 %v4861
        %5125 = vmatmul.mubr.bf16.gmra.mxu0 %v4860
        %v5126 = vpop.f32.mrf.mxu0
        %v5127 = vadd.f32 0.0, %v5126
        %v5128 = vpop.f32.mrf.mxu0
        %v5129 = vpop.f32.mrf.mxu0
        %v5130 = vadd.f32 0.0, %v5129
        %v5131 = vpop.f32.mrf.mxu0
        %5132 = vmatprep.mubr.bf16.mxu0 %v4864
        %5133 = vmatmul.mubr.bf16.gmra.mxu0 %v4863
        %v5134 = vpop.f32.mrf.mxu0
        %v5135 = vadd.f32 0.0, %v5134
        %v5136 = vpop.f32.mrf.mxu0
        %v5137 = vpop.f32.mrf.mxu0
        %v5138 = vadd.f32 0.0, %v5137
        %v5139 = vpop.f32.mrf.mxu0
        %5140 = vmatprep.mubr.bf16.mxu0 %v4867
        %5141 = vmatmul.mubr.bf16.gmra.mxu0 %v4866
        %v5142 = vpop.f32.mrf.mxu0
        %v5143 = vadd.f32 0.0, %v5142
        %v5144 = vpop.f32.mrf.mxu0
        %v5145 = vpop.f32.mrf.mxu0
        %v5146 = vadd.f32 0.0, %v5145
        %v5147 = vpop.f32.mrf.mxu0
        %5148 = vmatprep.mubr.bf16.mxu0 %v4870
        %5149 = vmatmul.mubr.bf16.gmra.mxu0 %v4869
        %v5150 = vpop.f32.mrf.mxu0
        %v5151 = vadd.f32 0.0, %v5150
        %v5152 = vpop.f32.mrf.mxu0
        %v5153 = vpop.f32.mrf.mxu0
        %v5154 = vadd.f32 0.0, %v5153
        %v5155 = vpop.f32.mrf.mxu0
        %5156 = vmatprep.mubr.bf16.mxu0 %v4873
        %5157 = vmatmul.mubr.bf16.gmra.mxu0 %v4872
        %v5158 = vpop.f32.mrf.mxu0
        %v5159 = vadd.f32 0.0, %v5158
        %v5160 = vpop.f32.mrf.mxu0
        %v5161 = vpop.f32.mrf.mxu0
        %v5162 = vadd.f32 0.0, %v5161
        %v5163 = vpop.f32.mrf.mxu0
        %5164 = vmatprep.mubr.bf16.mxu0 %v4876
        %5165 = vmatmul.mubr.bf16.gmra.mxu0 %v4875
        %v5166 = vpop.f32.mrf.mxu0
        %v5167 = vadd.f32 0.0, %v5166
        %v5168 = vpop.f32.mrf.mxu0
        %v5169 = vpop.f32.mrf.mxu0
        %v5170 = vadd.f32 0.0, %v5169
        %v5171 = vpop.f32.mrf.mxu0
        %5172 = vmatprep.mubr.bf16.mxu0 %v4879
        %5173 = vmatmul.mubr.bf16.gmra.mxu0 %v4878
        %v5174 = vpop.f32.mrf.mxu0
        %v5175 = vpop.f32.mrf.mxu0
        %v5176 = vpop.f32.mrf.mxu0
        %v5177 = vpop.f32.mrf.mxu0
        %5178 = vmatprep.mubr.bf16.mxu0 %v4882
        %5179 = vmatmul.mubr.bf16.gmra.mxu0 %v4881
        %v5180 = vpop.f32.mrf.mxu0
        %v5181 = vpop.f32.mrf.mxu0
        %v5182 = vpop.f32.mrf.mxu0
        %v5183 = vpop.f32.mrf.mxu0
        %5184 = vdwg.mxu0
        %5185 = vmatprep.subr.bf16.mxu0 0
        %5186 = vmatpush1.bf16.msra.mxu0 %v5039
        %5187 = vmatprep.subr.bf16.mxu0 0
        %5188 = vmatpush1.bf16.msra.mxu0 %v5038
        %5189 = vmatprep.subr.bf16.mxu0 0
        %5190 = vmatpush1.bf16.msra.mxu0 %v5037
        %5191 = vmatprep.subr.bf16.mxu0 0
        %5192 = vmatpush1.bf16.msra.mxu0 %v5036
        %5193 = vmatprep.subr.bf16.mxu0 0
        %5194 = vmatpush1.bf16.msra.mxu0 %v5035
        %5195 = vmatprep.subr.bf16.mxu0 0
        %5196 = vmatpush1.bf16.msra.mxu0 %v5034
        %5197 = vmatprep.subr.bf16.mxu0 0
        %5198 = vmatpush1.bf16.msra.mxu0 %v5033
        %5199 = vmatprep.subr.bf16.mxu0 0
        %5200 = vmatpush1.bf16.msra.mxu0 %v5032
        %5201 = vmatprep.subr.bf16.mxu0 0
        %5202 = vmatpush2.bf16.msra.mxu0 0
        %5203 = vmatprep.subr.bf16.mxu0 0
        %5204 = vmatpush2.bf16.msra.mxu0 0
        %5205 = vmatprep.subr.bf16.mxu0 0
        %5206 = vmatpush2.bf16.msra.mxu0 0
        %5207 = vmatprep.subr.bf16.mxu0 0
        %5208 = vmatpush2.bf16.msra.mxu0 0
        %5209 = vmatprep.subr.bf16.mxu0 0
        %5210 = vmatpush2.bf16.msra.mxu0 0
        %5211 = vmatprep.subr.bf16.mxu0 0
        %5212 = vmatpush2.bf16.msra.mxu0 0
        %5213 = vmatprep.subr.bf16.mxu0 0
        %5214 = vmatpush2.bf16.msra.mxu0 0
        %5215 = vmatprep.subr.bf16.mxu0 0
        %5216 = vmatpush2.bf16.msra.mxu0 0
        %5217 = vmatprep.mubr.bf16.mxu0 0
        %5218 = vmatmul.mubr.bf16.gmra.mxu0 %v4850
        %v5219 = vpop.f32.mrf.mxu0
        %v5220 = vpop.f32.mrf.mxu0
        %v5221 = vpop.f32.mrf.mxu0
        %v5222 = vpop.f32.mrf.mxu0
        %5223 = vmatprep.mubr.bf16.mxu0 0
        %5224 = vmatmul.mubr.bf16.gmra.mxu0 %v4853
        %v5225 = vpop.f32.mrf.mxu0
        %v5226 = vpop.f32.mrf.mxu0
        %v5227 = vpop.f32.mrf.mxu0
        %v5228 = vpop.f32.mrf.mxu0
        %5229 = vmatprep.mubr.bf16.mxu0 0
        %5230 = vmatmul.mubr.bf16.gmra.mxu0 %v4856
        %v5231 = vpop.f32.mrf.mxu0
        %v5232 = vadd.f32 %v5111, %v5231
        %v5233 = vpop.f32.mrf.mxu0
        %v5234 = vpop.f32.mrf.mxu0
        %v5235 = vadd.f32 %v5114, %v5234
        %v5236 = vpop.f32.mrf.mxu0
        %5237 = vmatprep.mubr.bf16.mxu0 0
        %5238 = vmatmul.mubr.bf16.gmra.mxu0 %v4859
        %v5239 = vpop.f32.mrf.mxu0
        %v5240 = vadd.f32 %v5119, %v5239
        %v5241 = vpop.f32.mrf.mxu0
        %v5242 = vpop.f32.mrf.mxu0
        %v5243 = vadd.f32 %v5122, %v5242
        %v5244 = vpop.f32.mrf.mxu0
        %5245 = vmatprep.mubr.bf16.mxu0 0
        %5246 = vmatmul.mubr.bf16.gmra.mxu0 %v4862
        %v5247 = vpop.f32.mrf.mxu0
        %v5248 = vadd.f32 %v5127, %v5247
        %v5249 = vpop.f32.mrf.mxu0
        %v5250 = vpop.f32.mrf.mxu0
        %v5251 = vadd.f32 %v5130, %v5250
        %v5252 = vpop.f32.mrf.mxu0
        %5253 = vmatprep.mubr.bf16.mxu0 0
        %5254 = vmatmul.mubr.bf16.gmra.mxu0 %v4865
        %v5255 = vpop.f32.mrf.mxu0
        %v5256 = vadd.f32 %v5135, %v5255
        %v5257 = vpop.f32.mrf.mxu0
        %v5258 = vpop.f32.mrf.mxu0
        %v5259 = vadd.f32 %v5138, %v5258
        %v5260 = vpop.f32.mrf.mxu0
        %5261 = vmatprep.mubr.bf16.mxu0 0
        %5262 = vmatmul.mubr.bf16.gmra.mxu0 %v4868
        %v5263 = vpop.f32.mrf.mxu0
        %v5264 = vadd.f32 %v5143, %v5263
        %v5265 = vpop.f32.mrf.mxu0
        %v5266 = vpop.f32.mrf.mxu0
        %v5267 = vadd.f32 %v5146, %v5266
        %v5268 = vpop.f32.mrf.mxu0
        %5269 = vmatprep.mubr.bf16.mxu0 0
        %5270 = vmatmul.mubr.bf16.gmra.mxu0 %v4871
        %v5271 = vpop.f32.mrf.mxu0
        %v5272 = vadd.f32 %v5151, %v5271
        %v5273 = vpop.f32.mrf.mxu0
        %v5274 = vpop.f32.mrf.mxu0
        %v5275 = vadd.f32 %v5154, %v5274
        %v5276 = vpop.f32.mrf.mxu0
        %5277 = vmatprep.mubr.bf16.mxu0 0
        %5278 = vmatmul.mubr.bf16.gmra.mxu0 %v4874
        %v5279 = vpop.f32.mrf.mxu0
        %v5280 = vadd.f32 %v5159, %v5279
        %v5281 = vpop.f32.mrf.mxu0
        %v5282 = vpop.f32.mrf.mxu0
        %v5283 = vadd.f32 %v5162, %v5282
        %v5284 = vpop.f32.mrf.mxu0
        %5285 = vmatprep.mubr.bf16.mxu0 0
        %5286 = vmatmul.mubr.bf16.gmra.mxu0 %v4877
        %v5287 = vpop.f32.mrf.mxu0
        %v5288 = vadd.f32 %v5167, %v5287
        %v5289 = vpop.f32.mrf.mxu0
        %v5290 = vpop.f32.mrf.mxu0
        %v5291 = vadd.f32 %v5170, %v5290
        %v5292 = vpop.f32.mrf.mxu0
        %5293 = vmatprep.mubr.bf16.mxu0 0
        %5294 = vmatmul.mubr.bf16.gmra.mxu0 %v4880
        %v5295 = vpop.f32.mrf.mxu0
        %v5296 = vpop.f32.mrf.mxu0
        %v5297 = vpop.f32.mrf.mxu0
        %v5298 = vpop.f32.mrf.mxu0
        %5299 = vmatprep.mubr.bf16.mxu0 0
        %5300 = vmatmul.mubr.bf16.gmra.mxu0 %v4883
        %v5301 = vpop.f32.mrf.mxu0
        %v5302 = vpop.f32.mrf.mxu0
        %v5303 = vpop.f32.mrf.mxu0
        %v5304 = vpop.f32.mrf.mxu0
        %5305 = vdwg.mxu0
        %v5310 = vunpack.c.l.b16 %v4578
        %v5311 = vunpack.c.h.b16 %v4578
        %v5312 = vunpack.c.l.b16 %v4579
        %v5313 = vunpack.c.l.b16 %v4580
        %v5314 = vunpack.c.h.b16 %v4580
        %v5315 = vunpack.c.l.b16 %v4581
        %v5316 = vpack.c.b16 %v5313, %v5310
        %v5317 = vpack.c.b16 %v5314, %v5311
        %v5318 = vpack.c.b16 %v5315, %v5312
        %v5370 = vunpack.c.l.b16 %v4627
        %v5371 = vunpack.c.l.b16 %v4628
        %v5372 = vunpack.c.l.b16 %v4629
        %v5373 = vunpack.c.l.b16 %v4630
        %v5374 = vunpack.c.l.b16 %v4631
        %v5375 = vunpack.c.l.b16 %v4632
        %v5376 = vunpack.c.l.b16 %v4633
        %v5377 = vunpack.c.l.b16 %v4634
        %v5378 = vunpack.c.l.b16 %v4635
        %v5379 = vunpack.c.l.b16 %v4636
        %v5380 = vunpack.c.l.b16 %v4637
        %v5381 = vunpack.c.l.b16 %v4638
        %v5382 = vunpack.c.l.b16 %v4639
        %v5383 = vunpack.c.l.b16 %v4640
        %v5384 = vunpack.c.l.b16 %v4641
        %v5385 = vunpack.c.l.b16 %v4642
        %v5386 = vunpack.c.l.b16 %v4643
        %v5387 = vunpack.c.l.b16 %v4644
        %v5388 = vunpack.c.l.b16 %v4645
        %v5389 = vunpack.c.l.b16 %v4646
        %v5390 = vunpack.c.l.b16 %v4647
        %v5391 = vunpack.c.l.b16 %v4648
        %v5392 = vunpack.c.l.b16 %v4649
        %v5393 = vunpack.c.l.b16 %v4650
        %v5394 = vunpack.c.l.b16 %v4651
        %v5395 = vunpack.c.l.b16 %v4652
        %v5396 = vunpack.c.l.b16 %v4653
        %v5397 = vunpack.c.l.b16 %v4654
        %v5398 = vunpack.c.l.b16 %v4655
        %v5399 = vunpack.c.l.b16 %v4656
        %v5400 = vunpack.c.l.b16 %v4657
        %v5401 = vunpack.c.l.b16 %v4658
        %v5402 = vunpack.c.l.b16 %v4659
        %v5403 = vunpack.c.l.b16 %v4660
        %v5404 = vunpack.c.l.b16 %v4661
        %v5405 = vunpack.c.l.b16 %v4662
        %v5406 = vunpack.c.l.b16 %v4663
        %v5407 = vunpack.c.l.b16 %v4664
        %v5408 = vunpack.c.l.b16 %v4665
        %v5409 = vunpack.c.l.b16 %v4666
        %v5410 = vunpack.c.l.b16 %v4667
        %v5411 = vunpack.c.l.b16 %v4668
        %v5412 = vunpack.c.l.b16 %v4669
        %v5413 = vunpack.c.l.b16 %v4670
        %v5414 = vunpack.c.l.b16 %v4671
        %v5415 = vunpack.c.l.b16 %v4672
        %v5416 = vunpack.c.l.b16 %v4673
        %v5417 = vunpack.c.l.b16 %v4674
        %v5418 = vpack.c.b16 %v5371, %v5370
        %v5419 = vpack.c.b16 %v5373, %v5372
        %v5420 = vpack.c.b16 %v5375, %v5374
        %v5421 = vpack.c.b16 %v5377, %v5376
        %v5422 = vpack.c.b16 %v5379, %v5378
        %v5423 = vpack.c.b16 %v5381, %v5380
        %v5424 = vpack.c.b16 %v5383, %v5382
        %v5425 = vpack.c.b16 %v5385, %v5384
        %v5426 = vpack.c.b16 %v5387, %v5386
        %v5427 = vpack.c.b16 %v5389, %v5388
        %v5428 = vpack.c.b16 %v5391, %v5390
        %v5429 = vpack.c.b16 %v5393, %v5392
        %v5430 = vpack.c.b16 %v5395, %v5394
        %v5431 = vpack.c.b16 %v5397, %v5396
        %v5432 = vpack.c.b16 %v5399, %v5398
        %v5433 = vpack.c.b16 %v5401, %v5400
        %v5434 = vpack.c.b16 %v5403, %v5402
        %v5435 = vpack.c.b16 %v5405, %v5404
        %v5436 = vpack.c.b16 %v5407, %v5406
        %v5437 = vpack.c.b16 %v5409, %v5408
        %v5438 = vpack.c.b16 %v5411, %v5410
        %v5439 = vpack.c.b16 %v5413, %v5412
        %v5440 = vpack.c.b16 %v5415, %v5414
        %v5441 = vpack.c.b16 %v5417, %v5416
        %5466 = vmatprep.subr.bf16.mxu0 0
        %5467 = vmatpush1.bf16.msra.mxu0 %v5425
        %5468 = vmatprep.subr.bf16.mxu0 0
        %5469 = vmatpush1.bf16.msra.mxu0 %v5424
        %5470 = vmatprep.subr.bf16.mxu0 0
        %5471 = vmatpush1.bf16.msra.mxu0 %v5423
        %5472 = vmatprep.subr.bf16.mxu0 0
        %5473 = vmatpush1.bf16.msra.mxu0 %v5422
        %5474 = vmatprep.subr.bf16.mxu0 0
        %5475 = vmatpush1.bf16.msra.mxu0 %v5421
        %5476 = vmatprep.subr.bf16.mxu0 0
        %5477 = vmatpush1.bf16.msra.mxu0 %v5420
        %5478 = vmatprep.subr.bf16.mxu0 0
        %5479 = vmatpush1.bf16.msra.mxu0 %v5419
        %5480 = vmatprep.subr.bf16.mxu0 0
        %5481 = vmatpush1.bf16.msra.mxu0 %v5418
        %5482 = vmatprep.subr.bf16.mxu0 0
        %5483 = vmatpush2.bf16.msra.mxu0 %v5433
        %5484 = vmatprep.subr.bf16.mxu0 0
        %5485 = vmatpush2.bf16.msra.mxu0 %v5432
        %5486 = vmatprep.subr.bf16.mxu0 0
        %5487 = vmatpush2.bf16.msra.mxu0 %v5431
        %5488 = vmatprep.subr.bf16.mxu0 0
        %5489 = vmatpush2.bf16.msra.mxu0 %v5430
        %5490 = vmatprep.subr.bf16.mxu0 0
        %5491 = vmatpush2.bf16.msra.mxu0 %v5429
        %5492 = vmatprep.subr.bf16.mxu0 0
        %5493 = vmatpush2.bf16.msra.mxu0 %v5428
        %5494 = vmatprep.subr.bf16.mxu0 0
        %5495 = vmatpush2.bf16.msra.mxu0 %v5427
        %5496 = vmatprep.subr.bf16.mxu0 0
        %5497 = vmatpush2.bf16.msra.mxu0 %v5426
        %5498 = vmatprep.mubr.bf16.mxu0 %v5317
        %5499 = vmatmul.mubr.bf16.gmra.mxu0 %v5316
        %v5500 = vpop.f32.mrf.mxu0
        %v5501 = vpop.f32.mrf.mxu0
        %v5502 = vpop.f32.mrf.mxu0
        %v5503 = vpop.f32.mrf.mxu0
        %5504 = vmatprep.mubr.bf16.mxu0 %v4849
        %5505 = vmatmul.mubr.bf16.gmra.mxu0 %v4848
        %v5506 = vpop.f32.mrf.mxu0
        %v5507 = vpop.f32.mrf.mxu0
        %v5508 = vpop.f32.mrf.mxu0
        %v5509 = vpop.f32.mrf.mxu0
        %5510 = vmatprep.mubr.bf16.mxu0 %v4852
        %5511 = vmatmul.mubr.bf16.gmra.mxu0 %v4851
        %v5512 = vpop.f32.mrf.mxu0
        %v5513 = vadd.f32 %v5232, %v5512
        %v5514 = vpop.f32.mrf.mxu0
        %v5515 = vpop.f32.mrf.mxu0
        %v5516 = vadd.f32 %v5235, %v5515
        %v5517 = vpop.f32.mrf.mxu0
        %5518 = vmatprep.mubr.bf16.mxu0 %v4855
        %5519 = vmatmul.mubr.bf16.gmra.mxu0 %v4854
        %v5520 = vpop.f32.mrf.mxu0
        %v5521 = vadd.f32 %v5240, %v5520
        %v5522 = vpop.f32.mrf.mxu0
        %v5523 = vpop.f32.mrf.mxu0
        %v5524 = vadd.f32 %v5243, %v5523
        %v5525 = vpop.f32.mrf.mxu0
        %5526 = vmatprep.mubr.bf16.mxu0 %v4858
        %5527 = vmatmul.mubr.bf16.gmra.mxu0 %v4857
        %v5528 = vpop.f32.mrf.mxu0
        %v5529 = vadd.f32 %v5248, %v5528
        %v5530 = vpop.f32.mrf.mxu0
        %v5531 = vpop.f32.mrf.mxu0
        %v5532 = vadd.f32 %v5251, %v5531
        %v5533 = vpop.f32.mrf.mxu0
        %5534 = vmatprep.mubr.bf16.mxu0 %v4861
        %5535 = vmatmul.mubr.bf16.gmra.mxu0 %v4860
        %v5536 = vpop.f32.mrf.mxu0
        %v5537 = vadd.f32 %v5256, %v5536
        %v5538 = vpop.f32.mrf.mxu0
        %v5539 = vpop.f32.mrf.mxu0
        %v5540 = vadd.f32 %v5259, %v5539
        %v5541 = vpop.f32.mrf.mxu0
        %5542 = vmatprep.mubr.bf16.mxu0 %v4864
        %5543 = vmatmul.mubr.bf16.gmra.mxu0 %v4863
        %v5544 = vpop.f32.mrf.mxu0
        %v5545 = vadd.f32 %v5264, %v5544
        %v5546 = vpop.f32.mrf.mxu0
        %v5547 = vpop.f32.mrf.mxu0
        %v5548 = vadd.f32 %v5267, %v5547
        %v5549 = vpop.f32.mrf.mxu0
        %5550 = vmatprep.mubr.bf16.mxu0 %v4867
        %5551 = vmatmul.mubr.bf16.gmra.mxu0 %v4866
        %v5552 = vpop.f32.mrf.mxu0
        %v5553 = vadd.f32 %v5272, %v5552
        %v5554 = vpop.f32.mrf.mxu0
        %v5555 = vpop.f32.mrf.mxu0
        %v5556 = vadd.f32 %v5275, %v5555
        %v5557 = vpop.f32.mrf.mxu0
        %5558 = vmatprep.mubr.bf16.mxu0 %v4870
        %5559 = vmatmul.mubr.bf16.gmra.mxu0 %v4869
        %v5560 = vpop.f32.mrf.mxu0
        %v5561 = vadd.f32 %v5280, %v5560
        %v5562 = vpop.f32.mrf.mxu0
        %v5563 = vpop.f32.mrf.mxu0
        %v5564 = vadd.f32 %v5283, %v5563
        %v5565 = vpop.f32.mrf.mxu0
        %5566 = vmatprep.mubr.bf16.mxu0 %v4873
        %5567 = vmatmul.mubr.bf16.gmra.mxu0 %v4872
        %v5568 = vpop.f32.mrf.mxu0
        %v5569 = vadd.f32 %v5288, %v5568
        %v5570 = vpop.f32.mrf.mxu0
        %v5571 = vpop.f32.mrf.mxu0
        %v5572 = vadd.f32 %v5291, %v5571
        %v5573 = vpop.f32.mrf.mxu0
        %5574 = vmatprep.mubr.bf16.mxu0 %v4876
        %5575 = vmatmul.mubr.bf16.gmra.mxu0 %v4875
        %v5576 = vpop.f32.mrf.mxu0
        %v5577 = vpop.f32.mrf.mxu0
        %v5578 = vpop.f32.mrf.mxu0
        %v5579 = vpop.f32.mrf.mxu0
        %5580 = vmatprep.mubr.bf16.mxu0 %v4879
        %5581 = vmatmul.mubr.bf16.gmra.mxu0 %v4878
        %v5582 = vpop.f32.mrf.mxu0
        %v5583 = vpop.f32.mrf.mxu0
        %v5584 = vpop.f32.mrf.mxu0
        %v5585 = vpop.f32.mrf.mxu0
        %5586 = vdwg.mxu0
        %5587 = vmatprep.subr.bf16.mxu0 0
        %5588 = vmatpush1.bf16.msra.mxu0 %v5441
        %5589 = vmatprep.subr.bf16.mxu0 0
        %5590 = vmatpush1.bf16.msra.mxu0 %v5440
        %5591 = vmatprep.subr.bf16.mxu0 0
        %5592 = vmatpush1.bf16.msra.mxu0 %v5439
        %5593 = vmatprep.subr.bf16.mxu0 0
        %5594 = vmatpush1.bf16.msra.mxu0 %v5438
        %5595 = vmatprep.subr.bf16.mxu0 0
        %5596 = vmatpush1.bf16.msra.mxu0 %v5437
        %5597 = vmatprep.subr.bf16.mxu0 0
        %5598 = vmatpush1.bf16.msra.mxu0 %v5436
        %5599 = vmatprep.subr.bf16.mxu0 0
        %5600 = vmatpush1.bf16.msra.mxu0 %v5435
        %5601 = vmatprep.subr.bf16.mxu0 0
        %5602 = vmatpush1.bf16.msra.mxu0 %v5434
        %5603 = vmatprep.subr.bf16.mxu0 0
        %5604 = vmatpush2.bf16.msra.mxu0 0
        %5605 = vmatprep.subr.bf16.mxu0 0
        %5606 = vmatpush2.bf16.msra.mxu0 0
        %5607 = vmatprep.subr.bf16.mxu0 0
        %5608 = vmatpush2.bf16.msra.mxu0 0
        %5609 = vmatprep.subr.bf16.mxu0 0
        %5610 = vmatpush2.bf16.msra.mxu0 0
        %5611 = vmatprep.subr.bf16.mxu0 0
        %5612 = vmatpush2.bf16.msra.mxu0 0
        %5613 = vmatprep.subr.bf16.mxu0 0
        %5614 = vmatpush2.bf16.msra.mxu0 0
        %5615 = vmatprep.subr.bf16.mxu0 0
        %5616 = vmatpush2.bf16.msra.mxu0 0
        %5617 = vmatprep.subr.bf16.mxu0 0
        %5618 = vmatpush2.bf16.msra.mxu0 0
        %5619 = vmatprep.mubr.bf16.mxu0 0
        %5620 = vmatmul.mubr.bf16.gmra.mxu0 %v5318
        %v5621 = vpop.f32.mrf.mxu0
        %v5622 = vpop.f32.mrf.mxu0
        %v5623 = vpop.f32.mrf.mxu0
        %v5624 = vpop.f32.mrf.mxu0
        %5625 = vmatprep.mubr.bf16.mxu0 0
        %5626 = vmatmul.mubr.bf16.gmra.mxu0 %v4850
        %v5627 = vpop.f32.mrf.mxu0
        %v5628 = vpop.f32.mrf.mxu0
        %v5629 = vpop.f32.mrf.mxu0
        %v5630 = vpop.f32.mrf.mxu0
        %5631 = vmatprep.mubr.bf16.mxu0 0
        %5632 = vmatmul.mubr.bf16.gmra.mxu0 %v4853
        %v5633 = vpop.f32.mrf.mxu0
        %v5634 = vadd.f32 %v5513, %v5633
        %v5635 = vpop.f32.mrf.mxu0
        %v5636 = vpop.f32.mrf.mxu0
        %v5637 = vadd.f32 %v5516, %v5636
        %v5638 = vpop.f32.mrf.mxu0
        %5639 = vmatprep.mubr.bf16.mxu0 0
        %5640 = vmatmul.mubr.bf16.gmra.mxu0 %v4856
        %v5641 = vpop.f32.mrf.mxu0
        %v5642 = vadd.f32 %v5521, %v5641
        %v5643 = vpop.f32.mrf.mxu0
        %v5644 = vpop.f32.mrf.mxu0
        %v5645 = vadd.f32 %v5524, %v5644
        %v5646 = vpop.f32.mrf.mxu0
        %5647 = vmatprep.mubr.bf16.mxu0 0
        %5648 = vmatmul.mubr.bf16.gmra.mxu0 %v4859
        %v5649 = vpop.f32.mrf.mxu0
        %v5650 = vadd.f32 %v5529, %v5649
        %v5651 = vpop.f32.mrf.mxu0
        %v5652 = vpop.f32.mrf.mxu0
        %v5653 = vadd.f32 %v5532, %v5652
        %v5654 = vpop.f32.mrf.mxu0
        %5655 = vmatprep.mubr.bf16.mxu0 0
        %5656 = vmatmul.mubr.bf16.gmra.mxu0 %v4862
        %v5657 = vpop.f32.mrf.mxu0
        %v5658 = vadd.f32 %v5537, %v5657
        %v5659 = vpop.f32.mrf.mxu0
        %v5660 = vpop.f32.mrf.mxu0
        %v5661 = vadd.f32 %v5540, %v5660
        %v5662 = vpop.f32.mrf.mxu0
        %5663 = vmatprep.mubr.bf16.mxu0 0
        %5664 = vmatmul.mubr.bf16.gmra.mxu0 %v4865
        %v5665 = vpop.f32.mrf.mxu0
        %v5666 = vadd.f32 %v5545, %v5665
        %v5667 = vpop.f32.mrf.mxu0
        %v5668 = vpop.f32.mrf.mxu0
        %v5669 = vadd.f32 %v5548, %v5668
        %v5670 = vpop.f32.mrf.mxu0
        %5671 = vmatprep.mubr.bf16.mxu0 0
        %5672 = vmatmul.mubr.bf16.gmra.mxu0 %v4868
        %v5673 = vpop.f32.mrf.mxu0
        %v5674 = vadd.f32 %v5553, %v5673
        %v5675 = vpop.f32.mrf.mxu0
        %v5676 = vpop.f32.mrf.mxu0
        %v5677 = vadd.f32 %v5556, %v5676
        %v5678 = vpop.f32.mrf.mxu0
        %5679 = vmatprep.mubr.bf16.mxu0 0
        %5680 = vmatmul.mubr.bf16.gmra.mxu0 %v4871
        %v5681 = vpop.f32.mrf.mxu0
        %v5682 = vadd.f32 %v5561, %v5681
        %v5683 = vpop.f32.mrf.mxu0
        %v5684 = vpop.f32.mrf.mxu0
        %v5685 = vadd.f32 %v5564, %v5684
        %v5686 = vpop.f32.mrf.mxu0
        %5687 = vmatprep.mubr.bf16.mxu0 0
        %5688 = vmatmul.mubr.bf16.gmra.mxu0 %v4874
        %v5689 = vpop.f32.mrf.mxu0
        %v5690 = vadd.f32 %v5569, %v5689
        %v5691 = vpop.f32.mrf.mxu0
        %v5692 = vpop.f32.mrf.mxu0
        %v5693 = vadd.f32 %v5572, %v5692
        %v5694 = vpop.f32.mrf.mxu0
        %5695 = vmatprep.mubr.bf16.mxu0 0
        %5696 = vmatmul.mubr.bf16.gmra.mxu0 %v4877
        %v5697 = vpop.f32.mrf.mxu0
        %v5698 = vpop.f32.mrf.mxu0
        %v5699 = vpop.f32.mrf.mxu0
        %v5700 = vpop.f32.mrf.mxu0
        %5701 = vmatprep.mubr.bf16.mxu0 0
        %5702 = vmatmul.mubr.bf16.gmra.mxu0 %v4880
        %v5703 = vpop.f32.mrf.mxu0
        %v5704 = vpop.f32.mrf.mxu0
        %v5705 = vpop.f32.mrf.mxu0
        %v5706 = vpop.f32.mrf.mxu0
        %5707 = vdwg.mxu0
        %v5708 = vld [vmem:[#allocation2 + $0x30] sm:$0xff]
        %v5709 = vld [vmem:[#allocation2 + $0x38] sm:$0xf]
        %v5710 = vld [vmem:[#allocation2 + $0x3c] sm:$0xff]
        %v5711 = vld [vmem:[#allocation2 + $0x44] sm:$0xf]
        %v5712 = vld [vmem:[#allocation2 + $0x48] sm:$0xff]
        %v5713 = vld [vmem:[#allocation2 + $0x50] sm:$0xf]
        %v5714 = vld [vmem:[#allocation2 + $0x54] sm:$0xff]
        %v5715 = vld [vmem:[#allocation2 + $0x5c] sm:$0xf]
        %v5716 = vld [vmem:[#allocation2 + $0x60] sm:$0xff]
        %v5717 = vld [vmem:[#allocation2 + $0x68] sm:$0xf]
        %v5718 = vld [vmem:[#allocation2 + $0x6c] sm:$0xff]
        %v5719 = vld [vmem:[#allocation2 + $0x74] sm:$0xf]
        %v5720 = vld [vmem:[#allocation2 + $0x78] sm:$0xff]
        %v5721 = vld [vmem:[#allocation2 + $0x80] sm:$0xf]
        %v5722 = vld [vmem:[#allocation2 + $0x84] sm:$0xff]
        %v5723 = vld [vmem:[#allocation2 + $0x8c] sm:$0xf]
        %v5724 = vld [vmem:[#allocation2 + $0x90] sm:$0xff]
        %v5725 = vld [vmem:[#allocation2 + $0x98] sm:$0xf]
        %v5726 = vld [vmem:[#allocation2 + $0x9c] sm:$0xff]
        %v5727 = vld [vmem:[#allocation2 + $0xa4] sm:$0xf]
        %v5728 = vld [vmem:[#allocation2 + $0xa8] sm:$0xff]
        %v5729 = vld [vmem:[#allocation2 + $0xb0] sm:$0xf]
        %v5730 = vld [vmem:[#allocation2 + $0xb4] sm:$0xff]
        %v5731 = vld [vmem:[#allocation2 + $0xbc] sm:$0xf]
        %v5732 = vld [vmem:[#allocation2 + $0xc0] sm:$0xff]
        %v5733 = vld [vmem:[#allocation2 + $0xc8] sm:$0xf]
        %v5734 = vld [vmem:[#allocation2 + $0xcc] sm:$0xff]
        %v5735 = vld [vmem:[#allocation2 + $0xd4] sm:$0xf]
        %v5736 = vld [vmem:[#allocation2 + $0xd8] sm:$0xff]
        %v5737 = vld [vmem:[#allocation2 + $0xe0] sm:$0xf]
        %v5738 = vld [vmem:[#allocation2 + $0xe4] sm:$0xff]
        %v5739 = vld [vmem:[#allocation2 + $0xec] sm:$0xf]
        %v5740 = vld [vmem:[#allocation2 + $0xf0] sm:$0xff]
        %v5741 = vld [vmem:[#allocation2 + $0xf8] sm:$0xf]
        %v5742 = vld [vmem:[#allocation2 + $0xfc] sm:$0xff]
        %v5743 = vld [vmem:[#allocation2 + $0x104] sm:$0xf]
        %v5744 = vld [vmem:[#allocation2 + $0x108] sm:$0xff]
        %v5745 = vld [vmem:[#allocation2 + $0x110] sm:$0xf]
        %v5746 = vld [vmem:[#allocation2 + $0x114] sm:$0xff]
        %v5747 = vld [vmem:[#allocation2 + $0x11c] sm:$0xf]
        %v5748 = vld [vmem:[#allocation2 + $0x120] sm:$0xff]
        %v5749 = vld [vmem:[#allocation2 + $0x128] sm:$0xf]
        %v5750 = vld [vmem:[#allocation2 + $0x12c] sm:$0xff]
        %v5751 = vld [vmem:[#allocation2 + $0x134] sm:$0xf]
        %v5752 = vld [vmem:[#allocation2 + $0x138] sm:$0xff]
        %v5753 = vld [vmem:[#allocation2 + $0x140] sm:$0xf]
        %v5754 = vld [vmem:[#allocation2 + $0x144] sm:$0xff]
        %v5755 = vld [vmem:[#allocation2 + $0x14c] sm:$0xf]
        %s5756 = scalar_lea.vmem [#allocation4], 960
        %v5757 = vld [vmem:[%s5756] sm:$0xf]
        %v5758 = vld [vmem:[%s5756 + $0x4] sm:$0xf]
        %v5759 = vld [vmem:[%s5756 + $0x8] sm:$0xf]
        %v5760 = vld [vmem:[%s5756 + $0xc] sm:$0xf]
        %v5761 = vld [vmem:[%s5756 + $0x10] sm:$0xf]
        %v5762 = vld [vmem:[%s5756 + $0x14] sm:$0xf]
        %v5763 = vld [vmem:[%s5756 + $0x18] sm:$0xf]
        %v5764 = vld [vmem:[%s5756 + $0x1c] sm:$0xf]
        %v5765 = vld [vmem:[%s5756 + $0x20] sm:$0xf]
        %v5766 = vld [vmem:[%s5756 + $0x24] sm:$0xf]
        %v5767 = vld [vmem:[%s5756 + $0x28] sm:$0xf]
        %v5768 = vld [vmem:[%s5756 + $0x2c] sm:$0xf]
        %v5769 = vld [vmem:[%s5756 + $0x30] sm:$0xf]
        %v5770 = vld [vmem:[%s5756 + $0x34] sm:$0xf]
        %v5771 = vld [vmem:[%s5756 + $0x38] sm:$0xf]
        %v5772 = vld [vmem:[%s5756 + $0x3c] sm:$0xf]
        %v5773 = vld [vmem:[%s5756 + $0x40] sm:$0xf]
        %v5774 = vld [vmem:[%s5756 + $0x44] sm:$0xf]
        %v5775 = vld [vmem:[%s5756 + $0x48] sm:$0xf]
        %v5776 = vld [vmem:[%s5756 + $0x4c] sm:$0xf]
        %v5777 = vld [vmem:[%s5756 + $0x50] sm:$0xf]
        %v5778 = vld [vmem:[%s5756 + $0x54] sm:$0xf]
        %v5779 = vld [vmem:[%s5756 + $0x58] sm:$0xf]
        %v5780 = vld [vmem:[%s5756 + $0x5c] sm:$0xf]
        %v5781 = vld [vmem:[%s5756 + $0x60] sm:$0xf]
        %v5782 = vld [vmem:[%s5756 + $0x64] sm:$0xf]
        %v5783 = vld [vmem:[%s5756 + $0x68] sm:$0xf]
        %v5784 = vld [vmem:[%s5756 + $0x6c] sm:$0xf]
        %v5785 = vld [vmem:[%s5756 + $0x70] sm:$0xf]
        %v5786 = vld [vmem:[%s5756 + $0x74] sm:$0xf]
        %v5787 = vld [vmem:[%s5756 + $0x78] sm:$0xf]
        %v5788 = vld [vmem:[%s5756 + $0x7c] sm:$0xf]
        %v5789 = vld [vmem:[%s5756 + $0x80] sm:$0xf]
        %v5790 = vld [vmem:[%s5756 + $0x84] sm:$0xf]
        %v5791 = vld [vmem:[%s5756 + $0x88] sm:$0xf]
        %v5792 = vld [vmem:[%s5756 + $0x8c] sm:$0xf]
        %v5793 = vld [vmem:[%s5756 + $0x90] sm:$0xf]
        %v5794 = vld [vmem:[%s5756 + $0x94] sm:$0xf]
        %v5795 = vld [vmem:[%s5756 + $0x98] sm:$0xf]
        %v5796 = vld [vmem:[%s5756 + $0x9c] sm:$0xf]
        %v5797 = vld [vmem:[%s5756 + $0xa0] sm:$0xf]
        %v5798 = vld [vmem:[%s5756 + $0xa4] sm:$0xf]
        %v5799 = vld [vmem:[%s5756 + $0xa8] sm:$0xf]
        %v5800 = vld [vmem:[%s5756 + $0xac] sm:$0xf]
        %v5801 = vld [vmem:[%s5756 + $0xb0] sm:$0xf]
        %v5802 = vld [vmem:[%s5756 + $0xb4] sm:$0xf]
        %v5803 = vld [vmem:[%s5756 + $0xb8] sm:$0xf]
        %v5804 = vld [vmem:[%s5756 + $0xbc] sm:$0xf]
        %v5853 = vunpack.c.l.b16 %v5708
        %v5854 = vunpack.c.h.b16 %v5708
        %v5855 = vunpack.c.l.b16 %v5709
        %v5856 = vunpack.c.l.b16 %v5710
        %v5857 = vunpack.c.h.b16 %v5710
        %v5858 = vunpack.c.l.b16 %v5711
        %v5859 = vunpack.c.l.b16 %v5712
        %v5860 = vunpack.c.h.b16 %v5712
        %v5861 = vunpack.c.l.b16 %v5713
        %v5862 = vunpack.c.l.b16 %v5714
        %v5863 = vunpack.c.h.b16 %v5714
        %v5864 = vunpack.c.l.b16 %v5715
        %v5865 = vunpack.c.l.b16 %v5716
        %v5866 = vunpack.c.h.b16 %v5716
        %v5867 = vunpack.c.l.b16 %v5717
        %v5868 = vunpack.c.l.b16 %v5718
        %v5869 = vunpack.c.h.b16 %v5718
        %v5870 = vunpack.c.l.b16 %v5719
        %v5871 = vunpack.c.l.b16 %v5720
        %v5872 = vunpack.c.h.b16 %v5720
        %v5873 = vunpack.c.l.b16 %v5721
        %v5874 = vunpack.c.l.b16 %v5722
        %v5875 = vunpack.c.h.b16 %v5722
        %v5876 = vunpack.c.l.b16 %v5723
        %v5877 = vunpack.c.l.b16 %v5724
        %v5878 = vunpack.c.h.b16 %v5724
        %v5879 = vunpack.c.l.b16 %v5725
        %v5880 = vunpack.c.l.b16 %v5726
        %v5881 = vunpack.c.h.b16 %v5726
        %v5882 = vunpack.c.l.b16 %v5727
        %v5883 = vunpack.c.l.b16 %v5728
        %v5884 = vunpack.c.h.b16 %v5728
        %v5885 = vunpack.c.l.b16 %v5729
        %v5886 = vunpack.c.l.b16 %v5730
        %v5887 = vunpack.c.h.b16 %v5730
        %v5888 = vunpack.c.l.b16 %v5731
        %v5889 = vunpack.c.l.b16 %v5732
        %v5890 = vunpack.c.h.b16 %v5732
        %v5891 = vunpack.c.l.b16 %v5733
        %v5892 = vunpack.c.l.b16 %v5734
        %v5893 = vunpack.c.h.b16 %v5734
        %v5894 = vunpack.c.l.b16 %v5735
        %v5895 = vunpack.c.l.b16 %v5736
        %v5896 = vunpack.c.h.b16 %v5736
        %v5897 = vunpack.c.l.b16 %v5737
        %v5898 = vunpack.c.l.b16 %v5738
        %v5899 = vunpack.c.h.b16 %v5738
        %v5900 = vunpack.c.l.b16 %v5739
        %v5901 = vunpack.c.l.b16 %v5740
        %v5902 = vunpack.c.h.b16 %v5740
        %v5903 = vunpack.c.l.b16 %v5741
        %v5904 = vunpack.c.l.b16 %v5742
        %v5905 = vunpack.c.h.b16 %v5742
        %v5906 = vunpack.c.l.b16 %v5743
        %v5907 = vunpack.c.l.b16 %v5744
        %v5908 = vunpack.c.h.b16 %v5744
        %v5909 = vunpack.c.l.b16 %v5745
        %v5910 = vunpack.c.l.b16 %v5746
        %v5911 = vunpack.c.h.b16 %v5746
        %v5912 = vunpack.c.l.b16 %v5747
        %v5913 = vunpack.c.l.b16 %v5748
        %v5914 = vunpack.c.h.b16 %v5748
        %v5915 = vunpack.c.l.b16 %v5749
        %v5916 = vunpack.c.l.b16 %v5750
        %v5917 = vunpack.c.h.b16 %v5750
        %v5918 = vunpack.c.l.b16 %v5751
        %v5919 = vunpack.c.l.b16 %v5752
        %v5920 = vunpack.c.h.b16 %v5752
        %v5921 = vunpack.c.l.b16 %v5753
        %v5922 = vunpack.c.l.b16 %v5754
        %v5923 = vunpack.c.h.b16 %v5754
        %v5924 = vunpack.c.l.b16 %v5755
        %v5925 = vpack.c.b16 %v5856, %v5853
        %v5926 = vpack.c.b16 %v5857, %v5854
        %v5927 = vpack.c.b16 %v5858, %v5855
        %v5928 = vpack.c.b16 %v5862, %v5859
        %v5929 = vpack.c.b16 %v5863, %v5860
        %v5930 = vpack.c.b16 %v5864, %v5861
        %v5931 = vpack.c.b16 %v5868, %v5865
        %v5932 = vpack.c.b16 %v5869, %v5866
        %v5933 = vpack.c.b16 %v5870, %v5867
        %v5934 = vpack.c.b16 %v5874, %v5871
        %v5935 = vpack.c.b16 %v5875, %v5872
        %v5936 = vpack.c.b16 %v5876, %v5873
        %v5937 = vpack.c.b16 %v5880, %v5877
        %v5938 = vpack.c.b16 %v5881, %v5878
        %v5939 = vpack.c.b16 %v5882, %v5879
        %v5940 = vpack.c.b16 %v5886, %v5883
        %v5941 = vpack.c.b16 %v5887, %v5884
        %v5942 = vpack.c.b16 %v5888, %v5885
        %v5943 = vpack.c.b16 %v5892, %v5889
        %v5944 = vpack.c.b16 %v5893, %v5890
        %v5945 = vpack.c.b16 %v5894, %v5891
        %v5946 = vpack.c.b16 %v5898, %v5895
        %v5947 = vpack.c.b16 %v5899, %v5896
        %v5948 = vpack.c.b16 %v5900, %v5897
        %v5949 = vpack.c.b16 %v5904, %v5901
        %v5950 = vpack.c.b16 %v5905, %v5902
        %v5951 = vpack.c.b16 %v5906, %v5903
        %v5952 = vpack.c.b16 %v5910, %v5907
        %v5953 = vpack.c.b16 %v5911, %v5908
        %v5954 = vpack.c.b16 %v5912, %v5909
        %v5955 = vpack.c.b16 %v5916, %v5913
        %v5956 = vpack.c.b16 %v5917, %v5914
        %v5957 = vpack.c.b16 %v5918, %v5915
        %v5958 = vpack.c.b16 %v5922, %v5919
        %v5959 = vpack.c.b16 %v5923, %v5920
        %v5960 = vpack.c.b16 %v5924, %v5921
        %v6045 = vunpack.c.l.b16 %v5757
        %v6046 = vunpack.c.l.b16 %v5758
        %v6047 = vunpack.c.l.b16 %v5759
        %v6048 = vunpack.c.l.b16 %v5760
        %v6049 = vunpack.c.l.b16 %v5761
        %v6050 = vunpack.c.l.b16 %v5762
        %v6051 = vunpack.c.l.b16 %v5763
        %v6052 = vunpack.c.l.b16 %v5764
        %v6053 = vunpack.c.l.b16 %v5765
        %v6054 = vunpack.c.l.b16 %v5766
        %v6055 = vunpack.c.l.b16 %v5767
        %v6056 = vunpack.c.l.b16 %v5768
        %v6057 = vunpack.c.l.b16 %v5769
        %v6058 = vunpack.c.l.b16 %v5770
        %v6059 = vunpack.c.l.b16 %v5771
        %v6060 = vunpack.c.l.b16 %v5772
        %v6061 = vunpack.c.l.b16 %v5773
        %v6062 = vunpack.c.l.b16 %v5774
        %v6063 = vunpack.c.l.b16 %v5775
        %v6064 = vunpack.c.l.b16 %v5776
        %v6065 = vunpack.c.l.b16 %v5777
        %v6066 = vunpack.c.l.b16 %v5778
        %v6067 = vunpack.c.l.b16 %v5779
        %v6068 = vunpack.c.l.b16 %v5780
        %v6069 = vunpack.c.l.b16 %v5781
        %v6070 = vunpack.c.l.b16 %v5782
        %v6071 = vunpack.c.l.b16 %v5783
        %v6072 = vunpack.c.l.b16 %v5784
        %v6073 = vunpack.c.l.b16 %v5785
        %v6074 = vunpack.c.l.b16 %v5786
        %v6075 = vunpack.c.l.b16 %v5787
        %v6076 = vunpack.c.l.b16 %v5788
        %v6077 = vunpack.c.l.b16 %v5789
        %v6078 = vunpack.c.l.b16 %v5790
        %v6079 = vunpack.c.l.b16 %v5791
        %v6080 = vunpack.c.l.b16 %v5792
        %v6081 = vunpack.c.l.b16 %v5793
        %v6082 = vunpack.c.l.b16 %v5794
        %v6083 = vunpack.c.l.b16 %v5795
        %v6084 = vunpack.c.l.b16 %v5796
        %v6085 = vunpack.c.l.b16 %v5797
        %v6086 = vunpack.c.l.b16 %v5798
        %v6087 = vunpack.c.l.b16 %v5799
        %v6088 = vunpack.c.l.b16 %v5800
        %v6089 = vunpack.c.l.b16 %v5801
        %v6090 = vunpack.c.l.b16 %v5802
        %v6091 = vunpack.c.l.b16 %v5803
        %v6092 = vunpack.c.l.b16 %v5804
        %v6093 = vpack.c.b16 %v6046, %v6045
        %v6094 = vpack.c.b16 %v6048, %v6047
        %v6095 = vpack.c.b16 %v6050, %v6049
        %v6096 = vpack.c.b16 %v6052, %v6051
        %v6097 = vpack.c.b16 %v6054, %v6053
        %v6098 = vpack.c.b16 %v6056, %v6055
        %v6099 = vpack.c.b16 %v6058, %v6057
        %v6100 = vpack.c.b16 %v6060, %v6059
        %v6101 = vpack.c.b16 %v6062, %v6061
        %v6102 = vpack.c.b16 %v6064, %v6063
        %v6103 = vpack.c.b16 %v6066, %v6065
        %v6104 = vpack.c.b16 %v6068, %v6067
        %v6105 = vpack.c.b16 %v6070, %v6069
        %v6106 = vpack.c.b16 %v6072, %v6071
        %v6107 = vpack.c.b16 %v6074, %v6073
        %v6108 = vpack.c.b16 %v6076, %v6075
        %v6109 = vpack.c.b16 %v6078, %v6077
        %v6110 = vpack.c.b16 %v6080, %v6079
        %v6111 = vpack.c.b16 %v6082, %v6081
        %v6112 = vpack.c.b16 %v6084, %v6083
        %v6113 = vpack.c.b16 %v6086, %v6085
        %v6114 = vpack.c.b16 %v6088, %v6087
        %v6115 = vpack.c.b16 %v6090, %v6089
        %v6116 = vpack.c.b16 %v6092, %v6091
        %6141 = vmatprep.subr.bf16.mxu0 0
        %6142 = vmatpush1.bf16.msra.mxu0 %v6100
        %6143 = vmatprep.subr.bf16.mxu0 0
        %6144 = vmatpush1.bf16.msra.mxu0 %v6099
        %6145 = vmatprep.subr.bf16.mxu0 0
        %6146 = vmatpush1.bf16.msra.mxu0 %v6098
        %6147 = vmatprep.subr.bf16.mxu0 0
        %6148 = vmatpush1.bf16.msra.mxu0 %v6097
        %6149 = vmatprep.subr.bf16.mxu0 0
        %6150 = vmatpush1.bf16.msra.mxu0 %v6096
        %6151 = vmatprep.subr.bf16.mxu0 0
        %6152 = vmatpush1.bf16.msra.mxu0 %v6095
        %6153 = vmatprep.subr.bf16.mxu0 0
        %6154 = vmatpush1.bf16.msra.mxu0 %v6094
        %6155 = vmatprep.subr.bf16.mxu0 0
        %6156 = vmatpush1.bf16.msra.mxu0 %v6093
        %6157 = vmatprep.subr.bf16.mxu0 0
        %6158 = vmatpush2.bf16.msra.mxu0 %v6108
        %6159 = vmatprep.subr.bf16.mxu0 0
        %6160 = vmatpush2.bf16.msra.mxu0 %v6107
        %6161 = vmatprep.subr.bf16.mxu0 0
        %6162 = vmatpush2.bf16.msra.mxu0 %v6106
        %6163 = vmatprep.subr.bf16.mxu0 0
        %6164 = vmatpush2.bf16.msra.mxu0 %v6105
        %6165 = vmatprep.subr.bf16.mxu0 0
        %6166 = vmatpush2.bf16.msra.mxu0 %v6104
        %6167 = vmatprep.subr.bf16.mxu0 0
        %6168 = vmatpush2.bf16.msra.mxu0 %v6103
        %6169 = vmatprep.subr.bf16.mxu0 0
        %6170 = vmatpush2.bf16.msra.mxu0 %v6102
        %6171 = vmatprep.subr.bf16.mxu0 0
        %6172 = vmatpush2.bf16.msra.mxu0 %v6101
        %6173 = vmatprep.mubr.bf16.mxu0 %v5926
        %6174 = vmatmul.mubr.bf16.gmra.mxu0 %v5925
        %v6175 = vpop.f32.mrf.mxu0
        %v6176 = vpop.f32.mrf.mxu0
        %v6177 = vpop.f32.mrf.mxu0
        %v6178 = vpop.f32.mrf.mxu0
        %6179 = vmatprep.mubr.bf16.mxu0 %v5929
        %6180 = vmatmul.mubr.bf16.gmra.mxu0 %v5928
        %v6181 = vpop.f32.mrf.mxu0
        %v6182 = vpop.f32.mrf.mxu0
        %v6183 = vpop.f32.mrf.mxu0
        %v6184 = vpop.f32.mrf.mxu0
        %6185 = vmatprep.mubr.bf16.mxu0 %v5932
        %6186 = vmatmul.mubr.bf16.gmra.mxu0 %v5931
        %v6187 = vpop.f32.mrf.mxu0
        %v6188 = vadd.f32 0.0, %v6187
        %v6189 = vpop.f32.mrf.mxu0
        %v6190 = vpop.f32.mrf.mxu0
        %v6191 = vadd.f32 0.0, %v6190
        %v6192 = vpop.f32.mrf.mxu0
        %6193 = vmatprep.mubr.bf16.mxu0 %v5935
        %6194 = vmatmul.mubr.bf16.gmra.mxu0 %v5934
        %v6195 = vpop.f32.mrf.mxu0
        %v6196 = vadd.f32 0.0, %v6195
        %v6197 = vpop.f32.mrf.mxu0
        %v6198 = vpop.f32.mrf.mxu0
        %v6199 = vadd.f32 0.0, %v6198
        %v6200 = vpop.f32.mrf.mxu0
        %6201 = vmatprep.mubr.bf16.mxu0 %v5938
        %6202 = vmatmul.mubr.bf16.gmra.mxu0 %v5937
        %v6203 = vpop.f32.mrf.mxu0
        %v6204 = vadd.f32 0.0, %v6203
        %v6205 = vpop.f32.mrf.mxu0
        %v6206 = vpop.f32.mrf.mxu0
        %v6207 = vadd.f32 0.0, %v6206
        %v6208 = vpop.f32.mrf.mxu0
        %6209 = vmatprep.mubr.bf16.mxu0 %v5941
        %6210 = vmatmul.mubr.bf16.gmra.mxu0 %v5940
        %v6211 = vpop.f32.mrf.mxu0
        %v6212 = vadd.f32 0.0, %v6211
        %v6213 = vpop.f32.mrf.mxu0
        %v6214 = vpop.f32.mrf.mxu0
        %v6215 = vadd.f32 0.0, %v6214
        %v6216 = vpop.f32.mrf.mxu0
        %6217 = vmatprep.mubr.bf16.mxu0 %v5944
        %6218 = vmatmul.mubr.bf16.gmra.mxu0 %v5943
        %v6219 = vpop.f32.mrf.mxu0
        %v6220 = vadd.f32 0.0, %v6219
        %v6221 = vpop.f32.mrf.mxu0
        %v6222 = vpop.f32.mrf.mxu0
        %v6223 = vadd.f32 0.0, %v6222
        %v6224 = vpop.f32.mrf.mxu0
        %6225 = vmatprep.mubr.bf16.mxu0 %v5947
        %6226 = vmatmul.mubr.bf16.gmra.mxu0 %v5946
        %v6227 = vpop.f32.mrf.mxu0
        %v6228 = vadd.f32 0.0, %v6227
        %v6229 = vpop.f32.mrf.mxu0
        %v6230 = vpop.f32.mrf.mxu0
        %v6231 = vadd.f32 0.0, %v6230
        %v6232 = vpop.f32.mrf.mxu0
        %6233 = vmatprep.mubr.bf16.mxu0 %v5950
        %6234 = vmatmul.mubr.bf16.gmra.mxu0 %v5949
        %v6235 = vpop.f32.mrf.mxu0
        %v6236 = vadd.f32 0.0, %v6235
        %v6237 = vpop.f32.mrf.mxu0
        %v6238 = vpop.f32.mrf.mxu0
        %v6239 = vadd.f32 0.0, %v6238
        %v6240 = vpop.f32.mrf.mxu0
        %6241 = vmatprep.mubr.bf16.mxu0 %v5953
        %6242 = vmatmul.mubr.bf16.gmra.mxu0 %v5952
        %v6243 = vpop.f32.mrf.mxu0
        %v6244 = vadd.f32 0.0, %v6243
        %v6245 = vpop.f32.mrf.mxu0
        %v6246 = vpop.f32.mrf.mxu0
        %v6247 = vadd.f32 0.0, %v6246
        %v6248 = vpop.f32.mrf.mxu0
        %6249 = vmatprep.mubr.bf16.mxu0 %v5956
        %6250 = vmatmul.mubr.bf16.gmra.mxu0 %v5955
        %v6251 = vpop.f32.mrf.mxu0
        %v6252 = vpop.f32.mrf.mxu0
        %v6253 = vpop.f32.mrf.mxu0
        %v6254 = vpop.f32.mrf.mxu0
        %6255 = vmatprep.mubr.bf16.mxu0 %v5959
        %6256 = vmatmul.mubr.bf16.gmra.mxu0 %v5958
        %v6257 = vpop.f32.mrf.mxu0
        %v6258 = vpop.f32.mrf.mxu0
        %v6259 = vpop.f32.mrf.mxu0
        %v6260 = vpop.f32.mrf.mxu0
        %6261 = vdwg.mxu0
        %6262 = vmatprep.subr.bf16.mxu0 0
        %6263 = vmatpush1.bf16.msra.mxu0 %v6116
        %6264 = vmatprep.subr.bf16.mxu0 0
        %6265 = vmatpush1.bf16.msra.mxu0 %v6115
        %6266 = vmatprep.subr.bf16.mxu0 0
        %6267 = vmatpush1.bf16.msra.mxu0 %v6114
        %6268 = vmatprep.subr.bf16.mxu0 0
        %6269 = vmatpush1.bf16.msra.mxu0 %v6113
        %6270 = vmatprep.subr.bf16.mxu0 0
        %6271 = vmatpush1.bf16.msra.mxu0 %v6112
        %6272 = vmatprep.subr.bf16.mxu0 0
        %6273 = vmatpush1.bf16.msra.mxu0 %v6111
        %6274 = vmatprep.subr.bf16.mxu0 0
        %6275 = vmatpush1.bf16.msra.mxu0 %v6110
        %6276 = vmatprep.subr.bf16.mxu0 0
        %6277 = vmatpush1.bf16.msra.mxu0 %v6109
        %6278 = vmatprep.subr.bf16.mxu0 0
        %6279 = vmatpush2.bf16.msra.mxu0 0
        %6280 = vmatprep.subr.bf16.mxu0 0
        %6281 = vmatpush2.bf16.msra.mxu0 0
        %6282 = vmatprep.subr.bf16.mxu0 0
        %6283 = vmatpush2.bf16.msra.mxu0 0
        %6284 = vmatprep.subr.bf16.mxu0 0
        %6285 = vmatpush2.bf16.msra.mxu0 0
        %6286 = vmatprep.subr.bf16.mxu0 0
        %6287 = vmatpush2.bf16.msra.mxu0 0
        %6288 = vmatprep.subr.bf16.mxu0 0
        %6289 = vmatpush2.bf16.msra.mxu0 0
        %6290 = vmatprep.subr.bf16.mxu0 0
        %6291 = vmatpush2.bf16.msra.mxu0 0
        %6292 = vmatprep.subr.bf16.mxu0 0
        %6293 = vmatpush2.bf16.msra.mxu0 0
        %6294 = vmatprep.mubr.bf16.mxu0 0
        %6295 = vmatmul.mubr.bf16.gmra.mxu0 %v5927
        %v6296 = vpop.f32.mrf.mxu0
        %v6297 = vpop.f32.mrf.mxu0
        %v6298 = vpop.f32.mrf.mxu0
        %v6299 = vpop.f32.mrf.mxu0
        %6300 = vmatprep.mubr.bf16.mxu0 0
        %6301 = vmatmul.mubr.bf16.gmra.mxu0 %v5930
        %v6302 = vpop.f32.mrf.mxu0
        %v6303 = vpop.f32.mrf.mxu0
        %v6304 = vpop.f32.mrf.mxu0
        %v6305 = vpop.f32.mrf.mxu0
        %6306 = vmatprep.mubr.bf16.mxu0 0
        %6307 = vmatmul.mubr.bf16.gmra.mxu0 %v5933
        %v6308 = vpop.f32.mrf.mxu0
        %v6309 = vadd.f32 %v6188, %v6308
        %v6310 = vpop.f32.mrf.mxu0
        %v6311 = vpop.f32.mrf.mxu0
        %v6312 = vadd.f32 %v6191, %v6311
        %v6313 = vpop.f32.mrf.mxu0
        %6314 = vmatprep.mubr.bf16.mxu0 0
        %6315 = vmatmul.mubr.bf16.gmra.mxu0 %v5936
        %v6316 = vpop.f32.mrf.mxu0
        %v6317 = vadd.f32 %v6196, %v6316
        %v6318 = vpop.f32.mrf.mxu0
        %v6319 = vpop.f32.mrf.mxu0
        %v6320 = vadd.f32 %v6199, %v6319
        %v6321 = vpop.f32.mrf.mxu0
        %6322 = vmatprep.mubr.bf16.mxu0 0
        %6323 = vmatmul.mubr.bf16.gmra.mxu0 %v5939
        %v6324 = vpop.f32.mrf.mxu0
        %v6325 = vadd.f32 %v6204, %v6324
        %v6326 = vpop.f32.mrf.mxu0
        %v6327 = vpop.f32.mrf.mxu0
        %v6328 = vadd.f32 %v6207, %v6327
        %v6329 = vpop.f32.mrf.mxu0
        %6330 = vmatprep.mubr.bf16.mxu0 0
        %6331 = vmatmul.mubr.bf16.gmra.mxu0 %v5942
        %v6332 = vpop.f32.mrf.mxu0
        %v6333 = vadd.f32 %v6212, %v6332
        %v6334 = vpop.f32.mrf.mxu0
        %v6335 = vpop.f32.mrf.mxu0
        %v6336 = vadd.f32 %v6215, %v6335
        %v6337 = vpop.f32.mrf.mxu0
        %6338 = vmatprep.mubr.bf16.mxu0 0
        %6339 = vmatmul.mubr.bf16.gmra.mxu0 %v5945
        %v6340 = vpop.f32.mrf.mxu0
        %v6341 = vadd.f32 %v6220, %v6340
        %v6342 = vpop.f32.mrf.mxu0
        %v6343 = vpop.f32.mrf.mxu0
        %v6344 = vadd.f32 %v6223, %v6343
        %v6345 = vpop.f32.mrf.mxu0
        %6346 = vmatprep.mubr.bf16.mxu0 0
        %6347 = vmatmul.mubr.bf16.gmra.mxu0 %v5948
        %v6348 = vpop.f32.mrf.mxu0
        %v6349 = vadd.f32 %v6228, %v6348
        %v6350 = vpop.f32.mrf.mxu0
        %v6351 = vpop.f32.mrf.mxu0
        %v6352 = vadd.f32 %v6231, %v6351
        %v6353 = vpop.f32.mrf.mxu0
        %6354 = vmatprep.mubr.bf16.mxu0 0
        %6355 = vmatmul.mubr.bf16.gmra.mxu0 %v5951
        %v6356 = vpop.f32.mrf.mxu0
        %v6357 = vadd.f32 %v6236, %v6356
        %v6358 = vpop.f32.mrf.mxu0
        %v6359 = vpop.f32.mrf.mxu0
        %v6360 = vadd.f32 %v6239, %v6359
        %v6361 = vpop.f32.mrf.mxu0
        %6362 = vmatprep.mubr.bf16.mxu0 0
        %6363 = vmatmul.mubr.bf16.gmra.mxu0 %v5954
        %v6364 = vpop.f32.mrf.mxu0
        %v6365 = vadd.f32 %v6244, %v6364
        %v6366 = vpop.f32.mrf.mxu0
        %v6367 = vpop.f32.mrf.mxu0
        %v6368 = vadd.f32 %v6247, %v6367
        %v6369 = vpop.f32.mrf.mxu0
        %6370 = vmatprep.mubr.bf16.mxu0 0
        %6371 = vmatmul.mubr.bf16.gmra.mxu0 %v5957
        %v6372 = vpop.f32.mrf.mxu0
        %v6373 = vpop.f32.mrf.mxu0
        %v6374 = vpop.f32.mrf.mxu0
        %v6375 = vpop.f32.mrf.mxu0
        %6376 = vmatprep.mubr.bf16.mxu0 0
        %6377 = vmatmul.mubr.bf16.gmra.mxu0 %v5960
        %v6378 = vpop.f32.mrf.mxu0
        %v6379 = vpop.f32.mrf.mxu0
        %v6380 = vpop.f32.mrf.mxu0
        %v6381 = vpop.f32.mrf.mxu0
        %6382 = vdwg.mxu0
        %v6383 = vadd.f32 %v5634, %v6309
        %v6384 = vadd.f32 %v5637, %v6312
        %v6385 = vadd.f32 %v5642, %v6317
        %v6386 = vadd.f32 %v5645, %v6320
        %v6387 = vadd.f32 %v5650, %v6325
        %v6388 = vadd.f32 %v5653, %v6328
        %v6389 = vadd.f32 %v5658, %v6333
        %v6390 = vadd.f32 %v5661, %v6336
        %v6391 = vadd.f32 %v5666, %v6341
        %v6392 = vadd.f32 %v5669, %v6344
        %v6393 = vadd.f32 %v5674, %v6349
        %v6394 = vadd.f32 %v5677, %v6352
        %v6395 = vadd.f32 %v5682, %v6357
        %v6396 = vadd.f32 %v5685, %v6360
        %v6397 = vadd.f32 %v5690, %v6365
        %v6398 = vadd.f32 %v5693, %v6368
        %s6399 = scalar_lea.vmem %s4, 1
        %v6400 = vld [vmem:[%s6399] sm:$0x1]
        %v6402 = vlaneseq
        %v6403 = vshrl.u32 %v6402, 7
        %v6404 = vsub.s32 0, %v6403
        %v6405 = vrot.slane %v6400, %v6404
        %v6407 = vadd.f32 %v6383, %v6405
        %v6408 = vadd.f32 %v6384, %v6405
        %v6409 = vadd.f32 %v6385, %v6405
        %v6410 = vadd.f32 %v6386, %v6405
        %v6411 = vadd.f32 %v6387, %v6405
        %v6412 = vadd.f32 %v6388, %v6405
        %v6413 = vadd.f32 %v6389, %v6405
        %v6414 = vadd.f32 %v6390, %v6405
        %v6415 = vadd.f32 %v6391, %v6405
        %v6416 = vadd.f32 %v6392, %v6405
        %v6417 = vadd.f32 %v6393, %v6405
        %v6418 = vadd.f32 %v6394, %v6405
        %v6419 = vadd.f32 %v6395, %v6405
        %v6420 = vadd.f32 %v6396, %v6405
        %v6421 = vadd.f32 %v6397, %v6405
        %v6422 = vadd.f32 %v6398, %v6405
        %v6423 = vsub.f32 0.0, %v6407
        %v6424 = vsub.f32 0.0, %v6408
        %v6425 = vsub.f32 0.0, %v6409
        %v6426 = vsub.f32 0.0, %v6410
        %v6427 = vsub.f32 0.0, %v6411
        %v6428 = vsub.f32 0.0, %v6412
        %v6429 = vsub.f32 0.0, %v6413
        %v6430 = vsub.f32 0.0, %v6414
        %v6431 = vsub.f32 0.0, %v6415
        %v6432 = vsub.f32 0.0, %v6416
        %v6433 = vsub.f32 0.0, %v6417
        %v6434 = vsub.f32 0.0, %v6418
        %v6435 = vsub.f32 0.0, %v6419
        %v6436 = vsub.f32 0.0, %v6420
        %v6437 = vsub.f32 0.0, %v6421
        %v6438 = vsub.f32 0.0, %v6422
        %v6439 = vmul.f32 %v6423, 1.442695
        %v6440 = vpow.pop %v6439
        %v6441 = vmul.f32 %v6424, 1.442695
        %v6442 = vpow.pop %v6441
        %v6443 = vmul.f32 %v6425, 1.442695
        %v6444 = vpow.pop %v6443
        %v6445 = vmul.f32 %v6426, 1.442695
        %v6446 = vpow.pop %v6445
        %v6447 = vmul.f32 %v6427, 1.442695
        %v6448 = vpow.pop %v6447
        %v6449 = vmul.f32 %v6428, 1.442695
        %v6450 = vpow.pop %v6449
        %v6451 = vmul.f32 %v6429, 1.442695
        %v6452 = vpow.pop %v6451
        %v6453 = vmul.f32 %v6430, 1.442695
        %v6454 = vpow.pop %v6453
        %v6455 = vmul.f32 %v6431, 1.442695
        %v6456 = vpow.pop %v6455
        %v6457 = vmul.f32 %v6432, 1.442695
        %v6458 = vpow.pop %v6457
        %v6459 = vmul.f32 %v6433, 1.442695
        %v6460 = vpow.pop %v6459
        %v6461 = vmul.f32 %v6434, 1.442695
        %v6462 = vpow.pop %v6461
        %v6463 = vmul.f32 %v6435, 1.442695
        %v6464 = vpow.pop %v6463
        %v6465 = vmul.f32 %v6436, 1.442695
        %v6466 = vpow.pop %v6465
        %v6467 = vmul.f32 %v6437, 1.442695
        %v6468 = vpow.pop %v6467
        %v6469 = vmul.f32 %v6438, 1.442695
        %v6470 = vpow.pop %v6469
        %v6471 = vadd.f32 %v6440, 1.0
        %v6472 = vadd.f32 %v6442, 1.0
        %v6473 = vadd.f32 %v6444, 1.0
        %v6474 = vadd.f32 %v6446, 1.0
        %v6475 = vadd.f32 %v6448, 1.0
        %v6476 = vadd.f32 %v6450, 1.0
        %v6477 = vadd.f32 %v6452, 1.0
        %v6478 = vadd.f32 %v6454, 1.0
        %v6479 = vadd.f32 %v6456, 1.0
        %v6480 = vadd.f32 %v6458, 1.0
        %v6481 = vadd.f32 %v6460, 1.0
        %v6482 = vadd.f32 %v6462, 1.0
        %v6483 = vadd.f32 %v6464, 1.0
        %v6484 = vadd.f32 %v6466, 1.0
        %v6485 = vadd.f32 %v6468, 1.0
        %v6486 = vadd.f32 %v6470, 1.0
        %v6487 = vrcp.pop %v6471
        %v6488 = vrcp.pop %v6472
        %v6489 = vrcp.pop %v6473
        %v6490 = vrcp.pop %v6474
        %v6491 = vrcp.pop %v6475
        %v6492 = vrcp.pop %v6476
        %v6493 = vrcp.pop %v6477
        %v6494 = vrcp.pop %v6478
        %v6495 = vrcp.pop %v6479
        %v6496 = vrcp.pop %v6480
        %v6497 = vrcp.pop %v6481
        %v6498 = vrcp.pop %v6482
        %v6499 = vrcp.pop %v6483
        %v6500 = vrcp.pop %v6484
        %v6501 = vrcp.pop %v6485
        %v6502 = vrcp.pop %v6486
        %v6503 = vmul.f32 %v6407, %v6487
        %v6504 = vmul.f32 %v6408, %v6488
        %v6505 = vmul.f32 %v6409, %v6489
        %v6506 = vmul.f32 %v6410, %v6490
        %v6507 = vmul.f32 %v6411, %v6491
        %v6508 = vmul.f32 %v6412, %v6492
        %v6509 = vmul.f32 %v6413, %v6493
        %v6510 = vmul.f32 %v6414, %v6494
        %v6511 = vmul.f32 %v6415, %v6495
        %v6512 = vmul.f32 %v6416, %v6496
        %v6513 = vmul.f32 %v6417, %v6497
        %v6514 = vmul.f32 %v6418, %v6498
        %v6515 = vmul.f32 %v6419, %v6499
        %v6516 = vmul.f32 %v6420, %v6500
        %v6517 = vmul.f32 %v6421, %v6501
        %v6518 = vmul.f32 %v6422, %v6502
        %v6519 = vpack.c.bf16 %v6504, %v6503
        %v6520 = vpack.c.bf16 %v6506, %v6505
        %v6521 = vpack.c.bf16 %v6508, %v6507
        %v6522 = vpack.c.bf16 %v6510, %v6509
        %v6523 = vpack.c.bf16 %v6512, %v6511
        %v6524 = vpack.c.bf16 %v6514, %v6513
        %v6525 = vpack.c.bf16 %v6516, %v6515
        %v6526 = vpack.c.bf16 %v6518, %v6517
        %v6535 = vunpack.c.l.b16 %v6519
        %v6536 = vunpack.c.h.b16 %v6519
        %v6537 = vunpack.c.l.b16 %v6520
        %v6538 = vunpack.c.h.b16 %v6520
        %v6539 = vunpack.c.l.b16 %v6521
        %v6540 = vunpack.c.h.b16 %v6521
        %v6541 = vunpack.c.l.b16 %v6522
        %v6542 = vunpack.c.h.b16 %v6522
        %v6543 = vunpack.c.l.b16 %v6523
        %v6544 = vunpack.c.h.b16 %v6523
        %v6545 = vunpack.c.l.b16 %v6524
        %v6546 = vunpack.c.h.b16 %v6524
        %v6547 = vunpack.c.l.b16 %v6525
        %v6548 = vunpack.c.h.b16 %v6525
        %v6549 = vunpack.c.l.b16 %v6526
        %v6550 = vunpack.c.h.b16 %v6526
        %v6551 = vpack.c.b16 %v6535, %v6535
        %v6552 = vpack.c.b16 %v6536, %v6536
        %v6553 = vpack.c.b16 %v6537, %v6537
        %v6554 = vpack.c.b16 %v6538, %v6538
        %v6555 = vpack.c.b16 %v6539, %v6539
        %v6556 = vpack.c.b16 %v6540, %v6540
        %v6557 = vpack.c.b16 %v6541, %v6541
        %v6558 = vpack.c.b16 %v6542, %v6542
        %v6559 = vpack.c.b16 %v6543, %v6543
        %v6560 = vpack.c.b16 %v6544, %v6544
        %v6561 = vpack.c.b16 %v6545, %v6545
        %v6562 = vpack.c.b16 %v6546, %v6546
        %v6563 = vpack.c.b16 %v6547, %v6547
        %v6564 = vpack.c.b16 %v6548, %v6548
        %v6565 = vpack.c.b16 %v6549, %v6549
        %v6566 = vpack.c.b16 %v6550, %v6550
        %6583 = vst [vmem:[#allocation3 + $0x8] sm:$0xf] %v6551
        %6584 = vst [vmem:[#allocation3 + $0x14] sm:$0xf] %v6552
        %6585 = vst [vmem:[#allocation3 + $0x20] sm:$0xf] %v6553
        %6586 = vst [vmem:[#allocation3 + $0x2c] sm:$0xf] %v6554
        %6587 = vst [vmem:[#allocation3 + $0x38] sm:$0xf] %v6555
        %6588 = vst [vmem:[#allocation3 + $0x44] sm:$0xf] %v6556
        %6589 = vst [vmem:[#allocation3 + $0x50] sm:$0xf] %v6557
        %6590 = vst [vmem:[#allocation3 + $0x5c] sm:$0xf] %v6558
        %6591 = vst [vmem:[#allocation3 + $0x68] sm:$0xf] %v6559
        %6592 = vst [vmem:[#allocation3 + $0x74] sm:$0xf] %v6560
        %6593 = vst [vmem:[#allocation3 + $0x80] sm:$0xf] %v6561
        %6594 = vst [vmem:[#allocation3 + $0x8c] sm:$0xf] %v6562
        %6595 = vst [vmem:[#allocation3 + $0x98] sm:$0xf] %v6563
        %6596 = vst [vmem:[#allocation3 + $0xa4] sm:$0xf] %v6564
        %6597 = vst [vmem:[#allocation3 + $0xb0] sm:$0xf] %v6565
        %6598 = vst [vmem:[#allocation3 + $0xbc] sm:$0xf] %v6566
        %v6599 = vld [vmem:[#allocation3] sm:$0xff]
        %v6600 = vld [vmem:[#allocation3 + $0x8] sm:$0xf]
        %v6601 = vld [vmem:[#allocation3 + $0xc] sm:$0xff]
        %v6602 = vld [vmem:[#allocation3 + $0x14] sm:$0xf]
        %v6603 = vld [vmem:[#allocation3 + $0x18] sm:$0xff]
        %v6604 = vld [vmem:[#allocation3 + $0x20] sm:$0xf]
        %v6605 = vld [vmem:[#allocation3 + $0x24] sm:$0xff]
        %v6606 = vld [vmem:[#allocation3 + $0x2c] sm:$0xf]
        %v6607 = vld [vmem:[#allocation3 + $0x30] sm:$0xff]
        %v6608 = vld [vmem:[#allocation3 + $0x38] sm:$0xf]
        %v6609 = vld [vmem:[#allocation3 + $0x3c] sm:$0xff]
        %v6610 = vld [vmem:[#allocation3 + $0x44] sm:$0xf]
        %v6611 = vld [vmem:[#allocation3 + $0x48] sm:$0xff]
        %v6612 = vld [vmem:[#allocation3 + $0x50] sm:$0xf]
        %v6613 = vld [vmem:[#allocation3 + $0x54] sm:$0xff]
        %v6614 = vld [vmem:[#allocation3 + $0x5c] sm:$0xf]
        %v6615 = vld [vmem:[#allocation3 + $0x60] sm:$0xff]
        %v6616 = vld [vmem:[#allocation3 + $0x68] sm:$0xf]
        %v6617 = vld [vmem:[#allocation3 + $0x6c] sm:$0xff]
        %v6618 = vld [vmem:[#allocation3 + $0x74] sm:$0xf]
        %v6619 = vld [vmem:[#allocation3 + $0x78] sm:$0xff]
        %v6620 = vld [vmem:[#allocation3 + $0x80] sm:$0xf]
        %v6621 = vld [vmem:[#allocation3 + $0x84] sm:$0xff]
        %v6622 = vld [vmem:[#allocation3 + $0x8c] sm:$0xf]
        %v6623 = vld [vmem:[#allocation3 + $0x90] sm:$0xff]
        %v6624 = vld [vmem:[#allocation3 + $0x98] sm:$0xf]
        %v6625 = vld [vmem:[#allocation3 + $0x9c] sm:$0xff]
        %v6626 = vld [vmem:[#allocation3 + $0xa4] sm:$0xf]
        %v6627 = vld [vmem:[#allocation3 + $0xa8] sm:$0xff]
        %v6628 = vld [vmem:[#allocation3 + $0xb0] sm:$0xf]
        %v6629 = vld [vmem:[#allocation3 + $0xb4] sm:$0xff]
        %v6630 = vld [vmem:[#allocation3 + $0xbc] sm:$0xf]
        %v6631 = vld [vmem:[%s5] sm:$0xf]
        %v6632 = vld [vmem:[%s5 + $0x4] sm:$0xf]
        %v6633 = vld [vmem:[%s5 + $0x8] sm:$0xf]
        %v6634 = vld [vmem:[%s5 + $0xc] sm:$0xf]
        %v6635 = vld [vmem:[%s5 + $0x10] sm:$0xf]
        %v6636 = vld [vmem:[%s5 + $0x14] sm:$0xf]
        %v6637 = vld [vmem:[%s5 + $0x18] sm:$0xf]
        %v6638 = vld [vmem:[%s5 + $0x1c] sm:$0xf]
        %v6639 = vld [vmem:[%s5 + $0x20] sm:$0xf]
        %v6640 = vld [vmem:[%s5 + $0x24] sm:$0xf]
        %v6641 = vld [vmem:[%s5 + $0x28] sm:$0xf]
        %v6642 = vld [vmem:[%s5 + $0x2c] sm:$0xf]
        %v6643 = vld [vmem:[%s5 + $0x30] sm:$0xf]
        %v6644 = vld [vmem:[%s5 + $0x34] sm:$0xf]
        %v6645 = vld [vmem:[%s5 + $0x38] sm:$0xf]
        %v6646 = vld [vmem:[%s5 + $0x3c] sm:$0xf]
        %v6647 = vld [vmem:[%s5 + $0x40] sm:$0xf]
        %v6648 = vld [vmem:[%s5 + $0x44] sm:$0xf]
        %v6649 = vld [vmem:[%s5 + $0x48] sm:$0xf]
        %v6650 = vld [vmem:[%s5 + $0x4c] sm:$0xf]
        %v6651 = vld [vmem:[%s5 + $0x50] sm:$0xf]
        %v6652 = vld [vmem:[%s5 + $0x54] sm:$0xf]
        %v6653 = vld [vmem:[%s5 + $0x58] sm:$0xf]
        %v6654 = vld [vmem:[%s5 + $0x5c] sm:$0xf]
        %v6655 = vld [vmem:[%s5 + $0x60] sm:$0xf]
        %v6656 = vld [vmem:[%s5 + $0x64] sm:$0xf]
        %v6657 = vld [vmem:[%s5 + $0x68] sm:$0xf]
        %v6658 = vld [vmem:[%s5 + $0x6c] sm:$0xf]
        %v6659 = vld [vmem:[%s5 + $0x70] sm:$0xf]
        %v6660 = vld [vmem:[%s5 + $0x74] sm:$0xf]
        %v6661 = vld [vmem:[%s5 + $0x78] sm:$0xf]
        %v6662 = vld [vmem:[%s5 + $0x7c] sm:$0xf]
        %v6663 = vld [vmem:[%s5 + $0x80] sm:$0xf]
        %v6664 = vld [vmem:[%s5 + $0x84] sm:$0xf]
        %v6665 = vld [vmem:[%s5 + $0x88] sm:$0xf]
        %v6666 = vld [vmem:[%s5 + $0x8c] sm:$0xf]
        %v6667 = vld [vmem:[%s5 + $0x90] sm:$0xf]
        %v6668 = vld [vmem:[%s5 + $0x94] sm:$0xf]
        %v6669 = vld [vmem:[%s5 + $0x98] sm:$0xf]
        %v6670 = vld [vmem:[%s5 + $0x9c] sm:$0xf]
        %v6671 = vld [vmem:[%s5 + $0xa0] sm:$0xf]
        %v6672 = vld [vmem:[%s5 + $0xa4] sm:$0xf]
        %v6673 = vld [vmem:[%s5 + $0xa8] sm:$0xf]
        %v6674 = vld [vmem:[%s5 + $0xac] sm:$0xf]
        %v6675 = vld [vmem:[%s5 + $0xb0] sm:$0xf]
        %v6676 = vld [vmem:[%s5 + $0xb4] sm:$0xf]
        %v6677 = vld [vmem:[%s5 + $0xb8] sm:$0xf]
        %v6678 = vld [vmem:[%s5 + $0xbc] sm:$0xf]
        %v6679 = vld [vmem:[%s6] sm:$0x1]
        %v6681 = vlaneseq
        %v6682 = vshrl.u32 %v6681, 7
        %v6683 = vsub.s32 0, %v6682
        %v6684 = vrot.slane %v6679, %v6683
        %v6718 = vunpack.c.l.b16 %v6599
        %v6719 = vunpack.c.h.b16 %v6599
        %v6720 = vunpack.c.l.b16 %v6600
        %v6721 = vunpack.c.l.b16 %v6601
        %v6722 = vunpack.c.h.b16 %v6601
        %v6723 = vunpack.c.l.b16 %v6602
        %v6724 = vunpack.c.l.b16 %v6603
        %v6725 = vunpack.c.h.b16 %v6603
        %v6726 = vunpack.c.l.b16 %v6604
        %v6727 = vunpack.c.l.b16 %v6605
        %v6728 = vunpack.c.h.b16 %v6605
        %v6729 = vunpack.c.l.b16 %v6606
        %v6730 = vunpack.c.l.b16 %v6607
        %v6731 = vunpack.c.h.b16 %v6607
        %v6732 = vunpack.c.l.b16 %v6608
        %v6733 = vunpack.c.l.b16 %v6609
        %v6734 = vunpack.c.h.b16 %v6609
        %v6735 = vunpack.c.l.b16 %v6610
        %v6736 = vunpack.c.l.b16 %v6611
        %v6737 = vunpack.c.h.b16 %v6611
        %v6738 = vunpack.c.l.b16 %v6612
        %v6739 = vunpack.c.l.b16 %v6613
        %v6740 = vunpack.c.h.b16 %v6613
        %v6741 = vunpack.c.l.b16 %v6614
        %v6742 = vunpack.c.l.b16 %v6615
        %v6743 = vunpack.c.h.b16 %v6615
        %v6744 = vunpack.c.l.b16 %v6616
        %v6745 = vunpack.c.l.b16 %v6617
        %v6746 = vunpack.c.h.b16 %v6617
        %v6747 = vunpack.c.l.b16 %v6618
        %v6748 = vunpack.c.l.b16 %v6619
        %v6749 = vunpack.c.h.b16 %v6619
        %v6750 = vunpack.c.l.b16 %v6620
        %v6751 = vunpack.c.l.b16 %v6621
        %v6752 = vunpack.c.h.b16 %v6621
        %v6753 = vunpack.c.l.b16 %v6622
        %v6754 = vunpack.c.l.b16 %v6623
        %v6755 = vunpack.c.h.b16 %v6623
        %v6756 = vunpack.c.l.b16 %v6624
        %v6757 = vunpack.c.l.b16 %v6625
        %v6758 = vunpack.c.h.b16 %v6625
        %v6759 = vunpack.c.l.b16 %v6626
        %v6760 = vunpack.c.l.b16 %v6627
        %v6761 = vunpack.c.h.b16 %v6627
        %v6762 = vunpack.c.l.b16 %v6628
        %v6763 = vunpack.c.l.b16 %v6629
        %v6764 = vunpack.c.h.b16 %v6629
        %v6765 = vunpack.c.l.b16 %v6630
        %v6766 = vpack.c.b16 %v6721, %v6718
        %v6767 = vpack.c.b16 %v6722, %v6719
        %v6768 = vpack.c.b16 %v6723, %v6720
        %v6769 = vpack.c.b16 %v6727, %v6724
        %v6770 = vpack.c.b16 %v6728, %v6725
        %v6771 = vpack.c.b16 %v6729, %v6726
        %v6772 = vpack.c.b16 %v6733, %v6730
        %v6773 = vpack.c.b16 %v6734, %v6731
        %v6774 = vpack.c.b16 %v6735, %v6732
        %v6775 = vpack.c.b16 %v6739, %v6736
        %v6776 = vpack.c.b16 %v6740, %v6737
        %v6777 = vpack.c.b16 %v6741, %v6738
        %v6778 = vpack.c.b16 %v6745, %v6742
        %v6779 = vpack.c.b16 %v6746, %v6743
        %v6780 = vpack.c.b16 %v6747, %v6744
        %v6781 = vpack.c.b16 %v6751, %v6748
        %v6782 = vpack.c.b16 %v6752, %v6749
        %v6783 = vpack.c.b16 %v6753, %v6750
        %v6784 = vpack.c.b16 %v6757, %v6754
        %v6785 = vpack.c.b16 %v6758, %v6755
        %v6786 = vpack.c.b16 %v6759, %v6756
        %v6787 = vpack.c.b16 %v6763, %v6760
        %v6788 = vpack.c.b16 %v6764, %v6761
        %v6789 = vpack.c.b16 %v6765, %v6762
        %v6862 = vunpack.c.l.b16 %v6631
        %v6863 = vunpack.c.l.b16 %v6632
        %v6864 = vunpack.c.l.b16 %v6633
        %v6865 = vunpack.c.l.b16 %v6634
        %v6866 = vunpack.c.l.b16 %v6635
        %v6867 = vunpack.c.l.b16 %v6636
        %v6868 = vunpack.c.l.b16 %v6637
        %v6869 = vunpack.c.l.b16 %v6638
        %v6870 = vunpack.c.l.b16 %v6639
        %v6871 = vunpack.c.l.b16 %v6640
        %v6872 = vunpack.c.l.b16 %v6641
        %v6873 = vunpack.c.l.b16 %v6642
        %v6874 = vunpack.c.l.b16 %v6643
        %v6875 = vunpack.c.l.b16 %v6644
        %v6876 = vunpack.c.l.b16 %v6645
        %v6877 = vunpack.c.l.b16 %v6646
        %v6878 = vunpack.c.l.b16 %v6647
        %v6879 = vunpack.c.l.b16 %v6648
        %v6880 = vunpack.c.l.b16 %v6649
        %v6881 = vunpack.c.l.b16 %v6650
        %v6882 = vunpack.c.l.b16 %v6651
        %v6883 = vunpack.c.l.b16 %v6652
        %v6884 = vunpack.c.l.b16 %v6653
        %v6885 = vunpack.c.l.b16 %v6654
        %v6886 = vunpack.c.l.b16 %v6655
        %v6887 = vunpack.c.l.b16 %v6656
        %v6888 = vunpack.c.l.b16 %v6657
        %v6889 = vunpack.c.l.b16 %v6658
        %v6890 = vunpack.c.l.b16 %v6659
        %v6891 = vunpack.c.l.b16 %v6660
        %v6892 = vunpack.c.l.b16 %v6661
        %v6893 = vunpack.c.l.b16 %v6662
        %v6894 = vunpack.c.l.b16 %v6663
        %v6895 = vunpack.c.l.b16 %v6664
        %v6896 = vunpack.c.l.b16 %v6665
        %v6897 = vunpack.c.l.b16 %v6666
        %v6898 = vunpack.c.l.b16 %v6667
        %v6899 = vunpack.c.l.b16 %v6668
        %v6900 = vunpack.c.l.b16 %v6669
        %v6901 = vunpack.c.l.b16 %v6670
        %v6902 = vunpack.c.l.b16 %v6671
        %v6903 = vunpack.c.l.b16 %v6672
        %v6904 = vunpack.c.l.b16 %v6673
        %v6905 = vunpack.c.l.b16 %v6674
        %v6906 = vunpack.c.l.b16 %v6675
        %v6907 = vunpack.c.l.b16 %v6676
        %v6908 = vunpack.c.l.b16 %v6677
        %v6909 = vunpack.c.l.b16 %v6678
        %v6910 = vpack.c.b16 %v6863, %v6862
        %v6911 = vpack.c.b16 %v6865, %v6864
        %v6912 = vpack.c.b16 %v6867, %v6866
        %v6913 = vpack.c.b16 %v6869, %v6868
        %v6914 = vpack.c.b16 %v6871, %v6870
        %v6915 = vpack.c.b16 %v6873, %v6872
        %v6916 = vpack.c.b16 %v6875, %v6874
        %v6917 = vpack.c.b16 %v6877, %v6876
        %v6918 = vpack.c.b16 %v6879, %v6878
        %v6919 = vpack.c.b16 %v6881, %v6880
        %v6920 = vpack.c.b16 %v6883, %v6882
        %v6921 = vpack.c.b16 %v6885, %v6884
        %v6922 = vpack.c.b16 %v6887, %v6886
        %v6923 = vpack.c.b16 %v6889, %v6888
        %v6924 = vpack.c.b16 %v6891, %v6890
        %v6925 = vpack.c.b16 %v6893, %v6892
        %v6926 = vpack.c.b16 %v6895, %v6894
        %v6927 = vpack.c.b16 %v6897, %v6896
        %v6928 = vpack.c.b16 %v6899, %v6898
        %v6929 = vpack.c.b16 %v6901, %v6900
        %v6930 = vpack.c.b16 %v6903, %v6902
        %v6931 = vpack.c.b16 %v6905, %v6904
        %v6932 = vpack.c.b16 %v6907, %v6906
        %v6933 = vpack.c.b16 %v6909, %v6908
        %6958 = vmatprep.subr.bf16.mxu0 0
        %6959 = vmatpush1.bf16.msra.mxu0 %v6917
        %6960 = vmatprep.subr.bf16.mxu0 0
        %6961 = vmatpush1.bf16.msra.mxu0 %v6916
        %6962 = vmatprep.subr.bf16.mxu0 0
        %6963 = vmatpush1.bf16.msra.mxu0 %v6915
        %6964 = vmatprep.subr.bf16.mxu0 0
        %6965 = vmatpush1.bf16.msra.mxu0 %v6914
        %6966 = vmatprep.subr.bf16.mxu0 0
        %6967 = vmatpush1.bf16.msra.mxu0 %v6913
        %6968 = vmatprep.subr.bf16.mxu0 0
        %6969 = vmatpush1.bf16.msra.mxu0 %v6912
        %6970 = vmatprep.subr.bf16.mxu0 0
        %6971 = vmatpush1.bf16.msra.mxu0 %v6911
        %6972 = vmatprep.subr.bf16.mxu0 0
        %6973 = vmatpush1.bf16.msra.mxu0 %v6910
        %6974 = vmatprep.subr.bf16.mxu0 0
        %6975 = vmatpush2.bf16.msra.mxu0 %v6925
        %6976 = vmatprep.subr.bf16.mxu0 0
        %6977 = vmatpush2.bf16.msra.mxu0 %v6924
        %6978 = vmatprep.subr.bf16.mxu0 0
        %6979 = vmatpush2.bf16.msra.mxu0 %v6923
        %6980 = vmatprep.subr.bf16.mxu0 0
        %6981 = vmatpush2.bf16.msra.mxu0 %v6922
        %6982 = vmatprep.subr.bf16.mxu0 0
        %6983 = vmatpush2.bf16.msra.mxu0 %v6921
        %6984 = vmatprep.subr.bf16.mxu0 0
        %6985 = vmatpush2.bf16.msra.mxu0 %v6920
        %6986 = vmatprep.subr.bf16.mxu0 0
        %6987 = vmatpush2.bf16.msra.mxu0 %v6919
        %6988 = vmatprep.subr.bf16.mxu0 0
        %6989 = vmatpush2.bf16.msra.mxu0 %v6918
        %6990 = vmatprep.mubr.bf16.mxu0 %v6767
        %6991 = vmatmul.mubr.bf16.gmra.mxu0 %v6766
        %v6992 = vpop.f32.mrf.mxu0
        %v6993 = vadd.f32 %v6684, %v6992
        %v6994 = vpop.f32.mrf.mxu0
        %v6995 = vpop.f32.mrf.mxu0
        %v6996 = vadd.f32 %v6684, %v6995
        %v6997 = vpop.f32.mrf.mxu0
        %6998 = vmatprep.mubr.bf16.mxu0 %v6770
        %6999 = vmatmul.mubr.bf16.gmra.mxu0 %v6769
        %v7000 = vpop.f32.mrf.mxu0
        %v7001 = vadd.f32 %v6684, %v7000
        %v7002 = vpop.f32.mrf.mxu0
        %v7003 = vpop.f32.mrf.mxu0
        %v7004 = vadd.f32 %v6684, %v7003
        %v7005 = vpop.f32.mrf.mxu0
        %7006 = vmatprep.mubr.bf16.mxu0 %v6773
        %7007 = vmatmul.mubr.bf16.gmra.mxu0 %v6772
        %v7008 = vpop.f32.mrf.mxu0
        %v7009 = vadd.f32 %v6684, %v7008
        %v7010 = vpop.f32.mrf.mxu0
        %v7011 = vpop.f32.mrf.mxu0
        %v7012 = vadd.f32 %v6684, %v7011
        %v7013 = vpop.f32.mrf.mxu0
        %7014 = vmatprep.mubr.bf16.mxu0 %v6776
        %7015 = vmatmul.mubr.bf16.gmra.mxu0 %v6775
        %v7016 = vpop.f32.mrf.mxu0
        %v7017 = vadd.f32 %v6684, %v7016
        %v7018 = vpop.f32.mrf.mxu0
        %v7019 = vpop.f32.mrf.mxu0
        %v7020 = vadd.f32 %v6684, %v7019
        %v7021 = vpop.f32.mrf.mxu0
        %7022 = vmatprep.mubr.bf16.mxu0 %v6779
        %7023 = vmatmul.mubr.bf16.gmra.mxu0 %v6778
        %v7024 = vpop.f32.mrf.mxu0
        %v7025 = vadd.f32 %v6684, %v7024
        %v7026 = vpop.f32.mrf.mxu0
        %v7027 = vpop.f32.mrf.mxu0
        %v7028 = vadd.f32 %v6684, %v7027
        %v7029 = vpop.f32.mrf.mxu0
        %7030 = vmatprep.mubr.bf16.mxu0 %v6782
        %7031 = vmatmul.mubr.bf16.gmra.mxu0 %v6781
        %v7032 = vpop.f32.mrf.mxu0
        %v7033 = vadd.f32 %v6684, %v7032
        %v7034 = vpop.f32.mrf.mxu0
        %v7035 = vpop.f32.mrf.mxu0
        %v7036 = vadd.f32 %v6684, %v7035
        %v7037 = vpop.f32.mrf.mxu0
        %7038 = vmatprep.mubr.bf16.mxu0 %v6785
        %7039 = vmatmul.mubr.bf16.gmra.mxu0 %v6784
        %v7040 = vpop.f32.mrf.mxu0
        %v7041 = vadd.f32 %v6684, %v7040
        %v7042 = vpop.f32.mrf.mxu0
        %v7043 = vpop.f32.mrf.mxu0
        %v7044 = vadd.f32 %v6684, %v7043
        %v7045 = vpop.f32.mrf.mxu0
        %7046 = vmatprep.mubr.bf16.mxu0 %v6788
        %7047 = vmatmul.mubr.bf16.gmra.mxu0 %v6787
        %v7048 = vpop.f32.mrf.mxu0
        %v7049 = vadd.f32 %v6684, %v7048
        %v7050 = vpop.f32.mrf.mxu0
        %v7051 = vpop.f32.mrf.mxu0
        %v7052 = vadd.f32 %v6684, %v7051
        %v7053 = vpop.f32.mrf.mxu0
        %7054 = vdwg.mxu0
        %7055 = vmatprep.subr.bf16.mxu0 0
        %7056 = vmatpush1.bf16.msra.mxu0 %v6933
        %7057 = vmatprep.subr.bf16.mxu0 0
        %7058 = vmatpush1.bf16.msra.mxu0 %v6932
        %7059 = vmatprep.subr.bf16.mxu0 0
        %7060 = vmatpush1.bf16.msra.mxu0 %v6931
        %7061 = vmatprep.subr.bf16.mxu0 0
        %7062 = vmatpush1.bf16.msra.mxu0 %v6930
        %7063 = vmatprep.subr.bf16.mxu0 0
        %7064 = vmatpush1.bf16.msra.mxu0 %v6929
        %7065 = vmatprep.subr.bf16.mxu0 0
        %7066 = vmatpush1.bf16.msra.mxu0 %v6928
        %7067 = vmatprep.subr.bf16.mxu0 0
        %7068 = vmatpush1.bf16.msra.mxu0 %v6927
        %7069 = vmatprep.subr.bf16.mxu0 0
        %7070 = vmatpush1.bf16.msra.mxu0 %v6926
        %7071 = vmatprep.subr.bf16.mxu0 0
        %7072 = vmatpush2.bf16.msra.mxu0 0
        %7073 = vmatprep.subr.bf16.mxu0 0
        %7074 = vmatpush2.bf16.msra.mxu0 0
        %7075 = vmatprep.subr.bf16.mxu0 0
        %7076 = vmatpush2.bf16.msra.mxu0 0
        %7077 = vmatprep.subr.bf16.mxu0 0
        %7078 = vmatpush2.bf16.msra.mxu0 0
        %7079 = vmatprep.subr.bf16.mxu0 0
        %7080 = vmatpush2.bf16.msra.mxu0 0
        %7081 = vmatprep.subr.bf16.mxu0 0
        %7082 = vmatpush2.bf16.msra.mxu0 0
        %7083 = vmatprep.subr.bf16.mxu0 0
        %7084 = vmatpush2.bf16.msra.mxu0 0
        %7085 = vmatprep.subr.bf16.mxu0 0
        %7086 = vmatpush2.bf16.msra.mxu0 0
        %7087 = vmatprep.mubr.bf16.mxu0 0
        %7088 = vmatmul.mubr.bf16.gmra.mxu0 %v6768
        %v7089 = vpop.f32.mrf.mxu0
        %v7090 = vadd.f32 %v6993, %v7089
        %v7091 = vpop.f32.mrf.mxu0
        %v7092 = vpop.f32.mrf.mxu0
        %v7093 = vadd.f32 %v6996, %v7092
        %v7094 = vpop.f32.mrf.mxu0
        %7095 = vmatprep.mubr.bf16.mxu0 0
        %7096 = vmatmul.mubr.bf16.gmra.mxu0 %v6771
        %v7097 = vpop.f32.mrf.mxu0
        %v7098 = vadd.f32 %v7001, %v7097
        %v7099 = vpop.f32.mrf.mxu0
        %v7100 = vpop.f32.mrf.mxu0
        %v7101 = vadd.f32 %v7004, %v7100
        %v7102 = vpop.f32.mrf.mxu0
        %7103 = vmatprep.mubr.bf16.mxu0 0
        %7104 = vmatmul.mubr.bf16.gmra.mxu0 %v6774
        %v7105 = vpop.f32.mrf.mxu0
        %v7106 = vadd.f32 %v7009, %v7105
        %v7107 = vpop.f32.mrf.mxu0
        %v7108 = vpop.f32.mrf.mxu0
        %v7109 = vadd.f32 %v7012, %v7108
        %v7110 = vpop.f32.mrf.mxu0
        %7111 = vmatprep.mubr.bf16.mxu0 0
        %7112 = vmatmul.mubr.bf16.gmra.mxu0 %v6777
        %v7113 = vpop.f32.mrf.mxu0
        %v7114 = vadd.f32 %v7017, %v7113
        %v7115 = vpop.f32.mrf.mxu0
        %v7116 = vpop.f32.mrf.mxu0
        %v7117 = vadd.f32 %v7020, %v7116
        %v7118 = vpop.f32.mrf.mxu0
        %7119 = vmatprep.mubr.bf16.mxu0 0
        %7120 = vmatmul.mubr.bf16.gmra.mxu0 %v6780
        %v7121 = vpop.f32.mrf.mxu0
        %v7122 = vadd.f32 %v7025, %v7121
        %v7123 = vpop.f32.mrf.mxu0
        %v7124 = vpop.f32.mrf.mxu0
        %v7125 = vadd.f32 %v7028, %v7124
        %v7126 = vpop.f32.mrf.mxu0
        %7127 = vmatprep.mubr.bf16.mxu0 0
        %7128 = vmatmul.mubr.bf16.gmra.mxu0 %v6783
        %v7129 = vpop.f32.mrf.mxu0
        %v7130 = vadd.f32 %v7033, %v7129
        %v7131 = vpop.f32.mrf.mxu0
        %v7132 = vpop.f32.mrf.mxu0
        %v7133 = vadd.f32 %v7036, %v7132
        %v7134 = vpop.f32.mrf.mxu0
        %7135 = vmatprep.mubr.bf16.mxu0 0
        %7136 = vmatmul.mubr.bf16.gmra.mxu0 %v6786
        %v7137 = vpop.f32.mrf.mxu0
        %v7138 = vadd.f32 %v7041, %v7137
        %v7139 = vpop.f32.mrf.mxu0
        %v7140 = vpop.f32.mrf.mxu0
        %v7141 = vadd.f32 %v7044, %v7140
        %v7142 = vpop.f32.mrf.mxu0
        %7143 = vmatprep.mubr.bf16.mxu0 0
        %7144 = vmatmul.mubr.bf16.gmra.mxu0 %v6789
        %v7145 = vpop.f32.mrf.mxu0
        %v7146 = vadd.f32 %v7049, %v7145
        %v7147 = vpop.f32.mrf.mxu0
        %v7148 = vpop.f32.mrf.mxu0
        %v7149 = vadd.f32 %v7052, %v7148
        %v7150 = vpop.f32.mrf.mxu0
        %7151 = vdwg.mxu0
        %v7152 = vsub.f32 0.0, %v7090
        %v7153 = vsub.f32 0.0, %v7093
        %v7154 = vsub.f32 0.0, %v7098
        %v7155 = vsub.f32 0.0, %v7101
        %v7156 = vsub.f32 0.0, %v7106
        %v7157 = vsub.f32 0.0, %v7109
        %v7158 = vsub.f32 0.0, %v7114
        %v7159 = vsub.f32 0.0, %v7117
        %v7160 = vsub.f32 0.0, %v7122
        %v7161 = vsub.f32 0.0, %v7125
        %v7162 = vsub.f32 0.0, %v7130
        %v7163 = vsub.f32 0.0, %v7133
        %v7164 = vsub.f32 0.0, %v7138
        %v7165 = vsub.f32 0.0, %v7141
        %v7166 = vsub.f32 0.0, %v7146
        %v7167 = vsub.f32 0.0, %v7149
        %v7168 = vmul.f32 %v7152, 1.442695
        %v7169 = vpow.pop %v7168
        %v7170 = vmul.f32 %v7153, 1.442695
        %v7171 = vpow.pop %v7170
        %v7172 = vmul.f32 %v7154, 1.442695
        %v7173 = vpow.pop %v7172
        %v7174 = vmul.f32 %v7155, 1.442695
        %v7175 = vpow.pop %v7174
        %v7176 = vmul.f32 %v7156, 1.442695
        %v7177 = vpow.pop %v7176
        %v7178 = vmul.f32 %v7157, 1.442695
        %v7179 = vpow.pop %v7178
        %v7180 = vmul.f32 %v7158, 1.442695
        %v7181 = vpow.pop %v7180
        %v7182 = vmul.f32 %v7159, 1.442695
        %v7183 = vpow.pop %v7182
        %v7184 = vmul.f32 %v7160, 1.442695
        %v7185 = vpow.pop %v7184
        %v7186 = vmul.f32 %v7161, 1.442695
        %v7187 = vpow.pop %v7186
        %v7188 = vmul.f32 %v7162, 1.442695
        %v7189 = vpow.pop %v7188
        %v7190 = vmul.f32 %v7163, 1.442695
        %v7191 = vpow.pop %v7190
        %v7192 = vmul.f32 %v7164, 1.442695
        %v7193 = vpow.pop %v7192
        %v7194 = vmul.f32 %v7165, 1.442695
        %v7195 = vpow.pop %v7194
        %v7196 = vmul.f32 %v7166, 1.442695
        %v7197 = vpow.pop %v7196
        %v7198 = vmul.f32 %v7167, 1.442695
        %v7199 = vpow.pop %v7198
        %v7200 = vadd.f32 %v7169, 1.0
        %v7201 = vadd.f32 %v7171, 1.0
        %v7202 = vadd.f32 %v7173, 1.0
        %v7203 = vadd.f32 %v7175, 1.0
        %v7204 = vadd.f32 %v7177, 1.0
        %v7205 = vadd.f32 %v7179, 1.0
        %v7206 = vadd.f32 %v7181, 1.0
        %v7207 = vadd.f32 %v7183, 1.0
        %v7208 = vadd.f32 %v7185, 1.0
        %v7209 = vadd.f32 %v7187, 1.0
        %v7210 = vadd.f32 %v7189, 1.0
        %v7211 = vadd.f32 %v7191, 1.0
        %v7212 = vadd.f32 %v7193, 1.0
        %v7213 = vadd.f32 %v7195, 1.0
        %v7214 = vadd.f32 %v7197, 1.0
        %v7215 = vadd.f32 %v7199, 1.0
        %v7216 = vrcp.pop %v7200
        %v7217 = vrcp.pop %v7201
        %v7218 = vrcp.pop %v7202
        %v7219 = vrcp.pop %v7203
        %v7220 = vrcp.pop %v7204
        %v7221 = vrcp.pop %v7205
        %v7222 = vrcp.pop %v7206
        %v7223 = vrcp.pop %v7207
        %v7224 = vrcp.pop %v7208
        %v7225 = vrcp.pop %v7209
        %v7226 = vrcp.pop %v7210
        %v7227 = vrcp.pop %v7211
        %v7228 = vrcp.pop %v7212
        %v7229 = vrcp.pop %v7213
        %v7230 = vrcp.pop %v7214
        %v7231 = vrcp.pop %v7215
        %v7232 = vmul.f32 %v7090, %v7216
        %v7233 = vmul.f32 %v7093, %v7217
        %v7234 = vmul.f32 %v7098, %v7218
        %v7235 = vmul.f32 %v7101, %v7219
        %v7236 = vmul.f32 %v7106, %v7220
        %v7237 = vmul.f32 %v7109, %v7221
        %v7238 = vmul.f32 %v7114, %v7222
        %v7239 = vmul.f32 %v7117, %v7223
        %v7240 = vmul.f32 %v7122, %v7224
        %v7241 = vmul.f32 %v7125, %v7225
        %v7242 = vmul.f32 %v7130, %v7226
        %v7243 = vmul.f32 %v7133, %v7227
        %v7244 = vmul.f32 %v7138, %v7228
        %v7245 = vmul.f32 %v7141, %v7229
        %v7246 = vmul.f32 %v7146, %v7230
        %v7247 = vmul.f32 %v7149, %v7231
        %v7248 = vpack.c.bf16 %v7233, %v7232
        %v7249 = vpack.c.bf16 %v7235, %v7234
        %v7250 = vpack.c.bf16 %v7237, %v7236
        %v7251 = vpack.c.bf16 %v7239, %v7238
        %v7252 = vpack.c.bf16 %v7241, %v7240
        %v7253 = vpack.c.bf16 %v7243, %v7242
        %v7254 = vpack.c.bf16 %v7245, %v7244
        %v7255 = vpack.c.bf16 %v7247, %v7246
        %v7264 = vunpack.c.l.b16 %v7248
        %v7265 = vunpack.c.h.b16 %v7248
        %v7266 = vunpack.c.l.b16 %v7249
        %v7267 = vunpack.c.h.b16 %v7249
        %v7268 = vunpack.c.l.b16 %v7250
        %v7269 = vunpack.c.h.b16 %v7250
        %v7270 = vunpack.c.l.b16 %v7251
        %v7271 = vunpack.c.h.b16 %v7251
        %v7272 = vunpack.c.l.b16 %v7252
        %v7273 = vunpack.c.h.b16 %v7252
        %v7274 = vunpack.c.l.b16 %v7253
        %v7275 = vunpack.c.h.b16 %v7253
        %v7276 = vunpack.c.l.b16 %v7254
        %v7277 = vunpack.c.h.b16 %v7254
        %v7278 = vunpack.c.l.b16 %v7255
        %v7279 = vunpack.c.h.b16 %v7255
        %v7280 = vpack.c.b16 %v7264, %v7264
        %v7281 = vpack.c.b16 %v7265, %v7265
        %v7282 = vpack.c.b16 %v7266, %v7266
        %v7283 = vpack.c.b16 %v7267, %v7267
        %v7284 = vpack.c.b16 %v7268, %v7268
        %v7285 = vpack.c.b16 %v7269, %v7269
        %v7286 = vpack.c.b16 %v7270, %v7270
        %v7287 = vpack.c.b16 %v7271, %v7271
        %v7288 = vpack.c.b16 %v7272, %v7272
        %v7289 = vpack.c.b16 %v7273, %v7273
        %v7290 = vpack.c.b16 %v7274, %v7274
        %v7291 = vpack.c.b16 %v7275, %v7275
        %v7292 = vpack.c.b16 %v7276, %v7276
        %v7293 = vpack.c.b16 %v7277, %v7277
        %v7294 = vpack.c.b16 %v7278, %v7278
        %v7295 = vpack.c.b16 %v7279, %v7279
        %7312 = vst [vmem:[%s315] sm:$0xf] %v7280
        %7313 = vst [vmem:[%s315 + $0x4] sm:$0xf] %v7281
        %7314 = vst [vmem:[%s315 + $0x8] sm:$0xf] %v7282
        %7315 = vst [vmem:[%s315 + $0xc] sm:$0xf] %v7283
        %7316 = vst [vmem:[%s315 + $0x10] sm:$0xf] %v7284
        %7317 = vst [vmem:[%s315 + $0x14] sm:$0xf] %v7285
        %7318 = vst [vmem:[%s315 + $0x18] sm:$0xf] %v7286
        %7319 = vst [vmem:[%s315 + $0x1c] sm:$0xf] %v7287
        %7320 = vst [vmem:[%s315 + $0x20] sm:$0xf] %v7288
        %7321 = vst [vmem:[%s315 + $0x24] sm:$0xf] %v7289
        %7322 = vst [vmem:[%s315 + $0x28] sm:$0xf] %v7290
        %7323 = vst [vmem:[%s315 + $0x2c] sm:$0xf] %v7291
        %7324 = vst [vmem:[%s315 + $0x30] sm:$0xf] %v7292
        %7325 = vst [vmem:[%s315 + $0x34] sm:$0xf] %v7293
        %7326 = vst [vmem:[%s315 + $0x38] sm:$0xf] %v7294
        %7327 = vst [vmem:[%s315 + $0x3c] sm:$0xf] %v7295
        %s7328 = smul.u32 16, %s24
        %p7329 = scmp.lt.s32.totalorder %s23, 1
        %s7330 = scalar_select %p7329, %s23, 1
        %p7331 = scmp.lt.s32.totalorder %s7328, 31
        %s7332 = scalar_select %p7331, %s7328, 31
        %s7333 = smul.addr %s7330, 32
        %s7334 = sadd.s32 %s7332, %s7333
        %s7335 = smul.addr %s7334, 4
        %s7336 = scalar_lea.vmem %s7, %s7335
        // Predicated region
        $region53: #{c2f_forward.1} parent=47 // pred_check
          %p7337 = pneg %p203
        $region54: #{c2f_forward.1} parent=47 // pred_check_branch
          %7339 = sbr.rel (%p7337) target = $region56
        $region55: #{c2f_forward.1} parent=47 // pred_region
          %s7340 = smul.u32 16, %s24
        $region56: #{c2f_forward.1} parent=47 // pred_fallthru
          _
      $region48: #{c2f_forward.1} parent=5 // pred_fallthru
        _
      %p7341 = scmp.le.s32.totalorder 2, %s14
      // Predicated region
      $region57: #{c2f_forward.1} parent=5 // pred_check
        %p7342 = pneg %p7341
      $region58: #{c2f_forward.1} parent=5 // pred_check_branch
        %7344 = sbr.rel (%p7342) target = $region60
      $region59: #{c2f_forward.1} parent=5 // pred_region
        %s7345 = ssub.s32 %s14, 2
        // Predicated region
        $region61: #{c2f_forward.1} parent=59 // pred_check
          %p7346 = pneg %p209
        $region62: #{c2f_forward.1} parent=59 // pred_check_branch
          %7348 = sbr.rel (%p7346) target = $region64
        $region63: #{c2f_forward.1} parent=59 // pred_region
          %s7349 = smul.u32 16, %s26
          %p7350 = scmp.lt.s32.totalorder %s25, 1
          %s7351 = scalar_select %p7350, %s25, 1
          %p7352 = scmp.lt.s32.totalorder %s7349, 31
          %s7353 = scalar_select %p7352, %s7349, 31
          %s7354 = smul.addr %s7351, 32
          %s7355 = sadd.s32 %s7353, %s7354
          %s7356 = smul.addr %s7355, 4
          %s7357 = scalar_lea.vmem %s7, %s7356
        $region64: #{c2f_forward.1} parent=59 // pred_fallthru
          _
      $region60: #{c2f_forward.1} parent=5 // pred_fallthru
        _
    $region6: #{c2f_forward.1} parent=1 // loop_footer
      %s18 = sadd.s32 1, %s14
    $region7: #{c2f_forward.1} parent=1 // loop_footer_branch
      %13 = sbr.rel target = $region3
    $region8: #{c2f_forward.1} parent=1 // loop_exit
      _
    %7358 = vsyncpa [#allocation5], 1
    %s7359 = scalar_lea.sflag [#allocation5], 1
    %7360 = vsyncpa %s7359, 1

</llo_original>
